<compile_context>
chip_gen: v6e
topology: v6e:2x2x1
jax: 0.10.0
libtpu: 0.0.40
codegen_flags: <defaults>
</compile_context>

<pallas_src>
import functools

import numpy as np

import jax
import jax.numpy as jnp
from jax.experimental import pallas as pl
from jax.experimental.pallas import tpu as pltpu


def _round_up(x, m):
    return (x + m - 1) // m * m


# ---------------------------------------------------------------------- Pallas kernels
def _linear_bn_elu_kernel(z_ref, w_ref, g_ref, b_ref, o_ref, *, batch, eps):
    """Fused Linear + BatchNorm1d(batch stats) + ELU, single grid step.

    The Linear bias is omitted: it is a per-feature constant that is exactly
    cancelled by the following BatchNorm's batch-mean subtraction.
    """
    acc = jnp.dot(z_ref[...], w_ref[...], preferred_element_type=jnp.float32)
    row = jax.lax.broadcasted_iota(jnp.int32, acc.shape, 0)
    valid = (row < batch).astype(jnp.float32)            # mask sublane-padding rows
    inv_n = 1.0 / batch
    mean = jnp.sum(acc * valid, axis=0, keepdims=True) * inv_n
    d = (acc - mean) * valid
    var = jnp.sum(d * d, axis=0, keepdims=True) * inv_n  # biased, two-pass
    y = (acc - mean) * jax.lax.rsqrt(var + eps) * g_ref[...] + b_ref[...]
    y = jnp.where(y > 0, y, jnp.exp(jnp.minimum(y, 0.0)) - 1.0)      # ELU(alpha=1)
    o_ref[...] = y.astype(o_ref.dtype)


def linear_bn_elu(z_p, w_t, gamma, beta, *, batch, eps=1e-5, out_dtype=jnp.bfloat16):
    Mp, Kp = z_p.shape
    N = w_t.shape[1]
    return pl.pallas_call(
        functools.partial(_linear_bn_elu_kernel, batch=batch, eps=eps),
        grid=(1,),
        in_specs=[
            pl.BlockSpec((Mp, Kp), lambda i: (0, 0)),
            pl.BlockSpec((Kp, N), lambda i: (0, 0)),
            pl.BlockSpec((1, N), lambda i: (0, 0)),
            pl.BlockSpec((1, N), lambda i: (0, 0)),
        ],
        out_specs=pl.BlockSpec((Mp, N), lambda i: (0, 0)),
        out_shape=jax.ShapeDtypeStruct((Mp, N), out_dtype),
        compiler_params=pltpu.CompilerParams(dimension_semantics=("arbitrary",)),
    )(z_p, w_t, gamma, beta)


def _convt_bn_relu_kernel(p_ref, w_ref, m_ref, a_ref, g_ref, b_ref, o_ref, *, count, eps):
    """Phase-folded ConvTranspose matmul + BatchNorm2d(batch stats) + ReLU.

    Output layout is (M = N*Hq*Wq, s*s*Co).  The conv bias is omitted (exactly
    cancelled by the BN mean subtraction).  BN statistics use only the valid
    (non-cropped, non-padded) entries selected by m_ref; per-(phase,channel) column
    sums are reduced over the s*s phases and broadcast back with the 0/1 matrix a_ref
    (a_ref[i,j] = 1 iff i == j (mod Co)) via a tiny f32 matmul.
    """
    y = jnp.dot(p_ref[...], w_ref[...], preferred_element_type=jnp.float32)
    m = m_ref[...]
    inv_n = 1.0 / count
    col_sum = jnp.sum(y * m, axis=0, keepdims=True)                      # (1, s2*Co)
    mean = jnp.dot(col_sum, a_ref[...], preferred_element_type=jnp.float32) * inv_n
    d = (y - mean) * m
    col_ssq = jnp.sum(d * d, axis=0, keepdims=True)
    var = jnp.dot(col_ssq, a_ref[...], preferred_element_type=jnp.float32) * inv_n
    yn = (y - mean) * jax.lax.rsqrt(var + eps) * g_ref[...] + b_ref[...]
    o_ref[...] = jnp.maximum(yn, 0.0).astype(o_ref.dtype)


def convt_bn_relu(patches_p, wmat, mask, amat, gamma_t, beta_t, *, count, eps=1e-5,
                  out_dtype=jnp.bfloat16):
    Mp, K = patches_p.shape
    Nc = wmat.shape[1]
    return pl.pallas_call(
        functools.partial(_convt_bn_relu_kernel, count=count, eps=eps),
        grid=(1,),
        in_specs=[
            pl.BlockSpec((Mp, K), lambda i: (0, 0)),
            pl.BlockSpec((K, Nc), lambda i: (0, 0)),
            pl.BlockSpec((Mp, Nc), lambda i: (0, 0)),
            pl.BlockSpec((Nc, Nc), lambda i: (0, 0)),
            pl.BlockSpec((1, Nc), lambda i: (0, 0)),
            pl.BlockSpec((1, Nc), lambda i: (0, 0)),
        ],
        out_specs=pl.BlockSpec((Mp, Nc), lambda i: (0, 0)),
        out_shape=jax.ShapeDtypeStruct((Mp, Nc), out_dtype),
        compiler_params=pltpu.CompilerParams(dimension_semantics=("arbitrary",)),
    )(patches_p, wmat, mask, amat, gamma_t, beta_t)


def _convt_sigmoid_kernel(p_ref, w_ref, bias_ref, o_ref):
    y = jnp.dot(p_ref[...], w_ref[...], preferred_element_type=jnp.float32)
    o_ref[...] = jax.nn.sigmoid(y + bias_ref[...]).astype(o_ref.dtype)


def convt_sigmoid(patches_p, wmat, bias):
    Mp, K = patches_p.shape
    Nc = wmat.shape[1]
    return pl.pallas_call(
        _convt_sigmoid_kernel,
        grid=(1,),
        in_specs=[
            pl.BlockSpec((Mp, K), lambda i: (0, 0)),
            pl.BlockSpec((K, Nc), lambda i: (0, 0)),
            pl.BlockSpec((1, Nc), lambda i: (0, 0)),
        ],
        out_specs=pl.BlockSpec((Mp, Nc), lambda i: (0, 0)),
        out_shape=jax.ShapeDtypeStruct((Mp, Nc), jnp.float32),
        compiler_params=pltpu.CompilerParams(dimension_semantics=("arbitrary",)),
    )(patches_p, wmat, bias)


# ------------------------------------------------------------ transposed conv helpers
def fold_convt_weight(w, stride, padding):
    """PyTorch ConvTranspose2d weight (Ci,Co,K,K) -> phase-folded correlation matrix.

    out[n, s*qy+ry, s*qx+rx, co] =
        sum_{ty,tx,ci} x_ext[n, qy+dlo+ty, qx+dlo+tx, ci] * Wmat[(ty,tx,ci),(ry,rx,co)]
    """
    w = np.asarray(w, np.float32)
    Ci, Co, K, _ = w.shape
    s, p = stride, padding
    pprime = K - 1 - p
    dys = sorted({(r + k - pprime) // s for r in range(s) for k in range(K)
                  if (r + k - pprime) % s == 0})
    dlo, dhi = dys[0], dys[-1]
    T = dhi - dlo + 1
    wsub = np.zeros((T, T, Ci, s, s, Co), np.float32)
    for ry in range(s):
        for ty in range(T):
            ki = s * (dlo + ty) + pprime - ry
            if not 0 <= ki < K:
                continue
            for rx in range(s):
                for tx in range(T):
                    kj = s * (dlo + tx) + pprime - rx
                    if not 0 <= kj < K:
                        continue
                    wsub[ty, tx, :, ry, rx, :] = w[:, :, K - 1 - ki, K - 1 - kj]
    wmat = wsub.reshape(T * T * Ci, s * s * Co)
    meta = dict(K=K, s=s, p=p, T=T, dlo=dlo, Ci=Ci, Co=Co)
    return wmat, meta


def extract_patches(x, meta):
    """x:(N,H,W,Ci) NHWC -> (Mp, T*T*Ci) bf16 patch matrix, rows padded to mult of 8."""
    N, H, W, Ci = x.shape
    K, s, p, T, dlo = meta["K"], meta["s"], meta["p"], meta["T"], meta["dlo"]
    Ho = (H - 1) * s - 2 * p + K
    Wo = (W - 1) * s - 2 * p + K
    Hq, Wq = -(-Ho // s), -(-Wo // s)
    dhi = dlo + T - 1
    pad_lo = max(0, -dlo)
    pad_hi_y = max(0, (Hq - 1) + dhi - (H - 1))
    pad_hi_x = max(0, (Wq - 1) + dhi - (W - 1))
    xe = jnp.pad(x, ((0, 0), (pad_lo, pad_hi_y), (pad_lo, pad_hi_x), (0, 0)))
    base = pad_lo + dlo                                  # >= 0 by construction
    slices = [xe[:, base + ty: base + ty + Hq, base + tx: base + tx + Wq, :]
              for ty in range(T) for tx in range(T)]
    patches = jnp.stack(slices, axis=3).reshape(N * Hq * Wq, T * T * Ci)
    M = N * Hq * Wq
    Mp = _round_up(M, 8)
    if Mp != M:
        patches = jnp.pad(patches, ((0, Mp - M), (0, 0)))
    return patches.astype(jnp.bfloat16), (Hq, Wq, Ho, Wo, M, Mp)


def bn_phase_mask(N, Hq, Wq, Ho, Wo, s, Co, Mp):
    """0/1 mask (Mp, s*s*Co): 1 where the phase-folded entry maps to a real output
    pixel (not cropped by [:Ho,:Wo], not a padded row).  Built with numpy at trace
    time (static shapes), so it is a baked constant under jit."""
    vy = (np.arange(Hq)[:, None] * s + np.arange(s)[None, :]) < Ho     # (Hq, s)
    vx = (np.arange(Wq)[:, None] * s + np.arange(s)[None, :]) < Wo     # (Wq, s)
    m = vy[:, None, :, None] & vx[None, :, None, :]                    # (Hq,Wq,s,s)
    m = np.broadcast_to(m[None, ..., None], (N, Hq, Wq, s, s, Co))
    m = m.reshape(N * Hq * Wq, s * s * Co).astype(np.float32)
    full = np.zeros((Mp, s * s * Co), np.float32)
    full[: N * Hq * Wq] = m
    return jnp.asarray(full)


def phase_reduce_matrix(s2, Co):
    """(s2*Co, s2*Co) 0/1 matrix: A[i,j] = 1 iff i == j (mod Co)."""
    idx = np.arange(s2 * Co) % Co
    return (idx[:, None] == idx[None, :]).astype(np.float32)


def depth_to_space_crop(y2d, N, Hq, Wq, s, Co, Ho, Wo):
    y = y2d.reshape(N, Hq, Wq, s, s, Co).transpose(0, 1, 3, 2, 4, 5)
    return y.reshape(N, Hq * s, Wq * s, Co)[:, :Ho, :Wo, :]


# -------------------------------------------------------------------------- parameters
def init_decoder_params(key, input_dim, channels, feat_hw):
    ks = jax.random.split(key, 10)
    fm = 128 * feat_hw * feat_hw
    s = 0.05
    return {
        "lin_w": jax.random.normal(ks[0], (fm, input_dim), jnp.float32) * s,
        "lin_b": jax.random.normal(ks[1], (fm,), jnp.float32) * 0.02,
        "bn0_g": 1.0 + 0.1 * jax.random.normal(ks[2], (fm,), jnp.float32),
        "bn0_b": 0.05 * jax.random.normal(ks[3], (fm,), jnp.float32),
        "ct1_w": jax.random.normal(ks[4], (128, 64, 3, 3), jnp.float32) * s,
        "ct1_b": 0.02 * jax.random.normal(ks[5], (64,), jnp.float32),
        "bn1_g": 1.0 + 0.1 * jax.random.normal(ks[6], (64,), jnp.float32),
        "bn1_b": jnp.zeros((64,), jnp.float32),
        "ct2_w": jax.random.normal(ks[7], (64, 32, 3, 3), jnp.float32) * s,
        "ct2_b": 0.02 * jax.random.normal(ks[8], (32,), jnp.float32),
        "bn2_g": jnp.ones((32,), jnp.float32),
        "bn2_b": 0.05 * jnp.ones((32,), jnp.float32),
        "ct3_w": jax.random.normal(ks[9], (32, channels, 2, 2), jnp.float32) * s,
        "ct3_b": jnp.zeros((channels,), jnp.float32),
    }


def prepare_decoder(raw, feat_hw, channels):
    """Hoist all constant weight transforms (transpose / permute / fold / pad / cast /
    gamma-beta tiling / phase matrices) out of the forward path."""
    fh, fc = feat_hw, 128
    fm = fc * fh * fh

    # Linear weight: (fm, K) -> (K, fm), output features permuted (c,h,w)->(h,w,c),
    # K padded to 128, bf16.  lin_b is dropped (cancelled by training-mode BN).
    lin_w = np.asarray(raw["lin_w"], np.float32)
    K = lin_w.shape[1]
    lin_w_t = lin_w.reshape(fc, fh, fh, K).transpose(1, 2, 0, 3).reshape(fm, K).T
    Kp = _round_up(K, 128)
    lin_w_p = np.zeros((Kp, fm), np.float32)
    lin_w_p[:K] = lin_w_t

    def perm_feat(v):                           # (c,h,w)-ordered features -> (h,w,c)
        return np.asarray(v, np.float32).reshape(fc, fh, fh).transpose(1, 2, 0).reshape(1, fm)

    w1, m1 = fold_convt_weight(raw["ct1_w"], stride=2, padding=1)
    w2, m2 = fold_convt_weight(raw["ct2_w"], stride=2, padding=0)
    w3, m3 = fold_convt_weight(raw["ct3_w"], stride=1, padding=0)
    s2_1, s2_2 = m1["s"] ** 2, m2["s"] ** 2

    def tile_phases(v, s2):                     # gamma/beta -> (1, s2*Co) in (ry,rx,co) order
        return np.tile(np.asarray(v, np.float32), s2).reshape(1, -1)

    # Final conv: pad Co up to 128 lanes (weight columns and bias).
    K3, Co3 = w3.shape
    Nc3 = _round_up(Co3, 128)
    w3_p = np.zeros((K3, Nc3), np.float32)
    w3_p[:, :Co3] = w3
    b3_p = np.zeros((1, Nc3), np.float32)
    b3_p[0, :Co3] = np.asarray(raw["ct3_b"], np.float32)

    params = {
        "lin_w": jnp.asarray(lin_w_p, jnp.bfloat16),
        "bn0_g": jnp.asarray(perm_feat(raw["bn0_g"])),
        "bn0_b": jnp.asarray(perm_feat(raw["bn0_b"])),
        "ct1_w": jnp.asarray(w1, jnp.bfloat16),
        "ct1_A": jnp.asarray(phase_reduce_matrix(s2_1, m1["Co"])),
        "bn1_g": jnp.asarray(tile_phases(raw["bn1_g"], s2_1)),
        "bn1_b": jnp.asarray(tile_phases(raw["bn1_b"], s2_1)),
        "ct2_w": jnp.asarray(w2, jnp.bfloat16),
        "ct2_A": jnp.asarray(phase_reduce_matrix(s2_2, m2["Co"])),
        "bn2_g": jnp.asarray(tile_phases(raw["bn2_g"], s2_2)),
        "bn2_b": jnp.asarray(tile_phases(raw["bn2_b"], s2_2)),
        "ct3_w": jnp.asarray(w3_p, jnp.bfloat16),
        "ct3_b": jnp.asarray(b3_p),
    }
    meta = {"ct1": m1, "ct2": m2, "ct3": m3, "feat_hw": fh, "channels": channels,
            "lin_in": K, "lin_in_pad": Kp}
    return params, meta


# ------------------------------------------------------------------------------ forward
def decoder_forward(z, params, meta):
    B = z.shape[0]
    fh = meta["feat_hw"]
    Kp = meta["lin_in_pad"]
    eps = 1e-5

    # Linear -> BatchNorm1d(batch stats) -> ELU (one kernel, single grid step, NHWC-ready)
    Bp = _round_up(max(B, 8), 8)
    z_p = jnp.pad(z.astype(jnp.bfloat16), ((0, Bp - B), (0, Kp - z.shape[1])))
    h = linear_bn_elu(z_p, params["lin_w"], params["bn0_g"], params["bn0_b"],
                      batch=B, eps=eps)
    x = h[:B].reshape(B, fh, fh, 128)                                   # NHWC

    # ConvTranspose(128->64, k3, s2, p1) + BatchNorm2d + ReLU (one kernel)
    m1 = meta["ct1"]
    patches, (Hq, Wq, Ho, Wo, M, Mp) = extract_patches(x, m1)
    mask = bn_phase_mask(B, Hq, Wq, Ho, Wo, m1["s"], m1["Co"], Mp)
    y = convt_bn_relu(patches, params["ct1_w"], mask, params["ct1_A"],
                      params["bn1_g"], params["bn1_b"], count=B * Ho * Wo, eps=eps)
    x = depth_to_space_crop(y[:M], B, Hq, Wq, m1["s"], m1["Co"], Ho, Wo)

    # ConvTranspose(64->32, k3, s2, p0) + BatchNorm2d + ReLU (one kernel)
    m2 = meta["ct2"]
    patches, (Hq, Wq, Ho, Wo, M, Mp) = extract_patches(x, m2)
    mask = bn_phase_mask(B, Hq, Wq, Ho, Wo, m2["s"], m2["Co"], Mp)
    y = convt_bn_relu(patches, params["ct2_w"], mask, params["ct2_A"],
                      params["bn2_g"], params["bn2_b"], count=B * Ho * Wo, eps=eps)
    x = depth_to_space_crop(y[:M], B, Hq, Wq, m2["s"], m2["Co"], Ho, Wo)

    # ConvTranspose(32->C, k2, s1, p0) + Sigmoid (one kernel), then NCHW
    m3 = meta["ct3"]
    Co = meta["channels"]
    patches, (Hq, Wq, Ho, Wo, M, Mp) = extract_patches(x, m3)
    y = convt_sigmoid(patches, params["ct3_w"], params["ct3_b"])
    y = y[:M, :Co].reshape(B, Ho, Wo, Co)
    return jnp.transpose(y, (0, 3, 1, 2))


# ---------------------------------------------------- pure-JAX reference (parity check)
def reference_forward(z, raw, feat_hw, channels, eps=1e-5):
    """Faithful emulation of the PyTorch Decoder.forward (training-mode BN), with the
    matmul/conv inputs quantized to bf16 (f32 accumulation) to match kernel precision."""
    bf = jnp.bfloat16
    B = z.shape[0]

    y = jnp.dot(z.astype(bf), raw["lin_w"].T.astype(bf),
                preferred_element_type=jnp.float32) + raw["lin_b"]
    mean = jnp.mean(y, axis=0, keepdims=True)
    var = jnp.mean(jnp.square(y - mean), axis=0, keepdims=True)
    y = (y - mean) * jax.lax.rsqrt(var + eps) * raw["bn0_g"] + raw["bn0_b"]
    y = jnp.where(y > 0, y, jnp.exp(jnp.minimum(y, 0.0)) - 1.0).astype(bf)
    x = y.reshape(B, 128, feat_hw, feat_hw)                             # NCHW

    def convt(x, w, b, s, p):
        wf = jnp.flip(w, (2, 3)).transpose(1, 0, 2, 3).astype(bf)       # (Co,Ci,K,K)
        K = w.shape[2]
        pad = K - 1 - p
        out = jax.lax.conv_general_dilated(
            x.astype(bf), wf, window_strides=(1, 1),
            padding=[(pad, pad), (pad, pad)], lhs_dilation=(s, s),
            dimension_numbers=("NCHW", "OIHW", "NCHW"),
            preferred_element_type=jnp.float32)
        return out + b.reshape(1, -1, 1, 1)

    def bn2d_relu(x, g, b):
        mean = jnp.mean(x, axis=(0, 2, 3), keepdims=True)
        var = jnp.mean(jnp.square(x - mean), axis=(0, 2, 3), keepdims=True)
        xn = (x - mean) * jax.lax.rsqrt(var + eps)
        xn = xn * g.reshape(1, -1, 1, 1) + b.reshape(1, -1, 1, 1)
        return jnp.maximum(xn, 0.0).astype(bf)

    x = bn2d_relu(convt(x, raw["ct1_w"], raw["ct1_b"], 2, 1), raw["bn1_g"], raw["bn1_b"])
    x = bn2d_relu(convt(x, raw["ct2_w"], raw["ct2_b"], 2, 0), raw["bn2_g"], raw["bn2_b"])
    x = convt(x, raw["ct3_w"], raw["ct3_b"], 1, 0)
    return jax.nn.sigmoid(x)


# ----------------------------------------------------------------------------------- main
if __name__ == "__main__":
    # Decoder(img_shape=(1, 28, 28), latent_dim=32, n_classes=10, use_label=True)
    channels = 1
    feat_hw = 7                              # feat_map_dim = (128, 7, 7)
    latent_dim, n_classes = 32, 10
    input_dim = latent_dim + n_classes
    batch = 2

    key = jax.random.PRNGKey(0)
    kp, kz = jax.random.split(key)
    raw = init_decoder_params(kp, input_dim, channels, feat_hw)
    params, meta = prepare_decoder(raw, feat_hw, channels)
    z = jax.random.normal(kz, (batch, input_dim), jnp.float32)

    fwd = jax.jit(lambda zz, pp: decoder_forward(zz, pp, meta))
    out = jax.block_until_ready(fwd(z, params))

    assert out.shape == (batch, channels, 28, 28), out.shape
    assert out.dtype == jnp.float32
    assert bool(jnp.all(jnp.isfinite(out)))
    assert bool(jnp.all((out >= 0.0) & (out <= 1.0)))   # sigmoid output range

    # Numerical parity against a precision-matched pure-JAX reference of the module.
    ref = jax.block_until_ready(reference_forward(z, raw, feat_hw, channels))
    max_err = float(jnp.max(jnp.abs(out - ref.astype(jnp.float32))))
    assert max_err < 3e-2, f"parity vs reference failed: max_err={max_err}"

    print("KERNEL_OK")
</pallas_src>

<mosaic_0001>
module attributes {stable_mosaic.version = 11 : i64} {
  func.func @_linear_bn_elu_kernel(%arg0: i32, %arg1: memref<8x128xbf16, #tpu.memory_space<vmem>>, %arg2: memref<128x6272xbf16, #tpu.memory_space<vmem>>, %arg3: memref<1x6272xf32, #tpu.memory_space<vmem>>, %arg4: memref<1x6272xf32, #tpu.memory_space<vmem>>, %arg5: memref<8x6272xbf16, #tpu.memory_space<vmem>>) attributes {dimension_semantics = [#tpu.dimension_semantics<arbitrary>], iteration_bounds = array<i64: 1>, scalar_prefetch = 0 : i64, scratch_operands = 0 : i64, tpu.core_type = #tpu.core_type<tc>, window_params = [{pipeline_mode = #tpu.pipeline_mode<synchronous>, transform_indices = @transform_0, window_bounds = array<i64: 8, 128>}, {pipeline_mode = #tpu.pipeline_mode<synchronous>, transform_indices = @transform_1, window_bounds = array<i64: 128, 6272>}, {pipeline_mode = #tpu.pipeline_mode<synchronous>, transform_indices = @transform_2, window_bounds = array<i64: 1, 6272>}, {pipeline_mode = #tpu.pipeline_mode<synchronous>, transform_indices = @transform_3, window_bounds = array<i64: 1, 6272>}, {pipeline_mode = #tpu.pipeline_mode<synchronous>, transform_indices = @transform_4, window_bounds = array<i64: 8, 6272>}]} {
    %c0 = arith.constant 0 : index
    %c0_0 = arith.constant 0 : index
    %0 = vector.load %arg1[%c0, %c0_0] : memref<8x128xbf16, #tpu.memory_space<vmem>>, vector<8x128xbf16>
    %c0_1 = arith.constant 0 : index
    %c0_2 = arith.constant 0 : index
    %1 = vector.load %arg2[%c0_1, %c0_2] : memref<128x6272xbf16, #tpu.memory_space<vmem>>, vector<128x6272xbf16>
    %cst = arith.constant dense<0.000000e+00> : vector<8x6272xf32>
    %2 = tpu.matmul %0, %1, %cst {dimension_numbers = #tpu.dot_dimension_numbers<[1], [0], [0], [1], [0, 0, 1, 1], [], []>} : vector<8x128xbf16>, vector<128x6272xbf16>, vector<8x6272xf32> -> vector<8x6272xf32>
    %3 = tpu.iota {dimensions = array<i32: 0>} : vector<8x6272xi32>
    %c2_i32 = arith.constant 2 : i32
    %4 = vector.broadcast %c2_i32 : i32 to vector<8x6272xi32>
    %5 = arith.cmpi slt, %3, %4 : vector<8x6272xi32>
    %6 = arith.extui %5 : vector<8x6272xi1> to vector<8x6272xi32>
    %7 = arith.sitofp %6 : vector<8x6272xi32> to vector<8x6272xf32>
    %8 = arith.mulf %2, %7 : vector<8x6272xf32>
    %cst_3 = arith.constant dense<0.000000e+00> : vector<6272xf32>
    %9 = vector.multi_reduction <add>, %8, %cst_3 [0] : vector<8x6272xf32> to vector<6272xf32>
    %10 = vector.shape_cast %9 : vector<6272xf32> to vector<1x6272xf32>
    %cst_4 = arith.constant 5.000000e-01 : f32
    %11 = vector.broadcast %cst_4 : f32 to vector<1x6272xf32>
    %12 = arith.mulf %10, %11 : vector<1x6272xf32>
    %13 = vector.broadcast %12 : vector<1x6272xf32> to vector<8x6272xf32>
    %14 = arith.subf %2, %13 : vector<8x6272xf32>
    %15 = arith.mulf %14, %7 : vector<8x6272xf32>
    %16 = arith.mulf %15, %15 : vector<8x6272xf32>
    %cst_5 = arith.constant dense<0.000000e+00> : vector<6272xf32>
    %17 = vector.multi_reduction <add>, %16, %cst_5 [0] : vector<8x6272xf32> to vector<6272xf32>
    %18 = vector.shape_cast %17 : vector<6272xf32> to vector<1x6272xf32>
    %cst_6 = arith.constant 5.000000e-01 : f32
    %19 = vector.broadcast %cst_6 : f32 to vector<1x6272xf32>
    %20 = arith.mulf %18, %19 : vector<1x6272xf32>
    %21 = vector.broadcast %12 : vector<1x6272xf32> to vector<8x6272xf32>
    %22 = arith.subf %2, %21 : vector<8x6272xf32>
    %cst_7 = arith.constant 9.99999974E-6 : f32
    %23 = vector.broadcast %cst_7 : f32 to vector<1x6272xf32>
    %24 = arith.addf %20, %23 : vector<1x6272xf32>
    %25 = math.rsqrt %24 : vector<1x6272xf32>
    %26 = vector.broadcast %25 : vector<1x6272xf32> to vector<8x6272xf32>
    %27 = arith.mulf %22, %26 : vector<8x6272xf32>
    %c0_8 = arith.constant 0 : index
    %c0_9 = arith.constant 0 : index
    %28 = vector.load %arg3[%c0_8, %c0_9] : memref<1x6272xf32, #tpu.memory_space<vmem>>, vector<1x6272xf32>
    %29 = vector.broadcast %28 : vector<1x6272xf32> to vector<8x6272xf32>
    %30 = arith.mulf %27, %29 : vector<8x6272xf32>
    %c0_10 = arith.constant 0 : index
    %c0_11 = arith.constant 0 : index
    %31 = vector.load %arg4[%c0_10, %c0_11] : memref<1x6272xf32, #tpu.memory_space<vmem>>, vector<1x6272xf32>
    %32 = vector.broadcast %31 : vector<1x6272xf32> to vector<8x6272xf32>
    %33 = arith.addf %30, %32 : vector<8x6272xf32>
    %cst_12 = arith.constant 0.000000e+00 : f32
    %34 = vector.broadcast %cst_12 : f32 to vector<8x6272xf32>
    %35 = arith.cmpf ogt, %33, %34 : vector<8x6272xf32>
    %cst_13 = arith.constant 0.000000e+00 : f32
    %36 = vector.broadcast %cst_13 : f32 to vector<8x6272xf32>
    %37 = arith.minimumf %33, %36 : vector<8x6272xf32>
    %38 = math.exp %37 : vector<8x6272xf32>
    %cst_14 = arith.constant 1.000000e+00 : f32
    %39 = vector.broadcast %cst_14 : f32 to vector<8x6272xf32>
    %40 = arith.subf %38, %39 : vector<8x6272xf32>
    %41 = arith.select %35, %33, %40 : vector<8x6272xi1>, vector<8x6272xf32>
    %42 = arith.truncf %41 : vector<8x6272xf32> to vector<8x6272xbf16>
    %c0_15 = arith.constant 0 : index
    %c0_16 = arith.constant 0 : index
    %43 = vector.load %arg5[%c0_15, %c0_16] : memref<8x6272xbf16, #tpu.memory_space<vmem>>, vector<8x6272xbf16>
    tpu.vector_store %arg5[%c0_15, %c0_16], %42 {strides = array<i32>} : memref<8x6272xbf16, #tpu.memory_space<vmem>>, vector<8x6272xbf16>,
    return
  }
  func.func @transform_0(%arg0: i32) -> (i32, i32) {
    %c0_i32 = arith.constant 0 : i32
    %c0_i32_0 = arith.constant 0 : i32
    %c0_i32_1 = arith.constant 0 : i32
    return %c0_i32, %c0_i32_0 : i32, i32
  }
  func.func @transform_1(%arg0: i32) -> (i32, i32) {
    %c0_i32 = arith.constant 0 : i32
    %c0_i32_0 = arith.constant 0 : i32
    %c0_i32_1 = arith.constant 0 : i32
    return %c0_i32, %c0_i32_0 : i32, i32
  }
  func.func @transform_2(%arg0: i32) -> (i32, i32) {
    %c0_i32 = arith.constant 0 : i32
    %c0_i32_0 = arith.constant 0 : i32
    %c0_i32_1 = arith.constant 0 : i32
    return %c0_i32, %c0_i32_0 : i32, i32
  }
  func.func @transform_3(%arg0: i32) -> (i32, i32) {
    %c0_i32 = arith.constant 0 : i32
    %c0_i32_0 = arith.constant 0 : i32
    %c0_i32_1 = arith.constant 0 : i32
    return %c0_i32, %c0_i32_0 : i32, i32
  }
  func.func @transform_4(%arg0: i32) -> (i32, i32) {
    %c0_i32 = arith.constant 0 : i32
    %c0_i32_0 = arith.constant 0 : i32
    %c0_i32_1 = arith.constant 0 : i32
    return %c0_i32, %c0_i32_0 : i32, i32
  }
}

module attributes {stable_mosaic.version = 11 : i64} {
  func.func @_convt_bn_relu_kernel(%arg0: i32, %arg1: memref<104x512xbf16, #tpu.memory_space<vmem>>, %arg2: memref<512x256xbf16, #tpu.memory_space<vmem>>, %arg3: memref<104x256xf32, #tpu.memory_space<vmem>>, %arg4: memref<256x256xf32, #tpu.memory_space<vmem>>, %arg5: memref<1x256xf32, #tpu.memory_space<vmem>>, %arg6: memref<1x256xf32, #tpu.memory_space<vmem>>, %arg7: memref<104x256xbf16, #tpu.memory_space<vmem>>) attributes {dimension_semantics = [#tpu.dimension_semantics<arbitrary>], iteration_bounds = array<i64: 1>, scalar_prefetch = 0 : i64, scratch_operands = 0 : i64, tpu.core_type = #tpu.core_type<tc>, window_params = [{pipeline_mode = #tpu.pipeline_mode<synchronous>, transform_indices = @transform_0, window_bounds = array<i64: 104, 512>}, {pipeline_mode = #tpu.pipeline_mode<synchronous>, transform_indices = @transform_1, window_bounds = array<i64: 512, 256>}, {pipeline_mode = #tpu.pipeline_mode<synchronous>, transform_indices = @transform_2, window_bounds = array<i64: 104, 256>}, {pipeline_mode = #tpu.pipeline_mode<synchronous>, transform_indices = @transform_3, window_bounds = array<i64: 256, 256>}, {pipeline_mode = #tpu.pipeline_mode<synchronous>, transform_indices = @transform_4, window_bounds = array<i64: 1, 256>}, {pipeline_mode = #tpu.pipeline_mode<synchronous>, transform_indices = @transform_5, window_bounds = array<i64: 1, 256>}, {pipeline_mode = #tpu.pipeline_mode<synchronous>, transform_indices = @transform_6, window_bounds = array<i64: 104, 256>}]} {
    %c0 = arith.constant 0 : index
    %c0_0 = arith.constant 0 : index
    %0 = vector.load %arg1[%c0, %c0_0] : memref<104x512xbf16, #tpu.memory_space<vmem>>, vector<104x512xbf16>
    %c0_1 = arith.constant 0 : index
    %c0_2 = arith.constant 0 : index
    %1 = vector.load %arg2[%c0_1, %c0_2] : memref<512x256xbf16, #tpu.memory_space<vmem>>, vector<512x256xbf16>
    %cst = arith.constant dense<0.000000e+00> : vector<104x256xf32>
    %2 = tpu.matmul %0, %1, %cst {dimension_numbers = #tpu.dot_dimension_numbers<[1], [0], [0], [1], [0, 0, 1, 1], [], []>} : vector<104x512xbf16>, vector<512x256xbf16>, vector<104x256xf32> -> vector<104x256xf32>
    %c0_3 = arith.constant 0 : index
    %c0_4 = arith.constant 0 : index
    %3 = vector.load %arg3[%c0_3, %c0_4] : memref<104x256xf32, #tpu.memory_space<vmem>>, vector<104x256xf32>
    %4 = arith.mulf %2, %3 : vector<104x256xf32>
    %cst_5 = arith.constant dense<0.000000e+00> : vector<256xf32>
    %5 = vector.multi_reduction <add>, %4, %cst_5 [0] : vector<104x256xf32> to vector<256xf32>
    %6 = vector.shape_cast %5 : vector<256xf32> to vector<1x256xf32>
    %c0_6 = arith.constant 0 : index
    %c0_7 = arith.constant 0 : index
    %7 = vector.load %arg4[%c0_6, %c0_7] : memref<256x256xf32, #tpu.memory_space<vmem>>, vector<256x256xf32>
    %cst_8 = arith.constant dense<0.000000e+00> : vector<1x256xf32>
    %8 = tpu.matmul %6, %7, %cst_8 {dimension_numbers = #tpu.dot_dimension_numbers<[1], [0], [0], [1], [0, 0, 1, 1], [], []>} : vector<1x256xf32>, vector<256x256xf32>, vector<1x256xf32> -> vector<1x256xf32>
    %cst_9 = arith.constant 2.958580e-03 : f32
    %9 = vector.broadcast %cst_9 : f32 to vector<1x256xf32>
    %10 = arith.mulf %8, %9 : vector<1x256xf32>
    %11 = vector.broadcast %10 : vector<1x256xf32> to vector<104x256xf32>
    %12 = arith.subf %2, %11 : vector<104x256xf32>
    %13 = arith.mulf %12, %3 : vector<104x256xf32>
    %14 = arith.mulf %13, %13 : vector<104x256xf32>
    %cst_10 = arith.constant dense<0.000000e+00> : vector<256xf32>
    %15 = vector.multi_reduction <add>, %14, %cst_10 [0] : vector<104x256xf32> to vector<256xf32>
    %16 = vector.shape_cast %15 : vector<256xf32> to vector<1x256xf32>
    %c0_11 = arith.constant 0 : index
    %c0_12 = arith.constant 0 : index
    %17 = vector.load %arg4[%c0_11, %c0_12] : memref<256x256xf32, #tpu.memory_space<vmem>>, vector<256x256xf32>
    %cst_13 = arith.constant dense<0.000000e+00> : vector<1x256xf32>
    %18 = tpu.matmul %16, %17, %cst_13 {dimension_numbers = #tpu.dot_dimension_numbers<[1], [0], [0], [1], [0, 0, 1, 1], [], []>} : vector<1x256xf32>, vector<256x256xf32>, vector<1x256xf32> -> vector<1x256xf32>
    %cst_14 = arith.constant 2.958580e-03 : f32
    %19 = vector.broadcast %cst_14 : f32 to vector<1x256xf32>
    %20 = arith.mulf %18, %19 : vector<1x256xf32>
    %21 = vector.broadcast %10 : vector<1x256xf32> to vector<104x256xf32>
    %22 = arith.subf %2, %21 : vector<104x256xf32>
    %cst_15 = arith.constant 9.99999974E-6 : f32
    %23 = vector.broadcast %cst_15 : f32 to vector<1x256xf32>
    %24 = arith.addf %20, %23 : vector<1x256xf32>
    %25 = math.rsqrt %24 : vector<1x256xf32>
    %26 = vector.broadcast %25 : vector<1x256xf32> to vector<104x256xf32>
    %27 = arith.mulf %22, %26 : vector<104x256xf32>
    %c0_16 = arith.constant 0 : index
    %c0_17 = arith.constant 0 : index
    %28 = vector.load %arg5[%c0_16, %c0_17] : memref<1x256xf32, #tpu.memory_space<vmem>>, vector<1x256xf32>
    %29 = vector.broadcast %28 : vector<1x256xf32> to vector<104x256xf32>
    %30 = arith.mulf %27, %29 : vector<104x256xf32>
    %c0_18 = arith.constant 0 : index
    %c0_19 = arith.constant 0 : index
    %31 = vector.load %arg6[%c0_18, %c0_19] : memref<1x256xf32, #tpu.memory_space<vmem>>, vector<1x256xf32>
    %32 = vector.broadcast %31 : vector<1x256xf32> to vector<104x256xf32>
    %33 = arith.addf %30, %32 : vector<104x256xf32>
    %cst_20 = arith.constant 0.000000e+00 : f32
    %34 = vector.broadcast %cst_20 : f32 to vector<104x256xf32>
    %35 = arith.maximumf %33, %34 : vector<104x256xf32>
    %36 = arith.truncf %35 : vector<104x256xf32> to vector<104x256xbf16>
    %c0_21 = arith.constant 0 : index
    %c0_22 = arith.constant 0 : index
    %37 = vector.load %arg7[%c0_21, %c0_22] : memref<104x256xbf16, #tpu.memory_space<vmem>>, vector<104x256xbf16>
    tpu.vector_store %arg7[%c0_21, %c0_22], %36 {strides = array<i32>} : memref<104x256xbf16, #tpu.memory_space<vmem>>, vector<104x256xbf16>,
    return
  }
  func.func @transform_0(%arg0: i32) -> (i32, i32) {
    %c0_i32 = arith.constant 0 : i32
    %c0_i32_0 = arith.constant 0 : i32
    %c0_i32_1 = arith.constant 0 : i32
    return %c0_i32, %c0_i32_0 : i32, i32
  }
  func.func @transform_1(%arg0: i32) -> (i32, i32) {
    %c0_i32 = arith.constant 0 : i32
    %c0_i32_0 = arith.constant 0 : i32
    %c0_i32_1 = arith.constant 0 : i32
    return %c0_i32, %c0_i32_0 : i32, i32
  }
  func.func @transform_2(%arg0: i32) -> (i32, i32) {
    %c0_i32 = arith.constant 0 : i32
    %c0_i32_0 = arith.constant 0 : i32
    %c0_i32_1 = arith.constant 0 : i32
    return %c0_i32, %c0_i32_0 : i32, i32
  }
  func.func @transform_3(%arg0: i32) -> (i32, i32) {
    %c0_i32 = arith.constant 0 : i32
    %c0_i32_0 = arith.constant 0 : i32
    %c0_i32_1 = arith.constant 0 : i32
    return %c0_i32, %c0_i32_0 : i32, i32
  }
  func.func @transform_4(%arg0: i32) -> (i32, i32) {
    %c0_i32 = arith.constant 0 : i32
    %c0_i32_0 = arith.constant 0 : i32
    %c0_i32_1 = arith.constant 0 : i32
    return %c0_i32, %c0_i32_0 : i32, i32
  }
  func.func @transform_5(%arg0: i32) -> (i32, i32) {
    %c0_i32 = arith.constant 0 : i32
    %c0_i32_0 = arith.constant 0 : i32
    %c0_i32_1 = arith.constant 0 : i32
    return %c0_i32, %c0_i32_0 : i32, i32
  }
  func.func @transform_6(%arg0: i32) -> (i32, i32) {
    %c0_i32 = arith.constant 0 : i32
    %c0_i32_0 = arith.constant 0 : i32
    %c0_i32_1 = arith.constant 0 : i32
    return %c0_i32, %c0_i32_0 : i32, i32
  }
}

module attributes {stable_mosaic.version = 11 : i64} {
  func.func @_convt_bn_relu_kernel(%arg0: i32, %arg1: memref<392x256xbf16, #tpu.memory_space<vmem>>, %arg2: memref<256x128xbf16, #tpu.memory_space<vmem>>, %arg3: memref<392x128xf32, #tpu.memory_space<vmem>>, %arg4: memref<128x128xf32, #tpu.memory_space<vmem>>, %arg5: memref<1x128xf32, #tpu.memory_space<vmem>>, %arg6: memref<1x128xf32, #tpu.memory_space<vmem>>, %arg7: memref<392x128xbf16, #tpu.memory_space<vmem>>) attributes {dimension_semantics = [#tpu.dimension_semantics<arbitrary>], iteration_bounds = array<i64: 1>, scalar_prefetch = 0 : i64, scratch_operands = 0 : i64, tpu.core_type = #tpu.core_type<tc>, window_params = [{pipeline_mode = #tpu.pipeline_mode<synchronous>, transform_indices = @transform_0, window_bounds = array<i64: 392, 256>}, {pipeline_mode = #tpu.pipeline_mode<synchronous>, transform_indices = @transform_1, window_bounds = array<i64: 256, 128>}, {pipeline_mode = #tpu.pipeline_mode<synchronous>, transform_indices = @transform_2, window_bounds = array<i64: 392, 128>}, {pipeline_mode = #tpu.pipeline_mode<synchronous>, transform_indices = @transform_3, window_bounds = array<i64: 128, 128>}, {pipeline_mode = #tpu.pipeline_mode<synchronous>, transform_indices = @transform_4, window_bounds = array<i64: 1, 128>}, {pipeline_mode = #tpu.pipeline_mode<synchronous>, transform_indices = @transform_5, window_bounds = array<i64: 1, 128>}, {pipeline_mode = #tpu.pipeline_mode<synchronous>, transform_indices = @transform_6, window_bounds = array<i64: 392, 128>}]} {
    %c0 = arith.constant 0 : index
    %c0_0 = arith.constant 0 : index
    %0 = vector.load %arg1[%c0, %c0_0] : memref<392x256xbf16, #tpu.memory_space<vmem>>, vector<392x256xbf16>
    %c0_1 = arith.constant 0 : index
    %c0_2 = arith.constant 0 : index
    %1 = vector.load %arg2[%c0_1, %c0_2] : memref<256x128xbf16, #tpu.memory_space<vmem>>, vector<256x128xbf16>
    %cst = arith.constant dense<0.000000e+00> : vector<392x128xf32>
    %2 = tpu.matmul %0, %1, %cst {dimension_numbers = #tpu.dot_dimension_numbers<[1], [0], [0], [1], [0, 0, 1, 1], [], []>} : vector<392x256xbf16>, vector<256x128xbf16>, vector<392x128xf32> -> vector<392x128xf32>
    %c0_3 = arith.constant 0 : index
    %c0_4 = arith.constant 0 : index
    %3 = vector.load %arg3[%c0_3, %c0_4] : memref<392x128xf32, #tpu.memory_space<vmem>>, vector<392x128xf32>
    %4 = arith.mulf %2, %3 : vector<392x128xf32>
    %cst_5 = arith.constant dense<0.000000e+00> : vector<128xf32>
    %5 = vector.multi_reduction <add>, %4, %cst_5 [0] : vector<392x128xf32> to vector<128xf32>
    %6 = vector.shape_cast %5 : vector<128xf32> to vector<1x128xf32>
    %c0_6 = arith.constant 0 : index
    %c0_7 = arith.constant 0 : index
    %7 = vector.load %arg4[%c0_6, %c0_7] : memref<128x128xf32, #tpu.memory_space<vmem>>, vector<128x128xf32>
    %cst_8 = arith.constant dense<0.000000e+00> : vector<1x128xf32>
    %8 = tpu.matmul %6, %7, %cst_8 {dimension_numbers = #tpu.dot_dimension_numbers<[1], [0], [0], [1], [0, 0, 1, 1], [], []>} : vector<1x128xf32>, vector<128x128xf32>, vector<1x128xf32> -> vector<1x128xf32>
    %cst_9 = arith.constant 6.85871055E-4 : f32
    %9 = vector.broadcast %cst_9 : f32 to vector<1x128xf32>
    %10 = arith.mulf %8, %9 : vector<1x128xf32>
    %11 = vector.broadcast %10 : vector<1x128xf32> to vector<392x128xf32>
    %12 = arith.subf %2, %11 : vector<392x128xf32>
    %13 = arith.mulf %12, %3 : vector<392x128xf32>
    %14 = arith.mulf %13, %13 : vector<392x128xf32>
    %cst_10 = arith.constant dense<0.000000e+00> : vector<128xf32>
    %15 = vector.multi_reduction <add>, %14, %cst_10 [0] : vector<392x128xf32> to vector<128xf32>
    %16 = vector.shape_cast %15 : vector<128xf32> to vector<1x128xf32>
    %c0_11 = arith.constant 0 : index
    %c0_12 = arith.constant 0 : index
    %17 = vector.load %arg4[%c0_11, %c0_12] : memref<128x128xf32, #tpu.memory_space<vmem>>, vector<128x128xf32>
    %cst_13 = arith.constant dense<0.000000e+00> : vector<1x128xf32>
    %18 = tpu.matmul %16, %17, %cst_13 {dimension_numbers = #tpu.dot_dimension_numbers<[1], [0], [0], [1], [0, 0, 1, 1], [], []>} : vector<1x128xf32>, vector<128x128xf32>, vector<1x128xf32> -> vector<1x128xf32>
    %cst_14 = arith.constant 6.85871055E-4 : f32
    %19 = vector.broadcast %cst_14 : f32 to vector<1x128xf32>
    %20 = arith.mulf %18, %19 : vector<1x128xf32>
    %21 = vector.broadcast %10 : vector<1x128xf32> to vector<392x128xf32>
    %22 = arith.subf %2, %21 : vector<392x128xf32>
    %cst_15 = arith.constant 9.99999974E-6 : f32
    %23 = vector.broadcast %cst_15 : f32 to vector<1x128xf32>
    %24 = arith.addf %20, %23 : vector<1x128xf32>
    %25 = math.rsqrt %24 : vector<1x128xf32>
    %26 = vector.broadcast %25 : vector<1x128xf32> to vector<392x128xf32>
    %27 = arith.mulf %22, %26 : vector<392x128xf32>
    %c0_16 = arith.constant 0 : index
    %c0_17 = arith.constant 0 : index
    %28 = vector.load %arg5[%c0_16, %c0_17] : memref<1x128xf32, #tpu.memory_space<vmem>>, vector<1x128xf32>
    %29 = vector.broadcast %28 : vector<1x128xf32> to vector<392x128xf32>
    %30 = arith.mulf %27, %29 : vector<392x128xf32>
    %c0_18 = arith.constant 0 : index
    %c0_19 = arith.constant 0 : index
    %31 = vector.load %arg6[%c0_18, %c0_19] : memref<1x128xf32, #tpu.memory_space<vmem>>, vector<1x128xf32>
    %32 = vector.broadcast %31 : vector<1x128xf32> to vector<392x128xf32>
    %33 = arith.addf %30, %32 : vector<392x128xf32>
    %cst_20 = arith.constant 0.000000e+00 : f32
    %34 = vector.broadcast %cst_20 : f32 to vector<392x128xf32>
    %35 = arith.maximumf %33, %34 : vector<392x128xf32>
    %36 = arith.truncf %35 : vector<392x128xf32> to vector<392x128xbf16>
    %c0_21 = arith.constant 0 : index
    %c0_22 = arith.constant 0 : index
    %37 = vector.load %arg7[%c0_21, %c0_22] : memref<392x128xbf16, #tpu.memory_space<vmem>>, vector<392x128xbf16>
    tpu.vector_store %arg7[%c0_21, %c0_22], %36 {strides = array<i32>} : memref<392x128xbf16, #tpu.memory_space<vmem>>, vector<392x128xbf16>,
    return
  }
  func.func @transform_0(%arg0: i32) -> (i32, i32) {
    %c0_i32 = arith.constant 0 : i32
    %c0_i32_0 = arith.constant 0 : i32
    %c0_i32_1 = arith.constant 0 : i32
    return %c0_i32, %c0_i32_0 : i32, i32
  }
  func.func @transform_1(%arg0: i32) -> (i32, i32) {
    %c0_i32 = arith.constant 0 : i32
    %c0_i32_0 = arith.constant 0 : i32
    %c0_i32_1 = arith.constant 0 : i32
    return %c0_i32, %c0_i32_0 : i32, i32
  }
  func.func @transform_2(%arg0: i32) -> (i32, i32) {
    %c0_i32 = arith.constant 0 : i32
    %c0_i32_0 = arith.constant 0 : i32
    %c0_i32_1 = arith.constant 0 : i32
    return %c0_i32, %c0_i32_0 : i32, i32
  }
  func.func @transform_3(%arg0: i32) -> (i32, i32) {
    %c0_i32 = arith.constant 0 : i32
    %c0_i32_0 = arith.constant 0 : i32
    %c0_i32_1 = arith.constant 0 : i32
    return %c0_i32, %c0_i32_0 : i32, i32
  }
  func.func @transform_4(%arg0: i32) -> (i32, i32) {
    %c0_i32 = arith.constant 0 : i32
    %c0_i32_0 = arith.constant 0 : i32
    %c0_i32_1 = arith.constant 0 : i32
    return %c0_i32, %c0_i32_0 : i32, i32
  }
  func.func @transform_5(%arg0: i32) -> (i32, i32) {
    %c0_i32 = arith.constant 0 : i32
    %c0_i32_0 = arith.constant 0 : i32
    %c0_i32_1 = arith.constant 0 : i32
    return %c0_i32, %c0_i32_0 : i32, i32
  }
  func.func @transform_6(%arg0: i32) -> (i32, i32) {
    %c0_i32 = arith.constant 0 : i32
    %c0_i32_0 = arith.constant 0 : i32
    %c0_i32_1 = arith.constant 0 : i32
    return %c0_i32, %c0_i32_0 : i32, i32
  }
}

module attributes {stable_mosaic.version = 11 : i64} {
  func.func @_convt_sigmoid_kernel(%arg0: i32, %arg1: memref<1568x128xbf16, #tpu.memory_space<vmem>>, %arg2: memref<128x128xbf16, #tpu.memory_space<vmem>>, %arg3: memref<1x128xf32, #tpu.memory_space<vmem>>, %arg4: memref<1568x128xf32, #tpu.memory_space<vmem>>) attributes {dimension_semantics = [#tpu.dimension_semantics<arbitrary>], iteration_bounds = array<i64: 1>, scalar_prefetch = 0 : i64, scratch_operands = 0 : i64, tpu.core_type = #tpu.core_type<tc>, window_params = [{pipeline_mode = #tpu.pipeline_mode<synchronous>, transform_indices = @transform_0, window_bounds = array<i64: 1568, 128>}, {pipeline_mode = #tpu.pipeline_mode<synchronous>, transform_indices = @transform_1, window_bounds = array<i64: 128, 128>}, {pipeline_mode = #tpu.pipeline_mode<synchronous>, transform_indices = @transform_2, window_bounds = array<i64: 1, 128>}, {pipeline_mode = #tpu.pipeline_mode<synchronous>, transform_indices = @transform_3, window_bounds = array<i64: 1568, 128>}]} {
    %c0 = arith.constant 0 : index
    %c0_0 = arith.constant 0 : index
    %0 = vector.load %arg1[%c0, %c0_0] : memref<1568x128xbf16, #tpu.memory_space<vmem>>, vector<1568x128xbf16>
    %c0_1 = arith.constant 0 : index
    %c0_2 = arith.constant 0 : index
    %1 = vector.load %arg2[%c0_1, %c0_2] : memref<128x128xbf16, #tpu.memory_space<vmem>>, vector<128x128xbf16>
    %cst = arith.constant dense<0.000000e+00> : vector<1568x128xf32>
    %2 = tpu.matmul %0, %1, %cst {dimension_numbers = #tpu.dot_dimension_numbers<[1], [0], [0], [1], [0, 0, 1, 1], [], []>} : vector<1568x128xbf16>, vector<128x128xbf16>, vector<1568x128xf32> -> vector<1568x128xf32>
    %c0_3 = arith.constant 0 : index
    %c0_4 = arith.constant 0 : index
    %3 = vector.load %arg3[%c0_3, %c0_4] : memref<1x128xf32, #tpu.memory_space<vmem>>, vector<1x128xf32>
    %4 = vector.broadcast %3 : vector<1x128xf32> to vector<1568x128xf32>
    %5 = arith.addf %2, %4 : vector<1568x128xf32>
    %6 = arith.negf %5 : vector<1568x128xf32>
    %7 = math.exp %6 : vector<1568x128xf32>
    %cst_5 = arith.constant 1.000000e+00 : f32
    %8 = vector.broadcast %cst_5 : f32 to vector<1568x128xf32>
    %9 = arith.addf %8, %7 : vector<1568x128xf32>
    %10 = arith.divf %8, %9 : vector<1568x128xf32>
    %c0_6 = arith.constant 0 : index
    %c0_7 = arith.constant 0 : index
    %11 = vector.load %arg4[%c0_6, %c0_7] : memref<1568x128xf32, #tpu.memory_space<vmem>>, vector<1568x128xf32>
    tpu.vector_store %arg4[%c0_6, %c0_7], %10 {strides = array<i32>} : memref<1568x128xf32, #tpu.memory_space<vmem>>, vector<1568x128xf32>,
    return
  }
  func.func @transform_0(%arg0: i32) -> (i32, i32) {
    %c0_i32 = arith.constant 0 : i32
    %c0_i32_0 = arith.constant 0 : i32
    %c0_i32_1 = arith.constant 0 : i32
    return %c0_i32, %c0_i32_0 : i32, i32
  }
  func.func @transform_1(%arg0: i32) -> (i32, i32) {
    %c0_i32 = arith.constant 0 : i32
    %c0_i32_0 = arith.constant 0 : i32
    %c0_i32_1 = arith.constant 0 : i32
    return %c0_i32, %c0_i32_0 : i32, i32
  }
  func.func @transform_2(%arg0: i32) -> (i32, i32) {
    %c0_i32 = arith.constant 0 : i32
    %c0_i32_0 = arith.constant 0 : i32
    %c0_i32_1 = arith.constant 0 : i32
    return %c0_i32, %c0_i32_0 : i32, i32
  }
  func.func @transform_3(%arg0: i32) -> (i32, i32) {
    %c0_i32 = arith.constant 0 : i32
    %c0_i32_0 = arith.constant 0 : i32
    %c0_i32_1 = arith.constant 0 : i32
    return %c0_i32, %c0_i32_0 : i32, i32
  }
}

</mosaic_0001>

<llo_original>
// kernel: _lambda_.5
$region0: #{_lambda_.5}
  #allocation0 [shape = 'u32[]', space=smem, size = 0x4, offset = 0x4, fixed_abs, tag = 'smem constant byte address 0x4 - core index']
  #allocation1 [shape = 'u32[144,128]{1,0:T(1,128)}', space=vmem, size = 0x12000, scoped, tag = 'internal scratch']
  %s0 = inlined_call_operand.vmem [shape: bf16[104,512], index: 0, kind: input, shape index: {}]
  %s1 = inlined_call_operand.vmem [shape: bf16[512,256], index: 1, kind: input, shape index: {}]
  %s2 = inlined_call_operand.vmem [shape: f32[104,256], index: 2, kind: input, shape index: {}]
  %s3 = inlined_call_operand.vmem [shape: f32[256,256], index: 3, kind: input, shape index: {}]
  %s4 = inlined_call_operand.vmem [shape: f32[1,256], index: 4, kind: input, shape index: {}]
  %s5 = inlined_call_operand.vmem [shape: f32[1,256], index: 5, kind: input, shape index: {}]
  %s6 = inlined_call_operand.vmem [shape: bf16[104,256], index: 6, kind: output, shape index: {}]
  %s7 = sld [smem:[#allocation0]]
  $region34: #{_lambda_.5} parent=0
    _
  %s9 = ssub.s32 1, %s7
  %s10 = scalar_select 0, %s9, %s7
  // Predicated region
  $region2: #{_lambda_.5} parent=0 // pred_check
    _
  $region3: #{_lambda_.5} parent=0 // pred_check_branch
    %12 = sbr.rel (0) target = $region5
  $region4: #{_lambda_.5} parent=0 // pred_region
    _
  $region5: #{_lambda_.5} parent=0 // pred_fallthru
    _
  // Predicated region
  $region6: #{_lambda_.5} parent=0 // pred_check
    _
  $region7: #{_lambda_.5} parent=0 // pred_check_branch
    %14 = sbr.rel (0) target = $region9
  $region8: #{_lambda_.5} parent=0 // pred_region
    _
  $region9: #{_lambda_.5} parent=0 // pred_fallthru
    _
  // Predicated region
  $region10: #{_lambda_.5} parent=0 // pred_check
    _
  $region11: #{_lambda_.5} parent=0 // pred_check_branch
    %16 = sbr.rel (0) target = $region13
  $region12: #{_lambda_.5} parent=0 // pred_region
    _
  $region13: #{_lambda_.5} parent=0 // pred_fallthru
    _
  // Predicated region
  $region14: #{_lambda_.5} parent=0 // pred_check
    _
  $region15: #{_lambda_.5} parent=0 // pred_check_branch
    %18 = sbr.rel (0) target = $region17
  $region16: #{_lambda_.5} parent=0 // pred_region
    _
  $region17: #{_lambda_.5} parent=0 // pred_fallthru
    _
  // Predicated region
  $region18: #{_lambda_.5} parent=0 // pred_check
    _
  $region19: #{_lambda_.5} parent=0 // pred_check_branch
    %20 = sbr.rel (0) target = $region21
  $region20: #{_lambda_.5} parent=0 // pred_region
    _
  $region21: #{_lambda_.5} parent=0 // pred_fallthru
    _
  // Predicated region
  $region22: #{_lambda_.5} parent=0 // pred_check
    _
  $region23: #{_lambda_.5} parent=0 // pred_check_branch
    %22 = sbr.rel (0) target = $region25
  $region24: #{_lambda_.5} parent=0 // pred_region
    _
  $region25: #{_lambda_.5} parent=0 // pred_fallthru
    _
  %v23 = vld [vmem:[%s0] sm:$0xff]
  %v24 = vld [vmem:[%s0 + $0x8] sm:$0xff]
  %v25 = vld [vmem:[%s0 + $0x10] sm:$0xff]
  %v26 = vld [vmem:[%s0 + $0x18] sm:$0xff]
  %v27 = vld [vmem:[%s0 + $0x20] sm:$0xff]
  %v28 = vld [vmem:[%s0 + $0x28] sm:$0xff]
  %v29 = vld [vmem:[%s0 + $0x30] sm:$0xff]
  %v30 = vld [vmem:[%s0 + $0x38] sm:$0xff]
  %v31 = vld [vmem:[%s0 + $0x40] sm:$0xff]
  %v32 = vld [vmem:[%s0 + $0x48] sm:$0xff]
  %v33 = vld [vmem:[%s0 + $0x50] sm:$0xff]
  %v34 = vld [vmem:[%s0 + $0x58] sm:$0xff]
  %v35 = vld [vmem:[%s0 + $0x60] sm:$0xff]
  %v36 = vld [vmem:[%s0 + $0x68] sm:$0xff]
  %v37 = vld [vmem:[%s0 + $0x70] sm:$0xff]
  %v38 = vld [vmem:[%s0 + $0x78] sm:$0xff]
  %v39 = vld [vmem:[%s0 + $0x80] sm:$0xff]
  %v40 = vld [vmem:[%s0 + $0x88] sm:$0xff]
  %v41 = vld [vmem:[%s0 + $0x90] sm:$0xff]
  %v42 = vld [vmem:[%s0 + $0x98] sm:$0xff]
  %v43 = vld [vmem:[%s0 + $0xa0] sm:$0xff]
  %v44 = vld [vmem:[%s0 + $0xa8] sm:$0xff]
  %v45 = vld [vmem:[%s0 + $0xb0] sm:$0xff]
  %v46 = vld [vmem:[%s0 + $0xb8] sm:$0xff]
  %v47 = vld [vmem:[%s0 + $0xc0] sm:$0xff]
  %v48 = vld [vmem:[%s0 + $0xc8] sm:$0xff]
  %v49 = vld [vmem:[%s1] sm:$0xff]
  %v50 = vld [vmem:[%s1 + $0x8] sm:$0xff]
  %v51 = vld [vmem:[%s1 + $0x10] sm:$0xff]
  %v52 = vld [vmem:[%s1 + $0x18] sm:$0xff]
  %v53 = vld [vmem:[%s1 + $0x20] sm:$0xff]
  %v54 = vld [vmem:[%s1 + $0x28] sm:$0xff]
  %v55 = vld [vmem:[%s1 + $0x30] sm:$0xff]
  %v56 = vld [vmem:[%s1 + $0x38] sm:$0xff]
  %v57 = vld [vmem:[%s1 + $0x40] sm:$0xff]
  %v58 = vld [vmem:[%s1 + $0x48] sm:$0xff]
  %v59 = vld [vmem:[%s1 + $0x50] sm:$0xff]
  %v60 = vld [vmem:[%s1 + $0x58] sm:$0xff]
  %v61 = vld [vmem:[%s1 + $0x60] sm:$0xff]
  %v62 = vld [vmem:[%s1 + $0x68] sm:$0xff]
  %v63 = vld [vmem:[%s1 + $0x70] sm:$0xff]
  %v64 = vld [vmem:[%s1 + $0x78] sm:$0xff]
  %v65 = vld [vmem:[%s1 + $0x80] sm:$0xff]
  %v66 = vld [vmem:[%s1 + $0x88] sm:$0xff]
  %v67 = vld [vmem:[%s1 + $0x90] sm:$0xff]
  %v68 = vld [vmem:[%s1 + $0x98] sm:$0xff]
  %v69 = vld [vmem:[%s1 + $0xa0] sm:$0xff]
  %v70 = vld [vmem:[%s1 + $0xa8] sm:$0xff]
  %v71 = vld [vmem:[%s1 + $0xb0] sm:$0xff]
  %v72 = vld [vmem:[%s1 + $0xb8] sm:$0xff]
  %v73 = vld [vmem:[%s1 + $0xc0] sm:$0xff]
  %v74 = vld [vmem:[%s1 + $0xc8] sm:$0xff]
  %v75 = vld [vmem:[%s1 + $0xd0] sm:$0xff]
  %v76 = vld [vmem:[%s1 + $0xd8] sm:$0xff]
  %v77 = vld [vmem:[%s1 + $0xe0] sm:$0xff]
  %v78 = vld [vmem:[%s1 + $0xe8] sm:$0xff]
  %v79 = vld [vmem:[%s1 + $0xf0] sm:$0xff]
  %v80 = vld [vmem:[%s1 + $0xf8] sm:$0xff]
  %v81 = vld [vmem:[%s1 + $0x100] sm:$0xff]
  %v82 = vld [vmem:[%s1 + $0x108] sm:$0xff]
  %v83 = vld [vmem:[%s1 + $0x110] sm:$0xff]
  %v84 = vld [vmem:[%s1 + $0x118] sm:$0xff]
  %v85 = vld [vmem:[%s1 + $0x120] sm:$0xff]
  %v86 = vld [vmem:[%s1 + $0x128] sm:$0xff]
  %v87 = vld [vmem:[%s1 + $0x130] sm:$0xff]
  %v88 = vld [vmem:[%s1 + $0x138] sm:$0xff]
  %v89 = vld [vmem:[%s1 + $0x140] sm:$0xff]
  %v90 = vld [vmem:[%s1 + $0x148] sm:$0xff]
  %v91 = vld [vmem:[%s1 + $0x150] sm:$0xff]
  %v92 = vld [vmem:[%s1 + $0x158] sm:$0xff]
  %v93 = vld [vmem:[%s1 + $0x160] sm:$0xff]
  %v94 = vld [vmem:[%s1 + $0x168] sm:$0xff]
  %v95 = vld [vmem:[%s1 + $0x170] sm:$0xff]
  %v96 = vld [vmem:[%s1 + $0x178] sm:$0xff]
  %v97 = vld [vmem:[%s1 + $0x180] sm:$0xff]
  %v98 = vld [vmem:[%s1 + $0x188] sm:$0xff]
  %v99 = vld [vmem:[%s1 + $0x190] sm:$0xff]
  %v100 = vld [vmem:[%s1 + $0x198] sm:$0xff]
  %v101 = vld [vmem:[%s1 + $0x1a0] sm:$0xff]
  %v102 = vld [vmem:[%s1 + $0x1a8] sm:$0xff]
  %v103 = vld [vmem:[%s1 + $0x1b0] sm:$0xff]
  %v104 = vld [vmem:[%s1 + $0x1b8] sm:$0xff]
  %v105 = vld [vmem:[%s1 + $0x1c0] sm:$0xff]
  %v106 = vld [vmem:[%s1 + $0x1c8] sm:$0xff]
  %v107 = vld [vmem:[%s1 + $0x1d0] sm:$0xff]
  %v108 = vld [vmem:[%s1 + $0x1d8] sm:$0xff]
  %v109 = vld [vmem:[%s1 + $0x1e0] sm:$0xff]
  %v110 = vld [vmem:[%s1 + $0x1e8] sm:$0xff]
  %v111 = vld [vmem:[%s1 + $0x1f0] sm:$0xff]
  %v112 = vld [vmem:[%s1 + $0x1f8] sm:$0xff]
  %v139 = vunpack.c.l.b16 %v23
  %v140 = vunpack.c.h.b16 %v23
  %v141 = vunpack.c.l.b16 %v24
  %v142 = vunpack.c.h.b16 %v24
  %v143 = vunpack.c.l.b16 %v25
  %v144 = vunpack.c.h.b16 %v25
  %v145 = vunpack.c.l.b16 %v26
  %v146 = vunpack.c.h.b16 %v26
  %v147 = vunpack.c.l.b16 %v27
  %v148 = vunpack.c.h.b16 %v27
  %v149 = vunpack.c.l.b16 %v28
  %v150 = vunpack.c.h.b16 %v28
  %v151 = vunpack.c.l.b16 %v29
  %v152 = vunpack.c.h.b16 %v29
  %v153 = vunpack.c.l.b16 %v30
  %v154 = vunpack.c.h.b16 %v30
  %v155 = vunpack.c.l.b16 %v31
  %v156 = vunpack.c.h.b16 %v31
  %v157 = vunpack.c.l.b16 %v32
  %v158 = vunpack.c.h.b16 %v32
  %v159 = vunpack.c.l.b16 %v33
  %v160 = vunpack.c.h.b16 %v33
  %v161 = vunpack.c.l.b16 %v34
  %v162 = vunpack.c.h.b16 %v34
  %v163 = vunpack.c.l.b16 %v35
  %v164 = vunpack.c.h.b16 %v35
  %v165 = vunpack.c.l.b16 %v36
  %v166 = vunpack.c.h.b16 %v36
  %v167 = vunpack.c.l.b16 %v37
  %v168 = vunpack.c.h.b16 %v37
  %v169 = vunpack.c.l.b16 %v38
  %v170 = vunpack.c.h.b16 %v38
  %v171 = vunpack.c.l.b16 %v39
  %v172 = vunpack.c.h.b16 %v39
  %v173 = vunpack.c.l.b16 %v40
  %v174 = vunpack.c.h.b16 %v40
  %v175 = vunpack.c.l.b16 %v41
  %v176 = vunpack.c.h.b16 %v41
  %v177 = vunpack.c.l.b16 %v42
  %v178 = vunpack.c.h.b16 %v42
  %v179 = vunpack.c.l.b16 %v43
  %v180 = vunpack.c.h.b16 %v43
  %v181 = vunpack.c.l.b16 %v44
  %v182 = vunpack.c.h.b16 %v44
  %v183 = vunpack.c.l.b16 %v45
  %v184 = vunpack.c.h.b16 %v45
  %v185 = vunpack.c.l.b16 %v46
  %v186 = vunpack.c.h.b16 %v46
  %v187 = vunpack.c.l.b16 %v47
  %v188 = vunpack.c.h.b16 %v47
  %v189 = vunpack.c.l.b16 %v48
  %v190 = vunpack.c.h.b16 %v48
  %v191 = vpack.c.b16 %v143, %v139
  %v192 = vpack.c.b16 %v144, %v140
  %v193 = vpack.c.b16 %v145, %v141
  %v194 = vpack.c.b16 %v146, %v142
  %v195 = vpack.c.b16 %v151, %v147
  %v196 = vpack.c.b16 %v152, %v148
  %v197 = vpack.c.b16 %v153, %v149
  %v198 = vpack.c.b16 %v154, %v150
  %v199 = vpack.c.b16 %v159, %v155
  %v200 = vpack.c.b16 %v160, %v156
  %v201 = vpack.c.b16 %v161, %v157
  %v202 = vpack.c.b16 %v162, %v158
  %v203 = vpack.c.b16 %v167, %v163
  %v204 = vpack.c.b16 %v168, %v164
  %v205 = vpack.c.b16 %v169, %v165
  %v206 = vpack.c.b16 %v170, %v166
  %v207 = vpack.c.b16 %v175, %v171
  %v208 = vpack.c.b16 %v176, %v172
  %v209 = vpack.c.b16 %v177, %v173
  %v210 = vpack.c.b16 %v178, %v174
  %v211 = vpack.c.b16 %v183, %v179
  %v212 = vpack.c.b16 %v184, %v180
  %v213 = vpack.c.b16 %v185, %v181
  %v214 = vpack.c.b16 %v186, %v182
  %v215 = vpack.c.b16 %v187, %v187
  %v216 = vpack.c.b16 %v188, %v188
  %v217 = vpack.c.b16 %v189, %v189
  %v218 = vpack.c.b16 %v190, %v190
  %v311 = vunpack.c.l.b16 %v49
  %v312 = vunpack.c.h.b16 %v49
  %v313 = vunpack.c.l.b16 %v50
  %v314 = vunpack.c.h.b16 %v50
  %v315 = vunpack.c.l.b16 %v51
  %v316 = vunpack.c.h.b16 %v51
  %v317 = vunpack.c.l.b16 %v52
  %v318 = vunpack.c.h.b16 %v52
  %v319 = vunpack.c.l.b16 %v53
  %v320 = vunpack.c.h.b16 %v53
  %v321 = vunpack.c.l.b16 %v54
  %v322 = vunpack.c.h.b16 %v54
  %v323 = vunpack.c.l.b16 %v55
  %v324 = vunpack.c.h.b16 %v55
  %v325 = vunpack.c.l.b16 %v56
  %v326 = vunpack.c.h.b16 %v56
  %v327 = vunpack.c.l.b16 %v57
  %v328 = vunpack.c.h.b16 %v57
  %v329 = vunpack.c.l.b16 %v58
  %v330 = vunpack.c.h.b16 %v58
  %v331 = vunpack.c.l.b16 %v59
  %v332 = vunpack.c.h.b16 %v59
  %v333 = vunpack.c.l.b16 %v60
  %v334 = vunpack.c.h.b16 %v60
  %v335 = vunpack.c.l.b16 %v61
  %v336 = vunpack.c.h.b16 %v61
  %v337 = vunpack.c.l.b16 %v62
  %v338 = vunpack.c.h.b16 %v62
  %v339 = vunpack.c.l.b16 %v63
  %v340 = vunpack.c.h.b16 %v63
  %v341 = vunpack.c.l.b16 %v64
  %v342 = vunpack.c.h.b16 %v64
  %v343 = vunpack.c.l.b16 %v65
  %v344 = vunpack.c.h.b16 %v65
  %v345 = vunpack.c.l.b16 %v66
  %v346 = vunpack.c.h.b16 %v66
  %v347 = vunpack.c.l.b16 %v67
  %v348 = vunpack.c.h.b16 %v67
  %v349 = vunpack.c.l.b16 %v68
  %v350 = vunpack.c.h.b16 %v68
  %v351 = vunpack.c.l.b16 %v69
  %v352 = vunpack.c.h.b16 %v69
  %v353 = vunpack.c.l.b16 %v70
  %v354 = vunpack.c.h.b16 %v70
  %v355 = vunpack.c.l.b16 %v71
  %v356 = vunpack.c.h.b16 %v71
  %v357 = vunpack.c.l.b16 %v72
  %v358 = vunpack.c.h.b16 %v72
  %v359 = vunpack.c.l.b16 %v73
  %v360 = vunpack.c.h.b16 %v73
  %v361 = vunpack.c.l.b16 %v74
  %v362 = vunpack.c.h.b16 %v74
  %v363 = vunpack.c.l.b16 %v75
  %v364 = vunpack.c.h.b16 %v75
  %v365 = vunpack.c.l.b16 %v76
  %v366 = vunpack.c.h.b16 %v76
  %v367 = vunpack.c.l.b16 %v77
  %v368 = vunpack.c.h.b16 %v77
  %v369 = vunpack.c.l.b16 %v78
  %v370 = vunpack.c.h.b16 %v78
  %v371 = vunpack.c.l.b16 %v79
  %v372 = vunpack.c.h.b16 %v79
  %v373 = vunpack.c.l.b16 %v80
  %v374 = vunpack.c.h.b16 %v80
  %v375 = vunpack.c.l.b16 %v81
  %v376 = vunpack.c.h.b16 %v81
  %v377 = vunpack.c.l.b16 %v82
  %v378 = vunpack.c.h.b16 %v82
  %v379 = vunpack.c.l.b16 %v83
  %v380 = vunpack.c.h.b16 %v83
  %v381 = vunpack.c.l.b16 %v84
  %v382 = vunpack.c.h.b16 %v84
  %v383 = vunpack.c.l.b16 %v85
  %v384 = vunpack.c.h.b16 %v85
  %v385 = vunpack.c.l.b16 %v86
  %v386 = vunpack.c.h.b16 %v86
  %v387 = vunpack.c.l.b16 %v87
  %v388 = vunpack.c.h.b16 %v87
  %v389 = vunpack.c.l.b16 %v88
  %v390 = vunpack.c.h.b16 %v88
  %v391 = vunpack.c.l.b16 %v89
  %v392 = vunpack.c.h.b16 %v89
  %v393 = vunpack.c.l.b16 %v90
  %v394 = vunpack.c.h.b16 %v90
  %v395 = vunpack.c.l.b16 %v91
  %v396 = vunpack.c.h.b16 %v91
  %v397 = vunpack.c.l.b16 %v92
  %v398 = vunpack.c.h.b16 %v92
  %v399 = vunpack.c.l.b16 %v93
  %v400 = vunpack.c.h.b16 %v93
  %v401 = vunpack.c.l.b16 %v94
  %v402 = vunpack.c.h.b16 %v94
  %v403 = vunpack.c.l.b16 %v95
  %v404 = vunpack.c.h.b16 %v95
  %v405 = vunpack.c.l.b16 %v96
  %v406 = vunpack.c.h.b16 %v96
  %v407 = vunpack.c.l.b16 %v97
  %v408 = vunpack.c.h.b16 %v97
  %v409 = vunpack.c.l.b16 %v98
  %v410 = vunpack.c.h.b16 %v98
  %v411 = vunpack.c.l.b16 %v99
  %v412 = vunpack.c.h.b16 %v99
  %v413 = vunpack.c.l.b16 %v100
  %v414 = vunpack.c.h.b16 %v100
  %v415 = vunpack.c.l.b16 %v101
  %v416 = vunpack.c.h.b16 %v101
  %v417 = vunpack.c.l.b16 %v102
  %v418 = vunpack.c.h.b16 %v102
  %v419 = vunpack.c.l.b16 %v103
  %v420 = vunpack.c.h.b16 %v103
  %v421 = vunpack.c.l.b16 %v104
  %v422 = vunpack.c.h.b16 %v104
  %v423 = vunpack.c.l.b16 %v105
  %v424 = vunpack.c.h.b16 %v105
  %v425 = vunpack.c.l.b16 %v106
  %v426 = vunpack.c.h.b16 %v106
  %v427 = vunpack.c.l.b16 %v107
  %v428 = vunpack.c.h.b16 %v107
  %v429 = vunpack.c.l.b16 %v108
  %v430 = vunpack.c.h.b16 %v108
  %v431 = vunpack.c.l.b16 %v109
  %v432 = vunpack.c.h.b16 %v109
  %v433 = vunpack.c.l.b16 %v110
  %v434 = vunpack.c.h.b16 %v110
  %v435 = vunpack.c.l.b16 %v111
  %v436 = vunpack.c.h.b16 %v111
  %v437 = vunpack.c.l.b16 %v112
  %v438 = vunpack.c.h.b16 %v112
  %v439 = vpack.c.b16 %v313, %v311
  %v440 = vpack.c.b16 %v314, %v312
  %v441 = vpack.c.b16 %v317, %v315
  %v442 = vpack.c.b16 %v318, %v316
  %v443 = vpack.c.b16 %v321, %v319
  %v444 = vpack.c.b16 %v322, %v320
  %v445 = vpack.c.b16 %v325, %v323
  %v446 = vpack.c.b16 %v326, %v324
  %v447 = vpack.c.b16 %v329, %v327
  %v448 = vpack.c.b16 %v330, %v328
  %v449 = vpack.c.b16 %v333, %v331
  %v450 = vpack.c.b16 %v334, %v332
  %v451 = vpack.c.b16 %v337, %v335
  %v452 = vpack.c.b16 %v338, %v336
  %v453 = vpack.c.b16 %v341, %v339
  %v454 = vpack.c.b16 %v342, %v340
  %v455 = vpack.c.b16 %v345, %v343
  %v456 = vpack.c.b16 %v346, %v344
  %v457 = vpack.c.b16 %v349, %v347
  %v458 = vpack.c.b16 %v350, %v348
  %v459 = vpack.c.b16 %v353, %v351
  %v460 = vpack.c.b16 %v354, %v352
  %v461 = vpack.c.b16 %v357, %v355
  %v462 = vpack.c.b16 %v358, %v356
  %v463 = vpack.c.b16 %v361, %v359
  %v464 = vpack.c.b16 %v362, %v360
  %v465 = vpack.c.b16 %v365, %v363
  %v466 = vpack.c.b16 %v366, %v364
  %v467 = vpack.c.b16 %v369, %v367
  %v468 = vpack.c.b16 %v370, %v368
  %v469 = vpack.c.b16 %v373, %v371
  %v470 = vpack.c.b16 %v374, %v372
  %v471 = vpack.c.b16 %v377, %v375
  %v472 = vpack.c.b16 %v378, %v376
  %v473 = vpack.c.b16 %v381, %v379
  %v474 = vpack.c.b16 %v382, %v380
  %v475 = vpack.c.b16 %v385, %v383
  %v476 = vpack.c.b16 %v386, %v384
  %v477 = vpack.c.b16 %v389, %v387
  %v478 = vpack.c.b16 %v390, %v388
  %v479 = vpack.c.b16 %v393, %v391
  %v480 = vpack.c.b16 %v394, %v392
  %v481 = vpack.c.b16 %v397, %v395
  %v482 = vpack.c.b16 %v398, %v396
  %v483 = vpack.c.b16 %v401, %v399
  %v484 = vpack.c.b16 %v402, %v400
  %v485 = vpack.c.b16 %v405, %v403
  %v486 = vpack.c.b16 %v406, %v404
  %v487 = vpack.c.b16 %v409, %v407
  %v488 = vpack.c.b16 %v410, %v408
  %v489 = vpack.c.b16 %v413, %v411
  %v490 = vpack.c.b16 %v414, %v412
  %v491 = vpack.c.b16 %v417, %v415
  %v492 = vpack.c.b16 %v418, %v416
  %v493 = vpack.c.b16 %v421, %v419
  %v494 = vpack.c.b16 %v422, %v420
  %v495 = vpack.c.b16 %v425, %v423
  %v496 = vpack.c.b16 %v426, %v424
  %v497 = vpack.c.b16 %v429, %v427
  %v498 = vpack.c.b16 %v430, %v428
  %v499 = vpack.c.b16 %v433, %v431
  %v500 = vpack.c.b16 %v434, %v432
  %v501 = vpack.c.b16 %v437, %v435
  %v502 = vpack.c.b16 %v438, %v436
  %567 = vmatprep.subr.bf16.mxu0 %v454
  %568 = vmatpush1.bf16.msra.mxu0 %v453
  %569 = vmatprep.subr.bf16.mxu0 %v452
  %570 = vmatpush1.bf16.msra.mxu0 %v451
  %571 = vmatprep.subr.bf16.mxu0 %v450
  %572 = vmatpush1.bf16.msra.mxu0 %v449
  %573 = vmatprep.subr.bf16.mxu0 %v448
  %574 = vmatpush1.bf16.msra.mxu0 %v447
  %575 = vmatprep.subr.bf16.mxu0 %v446
  %576 = vmatpush1.bf16.msra.mxu0 %v445
  %577 = vmatprep.subr.bf16.mxu0 %v444
  %578 = vmatpush1.bf16.msra.mxu0 %v443
  %579 = vmatprep.subr.bf16.mxu0 %v442
  %580 = vmatpush1.bf16.msra.mxu0 %v441
  %581 = vmatprep.subr.bf16.mxu0 %v440
  %582 = vmatpush1.bf16.msra.mxu0 %v439
  %583 = vmatprep.subr.bf16.mxu0 %v470
  %584 = vmatpush2.bf16.msra.mxu0 %v469
  %585 = vmatprep.subr.bf16.mxu0 %v468
  %586 = vmatpush2.bf16.msra.mxu0 %v467
  %587 = vmatprep.subr.bf16.mxu0 %v466
  %588 = vmatpush2.bf16.msra.mxu0 %v465
  %589 = vmatprep.subr.bf16.mxu0 %v464
  %590 = vmatpush2.bf16.msra.mxu0 %v463
  %591 = vmatprep.subr.bf16.mxu0 %v462
  %592 = vmatpush2.bf16.msra.mxu0 %v461
  %593 = vmatprep.subr.bf16.mxu0 %v460
  %594 = vmatpush2.bf16.msra.mxu0 %v459
  %595 = vmatprep.subr.bf16.mxu0 %v458
  %596 = vmatpush2.bf16.msra.mxu0 %v457
  %597 = vmatprep.subr.bf16.mxu0 %v456
  %598 = vmatpush2.bf16.msra.mxu0 %v455
  %599 = vmatprep.mubr.bf16.mxu0 %v192
  %600 = vmatmul.mubr.bf16.gmra.mxu0 %v191
  %v601 = vpop.f32.mrf.mxu0
  %v602 = vadd.f32 0.0, %v601
  %v603 = vpop.f32.mrf.mxu0
  %v604 = vadd.f32 0.0, %v603
  %v605 = vpop.f32.mrf.mxu0
  %v606 = vadd.f32 0.0, %v605
  %v607 = vpop.f32.mrf.mxu0
  %v608 = vadd.f32 0.0, %v607
  %609 = vmatprep.mubr.bf16.mxu0 %v196
  %610 = vmatmul.mubr.bf16.gmra.mxu0 %v195
  %v611 = vpop.f32.mrf.mxu0
  %v612 = vadd.f32 0.0, %v611
  %v613 = vpop.f32.mrf.mxu0
  %v614 = vadd.f32 0.0, %v613
  %v615 = vpop.f32.mrf.mxu0
  %v616 = vadd.f32 0.0, %v615
  %v617 = vpop.f32.mrf.mxu0
  %v618 = vadd.f32 0.0, %v617
  %619 = vmatprep.mubr.bf16.mxu0 %v200
  %620 = vmatmul.mubr.bf16.gmra.mxu0 %v199
  %v621 = vpop.f32.mrf.mxu0
  %v622 = vadd.f32 0.0, %v621
  %v623 = vpop.f32.mrf.mxu0
  %v624 = vadd.f32 0.0, %v623
  %v625 = vpop.f32.mrf.mxu0
  %v626 = vadd.f32 0.0, %v625
  %v627 = vpop.f32.mrf.mxu0
  %v628 = vadd.f32 0.0, %v627
  %629 = vmatprep.mubr.bf16.mxu0 %v204
  %630 = vmatmul.mubr.bf16.gmra.mxu0 %v203
  %v631 = vpop.f32.mrf.mxu0
  %v632 = vadd.f32 0.0, %v631
  %v633 = vpop.f32.mrf.mxu0
  %v634 = vadd.f32 0.0, %v633
  %v635 = vpop.f32.mrf.mxu0
  %v636 = vadd.f32 0.0, %v635
  %v637 = vpop.f32.mrf.mxu0
  %v638 = vadd.f32 0.0, %v637
  %639 = vmatprep.mubr.bf16.mxu0 %v208
  %640 = vmatmul.mubr.bf16.gmra.mxu0 %v207
  %v641 = vpop.f32.mrf.mxu0
  %v642 = vadd.f32 0.0, %v641
  %v643 = vpop.f32.mrf.mxu0
  %v644 = vadd.f32 0.0, %v643
  %v645 = vpop.f32.mrf.mxu0
  %v646 = vadd.f32 0.0, %v645
  %v647 = vpop.f32.mrf.mxu0
  %v648 = vadd.f32 0.0, %v647
  %649 = vmatprep.mubr.bf16.mxu0 %v212
  %650 = vmatmul.mubr.bf16.gmra.mxu0 %v211
  %v651 = vpop.f32.mrf.mxu0
  %v652 = vadd.f32 0.0, %v651
  %v653 = vpop.f32.mrf.mxu0
  %v654 = vadd.f32 0.0, %v653
  %v655 = vpop.f32.mrf.mxu0
  %v656 = vadd.f32 0.0, %v655
  %v657 = vpop.f32.mrf.mxu0
  %v658 = vadd.f32 0.0, %v657
  %659 = vmatprep.mubr.bf16.mxu0 %v216
  %660 = vmatmul.mubr.bf16.gmra.mxu0 %v215
  %v661 = vpop.f32.mrf.mxu0
  %v662 = vadd.f32 0.0, %v661
  %v663 = vpop.f32.mrf.mxu0
  %v664 = vadd.f32 0.0, %v663
  %v665 = vpop.f32.mrf.mxu0
  %v666 = vpop.f32.mrf.mxu0
  %667 = vdwg.mxu0
  %668 = vmatprep.subr.bf16.mxu0 %v486
  %669 = vmatpush1.bf16.msra.mxu0 %v485
  %670 = vmatprep.subr.bf16.mxu0 %v484
  %671 = vmatpush1.bf16.msra.mxu0 %v483
  %672 = vmatprep.subr.bf16.mxu0 %v482
  %673 = vmatpush1.bf16.msra.mxu0 %v481
  %674 = vmatprep.subr.bf16.mxu0 %v480
  %675 = vmatpush1.bf16.msra.mxu0 %v479
  %676 = vmatprep.subr.bf16.mxu0 %v478
  %677 = vmatpush1.bf16.msra.mxu0 %v477
  %678 = vmatprep.subr.bf16.mxu0 %v476
  %679 = vmatpush1.bf16.msra.mxu0 %v475
  %680 = vmatprep.subr.bf16.mxu0 %v474
  %681 = vmatpush1.bf16.msra.mxu0 %v473
  %682 = vmatprep.subr.bf16.mxu0 %v472
  %683 = vmatpush1.bf16.msra.mxu0 %v471
  %684 = vmatprep.subr.bf16.mxu0 %v502
  %685 = vmatpush2.bf16.msra.mxu0 %v501
  %686 = vmatprep.subr.bf16.mxu0 %v500
  %687 = vmatpush2.bf16.msra.mxu0 %v499
  %688 = vmatprep.subr.bf16.mxu0 %v498
  %689 = vmatpush2.bf16.msra.mxu0 %v497
  %690 = vmatprep.subr.bf16.mxu0 %v496
  %691 = vmatpush2.bf16.msra.mxu0 %v495
  %692 = vmatprep.subr.bf16.mxu0 %v494
  %693 = vmatpush2.bf16.msra.mxu0 %v493
  %694 = vmatprep.subr.bf16.mxu0 %v492
  %695 = vmatpush2.bf16.msra.mxu0 %v491
  %696 = vmatprep.subr.bf16.mxu0 %v490
  %697 = vmatpush2.bf16.msra.mxu0 %v489
  %698 = vmatprep.subr.bf16.mxu0 %v488
  %699 = vmatpush2.bf16.msra.mxu0 %v487
  %700 = vmatprep.mubr.bf16.mxu0 %v194
  %701 = vmatmul.mubr.bf16.gmra.mxu0 %v193
  %v702 = vpop.f32.mrf.mxu0
  %v703 = vadd.f32 %v602, %v702
  %v704 = vpop.f32.mrf.mxu0
  %v705 = vadd.f32 %v604, %v704
  %v706 = vpop.f32.mrf.mxu0
  %v707 = vadd.f32 %v606, %v706
  %v708 = vpop.f32.mrf.mxu0
  %v709 = vadd.f32 %v608, %v708
  %710 = vmatprep.mubr.bf16.mxu0 %v198
  %711 = vmatmul.mubr.bf16.gmra.mxu0 %v197
  %v712 = vpop.f32.mrf.mxu0
  %v713 = vadd.f32 %v612, %v712
  %v714 = vpop.f32.mrf.mxu0
  %v715 = vadd.f32 %v614, %v714
  %v716 = vpop.f32.mrf.mxu0
  %v717 = vadd.f32 %v616, %v716
  %v718 = vpop.f32.mrf.mxu0
  %v719 = vadd.f32 %v618, %v718
  %720 = vmatprep.mubr.bf16.mxu0 %v202
  %721 = vmatmul.mubr.bf16.gmra.mxu0 %v201
  %v722 = vpop.f32.mrf.mxu0
  %v723 = vadd.f32 %v622, %v722
  %v724 = vpop.f32.mrf.mxu0
  %v725 = vadd.f32 %v624, %v724
  %v726 = vpop.f32.mrf.mxu0
  %v727 = vadd.f32 %v626, %v726
  %v728 = vpop.f32.mrf.mxu0
  %v729 = vadd.f32 %v628, %v728
  %730 = vmatprep.mubr.bf16.mxu0 %v206
  %731 = vmatmul.mubr.bf16.gmra.mxu0 %v205
  %v732 = vpop.f32.mrf.mxu0
  %v733 = vadd.f32 %v632, %v732
  %v734 = vpop.f32.mrf.mxu0
  %v735 = vadd.f32 %v634, %v734
  %v736 = vpop.f32.mrf.mxu0
  %v737 = vadd.f32 %v636, %v736
  %v738 = vpop.f32.mrf.mxu0
  %v739 = vadd.f32 %v638, %v738
  %740 = vmatprep.mubr.bf16.mxu0 %v210
  %741 = vmatmul.mubr.bf16.gmra.mxu0 %v209
  %v742 = vpop.f32.mrf.mxu0
  %v743 = vadd.f32 %v642, %v742
  %v744 = vpop.f32.mrf.mxu0
  %v745 = vadd.f32 %v644, %v744
  %v746 = vpop.f32.mrf.mxu0
  %v747 = vadd.f32 %v646, %v746
  %v748 = vpop.f32.mrf.mxu0
  %v749 = vadd.f32 %v648, %v748
  %750 = vmatprep.mubr.bf16.mxu0 %v214
  %751 = vmatmul.mubr.bf16.gmra.mxu0 %v213
  %v752 = vpop.f32.mrf.mxu0
  %v753 = vadd.f32 %v652, %v752
  %v754 = vpop.f32.mrf.mxu0
  %v755 = vadd.f32 %v654, %v754
  %v756 = vpop.f32.mrf.mxu0
  %v757 = vadd.f32 %v656, %v756
  %v758 = vpop.f32.mrf.mxu0
  %v759 = vadd.f32 %v658, %v758
  %760 = vmatprep.mubr.bf16.mxu0 %v218
  %761 = vmatmul.mubr.bf16.gmra.mxu0 %v217
  %v762 = vpop.f32.mrf.mxu0
  %v763 = vadd.f32 %v662, %v762
  %v764 = vpop.f32.mrf.mxu0
  %v765 = vadd.f32 %v664, %v764
  %v766 = vpop.f32.mrf.mxu0
  %v767 = vpop.f32.mrf.mxu0
  %768 = vdwg.mxu0
  %v769 = vld [vmem:[%s2] sm:$0xff]
  %v770 = vld [vmem:[%s2 + $0x8] sm:$0xff]
  %v771 = vld [vmem:[%s2 + $0x10] sm:$0xff]
  %v772 = vld [vmem:[%s2 + $0x18] sm:$0xff]
  %v773 = vld [vmem:[%s2 + $0x20] sm:$0xff]
  %v774 = vld [vmem:[%s2 + $0x28] sm:$0xff]
  %v775 = vld [vmem:[%s2 + $0x30] sm:$0xff]
  %v776 = vld [vmem:[%s2 + $0x38] sm:$0xff]
  %v777 = vld [vmem:[%s2 + $0x40] sm:$0xff]
  %v778 = vld [vmem:[%s2 + $0x48] sm:$0xff]
  %v779 = vld [vmem:[%s2 + $0x50] sm:$0xff]
  %v780 = vld [vmem:[%s2 + $0x58] sm:$0xff]
  %v781 = vld [vmem:[%s2 + $0x60] sm:$0xff]
  %v782 = vld [vmem:[%s2 + $0x68] sm:$0xff]
  %v783 = vld [vmem:[%s2 + $0x70] sm:$0xff]
  %v784 = vld [vmem:[%s2 + $0x78] sm:$0xff]
  %v785 = vld [vmem:[%s2 + $0x80] sm:$0xff]
  %v786 = vld [vmem:[%s2 + $0x88] sm:$0xff]
  %v787 = vld [vmem:[%s2 + $0x90] sm:$0xff]
  %v788 = vld [vmem:[%s2 + $0x98] sm:$0xff]
  %v789 = vld [vmem:[%s2 + $0xa0] sm:$0xff]
  %v790 = vld [vmem:[%s2 + $0xa8] sm:$0xff]
  %v791 = vld [vmem:[%s2 + $0xb0] sm:$0xff]
  %v792 = vld [vmem:[%s2 + $0xb8] sm:$0xff]
  %v793 = vld [vmem:[%s2 + $0xc0] sm:$0xff]
  %v794 = vld [vmem:[%s2 + $0xc8] sm:$0xff]
  %v795 = vmul.f32 %v703, %v769
  %v796 = vmul.f32 %v705, %v770
  %v797 = vmul.f32 %v707, %v771
  %v798 = vmul.f32 %v709, %v772
  %v799 = vmul.f32 %v713, %v773
  %v800 = vmul.f32 %v715, %v774
  %v801 = vmul.f32 %v717, %v775
  %v802 = vmul.f32 %v719, %v776
  %v803 = vmul.f32 %v723, %v777
  %v804 = vmul.f32 %v725, %v778
  %v805 = vmul.f32 %v727, %v779
  %v806 = vmul.f32 %v729, %v780
  %v807 = vmul.f32 %v733, %v781
  %v808 = vmul.f32 %v735, %v782
  %v809 = vmul.f32 %v737, %v783
  %v810 = vmul.f32 %v739, %v784
  %v811 = vmul.f32 %v743, %v785
  %v812 = vmul.f32 %v745, %v786
  %v813 = vmul.f32 %v747, %v787
  %v814 = vmul.f32 %v749, %v788
  %v815 = vmul.f32 %v753, %v789
  %v816 = vmul.f32 %v755, %v790
  %v817 = vmul.f32 %v757, %v791
  %v818 = vmul.f32 %v759, %v792
  %v819 = vmul.f32 %v763, %v793
  %v820 = vmul.f32 %v765, %v794
  %v821 = vadd.f32 %v795, %v797
  %v822 = vadd.f32 %v821, %v799
  %v823 = vadd.f32 %v822, %v801
  %v824 = vadd.f32 %v823, %v803
  %v825 = vadd.f32 %v824, %v805
  %v826 = vadd.f32 %v825, %v807
  %v827 = vadd.f32 %v826, %v809
  %v828 = vadd.f32 %v827, %v811
  %v829 = vadd.f32 %v828, %v813
  %v830 = vadd.f32 %v829, %v815
  %v831 = vadd.f32 %v830, %v817
  %v832 = vadd.f32 %v831, %v819
  %v833 = vrot.slane %v832, 4
  %v834 = vadd.f32 %v832, %v833
  %v835 = vrot.slane %v834, 2
  %v836 = vadd.f32 %v834, %v835
  %v837 = vrot.slane %v836, 1
  %v838 = vadd.f32 %v836, %v837
  %v839 = vadd.f32 %v796, %v798
  %v840 = vadd.f32 %v839, %v800
  %v841 = vadd.f32 %v840, %v802
  %v842 = vadd.f32 %v841, %v804
  %v843 = vadd.f32 %v842, %v806
  %v844 = vadd.f32 %v843, %v808
  %v845 = vadd.f32 %v844, %v810
  %v846 = vadd.f32 %v845, %v812
  %v847 = vadd.f32 %v846, %v814
  %v848 = vadd.f32 %v847, %v816
  %v849 = vadd.f32 %v848, %v818
  %v850 = vadd.f32 %v849, %v820
  %v851 = vrot.slane %v850, 4
  %v852 = vadd.f32 %v850, %v851
  %v853 = vrot.slane %v852, 2
  %v854 = vadd.f32 %v852, %v853
  %v855 = vrot.slane %v854, 1
  %v856 = vadd.f32 %v854, %v855
  %v857 = vld [vmem:[%s3] sm:$0xff]
  %v858 = vld [vmem:[%s3 + $0x8] sm:$0xff]
  %v859 = vld [vmem:[%s3 + $0x10] sm:$0xff]
  %v860 = vld [vmem:[%s3 + $0x18] sm:$0xff]
  %v861 = vld [vmem:[%s3 + $0x20] sm:$0xff]
  %v862 = vld [vmem:[%s3 + $0x28] sm:$0xff]
  %v863 = vld [vmem:[%s3 + $0x30] sm:$0xff]
  %v864 = vld [vmem:[%s3 + $0x38] sm:$0xff]
  %v865 = vld [vmem:[%s3 + $0x40] sm:$0xff]
  %v866 = vld [vmem:[%s3 + $0x48] sm:$0xff]
  %v867 = vld [vmem:[%s3 + $0x50] sm:$0xff]
  %v868 = vld [vmem:[%s3 + $0x58] sm:$0xff]
  %v869 = vld [vmem:[%s3 + $0x60] sm:$0xff]
  %v870 = vld [vmem:[%s3 + $0x68] sm:$0xff]
  %v871 = vld [vmem:[%s3 + $0x70] sm:$0xff]
  %v872 = vld [vmem:[%s3 + $0x78] sm:$0xff]
  %v873 = vld [vmem:[%s3 + $0x80] sm:$0xff]
  %v874 = vld [vmem:[%s3 + $0x88] sm:$0xff]
  %v875 = vld [vmem:[%s3 + $0x90] sm:$0xff]
  %v876 = vld [vmem:[%s3 + $0x98] sm:$0xff]
  %v877 = vld [vmem:[%s3 + $0xa0] sm:$0xff]
  %v878 = vld [vmem:[%s3 + $0xa8] sm:$0xff]
  %v879 = vld [vmem:[%s3 + $0xb0] sm:$0xff]
  %v880 = vld [vmem:[%s3 + $0xb8] sm:$0xff]
  %v881 = vld [vmem:[%s3 + $0xc0] sm:$0xff]
  %v882 = vld [vmem:[%s3 + $0xc8] sm:$0xff]
  %v883 = vld [vmem:[%s3 + $0xd0] sm:$0xff]
  %v884 = vld [vmem:[%s3 + $0xd8] sm:$0xff]
  %v885 = vld [vmem:[%s3 + $0xe0] sm:$0xff]
  %v886 = vld [vmem:[%s3 + $0xe8] sm:$0xff]
  %v887 = vld [vmem:[%s3 + $0xf0] sm:$0xff]
  %v888 = vld [vmem:[%s3 + $0xf8] sm:$0xff]
  %v889 = vld [vmem:[%s3 + $0x100] sm:$0xff]
  %v890 = vld [vmem:[%s3 + $0x108] sm:$0xff]
  %v891 = vld [vmem:[%s3 + $0x110] sm:$0xff]
  %v892 = vld [vmem:[%s3 + $0x118] sm:$0xff]
  %v893 = vld [vmem:[%s3 + $0x120] sm:$0xff]
  %v894 = vld [vmem:[%s3 + $0x128] sm:$0xff]
  %v895 = vld [vmem:[%s3 + $0x130] sm:$0xff]
  %v896 = vld [vmem:[%s3 + $0x138] sm:$0xff]
  %v897 = vld [vmem:[%s3 + $0x140] sm:$0xff]
  %v898 = vld [vmem:[%s3 + $0x148] sm:$0xff]
  %v899 = vld [vmem:[%s3 + $0x150] sm:$0xff]
  %v900 = vld [vmem:[%s3 + $0x158] sm:$0xff]
  %v901 = vld [vmem:[%s3 + $0x160] sm:$0xff]
  %v902 = vld [vmem:[%s3 + $0x168] sm:$0xff]
  %v903 = vld [vmem:[%s3 + $0x170] sm:$0xff]
  %v904 = vld [vmem:[%s3 + $0x178] sm:$0xff]
  %v905 = vld [vmem:[%s3 + $0x180] sm:$0xff]
  %v906 = vld [vmem:[%s3 + $0x188] sm:$0xff]
  %v907 = vld [vmem:[%s3 + $0x190] sm:$0xff]
  %v908 = vld [vmem:[%s3 + $0x198] sm:$0xff]
  %v909 = vld [vmem:[%s3 + $0x1a0] sm:$0xff]
  %v910 = vld [vmem:[%s3 + $0x1a8] sm:$0xff]
  %v911 = vld [vmem:[%s3 + $0x1b0] sm:$0xff]
  %v912 = vld [vmem:[%s3 + $0x1b8] sm:$0xff]
  %v913 = vld [vmem:[%s3 + $0x1c0] sm:$0xff]
  %v914 = vld [vmem:[%s3 + $0x1c8] sm:$0xff]
  %v915 = vld [vmem:[%s3 + $0x1d0] sm:$0xff]
  %v916 = vld [vmem:[%s3 + $0x1d8] sm:$0xff]
  %v917 = vld [vmem:[%s3 + $0x1e0] sm:$0xff]
  %v918 = vld [vmem:[%s3 + $0x1e8] sm:$0xff]
  %v919 = vld [vmem:[%s3 + $0x1f0] sm:$0xff]
  %v920 = vld [vmem:[%s3 + $0x1f8] sm:$0xff]
  %921 = vmatprep.subr.mxu0 %v888
  %922 = vmatpush1.msra.mxu0 %v887
  %923 = vmatprep.subr.mxu0 %v886
  %924 = vmatpush1.msra.mxu0 %v885
  %925 = vmatprep.subr.mxu0 %v884
  %926 = vmatpush1.msra.mxu0 %v883
  %927 = vmatprep.subr.mxu0 %v882
  %928 = vmatpush1.msra.mxu0 %v881
  %929 = vmatprep.subr.mxu0 %v880
  %930 = vmatpush1.msra.mxu0 %v879
  %931 = vmatprep.subr.mxu0 %v878
  %932 = vmatpush1.msra.mxu0 %v877
  %933 = vmatprep.subr.mxu0 %v876
  %934 = vmatpush1.msra.mxu0 %v875
  %935 = vmatprep.subr.mxu0 %v874
  %936 = vmatpush1.msra.mxu0 %v873
  %937 = vmatprep.subr.mxu0 %v872
  %938 = vmatpush1.msra.mxu0 %v871
  %939 = vmatprep.subr.mxu0 %v870
  %940 = vmatpush1.msra.mxu0 %v869
  %941 = vmatprep.subr.mxu0 %v868
  %942 = vmatpush1.msra.mxu0 %v867
  %943 = vmatprep.subr.mxu0 %v866
  %944 = vmatpush1.msra.mxu0 %v865
  %945 = vmatprep.subr.mxu0 %v864
  %946 = vmatpush1.msra.mxu0 %v863
  %947 = vmatprep.subr.mxu0 %v862
  %948 = vmatpush1.msra.mxu0 %v861
  %949 = vmatprep.subr.mxu0 %v860
  %950 = vmatpush1.msra.mxu0 %v859
  %951 = vmatprep.subr.mxu0 %v858
  %952 = vmatpush1.msra.mxu0 %v857
  %953 = vmatprep.subr.mxu0 %v920
  %954 = vmatpush2.msra.mxu0 %v919
  %955 = vmatprep.subr.mxu0 %v918
  %956 = vmatpush2.msra.mxu0 %v917
  %957 = vmatprep.subr.mxu0 %v916
  %958 = vmatpush2.msra.mxu0 %v915
  %959 = vmatprep.subr.mxu0 %v914
  %960 = vmatpush2.msra.mxu0 %v913
  %961 = vmatprep.subr.mxu0 %v912
  %962 = vmatpush2.msra.mxu0 %v911
  %963 = vmatprep.subr.mxu0 %v910
  %964 = vmatpush2.msra.mxu0 %v909
  %965 = vmatprep.subr.mxu0 %v908
  %966 = vmatpush2.msra.mxu0 %v907
  %967 = vmatprep.subr.mxu0 %v906
  %968 = vmatpush2.msra.mxu0 %v905
  %969 = vmatprep.subr.mxu0 %v904
  %970 = vmatpush2.msra.mxu0 %v903
  %971 = vmatprep.subr.mxu0 %v902
  %972 = vmatpush2.msra.mxu0 %v901
  %973 = vmatprep.subr.mxu0 %v900
  %974 = vmatpush2.msra.mxu0 %v899
  %975 = vmatprep.subr.mxu0 %v898
  %976 = vmatpush2.msra.mxu0 %v897
  %977 = vmatprep.subr.mxu0 %v896
  %978 = vmatpush2.msra.mxu0 %v895
  %979 = vmatprep.subr.mxu0 %v894
  %980 = vmatpush2.msra.mxu0 %v893
  %981 = vmatprep.subr.mxu0 %v892
  %982 = vmatpush2.msra.mxu0 %v891
  %983 = vmatprep.subr.mxu0 %v890
  %984 = vmatpush2.msra.mxu0 %v889
  %985 = vmatprep.mubr.f32.mxu0 %v856
  %986 = vmatmul.mubr.f32.gmra.mxu0 %v838
  %v987 = vpop.f32.mrf.mxu0
  %v988 = vadd.f32 0.0, %v987
  %v989 = vpop.f32.mrf.mxu0
  %v990 = vadd.f32 0.0, %v989
  %991 = vdwg.mxu0
  %v992 = vmul.f32 %v988, 0.00295858
  %v993 = vmul.f32 %v990, 0.00295858
  %v994 = vlaneseq
  %v995 = vshrl.u32 %v994, 7
  %v996 = vsub.s32 0, %v995
  %v997 = vrot.slane %v992, %v996
  %v998 = vlaneseq
  %v999 = vshrl.u32 %v998, 7
  %v1000 = vsub.s32 0, %v999
  %v1001 = vrot.slane %v993, %v1000
  %v1002 = vsub.f32 %v703, %v997
  %v1003 = vsub.f32 %v705, %v1001
  %v1004 = vsub.f32 %v707, %v997
  %v1005 = vsub.f32 %v709, %v1001
  %v1006 = vsub.f32 %v713, %v997
  %v1007 = vsub.f32 %v715, %v1001
  %v1008 = vsub.f32 %v717, %v997
  %v1009 = vsub.f32 %v719, %v1001
  %v1010 = vsub.f32 %v723, %v997
  %v1011 = vsub.f32 %v725, %v1001
  %v1012 = vsub.f32 %v727, %v997
  %v1013 = vsub.f32 %v729, %v1001
  %v1014 = vsub.f32 %v733, %v997
  %v1015 = vsub.f32 %v735, %v1001
  %v1016 = vsub.f32 %v737, %v997
  %v1017 = vsub.f32 %v739, %v1001
  %v1018 = vsub.f32 %v743, %v997
  %v1019 = vsub.f32 %v745, %v1001
  %v1020 = vsub.f32 %v747, %v997
  %v1021 = vsub.f32 %v749, %v1001
  %v1022 = vsub.f32 %v753, %v997
  %v1023 = vsub.f32 %v755, %v1001
  %v1024 = vsub.f32 %v757, %v997
  %v1025 = vsub.f32 %v759, %v1001
  %v1026 = vsub.f32 %v763, %v997
  %v1027 = vsub.f32 %v765, %v1001
  %v1028 = vmul.f32 %v1002, %v769
  %v1029 = vmul.f32 %v1003, %v770
  %v1030 = vmul.f32 %v1004, %v771
  %v1031 = vmul.f32 %v1005, %v772
  %v1032 = vmul.f32 %v1006, %v773
  %v1033 = vmul.f32 %v1007, %v774
  %v1034 = vmul.f32 %v1008, %v775
  %v1035 = vmul.f32 %v1009, %v776
  %v1036 = vmul.f32 %v1010, %v777
  %v1037 = vmul.f32 %v1011, %v778
  %v1038 = vmul.f32 %v1012, %v779
  %v1039 = vmul.f32 %v1013, %v780
  %v1040 = vmul.f32 %v1014, %v781
  %v1041 = vmul.f32 %v1015, %v782
  %v1042 = vmul.f32 %v1016, %v783
  %v1043 = vmul.f32 %v1017, %v784
  %v1044 = vmul.f32 %v1018, %v785
  %v1045 = vmul.f32 %v1019, %v786
  %v1046 = vmul.f32 %v1020, %v787
  %v1047 = vmul.f32 %v1021, %v788
  %v1048 = vmul.f32 %v1022, %v789
  %v1049 = vmul.f32 %v1023, %v790
  %v1050 = vmul.f32 %v1024, %v791
  %v1051 = vmul.f32 %v1025, %v792
  %v1052 = vmul.f32 %v1026, %v793
  %v1053 = vmul.f32 %v1027, %v794
  %v1054 = vmul.f32 %v1028, %v1028
  %v1055 = vmul.f32 %v1029, %v1029
  %v1056 = vmul.f32 %v1030, %v1030
  %v1057 = vmul.f32 %v1031, %v1031
  %v1058 = vmul.f32 %v1032, %v1032
  %v1059 = vmul.f32 %v1033, %v1033
  %v1060 = vmul.f32 %v1034, %v1034
  %v1061 = vmul.f32 %v1035, %v1035
  %v1062 = vmul.f32 %v1036, %v1036
  %v1063 = vmul.f32 %v1037, %v1037
  %v1064 = vmul.f32 %v1038, %v1038
  %v1065 = vmul.f32 %v1039, %v1039
  %v1066 = vmul.f32 %v1040, %v1040
  %v1067 = vmul.f32 %v1041, %v1041
  %v1068 = vmul.f32 %v1042, %v1042
  %v1069 = vmul.f32 %v1043, %v1043
  %v1070 = vmul.f32 %v1044, %v1044
  %v1071 = vmul.f32 %v1045, %v1045
  %v1072 = vmul.f32 %v1046, %v1046
  %v1073 = vmul.f32 %v1047, %v1047
  %v1074 = vmul.f32 %v1048, %v1048
  %v1075 = vmul.f32 %v1049, %v1049
  %v1076 = vmul.f32 %v1050, %v1050
  %v1077 = vmul.f32 %v1051, %v1051
  %v1078 = vmul.f32 %v1052, %v1052
  %v1079 = vmul.f32 %v1053, %v1053
  %v1080 = vadd.f32 %v1054, %v1056
  %v1081 = vadd.f32 %v1080, %v1058
  %v1082 = vadd.f32 %v1081, %v1060
  %v1083 = vadd.f32 %v1082, %v1062
  %v1084 = vadd.f32 %v1083, %v1064
  %v1085 = vadd.f32 %v1084, %v1066
  %v1086 = vadd.f32 %v1085, %v1068
  %v1087 = vadd.f32 %v1086, %v1070
  %v1088 = vadd.f32 %v1087, %v1072
  %v1089 = vadd.f32 %v1088, %v1074
  %v1090 = vadd.f32 %v1089, %v1076
  %v1091 = vadd.f32 %v1090, %v1078
  %v1092 = vrot.slane %v1091, 4
  %v1093 = vadd.f32 %v1091, %v1092
  %v1094 = vrot.slane %v1093, 2
  %v1095 = vadd.f32 %v1093, %v1094
  %v1096 = vrot.slane %v1095, 1
  %v1097 = vadd.f32 %v1095, %v1096
  %v1098 = vadd.f32 %v1055, %v1057
  %v1099 = vadd.f32 %v1098, %v1059
  %v1100 = vadd.f32 %v1099, %v1061
  %v1101 = vadd.f32 %v1100, %v1063
  %v1102 = vadd.f32 %v1101, %v1065
  %v1103 = vadd.f32 %v1102, %v1067
  %v1104 = vadd.f32 %v1103, %v1069
  %v1105 = vadd.f32 %v1104, %v1071
  %v1106 = vadd.f32 %v1105, %v1073
  %v1107 = vadd.f32 %v1106, %v1075
  %v1108 = vadd.f32 %v1107, %v1077
  %v1109 = vadd.f32 %v1108, %v1079
  %v1110 = vrot.slane %v1109, 4
  %v1111 = vadd.f32 %v1109, %v1110
  %v1112 = vrot.slane %v1111, 2
  %v1113 = vadd.f32 %v1111, %v1112
  %v1114 = vrot.slane %v1113, 1
  %v1115 = vadd.f32 %v1113, %v1114
  %1116 = vmatprep.subr.mxu0 %v888
  %1117 = vmatpush1.msra.mxu0 %v887
  %1118 = vmatprep.subr.mxu0 %v886
  %1119 = vmatpush1.msra.mxu0 %v885
  %1120 = vmatprep.subr.mxu0 %v884
  %1121 = vmatpush1.msra.mxu0 %v883
  %1122 = vmatprep.subr.mxu0 %v882
  %1123 = vmatpush1.msra.mxu0 %v881
  %1124 = vmatprep.subr.mxu0 %v880
  %1125 = vmatpush1.msra.mxu0 %v879
  %1126 = vmatprep.subr.mxu0 %v878
  %1127 = vmatpush1.msra.mxu0 %v877
  %1128 = vmatprep.subr.mxu0 %v876
  %1129 = vmatpush1.msra.mxu0 %v875
  %1130 = vmatprep.subr.mxu0 %v874
  %1131 = vmatpush1.msra.mxu0 %v873
  %1132 = vmatprep.subr.mxu0 %v872
  %1133 = vmatpush1.msra.mxu0 %v871
  %1134 = vmatprep.subr.mxu0 %v870
  %1135 = vmatpush1.msra.mxu0 %v869
  %1136 = vmatprep.subr.mxu0 %v868
  %1137 = vmatpush1.msra.mxu0 %v867
  %1138 = vmatprep.subr.mxu0 %v866
  %1139 = vmatpush1.msra.mxu0 %v865
  %1140 = vmatprep.subr.mxu0 %v864
  %1141 = vmatpush1.msra.mxu0 %v863
  %1142 = vmatprep.subr.mxu0 %v862
  %1143 = vmatpush1.msra.mxu0 %v861
  %1144 = vmatprep.subr.mxu0 %v860
  %1145 = vmatpush1.msra.mxu0 %v859
  %1146 = vmatprep.subr.mxu0 %v858
  %1147 = vmatpush1.msra.mxu0 %v857
  %1148 = vmatprep.subr.mxu0 %v920
  %1149 = vmatpush2.msra.mxu0 %v919
  %1150 = vmatprep.subr.mxu0 %v918
  %1151 = vmatpush2.msra.mxu0 %v917
  %1152 = vmatprep.subr.mxu0 %v916
  %1153 = vmatpush2.msra.mxu0 %v915
  %1154 = vmatprep.subr.mxu0 %v914
  %1155 = vmatpush2.msra.mxu0 %v913
  %1156 = vmatprep.subr.mxu0 %v912
  %1157 = vmatpush2.msra.mxu0 %v911
  %1158 = vmatprep.subr.mxu0 %v910
  %1159 = vmatpush2.msra.mxu0 %v909
  %1160 = vmatprep.subr.mxu0 %v908
  %1161 = vmatpush2.msra.mxu0 %v907
  %1162 = vmatprep.subr.mxu0 %v906
  %1163 = vmatpush2.msra.mxu0 %v905
  %1164 = vmatprep.subr.mxu0 %v904
  %1165 = vmatpush2.msra.mxu0 %v903
  %1166 = vmatprep.subr.mxu0 %v902
  %1167 = vmatpush2.msra.mxu0 %v901
  %1168 = vmatprep.subr.mxu0 %v900
  %1169 = vmatpush2.msra.mxu0 %v899
  %1170 = vmatprep.subr.mxu0 %v898
  %1171 = vmatpush2.msra.mxu0 %v897
  %1172 = vmatprep.subr.mxu0 %v896
  %1173 = vmatpush2.msra.mxu0 %v895
  %1174 = vmatprep.subr.mxu0 %v894
  %1175 = vmatpush2.msra.mxu0 %v893
  %1176 = vmatprep.subr.mxu0 %v892
  %1177 = vmatpush2.msra.mxu0 %v891
  %1178 = vmatprep.subr.mxu0 %v890
  %1179 = vmatpush2.msra.mxu0 %v889
  %1180 = vmatprep.mubr.f32.mxu0 %v1115
  %1181 = vmatmul.mubr.f32.gmra.mxu0 %v1097
  %v1182 = vpop.f32.mrf.mxu0
  %v1183 = vadd.f32 0.0, %v1182
  %v1184 = vpop.f32.mrf.mxu0
  %v1185 = vadd.f32 0.0, %v1184
  %1186 = vdwg.mxu0
  %v1187 = vmul.f32 %v1183, 0.00295858
  %v1188 = vmul.f32 %v1185, 0.00295858
  %v1189 = vadd.f32 %v1187, 1e-05
  %v1190 = vadd.f32 %v1188, 1e-05
  %v1191 = vrsqrt.pop %v1189
  %v1192 = vrsqrt.pop %v1190
  %v1193 = vlaneseq
  %v1194 = vshrl.u32 %v1193, 7
  %v1195 = vsub.s32 0, %v1194
  %v1196 = vrot.slane %v1191, %v1195
  %v1197 = vlaneseq
  %v1198 = vshrl.u32 %v1197, 7
  %v1199 = vsub.s32 0, %v1198
  %v1200 = vrot.slane %v1192, %v1199
  %v1201 = vmul.f32 %v1002, %v1196
  %v1202 = vmul.f32 %v1003, %v1200
  %v1203 = vmul.f32 %v1004, %v1196
  %v1204 = vmul.f32 %v1005, %v1200
  %v1205 = vmul.f32 %v1006, %v1196
  %v1206 = vmul.f32 %v1007, %v1200
  %v1207 = vmul.f32 %v1008, %v1196
  %v1208 = vmul.f32 %v1009, %v1200
  %v1209 = vmul.f32 %v1010, %v1196
  %v1210 = vmul.f32 %v1011, %v1200
  %v1211 = vmul.f32 %v1012, %v1196
  %v1212 = vmul.f32 %v1013, %v1200
  %v1213 = vmul.f32 %v1014, %v1196
  %v1214 = vmul.f32 %v1015, %v1200
  %v1215 = vmul.f32 %v1016, %v1196
  %v1216 = vmul.f32 %v1017, %v1200
  %v1217 = vmul.f32 %v1018, %v1196
  %v1218 = vmul.f32 %v1019, %v1200
  %v1219 = vmul.f32 %v1020, %v1196
  %v1220 = vmul.f32 %v1021, %v1200
  %v1221 = vmul.f32 %v1022, %v1196
  %v1222 = vmul.f32 %v1023, %v1200
  %v1223 = vmul.f32 %v1024, %v1196
  %v1224 = vmul.f32 %v1025, %v1200
  %v1225 = vmul.f32 %v1026, %v1196
  %v1226 = vmul.f32 %v1027, %v1200
  %v1227 = vld [vmem:[%s4] sm:$0x3]
  %v1229 = vlaneseq
  %v1230 = vshrl.u32 %v1229, 7
  %v1231 = vsub.s32 0, %v1230
  %v1232 = vrot.slane %v1227, %v1231
  %v1233 = vlaneseq
  %v1234 = vshrl.u32 %v1233, 7
  %v1235 = vsub.s32 1, %v1234
  %v1236 = vrot.slane %v1227, %v1235
  %v1239 = vmul.f32 %v1201, %v1232
  %v1240 = vmul.f32 %v1202, %v1236
  %v1241 = vmul.f32 %v1203, %v1232
  %v1242 = vmul.f32 %v1204, %v1236
  %v1243 = vmul.f32 %v1205, %v1232
  %v1244 = vmul.f32 %v1206, %v1236
  %v1245 = vmul.f32 %v1207, %v1232
  %v1246 = vmul.f32 %v1208, %v1236
  %v1247 = vmul.f32 %v1209, %v1232
  %v1248 = vmul.f32 %v1210, %v1236
  %v1249 = vmul.f32 %v1211, %v1232
  %v1250 = vmul.f32 %v1212, %v1236
  %v1251 = vmul.f32 %v1213, %v1232
  %v1252 = vmul.f32 %v1214, %v1236
  %v1253 = vmul.f32 %v1215, %v1232
  %v1254 = vmul.f32 %v1216, %v1236
  %v1255 = vmul.f32 %v1217, %v1232
  %v1256 = vmul.f32 %v1218, %v1236
  %v1257 = vmul.f32 %v1219, %v1232
  %v1258 = vmul.f32 %v1220, %v1236
  %v1259 = vmul.f32 %v1221, %v1232
  %v1260 = vmul.f32 %v1222, %v1236
  %v1261 = vmul.f32 %v1223, %v1232
  %v1262 = vmul.f32 %v1224, %v1236
  %v1263 = vmul.f32 %v1225, %v1232
  %v1264 = vmul.f32 %v1226, %v1236
  %v1265 = vld [vmem:[%s5] sm:$0x3]
  %v1267 = vlaneseq
  %v1268 = vshrl.u32 %v1267, 7
  %v1269 = vsub.s32 0, %v1268
  %v1270 = vrot.slane %v1265, %v1269
  %v1271 = vlaneseq
  %v1272 = vshrl.u32 %v1271, 7
  %v1273 = vsub.s32 1, %v1272
  %v1274 = vrot.slane %v1265, %v1273
  %v1277 = vadd.f32 %v1239, %v1270
  %v1278 = vadd.f32 %v1240, %v1274
  %v1279 = vadd.f32 %v1241, %v1270
  %v1280 = vadd.f32 %v1242, %v1274
  %v1281 = vadd.f32 %v1243, %v1270
  %v1282 = vadd.f32 %v1244, %v1274
  %v1283 = vadd.f32 %v1245, %v1270
  %v1284 = vadd.f32 %v1246, %v1274
  %v1285 = vadd.f32 %v1247, %v1270
  %v1286 = vadd.f32 %v1248, %v1274
  %v1287 = vadd.f32 %v1249, %v1270
  %v1288 = vadd.f32 %v1250, %v1274
  %v1289 = vadd.f32 %v1251, %v1270
  %v1290 = vadd.f32 %v1252, %v1274
  %v1291 = vadd.f32 %v1253, %v1270
  %v1292 = vadd.f32 %v1254, %v1274
  %v1293 = vadd.f32 %v1255, %v1270
  %v1294 = vadd.f32 %v1256, %v1274
  %v1295 = vadd.f32 %v1257, %v1270
  %v1296 = vadd.f32 %v1258, %v1274
  %v1297 = vadd.f32 %v1259, %v1270
  %v1298 = vadd.f32 %v1260, %v1274
  %v1299 = vadd.f32 %v1261, %v1270
  %v1300 = vadd.f32 %v1262, %v1274
  %v1301 = vadd.f32 %v1263, %v1270
  %v1302 = vadd.f32 %v1264, %v1274
  %v1303 = vmax.f32 %v1277, 0.0
  %v1304 = vmax.f32 %v1278, 0.0
  %v1305 = vmax.f32 %v1279, 0.0
  %v1306 = vmax.f32 %v1280, 0.0
  %v1307 = vmax.f32 %v1281, 0.0
  %v1308 = vmax.f32 %v1282, 0.0
  %v1309 = vmax.f32 %v1283, 0.0
  %v1310 = vmax.f32 %v1284, 0.0
  %v1311 = vmax.f32 %v1285, 0.0
  %v1312 = vmax.f32 %v1286, 0.0
  %v1313 = vmax.f32 %v1287, 0.0
  %v1314 = vmax.f32 %v1288, 0.0
  %v1315 = vmax.f32 %v1289, 0.0
  %v1316 = vmax.f32 %v1290, 0.0
  %v1317 = vmax.f32 %v1291, 0.0
  %v1318 = vmax.f32 %v1292, 0.0
  %v1319 = vmax.f32 %v1293, 0.0
  %v1320 = vmax.f32 %v1294, 0.0
  %v1321 = vmax.f32 %v1295, 0.0
  %v1322 = vmax.f32 %v1296, 0.0
  %v1323 = vmax.f32 %v1297, 0.0
  %v1324 = vmax.f32 %v1298, 0.0
  %v1325 = vmax.f32 %v1299, 0.0
  %v1326 = vmax.f32 %v1300, 0.0
  %v1327 = vmax.f32 %v1301, 0.0
  %v1328 = vmax.f32 %v1302, 0.0
  %v1329 = vpack.c.bf16 %v1305, %v1303
  %v1330 = vpack.c.bf16 %v1306, %v1304
  %v1331 = vpack.c.bf16 %v1309, %v1307
  %v1332 = vpack.c.bf16 %v1310, %v1308
  %v1333 = vpack.c.bf16 %v1313, %v1311
  %v1334 = vpack.c.bf16 %v1314, %v1312
  %v1335 = vpack.c.bf16 %v1317, %v1315
  %v1336 = vpack.c.bf16 %v1318, %v1316
  %v1337 = vpack.c.bf16 %v1321, %v1319
  %v1338 = vpack.c.bf16 %v1322, %v1320
  %v1339 = vpack.c.bf16 %v1325, %v1323
  %v1340 = vpack.c.bf16 %v1326, %v1324
  %v1341 = vpack.c.bf16 %v1327, %v1327
  %v1342 = vpack.c.bf16 %v1328, %v1328
  %v1357 = vunpack.c.l.b16 %v1329
  %v1358 = vunpack.c.l.b16 %v1330
  %v1359 = vunpack.c.h.b16 %v1329
  %v1360 = vunpack.c.h.b16 %v1330
  %v1361 = vunpack.c.l.b16 %v1331
  %v1362 = vunpack.c.l.b16 %v1332
  %v1363 = vunpack.c.h.b16 %v1331
  %v1364 = vunpack.c.h.b16 %v1332
  %v1365 = vunpack.c.l.b16 %v1333
  %v1366 = vunpack.c.l.b16 %v1334
  %v1367 = vunpack.c.h.b16 %v1333
  %v1368 = vunpack.c.h.b16 %v1334
  %v1369 = vunpack.c.l.b16 %v1335
  %v1370 = vunpack.c.l.b16 %v1336
  %v1371 = vunpack.c.h.b16 %v1335
  %v1372 = vunpack.c.h.b16 %v1336
  %v1373 = vunpack.c.l.b16 %v1337
  %v1374 = vunpack.c.l.b16 %v1338
  %v1375 = vunpack.c.h.b16 %v1337
  %v1376 = vunpack.c.h.b16 %v1338
  %v1377 = vunpack.c.l.b16 %v1339
  %v1378 = vunpack.c.l.b16 %v1340
  %v1379 = vunpack.c.h.b16 %v1339
  %v1380 = vunpack.c.h.b16 %v1340
  %v1381 = vunpack.c.l.b16 %v1341
  %v1382 = vunpack.c.l.b16 %v1342
  %v1383 = vpack.c.b16 %v1358, %v1357
  %v1384 = vpack.c.b16 %v1360, %v1359
  %v1385 = vpack.c.b16 %v1362, %v1361
  %v1386 = vpack.c.b16 %v1364, %v1363
  %v1387 = vpack.c.b16 %v1366, %v1365
  %v1388 = vpack.c.b16 %v1368, %v1367
  %v1389 = vpack.c.b16 %v1370, %v1369
  %v1390 = vpack.c.b16 %v1372, %v1371
  %v1391 = vpack.c.b16 %v1374, %v1373
  %v1392 = vpack.c.b16 %v1376, %v1375
  %v1393 = vpack.c.b16 %v1378, %v1377
  %v1394 = vpack.c.b16 %v1380, %v1379
  %v1395 = vpack.c.b16 %v1382, %v1381
  %1409 = vst [vmem:[%s6] sm:$0xff] %v1383
  %1410 = vst [vmem:[%s6 + $0x8] sm:$0xff] %v1384
  %1411 = vst [vmem:[%s6 + $0x10] sm:$0xff] %v1385
  %1412 = vst [vmem:[%s6 + $0x18] sm:$0xff] %v1386
  %1413 = vst [vmem:[%s6 + $0x20] sm:$0xff] %v1387
  %1414 = vst [vmem:[%s6 + $0x28] sm:$0xff] %v1388
  %1415 = vst [vmem:[%s6 + $0x30] sm:$0xff] %v1389
  %1416 = vst [vmem:[%s6 + $0x38] sm:$0xff] %v1390
  %1417 = vst [vmem:[%s6 + $0x40] sm:$0xff] %v1391
  %1418 = vst [vmem:[%s6 + $0x48] sm:$0xff] %v1392
  %1419 = vst [vmem:[%s6 + $0x50] sm:$0xff] %v1393
  %1420 = vst [vmem:[%s6 + $0x58] sm:$0xff] %v1394
  %1421 = vst [vmem:[%s6 + $0x60] sm:$0xff] %v1395
  // Predicated region
  $region26: #{_lambda_.5} parent=0 // pred_check
    _
  $region27: #{_lambda_.5} parent=0 // pred_check_branch
    %1423 = sbr.rel (0) target = $region29
  $region28: #{_lambda_.5} parent=0 // pred_region
    _
  $region29: #{_lambda_.5} parent=0 // pred_fallthru
    _
  // Predicated region
  $region30: #{_lambda_.5} parent=0 // pred_check
    _
  $region31: #{_lambda_.5} parent=0 // pred_check_branch
    %1425 = sbr.rel (0) target = $region33
  $region32: #{_lambda_.5} parent=0 // pred_region
    _
  $region33: #{_lambda_.5} parent=0 // pred_fallthru
    _

// kernel: _lambda_.4
$region0: #{_lambda_.4}
  #allocation0 [shape = 'u32[]', space=smem, size = 0x4, offset = 0x4, fixed_abs, tag = 'smem constant byte address 0x4 - core index']
  #allocation1 [shape = 'u32[144,128]{1,0:T(1,128)}', space=vmem, size = 0x12000, scoped, tag = 'internal scratch']
  %s0 = inlined_call_operand.vmem [shape: bf16[8,128], index: 0, kind: input, shape index: {}]
  %s1 = inlined_call_operand.hbm [shape: bf16[128,6272], index: 1, kind: input, shape index: {}]
  %s2 = inlined_call_operand.hbm [shape: f32[1,6272], index: 2, kind: input, shape index: {}]
  %s3 = inlined_call_operand.hbm [shape: f32[1,6272], index: 3, kind: input, shape index: {}]
  %s4 = inlined_call_operand.vmem [shape: bf16[8,6272], index: 4, kind: output, shape index: {}]
  %s5 = sld [smem:[#allocation0]]
  $region38: #{_lambda_.4} parent=0
    _
  %s7 = ssub.s32 1, %s5
  %s8 = scalar_select 0, %s7, %s5
  $region1: #{_lambda_.4} parent=0
    #allocation2 [shape = 'u8[1605632]{0}', space=vmem, size = 0x188000, scoped, tag = 'input window, operand 1, single buffered']
    #allocation3 [shape = 's32[1]{0}', space=sflag, size = 0x4, scoped, tag = 'scoped memory for _lambda_.4']
    #allocation4 [shape = 'u8[25088]{0}', space=vmem, size = 0x6400, scoped, tag = 'input window, operand 2, single buffered']
    #allocation5 [shape = 's32[1]{0}', space=sflag, size = 0x4, scoped, tag = 'scoped memory for _lambda_.4']
    #allocation6 [shape = 'u8[25088]{0}', space=vmem, size = 0x6400, scoped, tag = 'input window, operand 3, single buffered']
    %9 = vsyncpa [#allocation3], 0
    %10 = vsyncpa [#allocation5], 0
    // Predicated region
    $region2: #{_lambda_.4} parent=1 // pred_check
      _
    $region3: #{_lambda_.4} parent=1 // pred_check_branch
      %12 = sbr.rel (0) target = $region5
    $region4: #{_lambda_.4} parent=1 // pred_region
      _
    $region5: #{_lambda_.4} parent=1 // pred_fallthru
      _
    // Predicated region
    $region6: #{_lambda_.4} parent=1 // pred_check
      _
    $region7: #{_lambda_.4} parent=1 // pred_check_branch
      %14 = sbr.rel (0) target = $region9
    $region8: #{_lambda_.4} parent=1 // pred_region
      %s16 = ssub.s32 50176, 50176
      %17 = vsyncadd [#allocation3], %s16
      %s18 = sshll.u32 [#allocation2], 4
      %s19 = int_to_ptr.vmem [resolvable:$true] %s18
      %24 = dma.hbm_to_vmem [thread:$0]  %s1, 50176, %s19, [#allocation3], 3136, 3136, 196
    $region9: #{_lambda_.4} parent=1 // pred_fallthru
      _
    // Predicated region
    $region10: #{_lambda_.4} parent=1 // pred_check
      _
    $region11: #{_lambda_.4} parent=1 // pred_check_branch
      %26 = sbr.rel (0) target = $region13
    $region12: #{_lambda_.4} parent=1 // pred_region
      %s28 = ssub.s32 784, 784
      %29 = vsyncadd [#allocation5], %s28
      %s31 = sshll.u32 [#allocation4], 4
      %s32 = int_to_ptr.vmem [resolvable:$true] %s31
      %34 = dma.hbm_to_vmem [thread:$0]  %s2, 784, %s32, [#allocation5]
    $region13: #{_lambda_.4} parent=1 // pred_fallthru
      _
    // Predicated region
    $region14: #{_lambda_.4} parent=1 // pred_check
      _
    $region15: #{_lambda_.4} parent=1 // pred_check_branch
      %36 = sbr.rel (0) target = $region17
    $region16: #{_lambda_.4} parent=1 // pred_region
      %s38 = ssub.s32 784, 784
      %39 = vsyncadd [#allocation5], %s38
      %s41 = sshll.u32 [#allocation6], 4
      %s42 = int_to_ptr.vmem [resolvable:$true] %s41
      %44 = dma.hbm_to_vmem [thread:$0]  %s3, 784, %s42, [#allocation5]
    $region17: #{_lambda_.4} parent=1 // pred_fallthru
      _
    // Predicated region
    $region18: #{_lambda_.4} parent=1 // pred_check
      _
    $region19: #{_lambda_.4} parent=1 // pred_check_branch
      %46 = sbr.rel (0) target = $region21
    $region20: #{_lambda_.4} parent=1 // pred_region
      %47 = dma.done [#allocation3], 50176
    $region21: #{_lambda_.4} parent=1 // pred_fallthru
      _
    // Predicated region
    $region22: #{_lambda_.4} parent=1 // pred_check
      _
    $region23: #{_lambda_.4} parent=1 // pred_check_branch
      %49 = sbr.rel (0) target = $region25
    $region24: #{_lambda_.4} parent=1 // pred_region
      %50 = dma.done [#allocation5], 784
    $region25: #{_lambda_.4} parent=1 // pred_fallthru
      _
    // Predicated region
    $region26: #{_lambda_.4} parent=1 // pred_check
      _
    $region27: #{_lambda_.4} parent=1 // pred_check_branch
      %52 = sbr.rel (0) target = $region29
    $region28: #{_lambda_.4} parent=1 // pred_region
      %53 = dma.done [#allocation5], 784
    $region29: #{_lambda_.4} parent=1 // pred_fallthru
      _
    %v55 = vld [vmem:[%s0] sm:$0xf]
    %v56 = vld [vmem:[#allocation2] sm:$0xff]
    %v57 = vld [vmem:[#allocation2 + $0x8] sm:$0xff]
    %v58 = vld [vmem:[#allocation2 + $0x10] sm:$0xff]
    %v59 = vld [vmem:[#allocation2 + $0x18] sm:$0xff]
    %v60 = vld [vmem:[#allocation2 + $0x20] sm:$0xff]
    %v61 = vld [vmem:[#allocation2 + $0x28] sm:$0xff]
    %v62 = vld [vmem:[#allocation2 + $0x30] sm:$0xff]
    %v63 = vld [vmem:[#allocation2 + $0x38] sm:$0xff]
    %v64 = vld [vmem:[#allocation2 + $0x40] sm:$0xff]
    %v65 = vld [vmem:[#allocation2 + $0x48] sm:$0xff]
    %v66 = vld [vmem:[#allocation2 + $0x50] sm:$0xff]
    %v67 = vld [vmem:[#allocation2 + $0x58] sm:$0xff]
    %v68 = vld [vmem:[#allocation2 + $0x60] sm:$0xff]
    %v69 = vld [vmem:[#allocation2 + $0x68] sm:$0xff]
    %v70 = vld [vmem:[#allocation2 + $0x70] sm:$0xff]
    %v71 = vld [vmem:[#allocation2 + $0x78] sm:$0xff]
    %v72 = vld [vmem:[#allocation2 + $0x80] sm:$0xff]
    %v73 = vld [vmem:[#allocation2 + $0x88] sm:$0xff]
    %v74 = vld [vmem:[#allocation2 + $0x90] sm:$0xff]
    %v75 = vld [vmem:[#allocation2 + $0x98] sm:$0xff]
    %v76 = vld [vmem:[#allocation2 + $0xa0] sm:$0xff]
    %v77 = vld [vmem:[#allocation2 + $0xa8] sm:$0xff]
    %v78 = vld [vmem:[#allocation2 + $0xb0] sm:$0xff]
    %v79 = vld [vmem:[#allocation2 + $0xb8] sm:$0xff]
    %v80 = vld [vmem:[#allocation2 + $0xc0] sm:$0xf]
    %v81 = vld [vmem:[#allocation2 + $0xc4] sm:$0xff]
    %v82 = vld [vmem:[#allocation2 + $0xcc] sm:$0xff]
    %v83 = vld [vmem:[#allocation2 + $0xd4] sm:$0xff]
    %v84 = vld [vmem:[#allocation2 + $0xdc] sm:$0xff]
    %v85 = vld [vmem:[#allocation2 + $0xe4] sm:$0xff]
    %v86 = vld [vmem:[#allocation2 + $0xec] sm:$0xff]
    %v87 = vld [vmem:[#allocation2 + $0xf4] sm:$0xff]
    %v88 = vld [vmem:[#allocation2 + $0xfc] sm:$0xff]
    %v89 = vld [vmem:[#allocation2 + $0x104] sm:$0xff]
    %v90 = vld [vmem:[#allocation2 + $0x10c] sm:$0xff]
    %v91 = vld [vmem:[#allocation2 + $0x114] sm:$0xff]
    %v92 = vld [vmem:[#allocation2 + $0x11c] sm:$0xff]
    %v93 = vld [vmem:[#allocation2 + $0x124] sm:$0xff]
    %v94 = vld [vmem:[#allocation2 + $0x12c] sm:$0xff]
    %v95 = vld [vmem:[#allocation2 + $0x134] sm:$0xff]
    %v96 = vld [vmem:[#allocation2 + $0x13c] sm:$0xff]
    %v97 = vld [vmem:[#allocation2 + $0x144] sm:$0xff]
    %v98 = vld [vmem:[#allocation2 + $0x14c] sm:$0xff]
    %v99 = vld [vmem:[#allocation2 + $0x154] sm:$0xff]
    %v100 = vld [vmem:[#allocation2 + $0x15c] sm:$0xff]
    %v101 = vld [vmem:[#allocation2 + $0x164] sm:$0xff]
    %v102 = vld [vmem:[#allocation2 + $0x16c] sm:$0xff]
    %v103 = vld [vmem:[#allocation2 + $0x174] sm:$0xff]
    %v104 = vld [vmem:[#allocation2 + $0x17c] sm:$0xff]
    %v105 = vld [vmem:[#allocation2 + $0x184] sm:$0xf]
    %v106 = vld [vmem:[#allocation2 + $0x188] sm:$0xff]
    %v107 = vld [vmem:[#allocation2 + $0x190] sm:$0xff]
    %v108 = vld [vmem:[#allocation2 + $0x198] sm:$0xff]
    %v109 = vld [vmem:[#allocation2 + $0x1a0] sm:$0xff]
    %v110 = vld [vmem:[#allocation2 + $0x1a8] sm:$0xff]
    %v111 = vld [vmem:[#allocation2 + $0x1b0] sm:$0xff]
    %v112 = vld [vmem:[#allocation2 + $0x1b8] sm:$0xff]
    %v113 = vld [vmem:[#allocation2 + $0x1c0] sm:$0xff]
    %v114 = vld [vmem:[#allocation2 + $0x1c8] sm:$0xff]
    %v115 = vld [vmem:[#allocation2 + $0x1d0] sm:$0xff]
    %v116 = vld [vmem:[#allocation2 + $0x1d8] sm:$0xff]
    %v117 = vld [vmem:[#allocation2 + $0x1e0] sm:$0xff]
    %v118 = vld [vmem:[#allocation2 + $0x1e8] sm:$0xff]
    %v119 = vld [vmem:[#allocation2 + $0x1f0] sm:$0xff]
    %v120 = vld [vmem:[#allocation2 + $0x1f8] sm:$0xff]
    %v121 = vld [vmem:[#allocation2 + $0x200] sm:$0xff]
    %v122 = vld [vmem:[#allocation2 + $0x208] sm:$0xff]
    %v123 = vld [vmem:[#allocation2 + $0x210] sm:$0xff]
    %v124 = vld [vmem:[#allocation2 + $0x218] sm:$0xff]
    %v125 = vld [vmem:[#allocation2 + $0x220] sm:$0xff]
    %v126 = vld [vmem:[#allocation2 + $0x228] sm:$0xff]
    %v127 = vld [vmem:[#allocation2 + $0x230] sm:$0xff]
    %v128 = vld [vmem:[#allocation2 + $0x238] sm:$0xff]
    %v129 = vld [vmem:[#allocation2 + $0x240] sm:$0xff]
    %v130 = vld [vmem:[#allocation2 + $0x248] sm:$0xf]
    %v131 = vld [vmem:[#allocation2 + $0x24c] sm:$0xff]
    %v132 = vld [vmem:[#allocation2 + $0x254] sm:$0xff]
    %v133 = vld [vmem:[#allocation2 + $0x25c] sm:$0xff]
    %v134 = vld [vmem:[#allocation2 + $0x264] sm:$0xff]
    %v135 = vld [vmem:[#allocation2 + $0x26c] sm:$0xff]
    %v136 = vld [vmem:[#allocation2 + $0x274] sm:$0xff]
    %v137 = vld [vmem:[#allocation2 + $0x27c] sm:$0xff]
    %v138 = vld [vmem:[#allocation2 + $0x284] sm:$0xff]
    %v139 = vld [vmem:[#allocation2 + $0x28c] sm:$0xff]
    %v140 = vld [vmem:[#allocation2 + $0x294] sm:$0xff]
    %v141 = vld [vmem:[#allocation2 + $0x29c] sm:$0xff]
    %v142 = vld [vmem:[#allocation2 + $0x2a4] sm:$0xff]
    %v143 = vld [vmem:[#allocation2 + $0x2ac] sm:$0xff]
    %v144 = vld [vmem:[#allocation2 + $0x2b4] sm:$0xff]
    %v145 = vld [vmem:[#allocation2 + $0x2bc] sm:$0xff]
    %v146 = vld [vmem:[#allocation2 + $0x2c4] sm:$0xff]
    %v147 = vld [vmem:[#allocation2 + $0x2cc] sm:$0xff]
    %v148 = vld [vmem:[#allocation2 + $0x2d4] sm:$0xff]
    %v149 = vld [vmem:[#allocation2 + $0x2dc] sm:$0xff]
    %v150 = vld [vmem:[#allocation2 + $0x2e4] sm:$0xff]
    %v151 = vld [vmem:[#allocation2 + $0x2ec] sm:$0xff]
    %v152 = vld [vmem:[#allocation2 + $0x2f4] sm:$0xff]
    %v153 = vld [vmem:[#allocation2 + $0x2fc] sm:$0xff]
    %v154 = vld [vmem:[#allocation2 + $0x304] sm:$0xff]
    %v155 = vld [vmem:[#allocation2 + $0x30c] sm:$0xf]
    %v156 = vld [vmem:[#allocation2 + $0x310] sm:$0xff]
    %v157 = vld [vmem:[#allocation2 + $0x318] sm:$0xff]
    %v158 = vld [vmem:[#allocation2 + $0x320] sm:$0xff]
    %v159 = vld [vmem:[#allocation2 + $0x328] sm:$0xff]
    %v160 = vld [vmem:[#allocation2 + $0x330] sm:$0xff]
    %v161 = vld [vmem:[#allocation2 + $0x338] sm:$0xff]
    %v162 = vld [vmem:[#allocation2 + $0x340] sm:$0xff]
    %v163 = vld [vmem:[#allocation2 + $0x348] sm:$0xff]
    %v164 = vld [vmem:[#allocation2 + $0x350] sm:$0xff]
    %v165 = vld [vmem:[#allocation2 + $0x358] sm:$0xff]
    %v166 = vld [vmem:[#allocation2 + $0x360] sm:$0xff]
    %v167 = vld [vmem:[#allocation2 + $0x368] sm:$0xff]
    %v168 = vld [vmem:[#allocation2 + $0x370] sm:$0xff]
    %v169 = vld [vmem:[#allocation2 + $0x378] sm:$0xff]
    %v170 = vld [vmem:[#allocation2 + $0x380] sm:$0xff]
    %v171 = vld [vmem:[#allocation2 + $0x388] sm:$0xff]
    %v172 = vld [vmem:[#allocation2 + $0x390] sm:$0xff]
    %v173 = vld [vmem:[#allocation2 + $0x398] sm:$0xff]
    %v174 = vld [vmem:[#allocation2 + $0x3a0] sm:$0xff]
    %v175 = vld [vmem:[#allocation2 + $0x3a8] sm:$0xff]
    %v176 = vld [vmem:[#allocation2 + $0x3b0] sm:$0xff]
    %v177 = vld [vmem:[#allocation2 + $0x3b8] sm:$0xff]
    %v178 = vld [vmem:[#allocation2 + $0x3c0] sm:$0xff]
    %v179 = vld [vmem:[#allocation2 + $0x3c8] sm:$0xff]
    %v180 = vld [vmem:[#allocation2 + $0x3d0] sm:$0xf]
    %v181 = vld [vmem:[#allocation2 + $0x3d4] sm:$0xff]
    %v182 = vld [vmem:[#allocation2 + $0x3dc] sm:$0xff]
    %v183 = vld [vmem:[#allocation2 + $0x3e4] sm:$0xff]
    %v184 = vld [vmem:[#allocation2 + $0x3ec] sm:$0xff]
    %v185 = vld [vmem:[#allocation2 + $0x3f4] sm:$0xff]
    %v186 = vld [vmem:[#allocation2 + $0x3fc] sm:$0xff]
    %v187 = vld [vmem:[#allocation2 + $0x404] sm:$0xff]
    %v188 = vld [vmem:[#allocation2 + $0x40c] sm:$0xff]
    %v189 = vld [vmem:[#allocation2 + $0x414] sm:$0xff]
    %v190 = vld [vmem:[#allocation2 + $0x41c] sm:$0xff]
    %v191 = vld [vmem:[#allocation2 + $0x424] sm:$0xff]
    %v192 = vld [vmem:[#allocation2 + $0x42c] sm:$0xff]
    %v193 = vld [vmem:[#allocation2 + $0x434] sm:$0xff]
    %v194 = vld [vmem:[#allocation2 + $0x43c] sm:$0xff]
    %v195 = vld [vmem:[#allocation2 + $0x444] sm:$0xff]
    %v196 = vld [vmem:[#allocation2 + $0x44c] sm:$0xff]
    %v197 = vld [vmem:[#allocation2 + $0x454] sm:$0xff]
    %v198 = vld [vmem:[#allocation2 + $0x45c] sm:$0xff]
    %v199 = vld [vmem:[#allocation2 + $0x464] sm:$0xff]
    %v200 = vld [vmem:[#allocation2 + $0x46c] sm:$0xff]
    %v201 = vld [vmem:[#allocation2 + $0x474] sm:$0xff]
    %v202 = vld [vmem:[#allocation2 + $0x47c] sm:$0xff]
    %v203 = vld [vmem:[#allocation2 + $0x484] sm:$0xff]
    %v204 = vld [vmem:[#allocation2 + $0x48c] sm:$0xff]
    %v205 = vld [vmem:[#allocation2 + $0x494] sm:$0xf]
    %v206 = vld [vmem:[#allocation2 + $0x498] sm:$0xff]
    %v207 = vld [vmem:[#allocation2 + $0x4a0] sm:$0xff]
    %v208 = vld [vmem:[#allocation2 + $0x4a8] sm:$0xff]
    %v209 = vld [vmem:[#allocation2 + $0x4b0] sm:$0xff]
    %v210 = vld [vmem:[#allocation2 + $0x4b8] sm:$0xff]
    %v211 = vld [vmem:[#allocation2 + $0x4c0] sm:$0xff]
    %v212 = vld [vmem:[#allocation2 + $0x4c8] sm:$0xff]
    %v213 = vld [vmem:[#allocation2 + $0x4d0] sm:$0xff]
    %v214 = vld [vmem:[#allocation2 + $0x4d8] sm:$0xff]
    %v215 = vld [vmem:[#allocation2 + $0x4e0] sm:$0xff]
    %v216 = vld [vmem:[#allocation2 + $0x4e8] sm:$0xff]
    %v217 = vld [vmem:[#allocation2 + $0x4f0] sm:$0xff]
    %v218 = vld [vmem:[#allocation2 + $0x4f8] sm:$0xff]
    %v219 = vld [vmem:[#allocation2 + $0x500] sm:$0xff]
    %v220 = vld [vmem:[#allocation2 + $0x508] sm:$0xff]
    %v221 = vld [vmem:[#allocation2 + $0x510] sm:$0xff]
    %v222 = vld [vmem:[#allocation2 + $0x518] sm:$0xff]
    %v223 = vld [vmem:[#allocation2 + $0x520] sm:$0xff]
    %v224 = vld [vmem:[#allocation2 + $0x528] sm:$0xff]
    %v225 = vld [vmem:[#allocation2 + $0x530] sm:$0xff]
    %v226 = vld [vmem:[#allocation2 + $0x538] sm:$0xff]
    %v227 = vld [vmem:[#allocation2 + $0x540] sm:$0xff]
    %v228 = vld [vmem:[#allocation2 + $0x548] sm:$0xff]
    %v229 = vld [vmem:[#allocation2 + $0x550] sm:$0xff]
    %v230 = vld [vmem:[#allocation2 + $0x558] sm:$0xf]
    %v231 = vld [vmem:[#allocation2 + $0x55c] sm:$0xff]
    %v232 = vld [vmem:[#allocation2 + $0x564] sm:$0xff]
    %v233 = vld [vmem:[#allocation2 + $0x56c] sm:$0xff]
    %v234 = vld [vmem:[#allocation2 + $0x574] sm:$0xff]
    %v235 = vld [vmem:[#allocation2 + $0x57c] sm:$0xff]
    %v236 = vld [vmem:[#allocation2 + $0x584] sm:$0xff]
    %v237 = vld [vmem:[#allocation2 + $0x58c] sm:$0xff]
    %v238 = vld [vmem:[#allocation2 + $0x594] sm:$0xff]
    %v239 = vld [vmem:[#allocation2 + $0x59c] sm:$0xff]
    %v240 = vld [vmem:[#allocation2 + $0x5a4] sm:$0xff]
    %v241 = vld [vmem:[#allocation2 + $0x5ac] sm:$0xff]
    %v242 = vld [vmem:[#allocation2 + $0x5b4] sm:$0xff]
    %v243 = vld [vmem:[#allocation2 + $0x5bc] sm:$0xff]
    %v244 = vld [vmem:[#allocation2 + $0x5c4] sm:$0xff]
    %v245 = vld [vmem:[#allocation2 + $0x5cc] sm:$0xff]
    %v246 = vld [vmem:[#allocation2 + $0x5d4] sm:$0xff]
    %v247 = vld [vmem:[#allocation2 + $0x5dc] sm:$0xff]
    %v248 = vld [vmem:[#allocation2 + $0x5e4] sm:$0xff]
    %v249 = vld [vmem:[#allocation2 + $0x5ec] sm:$0xff]
    %v250 = vld [vmem:[#allocation2 + $0x5f4] sm:$0xff]
    %v251 = vld [vmem:[#allocation2 + $0x5fc] sm:$0xff]
    %v252 = vld [vmem:[#allocation2 + $0x604] sm:$0xff]
    %v253 = vld [vmem:[#allocation2 + $0x60c] sm:$0xff]
    %v254 = vld [vmem:[#allocation2 + $0x614] sm:$0xff]
    %v255 = vld [vmem:[#allocation2 + $0x61c] sm:$0xf]
    %v256 = vld [vmem:[#allocation2 + $0x620] sm:$0xff]
    %v257 = vld [vmem:[#allocation2 + $0x628] sm:$0xff]
    %v258 = vld [vmem:[#allocation2 + $0x630] sm:$0xff]
    %v259 = vld [vmem:[#allocation2 + $0x638] sm:$0xff]
    %v260 = vld [vmem:[#allocation2 + $0x640] sm:$0xff]
    %v261 = vld [vmem:[#allocation2 + $0x648] sm:$0xff]
    %v262 = vld [vmem:[#allocation2 + $0x650] sm:$0xff]
    %v263 = vld [vmem:[#allocation2 + $0x658] sm:$0xff]
    %v264 = vld [vmem:[#allocation2 + $0x660] sm:$0xff]
    %v265 = vld [vmem:[#allocation2 + $0x668] sm:$0xff]
    %v266 = vld [vmem:[#allocation2 + $0x670] sm:$0xff]
    %v267 = vld [vmem:[#allocation2 + $0x678] sm:$0xff]
    %v268 = vld [vmem:[#allocation2 + $0x680] sm:$0xff]
    %v269 = vld [vmem:[#allocation2 + $0x688] sm:$0xff]
    %v270 = vld [vmem:[#allocation2 + $0x690] sm:$0xff]
    %v271 = vld [vmem:[#allocation2 + $0x698] sm:$0xff]
    %v272 = vld [vmem:[#allocation2 + $0x6a0] sm:$0xff]
    %v273 = vld [vmem:[#allocation2 + $0x6a8] sm:$0xff]
    %v274 = vld [vmem:[#allocation2 + $0x6b0] sm:$0xff]
    %v275 = vld [vmem:[#allocation2 + $0x6b8] sm:$0xff]
    %v276 = vld [vmem:[#allocation2 + $0x6c0] sm:$0xff]
    %v277 = vld [vmem:[#allocation2 + $0x6c8] sm:$0xff]
    %v278 = vld [vmem:[#allocation2 + $0x6d0] sm:$0xff]
    %v279 = vld [vmem:[#allocation2 + $0x6d8] sm:$0xff]
    %v280 = vld [vmem:[#allocation2 + $0x6e0] sm:$0xf]
    %v281 = vld [vmem:[#allocation2 + $0x6e4] sm:$0xff]
    %v282 = vld [vmem:[#allocation2 + $0x6ec] sm:$0xff]
    %v283 = vld [vmem:[#allocation2 + $0x6f4] sm:$0xff]
    %v284 = vld [vmem:[#allocation2 + $0x6fc] sm:$0xff]
    %v285 = vld [vmem:[#allocation2 + $0x704] sm:$0xff]
    %v286 = vld [vmem:[#allocation2 + $0x70c] sm:$0xff]
    %v287 = vld [vmem:[#allocation2 + $0x714] sm:$0xff]
    %v288 = vld [vmem:[#allocation2 + $0x71c] sm:$0xff]
    %v289 = vld [vmem:[#allocation2 + $0x724] sm:$0xff]
    %v290 = vld [vmem:[#allocation2 + $0x72c] sm:$0xff]
    %v291 = vld [vmem:[#allocation2 + $0x734] sm:$0xff]
    %v292 = vld [vmem:[#allocation2 + $0x73c] sm:$0xff]
    %v293 = vld [vmem:[#allocation2 + $0x744] sm:$0xff]
    %v294 = vld [vmem:[#allocation2 + $0x74c] sm:$0xff]
    %v295 = vld [vmem:[#allocation2 + $0x754] sm:$0xff]
    %v296 = vld [vmem:[#allocation2 + $0x75c] sm:$0xff]
    %v297 = vld [vmem:[#allocation2 + $0x764] sm:$0xff]
    %v298 = vld [vmem:[#allocation2 + $0x76c] sm:$0xff]
    %v299 = vld [vmem:[#allocation2 + $0x774] sm:$0xff]
    %v300 = vld [vmem:[#allocation2 + $0x77c] sm:$0xff]
    %v301 = vld [vmem:[#allocation2 + $0x784] sm:$0xff]
    %v302 = vld [vmem:[#allocation2 + $0x78c] sm:$0xff]
    %v303 = vld [vmem:[#allocation2 + $0x794] sm:$0xff]
    %v304 = vld [vmem:[#allocation2 + $0x79c] sm:$0xff]
    %v305 = vld [vmem:[#allocation2 + $0x7a4] sm:$0xf]
    %v306 = vld [vmem:[#allocation2 + $0x7a8] sm:$0xff]
    %v307 = vld [vmem:[#allocation2 + $0x7b0] sm:$0xff]
    %v308 = vld [vmem:[#allocation2 + $0x7b8] sm:$0xff]
    %v309 = vld [vmem:[#allocation2 + $0x7c0] sm:$0xff]
    %v310 = vld [vmem:[#allocation2 + $0x7c8] sm:$0xff]
    %v311 = vld [vmem:[#allocation2 + $0x7d0] sm:$0xff]
    %v312 = vld [vmem:[#allocation2 + $0x7d8] sm:$0xff]
    %v313 = vld [vmem:[#allocation2 + $0x7e0] sm:$0xff]
    %v314 = vld [vmem:[#allocation2 + $0x7e8] sm:$0xff]
    %v315 = vld [vmem:[#allocation2 + $0x7f0] sm:$0xff]
    %v316 = vld [vmem:[#allocation2 + $0x7f8] sm:$0xff]
    %v317 = vld [vmem:[#allocation2 + $0x800] sm:$0xff]
    %v318 = vld [vmem:[#allocation2 + $0x808] sm:$0xff]
    %v319 = vld [vmem:[#allocation2 + $0x810] sm:$0xff]
    %v320 = vld [vmem:[#allocation2 + $0x818] sm:$0xff]
    %v321 = vld [vmem:[#allocation2 + $0x820] sm:$0xff]
    %v322 = vld [vmem:[#allocation2 + $0x828] sm:$0xff]
    %v323 = vld [vmem:[#allocation2 + $0x830] sm:$0xff]
    %v324 = vld [vmem:[#allocation2 + $0x838] sm:$0xff]
    %v325 = vld [vmem:[#allocation2 + $0x840] sm:$0xff]
    %v326 = vld [vmem:[#allocation2 + $0x848] sm:$0xff]
    %v327 = vld [vmem:[#allocation2 + $0x850] sm:$0xff]
    %v328 = vld [vmem:[#allocation2 + $0x858] sm:$0xff]
    %v329 = vld [vmem:[#allocation2 + $0x860] sm:$0xff]
    %v330 = vld [vmem:[#allocation2 + $0x868] sm:$0xf]
    %v331 = vld [vmem:[#allocation2 + $0x86c] sm:$0xff]
    %v332 = vld [vmem:[#allocation2 + $0x874] sm:$0xff]
    %v333 = vld [vmem:[#allocation2 + $0x87c] sm:$0xff]
    %v334 = vld [vmem:[#allocation2 + $0x884] sm:$0xff]
    %v335 = vld [vmem:[#allocation2 + $0x88c] sm:$0xff]
    %v336 = vld [vmem:[#allocation2 + $0x894] sm:$0xff]
    %v337 = vld [vmem:[#allocation2 + $0x89c] sm:$0xff]
    %v338 = vld [vmem:[#allocation2 + $0x8a4] sm:$0xff]
    %v339 = vld [vmem:[#allocation2 + $0x8ac] sm:$0xff]
    %v340 = vld [vmem:[#allocation2 + $0x8b4] sm:$0xff]
    %v341 = vld [vmem:[#allocation2 + $0x8bc] sm:$0xff]
    %v342 = vld [vmem:[#allocation2 + $0x8c4] sm:$0xff]
    %v343 = vld [vmem:[#allocation2 + $0x8cc] sm:$0xff]
    %v344 = vld [vmem:[#allocation2 + $0x8d4] sm:$0xff]
    %v345 = vld [vmem:[#allocation2 + $0x8dc] sm:$0xff]
    %v346 = vld [vmem:[#allocation2 + $0x8e4] sm:$0xff]
    %v347 = vld [vmem:[#allocation2 + $0x8ec] sm:$0xff]
    %v348 = vld [vmem:[#allocation2 + $0x8f4] sm:$0xff]
    %v349 = vld [vmem:[#allocation2 + $0x8fc] sm:$0xff]
    %v350 = vld [vmem:[#allocation2 + $0x904] sm:$0xff]
    %v351 = vld [vmem:[#allocation2 + $0x90c] sm:$0xff]
    %v352 = vld [vmem:[#allocation2 + $0x914] sm:$0xff]
    %v353 = vld [vmem:[#allocation2 + $0x91c] sm:$0xff]
    %v354 = vld [vmem:[#allocation2 + $0x924] sm:$0xff]
    %v355 = vld [vmem:[#allocation2 + $0x92c] sm:$0xf]
    %v356 = vld [vmem:[#allocation2 + $0x930] sm:$0xff]
    %v357 = vld [vmem:[#allocation2 + $0x938] sm:$0xff]
    %v358 = vld [vmem:[#allocation2 + $0x940] sm:$0xff]
    %v359 = vld [vmem:[#allocation2 + $0x948] sm:$0xff]
    %v360 = vld [vmem:[#allocation2 + $0x950] sm:$0xff]
    %v361 = vld [vmem:[#allocation2 + $0x958] sm:$0xff]
    %v362 = vld [vmem:[#allocation2 + $0x960] sm:$0xff]
    %v363 = vld [vmem:[#allocation2 + $0x968] sm:$0xff]
    %v364 = vld [vmem:[#allocation2 + $0x970] sm:$0xff]
    %v365 = vld [vmem:[#allocation2 + $0x978] sm:$0xff]
    %v366 = vld [vmem:[#allocation2 + $0x980] sm:$0xff]
    %v367 = vld [vmem:[#allocation2 + $0x988] sm:$0xff]
    %v368 = vld [vmem:[#allocation2 + $0x990] sm:$0xff]
    %v369 = vld [vmem:[#allocation2 + $0x998] sm:$0xff]
    %v370 = vld [vmem:[#allocation2 + $0x9a0] sm:$0xff]
    %v371 = vld [vmem:[#allocation2 + $0x9a8] sm:$0xff]
    %v372 = vld [vmem:[#allocation2 + $0x9b0] sm:$0xff]
    %v373 = vld [vmem:[#allocation2 + $0x9b8] sm:$0xff]
    %v374 = vld [vmem:[#allocation2 + $0x9c0] sm:$0xff]
    %v375 = vld [vmem:[#allocation2 + $0x9c8] sm:$0xff]
    %v376 = vld [vmem:[#allocation2 + $0x9d0] sm:$0xff]
    %v377 = vld [vmem:[#allocation2 + $0x9d8] sm:$0xff]
    %v378 = vld [vmem:[#allocation2 + $0x9e0] sm:$0xff]
    %v379 = vld [vmem:[#allocation2 + $0x9e8] sm:$0xff]
    %v380 = vld [vmem:[#allocation2 + $0x9f0] sm:$0xf]
    %v381 = vld [vmem:[#allocation2 + $0x9f4] sm:$0xff]
    %v382 = vld [vmem:[#allocation2 + $0x9fc] sm:$0xff]
    %v383 = vld [vmem:[#allocation2 + $0xa04] sm:$0xff]
    %v384 = vld [vmem:[#allocation2 + $0xa0c] sm:$0xff]
    %v385 = vld [vmem:[#allocation2 + $0xa14] sm:$0xff]
    %v386 = vld [vmem:[#allocation2 + $0xa1c] sm:$0xff]
    %v387 = vld [vmem:[#allocation2 + $0xa24] sm:$0xff]
    %v388 = vld [vmem:[#allocation2 + $0xa2c] sm:$0xff]
    %v389 = vld [vmem:[#allocation2 + $0xa34] sm:$0xff]
    %v390 = vld [vmem:[#allocation2 + $0xa3c] sm:$0xff]
    %v391 = vld [vmem:[#allocation2 + $0xa44] sm:$0xff]
    %v392 = vld [vmem:[#allocation2 + $0xa4c] sm:$0xff]
    %v393 = vld [vmem:[#allocation2 + $0xa54] sm:$0xff]
    %v394 = vld [vmem:[#allocation2 + $0xa5c] sm:$0xff]
    %v395 = vld [vmem:[#allocation2 + $0xa64] sm:$0xff]
    %v396 = vld [vmem:[#allocation2 + $0xa6c] sm:$0xff]
    %v397 = vld [vmem:[#allocation2 + $0xa74] sm:$0xff]
    %v398 = vld [vmem:[#allocation2 + $0xa7c] sm:$0xff]
    %v399 = vld [vmem:[#allocation2 + $0xa84] sm:$0xff]
    %v400 = vld [vmem:[#allocation2 + $0xa8c] sm:$0xff]
    %v401 = vld [vmem:[#allocation2 + $0xa94] sm:$0xff]
    %v402 = vld [vmem:[#allocation2 + $0xa9c] sm:$0xff]
    %v403 = vld [vmem:[#allocation2 + $0xaa4] sm:$0xff]
    %v404 = vld [vmem:[#allocation2 + $0xaac] sm:$0xff]
    %v405 = vld [vmem:[#allocation2 + $0xab4] sm:$0xf]
    %v406 = vld [vmem:[#allocation2 + $0xab8] sm:$0xff]
    %v407 = vld [vmem:[#allocation2 + $0xac0] sm:$0xff]
    %v408 = vld [vmem:[#allocation2 + $0xac8] sm:$0xff]
    %v409 = vld [vmem:[#allocation2 + $0xad0] sm:$0xff]
    %v410 = vld [vmem:[#allocation2 + $0xad8] sm:$0xff]
    %v411 = vld [vmem:[#allocation2 + $0xae0] sm:$0xff]
    %v412 = vld [vmem:[#allocation2 + $0xae8] sm:$0xff]
    %v413 = vld [vmem:[#allocation2 + $0xaf0] sm:$0xff]
    %v414 = vld [vmem:[#allocation2 + $0xaf8] sm:$0xff]
    %v415 = vld [vmem:[#allocation2 + $0xb00] sm:$0xff]
    %v416 = vld [vmem:[#allocation2 + $0xb08] sm:$0xff]
    %v417 = vld [vmem:[#allocation2 + $0xb10] sm:$0xff]
    %v418 = vld [vmem:[#allocation2 + $0xb18] sm:$0xff]
    %v419 = vld [vmem:[#allocation2 + $0xb20] sm:$0xff]
    %v420 = vld [vmem:[#allocation2 + $0xb28] sm:$0xff]
    %v421 = vld [vmem:[#allocation2 + $0xb30] sm:$0xff]
    %v422 = vld [vmem:[#allocation2 + $0xb38] sm:$0xff]
    %v423 = vld [vmem:[#allocation2 + $0xb40] sm:$0xff]
    %v424 = vld [vmem:[#allocation2 + $0xb48] sm:$0xff]
    %v425 = vld [vmem:[#allocation2 + $0xb50] sm:$0xff]
    %v426 = vld [vmem:[#allocation2 + $0xb58] sm:$0xff]
    %v427 = vld [vmem:[#allocation2 + $0xb60] sm:$0xff]
    %v428 = vld [vmem:[#allocation2 + $0xb68] sm:$0xff]
    %v429 = vld [vmem:[#allocation2 + $0xb70] sm:$0xff]
    %v430 = vld [vmem:[#allocation2 + $0xb78] sm:$0xf]
    %v431 = vld [vmem:[#allocation2 + $0xb7c] sm:$0xff]
    %v432 = vld [vmem:[#allocation2 + $0xb84] sm:$0xff]
    %v433 = vld [vmem:[#allocation2 + $0xb8c] sm:$0xff]
    %v434 = vld [vmem:[#allocation2 + $0xb94] sm:$0xff]
    %v435 = vld [vmem:[#allocation2 + $0xb9c] sm:$0xff]
    %v436 = vld [vmem:[#allocation2 + $0xba4] sm:$0xff]
    %v437 = vld [vmem:[#allocation2 + $0xbac] sm:$0xff]
    %v438 = vld [vmem:[#allocation2 + $0xbb4] sm:$0xff]
    %v439 = vld [vmem:[#allocation2 + $0xbbc] sm:$0xff]
    %v440 = vld [vmem:[#allocation2 + $0xbc4] sm:$0xff]
    %v441 = vld [vmem:[#allocation2 + $0xbcc] sm:$0xff]
    %v442 = vld [vmem:[#allocation2 + $0xbd4] sm:$0xff]
    %v443 = vld [vmem:[#allocation2 + $0xbdc] sm:$0xff]
    %v444 = vld [vmem:[#allocation2 + $0xbe4] sm:$0xff]
    %v445 = vld [vmem:[#allocation2 + $0xbec] sm:$0xff]
    %v446 = vld [vmem:[#allocation2 + $0xbf4] sm:$0xff]
    %v447 = vld [vmem:[#allocation2 + $0xbfc] sm:$0xff]
    %v448 = vld [vmem:[#allocation2 + $0xc04] sm:$0xff]
    %v449 = vld [vmem:[#allocation2 + $0xc0c] sm:$0xff]
    %v450 = vld [vmem:[#allocation2 + $0xc14] sm:$0xff]
    %v451 = vld [vmem:[#allocation2 + $0xc1c] sm:$0xff]
    %v452 = vld [vmem:[#allocation2 + $0xc24] sm:$0xff]
    %v453 = vld [vmem:[#allocation2 + $0xc2c] sm:$0xff]
    %v454 = vld [vmem:[#allocation2 + $0xc34] sm:$0xff]
    %v455 = vld [vmem:[#allocation2 + $0xc3c] sm:$0xf]
    %v856 = vunpack.c.l.b16 %v56
    %v857 = vunpack.c.h.b16 %v56
    %v858 = vunpack.c.l.b16 %v57
    %v859 = vunpack.c.h.b16 %v57
    %v860 = vunpack.c.l.b16 %v58
    %v861 = vunpack.c.h.b16 %v58
    %v862 = vunpack.c.l.b16 %v59
    %v863 = vunpack.c.h.b16 %v59
    %v864 = vunpack.c.l.b16 %v60
    %v865 = vunpack.c.h.b16 %v60
    %v866 = vunpack.c.l.b16 %v61
    %v867 = vunpack.c.h.b16 %v61
    %v868 = vunpack.c.l.b16 %v62
    %v869 = vunpack.c.h.b16 %v62
    %v870 = vunpack.c.l.b16 %v63
    %v871 = vunpack.c.h.b16 %v63
    %v872 = vunpack.c.l.b16 %v64
    %v873 = vunpack.c.h.b16 %v64
    %v874 = vunpack.c.l.b16 %v65
    %v875 = vunpack.c.h.b16 %v65
    %v876 = vunpack.c.l.b16 %v66
    %v877 = vunpack.c.h.b16 %v66
    %v878 = vunpack.c.l.b16 %v67
    %v879 = vunpack.c.h.b16 %v67
    %v880 = vunpack.c.l.b16 %v68
    %v881 = vunpack.c.h.b16 %v68
    %v882 = vunpack.c.l.b16 %v69
    %v883 = vunpack.c.h.b16 %v69
    %v884 = vunpack.c.l.b16 %v70
    %v885 = vunpack.c.h.b16 %v70
    %v886 = vunpack.c.l.b16 %v71
    %v887 = vunpack.c.h.b16 %v71
    %v888 = vunpack.c.l.b16 %v72
    %v889 = vunpack.c.h.b16 %v72
    %v890 = vunpack.c.l.b16 %v73
    %v891 = vunpack.c.h.b16 %v73
    %v892 = vunpack.c.l.b16 %v74
    %v893 = vunpack.c.h.b16 %v74
    %v894 = vunpack.c.l.b16 %v75
    %v895 = vunpack.c.h.b16 %v75
    %v896 = vunpack.c.l.b16 %v76
    %v897 = vunpack.c.h.b16 %v76
    %v898 = vunpack.c.l.b16 %v77
    %v899 = vunpack.c.h.b16 %v77
    %v900 = vunpack.c.l.b16 %v78
    %v901 = vunpack.c.h.b16 %v78
    %v902 = vunpack.c.l.b16 %v79
    %v903 = vunpack.c.h.b16 %v79
    %v904 = vunpack.c.l.b16 %v80
    %v905 = vunpack.c.l.b16 %v81
    %v906 = vunpack.c.h.b16 %v81
    %v907 = vunpack.c.l.b16 %v82
    %v908 = vunpack.c.h.b16 %v82
    %v909 = vunpack.c.l.b16 %v83
    %v910 = vunpack.c.h.b16 %v83
    %v911 = vunpack.c.l.b16 %v84
    %v912 = vunpack.c.h.b16 %v84
    %v913 = vunpack.c.l.b16 %v85
    %v914 = vunpack.c.h.b16 %v85
    %v915 = vunpack.c.l.b16 %v86
    %v916 = vunpack.c.h.b16 %v86
    %v917 = vunpack.c.l.b16 %v87
    %v918 = vunpack.c.h.b16 %v87
    %v919 = vunpack.c.l.b16 %v88
    %v920 = vunpack.c.h.b16 %v88
    %v921 = vunpack.c.l.b16 %v89
    %v922 = vunpack.c.h.b16 %v89
    %v923 = vunpack.c.l.b16 %v90
    %v924 = vunpack.c.h.b16 %v90
    %v925 = vunpack.c.l.b16 %v91
    %v926 = vunpack.c.h.b16 %v91
    %v927 = vunpack.c.l.b16 %v92
    %v928 = vunpack.c.h.b16 %v92
    %v929 = vunpack.c.l.b16 %v93
    %v930 = vunpack.c.h.b16 %v93
    %v931 = vunpack.c.l.b16 %v94
    %v932 = vunpack.c.h.b16 %v94
    %v933 = vunpack.c.l.b16 %v95
    %v934 = vunpack.c.h.b16 %v95
    %v935 = vunpack.c.l.b16 %v96
    %v936 = vunpack.c.h.b16 %v96
    %v937 = vunpack.c.l.b16 %v97
    %v938 = vunpack.c.h.b16 %v97
    %v939 = vunpack.c.l.b16 %v98
    %v940 = vunpack.c.h.b16 %v98
    %v941 = vunpack.c.l.b16 %v99
    %v942 = vunpack.c.h.b16 %v99
    %v943 = vunpack.c.l.b16 %v100
    %v944 = vunpack.c.h.b16 %v100
    %v945 = vunpack.c.l.b16 %v101
    %v946 = vunpack.c.h.b16 %v101
    %v947 = vunpack.c.l.b16 %v102
    %v948 = vunpack.c.h.b16 %v102
    %v949 = vunpack.c.l.b16 %v103
    %v950 = vunpack.c.h.b16 %v103
    %v951 = vunpack.c.l.b16 %v104
    %v952 = vunpack.c.h.b16 %v104
    %v953 = vunpack.c.l.b16 %v105
    %v954 = vunpack.c.l.b16 %v106
    %v955 = vunpack.c.h.b16 %v106
    %v956 = vunpack.c.l.b16 %v107
    %v957 = vunpack.c.h.b16 %v107
    %v958 = vunpack.c.l.b16 %v108
    %v959 = vunpack.c.h.b16 %v108
    %v960 = vunpack.c.l.b16 %v109
    %v961 = vunpack.c.h.b16 %v109
    %v962 = vunpack.c.l.b16 %v110
    %v963 = vunpack.c.h.b16 %v110
    %v964 = vunpack.c.l.b16 %v111
    %v965 = vunpack.c.h.b16 %v111
    %v966 = vunpack.c.l.b16 %v112
    %v967 = vunpack.c.h.b16 %v112
    %v968 = vunpack.c.l.b16 %v113
    %v969 = vunpack.c.h.b16 %v113
    %v970 = vunpack.c.l.b16 %v114
    %v971 = vunpack.c.h.b16 %v114
    %v972 = vunpack.c.l.b16 %v115
    %v973 = vunpack.c.h.b16 %v115
    %v974 = vunpack.c.l.b16 %v116
    %v975 = vunpack.c.h.b16 %v116
    %v976 = vunpack.c.l.b16 %v117
    %v977 = vunpack.c.h.b16 %v117
    %v978 = vunpack.c.l.b16 %v118
    %v979 = vunpack.c.h.b16 %v118
    %v980 = vunpack.c.l.b16 %v119
    %v981 = vunpack.c.h.b16 %v119
    %v982 = vunpack.c.l.b16 %v120
    %v983 = vunpack.c.h.b16 %v120
    %v984 = vunpack.c.l.b16 %v121
    %v985 = vunpack.c.h.b16 %v121
    %v986 = vunpack.c.l.b16 %v122
    %v987 = vunpack.c.h.b16 %v122
    %v988 = vunpack.c.l.b16 %v123
    %v989 = vunpack.c.h.b16 %v123
    %v990 = vunpack.c.l.b16 %v124
    %v991 = vunpack.c.h.b16 %v124
    %v992 = vunpack.c.l.b16 %v125
    %v993 = vunpack.c.h.b16 %v125
    %v994 = vunpack.c.l.b16 %v126
    %v995 = vunpack.c.h.b16 %v126
    %v996 = vunpack.c.l.b16 %v127
    %v997 = vunpack.c.h.b16 %v127
    %v998 = vunpack.c.l.b16 %v128
    %v999 = vunpack.c.h.b16 %v128
    %v1000 = vunpack.c.l.b16 %v129
    %v1001 = vunpack.c.h.b16 %v129
    %v1002 = vunpack.c.l.b16 %v130
    %v1003 = vunpack.c.l.b16 %v131
    %v1004 = vunpack.c.h.b16 %v131
    %v1005 = vunpack.c.l.b16 %v132
    %v1006 = vunpack.c.h.b16 %v132
    %v1007 = vunpack.c.l.b16 %v133
    %v1008 = vunpack.c.h.b16 %v133
    %v1009 = vunpack.c.l.b16 %v134
    %v1010 = vunpack.c.h.b16 %v134
    %v1011 = vunpack.c.l.b16 %v135
    %v1012 = vunpack.c.h.b16 %v135
    %v1013 = vunpack.c.l.b16 %v136
    %v1014 = vunpack.c.h.b16 %v136
    %v1015 = vunpack.c.l.b16 %v137
    %v1016 = vunpack.c.h.b16 %v137
    %v1017 = vunpack.c.l.b16 %v138
    %v1018 = vunpack.c.h.b16 %v138
    %v1019 = vunpack.c.l.b16 %v139
    %v1020 = vunpack.c.h.b16 %v139
    %v1021 = vunpack.c.l.b16 %v140
    %v1022 = vunpack.c.h.b16 %v140
    %v1023 = vunpack.c.l.b16 %v141
    %v1024 = vunpack.c.h.b16 %v141
    %v1025 = vunpack.c.l.b16 %v142
    %v1026 = vunpack.c.h.b16 %v142
    %v1027 = vunpack.c.l.b16 %v143
    %v1028 = vunpack.c.h.b16 %v143
    %v1029 = vunpack.c.l.b16 %v144
    %v1030 = vunpack.c.h.b16 %v144
    %v1031 = vunpack.c.l.b16 %v145
    %v1032 = vunpack.c.h.b16 %v145
    %v1033 = vunpack.c.l.b16 %v146
    %v1034 = vunpack.c.h.b16 %v146
    %v1035 = vunpack.c.l.b16 %v147
    %v1036 = vunpack.c.h.b16 %v147
    %v1037 = vunpack.c.l.b16 %v148
    %v1038 = vunpack.c.h.b16 %v148
    %v1039 = vunpack.c.l.b16 %v149
    %v1040 = vunpack.c.h.b16 %v149
    %v1041 = vunpack.c.l.b16 %v150
    %v1042 = vunpack.c.h.b16 %v150
    %v1043 = vunpack.c.l.b16 %v151
    %v1044 = vunpack.c.h.b16 %v151
    %v1045 = vunpack.c.l.b16 %v152
    %v1046 = vunpack.c.h.b16 %v152
    %v1047 = vunpack.c.l.b16 %v153
    %v1048 = vunpack.c.h.b16 %v153
    %v1049 = vunpack.c.l.b16 %v154
    %v1050 = vunpack.c.h.b16 %v154
    %v1051 = vunpack.c.l.b16 %v155
    %v1052 = vunpack.c.l.b16 %v156
    %v1053 = vunpack.c.h.b16 %v156
    %v1054 = vunpack.c.l.b16 %v157
    %v1055 = vunpack.c.h.b16 %v157
    %v1056 = vunpack.c.l.b16 %v158
    %v1057 = vunpack.c.h.b16 %v158
    %v1058 = vunpack.c.l.b16 %v159
    %v1059 = vunpack.c.h.b16 %v159
    %v1060 = vunpack.c.l.b16 %v160
    %v1061 = vunpack.c.h.b16 %v160
    %v1062 = vunpack.c.l.b16 %v161
    %v1063 = vunpack.c.h.b16 %v161
    %v1064 = vunpack.c.l.b16 %v162
    %v1065 = vunpack.c.h.b16 %v162
    %v1066 = vunpack.c.l.b16 %v163
    %v1067 = vunpack.c.h.b16 %v163
    %v1068 = vunpack.c.l.b16 %v164
    %v1069 = vunpack.c.h.b16 %v164
    %v1070 = vunpack.c.l.b16 %v165
    %v1071 = vunpack.c.h.b16 %v165
    %v1072 = vunpack.c.l.b16 %v166
    %v1073 = vunpack.c.h.b16 %v166
    %v1074 = vunpack.c.l.b16 %v167
    %v1075 = vunpack.c.h.b16 %v167
    %v1076 = vunpack.c.l.b16 %v168
    %v1077 = vunpack.c.h.b16 %v168
    %v1078 = vunpack.c.l.b16 %v169
    %v1079 = vunpack.c.h.b16 %v169
    %v1080 = vunpack.c.l.b16 %v170
    %v1081 = vunpack.c.h.b16 %v170
    %v1082 = vunpack.c.l.b16 %v171
    %v1083 = vunpack.c.h.b16 %v171
    %v1084 = vunpack.c.l.b16 %v172
    %v1085 = vunpack.c.h.b16 %v172
    %v1086 = vunpack.c.l.b16 %v173
    %v1087 = vunpack.c.h.b16 %v173
    %v1088 = vunpack.c.l.b16 %v174
    %v1089 = vunpack.c.h.b16 %v174
    %v1090 = vunpack.c.l.b16 %v175
    %v1091 = vunpack.c.h.b16 %v175
    %v1092 = vunpack.c.l.b16 %v176
    %v1093 = vunpack.c.h.b16 %v176
    %v1094 = vunpack.c.l.b16 %v177
    %v1095 = vunpack.c.h.b16 %v177
    %v1096 = vunpack.c.l.b16 %v178
    %v1097 = vunpack.c.h.b16 %v178
    %v1098 = vunpack.c.l.b16 %v179
    %v1099 = vunpack.c.h.b16 %v179
    %v1100 = vunpack.c.l.b16 %v180
    %v1101 = vunpack.c.l.b16 %v181
    %v1102 = vunpack.c.h.b16 %v181
    %v1103 = vunpack.c.l.b16 %v182
    %v1104 = vunpack.c.h.b16 %v182
    %v1105 = vunpack.c.l.b16 %v183
    %v1106 = vunpack.c.h.b16 %v183
    %v1107 = vunpack.c.l.b16 %v184
    %v1108 = vunpack.c.h.b16 %v184
    %v1109 = vunpack.c.l.b16 %v185
    %v1110 = vunpack.c.h.b16 %v185
    %v1111 = vunpack.c.l.b16 %v186
    %v1112 = vunpack.c.h.b16 %v186
    %v1113 = vunpack.c.l.b16 %v187
    %v1114 = vunpack.c.h.b16 %v187
    %v1115 = vunpack.c.l.b16 %v188
    %v1116 = vunpack.c.h.b16 %v188
    %v1117 = vunpack.c.l.b16 %v189
    %v1118 = vunpack.c.h.b16 %v189
    %v1119 = vunpack.c.l.b16 %v190
    %v1120 = vunpack.c.h.b16 %v190
    %v1121 = vunpack.c.l.b16 %v191
    %v1122 = vunpack.c.h.b16 %v191
    %v1123 = vunpack.c.l.b16 %v192
    %v1124 = vunpack.c.h.b16 %v192
    %v1125 = vunpack.c.l.b16 %v193
    %v1126 = vunpack.c.h.b16 %v193
    %v1127 = vunpack.c.l.b16 %v194
    %v1128 = vunpack.c.h.b16 %v194
    %v1129 = vunpack.c.l.b16 %v195
    %v1130 = vunpack.c.h.b16 %v195
    %v1131 = vunpack.c.l.b16 %v196
    %v1132 = vunpack.c.h.b16 %v196
    %v1133 = vunpack.c.l.b16 %v197
    %v1134 = vunpack.c.h.b16 %v197
    %v1135 = vunpack.c.l.b16 %v198
    %v1136 = vunpack.c.h.b16 %v198
    %v1137 = vunpack.c.l.b16 %v199
    %v1138 = vunpack.c.h.b16 %v199
    %v1139 = vunpack.c.l.b16 %v200
    %v1140 = vunpack.c.h.b16 %v200
    %v1141 = vunpack.c.l.b16 %v201
    %v1142 = vunpack.c.h.b16 %v201
    %v1143 = vunpack.c.l.b16 %v202
    %v1144 = vunpack.c.h.b16 %v202
    %v1145 = vunpack.c.l.b16 %v203
    %v1146 = vunpack.c.h.b16 %v203
    %v1147 = vunpack.c.l.b16 %v204
    %v1148 = vunpack.c.h.b16 %v204
    %v1149 = vunpack.c.l.b16 %v205
    %v1150 = vunpack.c.l.b16 %v206
    %v1151 = vunpack.c.h.b16 %v206
    %v1152 = vunpack.c.l.b16 %v207
    %v1153 = vunpack.c.h.b16 %v207
    %v1154 = vunpack.c.l.b16 %v208
    %v1155 = vunpack.c.h.b16 %v208
    %v1156 = vunpack.c.l.b16 %v209
    %v1157 = vunpack.c.h.b16 %v209
    %v1158 = vunpack.c.l.b16 %v210
    %v1159 = vunpack.c.h.b16 %v210
    %v1160 = vunpack.c.l.b16 %v211
    %v1161 = vunpack.c.h.b16 %v211
    %v1162 = vunpack.c.l.b16 %v212
    %v1163 = vunpack.c.h.b16 %v212
    %v1164 = vunpack.c.l.b16 %v213
    %v1165 = vunpack.c.h.b16 %v213
    %v1166 = vunpack.c.l.b16 %v214
    %v1167 = vunpack.c.h.b16 %v214
    %v1168 = vunpack.c.l.b16 %v215
    %v1169 = vunpack.c.h.b16 %v215
    %v1170 = vunpack.c.l.b16 %v216
    %v1171 = vunpack.c.h.b16 %v216
    %v1172 = vunpack.c.l.b16 %v217
    %v1173 = vunpack.c.h.b16 %v217
    %v1174 = vunpack.c.l.b16 %v218
    %v1175 = vunpack.c.h.b16 %v218
    %v1176 = vunpack.c.l.b16 %v219
    %v1177 = vunpack.c.h.b16 %v219
    %v1178 = vunpack.c.l.b16 %v220
    %v1179 = vunpack.c.h.b16 %v220
    %v1180 = vunpack.c.l.b16 %v221
    %v1181 = vunpack.c.h.b16 %v221
    %v1182 = vunpack.c.l.b16 %v222
    %v1183 = vunpack.c.h.b16 %v222
    %v1184 = vunpack.c.l.b16 %v223
    %v1185 = vunpack.c.h.b16 %v223
    %v1186 = vunpack.c.l.b16 %v224
    %v1187 = vunpack.c.h.b16 %v224
    %v1188 = vunpack.c.l.b16 %v225
    %v1189 = vunpack.c.h.b16 %v225
    %v1190 = vunpack.c.l.b16 %v226
    %v1191 = vunpack.c.h.b16 %v226
    %v1192 = vunpack.c.l.b16 %v227
    %v1193 = vunpack.c.h.b16 %v227
    %v1194 = vunpack.c.l.b16 %v228
    %v1195 = vunpack.c.h.b16 %v228
    %v1196 = vunpack.c.l.b16 %v229
    %v1197 = vunpack.c.h.b16 %v229
    %v1198 = vunpack.c.l.b16 %v230
    %v1199 = vunpack.c.l.b16 %v231
    %v1200 = vunpack.c.h.b16 %v231
    %v1201 = vunpack.c.l.b16 %v232
    %v1202 = vunpack.c.h.b16 %v232
    %v1203 = vunpack.c.l.b16 %v233
    %v1204 = vunpack.c.h.b16 %v233
    %v1205 = vunpack.c.l.b16 %v234
    %v1206 = vunpack.c.h.b16 %v234
    %v1207 = vunpack.c.l.b16 %v235
    %v1208 = vunpack.c.h.b16 %v235
    %v1209 = vunpack.c.l.b16 %v236
    %v1210 = vunpack.c.h.b16 %v236
    %v1211 = vunpack.c.l.b16 %v237
    %v1212 = vunpack.c.h.b16 %v237
    %v1213 = vunpack.c.l.b16 %v238
    %v1214 = vunpack.c.h.b16 %v238
    %v1215 = vunpack.c.l.b16 %v239
    %v1216 = vunpack.c.h.b16 %v239
    %v1217 = vunpack.c.l.b16 %v240
    %v1218 = vunpack.c.h.b16 %v240
    %v1219 = vunpack.c.l.b16 %v241
    %v1220 = vunpack.c.h.b16 %v241
    %v1221 = vunpack.c.l.b16 %v242
    %v1222 = vunpack.c.h.b16 %v242
    %v1223 = vunpack.c.l.b16 %v243
    %v1224 = vunpack.c.h.b16 %v243
    %v1225 = vunpack.c.l.b16 %v244
    %v1226 = vunpack.c.h.b16 %v244
    %v1227 = vunpack.c.l.b16 %v245
    %v1228 = vunpack.c.h.b16 %v245
    %v1229 = vunpack.c.l.b16 %v246
    %v1230 = vunpack.c.h.b16 %v246
    %v1231 = vunpack.c.l.b16 %v247
    %v1232 = vunpack.c.h.b16 %v247
    %v1233 = vunpack.c.l.b16 %v248
    %v1234 = vunpack.c.h.b16 %v248
    %v1235 = vunpack.c.l.b16 %v249
    %v1236 = vunpack.c.h.b16 %v249
    %v1237 = vunpack.c.l.b16 %v250
    %v1238 = vunpack.c.h.b16 %v250
    %v1239 = vunpack.c.l.b16 %v251
    %v1240 = vunpack.c.h.b16 %v251
    %v1241 = vunpack.c.l.b16 %v252
    %v1242 = vunpack.c.h.b16 %v252
    %v1243 = vunpack.c.l.b16 %v253
    %v1244 = vunpack.c.h.b16 %v253
    %v1245 = vunpack.c.l.b16 %v254
    %v1246 = vunpack.c.h.b16 %v254
    %v1247 = vunpack.c.l.b16 %v255
    %v1248 = vunpack.c.l.b16 %v256
    %v1249 = vunpack.c.h.b16 %v256
    %v1250 = vunpack.c.l.b16 %v257
    %v1251 = vunpack.c.h.b16 %v257
    %v1252 = vunpack.c.l.b16 %v258
    %v1253 = vunpack.c.h.b16 %v258
    %v1254 = vunpack.c.l.b16 %v259
    %v1255 = vunpack.c.h.b16 %v259
    %v1256 = vunpack.c.l.b16 %v260
    %v1257 = vunpack.c.h.b16 %v260
    %v1258 = vunpack.c.l.b16 %v261
    %v1259 = vunpack.c.h.b16 %v261
    %v1260 = vunpack.c.l.b16 %v262
    %v1261 = vunpack.c.h.b16 %v262
    %v1262 = vunpack.c.l.b16 %v263
    %v1263 = vunpack.c.h.b16 %v263
    %v1264 = vunpack.c.l.b16 %v264
    %v1265 = vunpack.c.h.b16 %v264
    %v1266 = vunpack.c.l.b16 %v265
    %v1267 = vunpack.c.h.b16 %v265
    %v1268 = vunpack.c.l.b16 %v266
    %v1269 = vunpack.c.h.b16 %v266
    %v1270 = vunpack.c.l.b16 %v267
    %v1271 = vunpack.c.h.b16 %v267
    %v1272 = vunpack.c.l.b16 %v268
    %v1273 = vunpack.c.h.b16 %v268
    %v1274 = vunpack.c.l.b16 %v269
    %v1275 = vunpack.c.h.b16 %v269
    %v1276 = vunpack.c.l.b16 %v270
    %v1277 = vunpack.c.h.b16 %v270
    %v1278 = vunpack.c.l.b16 %v271
    %v1279 = vunpack.c.h.b16 %v271
    %v1280 = vunpack.c.l.b16 %v272
    %v1281 = vunpack.c.h.b16 %v272
    %v1282 = vunpack.c.l.b16 %v273
    %v1283 = vunpack.c.h.b16 %v273
    %v1284 = vunpack.c.l.b16 %v274
    %v1285 = vunpack.c.h.b16 %v274
    %v1286 = vunpack.c.l.b16 %v275
    %v1287 = vunpack.c.h.b16 %v275
    %v1288 = vunpack.c.l.b16 %v276
    %v1289 = vunpack.c.h.b16 %v276
    %v1290 = vunpack.c.l.b16 %v277
    %v1291 = vunpack.c.h.b16 %v277
    %v1292 = vunpack.c.l.b16 %v278
    %v1293 = vunpack.c.h.b16 %v278
    %v1294 = vunpack.c.l.b16 %v279
    %v1295 = vunpack.c.h.b16 %v279
    %v1296 = vunpack.c.l.b16 %v280
    %v1297 = vunpack.c.l.b16 %v281
    %v1298 = vunpack.c.h.b16 %v281
    %v1299 = vunpack.c.l.b16 %v282
    %v1300 = vunpack.c.h.b16 %v282
    %v1301 = vunpack.c.l.b16 %v283
    %v1302 = vunpack.c.h.b16 %v283
    %v1303 = vunpack.c.l.b16 %v284
    %v1304 = vunpack.c.h.b16 %v284
    %v1305 = vunpack.c.l.b16 %v285
    %v1306 = vunpack.c.h.b16 %v285
    %v1307 = vunpack.c.l.b16 %v286
    %v1308 = vunpack.c.h.b16 %v286
    %v1309 = vunpack.c.l.b16 %v287
    %v1310 = vunpack.c.h.b16 %v287
    %v1311 = vunpack.c.l.b16 %v288
    %v1312 = vunpack.c.h.b16 %v288
    %v1313 = vunpack.c.l.b16 %v289
    %v1314 = vunpack.c.h.b16 %v289
    %v1315 = vunpack.c.l.b16 %v290
    %v1316 = vunpack.c.h.b16 %v290
    %v1317 = vunpack.c.l.b16 %v291
    %v1318 = vunpack.c.h.b16 %v291
    %v1319 = vunpack.c.l.b16 %v292
    %v1320 = vunpack.c.h.b16 %v292
    %v1321 = vunpack.c.l.b16 %v293
    %v1322 = vunpack.c.h.b16 %v293
    %v1323 = vunpack.c.l.b16 %v294
    %v1324 = vunpack.c.h.b16 %v294
    %v1325 = vunpack.c.l.b16 %v295
    %v1326 = vunpack.c.h.b16 %v295
    %v1327 = vunpack.c.l.b16 %v296
    %v1328 = vunpack.c.h.b16 %v296
    %v1329 = vunpack.c.l.b16 %v297
    %v1330 = vunpack.c.h.b16 %v297
    %v1331 = vunpack.c.l.b16 %v298
    %v1332 = vunpack.c.h.b16 %v298
    %v1333 = vunpack.c.l.b16 %v299
    %v1334 = vunpack.c.h.b16 %v299
    %v1335 = vunpack.c.l.b16 %v300
    %v1336 = vunpack.c.h.b16 %v300
    %v1337 = vunpack.c.l.b16 %v301
    %v1338 = vunpack.c.h.b16 %v301
    %v1339 = vunpack.c.l.b16 %v302
    %v1340 = vunpack.c.h.b16 %v302
    %v1341 = vunpack.c.l.b16 %v303
    %v1342 = vunpack.c.h.b16 %v303
    %v1343 = vunpack.c.l.b16 %v304
    %v1344 = vunpack.c.h.b16 %v304
    %v1345 = vunpack.c.l.b16 %v305
    %v1346 = vunpack.c.l.b16 %v306
    %v1347 = vunpack.c.h.b16 %v306
    %v1348 = vunpack.c.l.b16 %v307
    %v1349 = vunpack.c.h.b16 %v307
    %v1350 = vunpack.c.l.b16 %v308
    %v1351 = vunpack.c.h.b16 %v308
    %v1352 = vunpack.c.l.b16 %v309
    %v1353 = vunpack.c.h.b16 %v309
    %v1354 = vunpack.c.l.b16 %v310
    %v1355 = vunpack.c.h.b16 %v310
    %v1356 = vunpack.c.l.b16 %v311
    %v1357 = vunpack.c.h.b16 %v311
    %v1358 = vunpack.c.l.b16 %v312
    %v1359 = vunpack.c.h.b16 %v312
    %v1360 = vunpack.c.l.b16 %v313
    %v1361 = vunpack.c.h.b16 %v313
    %v1362 = vunpack.c.l.b16 %v314
    %v1363 = vunpack.c.h.b16 %v314
    %v1364 = vunpack.c.l.b16 %v315
    %v1365 = vunpack.c.h.b16 %v315
    %v1366 = vunpack.c.l.b16 %v316
    %v1367 = vunpack.c.h.b16 %v316
    %v1368 = vunpack.c.l.b16 %v317
    %v1369 = vunpack.c.h.b16 %v317
    %v1370 = vunpack.c.l.b16 %v318
    %v1371 = vunpack.c.h.b16 %v318
    %v1372 = vunpack.c.l.b16 %v319
    %v1373 = vunpack.c.h.b16 %v319
    %v1374 = vunpack.c.l.b16 %v320
    %v1375 = vunpack.c.h.b16 %v320
    %v1376 = vunpack.c.l.b16 %v321
    %v1377 = vunpack.c.h.b16 %v321
    %v1378 = vunpack.c.l.b16 %v322
    %v1379 = vunpack.c.h.b16 %v322
    %v1380 = vunpack.c.l.b16 %v323
    %v1381 = vunpack.c.h.b16 %v323
    %v1382 = vunpack.c.l.b16 %v324
    %v1383 = vunpack.c.h.b16 %v324
    %v1384 = vunpack.c.l.b16 %v325
    %v1385 = vunpack.c.h.b16 %v325
    %v1386 = vunpack.c.l.b16 %v326
    %v1387 = vunpack.c.h.b16 %v326
    %v1388 = vunpack.c.l.b16 %v327
    %v1389 = vunpack.c.h.b16 %v327
    %v1390 = vunpack.c.l.b16 %v328
    %v1391 = vunpack.c.h.b16 %v328
    %v1392 = vunpack.c.l.b16 %v329
    %v1393 = vunpack.c.h.b16 %v329
    %v1394 = vunpack.c.l.b16 %v330
    %v1395 = vunpack.c.l.b16 %v331
    %v1396 = vunpack.c.h.b16 %v331
    %v1397 = vunpack.c.l.b16 %v332
    %v1398 = vunpack.c.h.b16 %v332
    %v1399 = vunpack.c.l.b16 %v333
    %v1400 = vunpack.c.h.b16 %v333
    %v1401 = vunpack.c.l.b16 %v334
    %v1402 = vunpack.c.h.b16 %v334
    %v1403 = vunpack.c.l.b16 %v335
    %v1404 = vunpack.c.h.b16 %v335
    %v1405 = vunpack.c.l.b16 %v336
    %v1406 = vunpack.c.h.b16 %v336
    %v1407 = vunpack.c.l.b16 %v337
    %v1408 = vunpack.c.h.b16 %v337
    %v1409 = vunpack.c.l.b16 %v338
    %v1410 = vunpack.c.h.b16 %v338
    %v1411 = vunpack.c.l.b16 %v339
    %v1412 = vunpack.c.h.b16 %v339
    %v1413 = vunpack.c.l.b16 %v340
    %v1414 = vunpack.c.h.b16 %v340
    %v1415 = vunpack.c.l.b16 %v341
    %v1416 = vunpack.c.h.b16 %v341
    %v1417 = vunpack.c.l.b16 %v342
    %v1418 = vunpack.c.h.b16 %v342
    %v1419 = vunpack.c.l.b16 %v343
    %v1420 = vunpack.c.h.b16 %v343
    %v1421 = vunpack.c.l.b16 %v344
    %v1422 = vunpack.c.h.b16 %v344
    %v1423 = vunpack.c.l.b16 %v345
    %v1424 = vunpack.c.h.b16 %v345
    %v1425 = vunpack.c.l.b16 %v346
    %v1426 = vunpack.c.h.b16 %v346
    %v1427 = vunpack.c.l.b16 %v347
    %v1428 = vunpack.c.h.b16 %v347
    %v1429 = vunpack.c.l.b16 %v348
    %v1430 = vunpack.c.h.b16 %v348
    %v1431 = vunpack.c.l.b16 %v349
    %v1432 = vunpack.c.h.b16 %v349
    %v1433 = vunpack.c.l.b16 %v350
    %v1434 = vunpack.c.h.b16 %v350
    %v1435 = vunpack.c.l.b16 %v351
    %v1436 = vunpack.c.h.b16 %v351
    %v1437 = vunpack.c.l.b16 %v352
    %v1438 = vunpack.c.h.b16 %v352
    %v1439 = vunpack.c.l.b16 %v353
    %v1440 = vunpack.c.h.b16 %v353
    %v1441 = vunpack.c.l.b16 %v354
    %v1442 = vunpack.c.h.b16 %v354
    %v1443 = vunpack.c.l.b16 %v355
    %v1444 = vunpack.c.l.b16 %v356
    %v1445 = vunpack.c.h.b16 %v356
    %v1446 = vunpack.c.l.b16 %v357
    %v1447 = vunpack.c.h.b16 %v357
    %v1448 = vunpack.c.l.b16 %v358
    %v1449 = vunpack.c.h.b16 %v358
    %v1450 = vunpack.c.l.b16 %v359
    %v1451 = vunpack.c.h.b16 %v359
    %v1452 = vunpack.c.l.b16 %v360
    %v1453 = vunpack.c.h.b16 %v360
    %v1454 = vunpack.c.l.b16 %v361
    %v1455 = vunpack.c.h.b16 %v361
    %v1456 = vunpack.c.l.b16 %v362
    %v1457 = vunpack.c.h.b16 %v362
    %v1458 = vunpack.c.l.b16 %v363
    %v1459 = vunpack.c.h.b16 %v363
    %v1460 = vunpack.c.l.b16 %v364
    %v1461 = vunpack.c.h.b16 %v364
    %v1462 = vunpack.c.l.b16 %v365
    %v1463 = vunpack.c.h.b16 %v365
    %v1464 = vunpack.c.l.b16 %v366
    %v1465 = vunpack.c.h.b16 %v366
    %v1466 = vunpack.c.l.b16 %v367
    %v1467 = vunpack.c.h.b16 %v367
    %v1468 = vunpack.c.l.b16 %v368
    %v1469 = vunpack.c.h.b16 %v368
    %v1470 = vunpack.c.l.b16 %v369
    %v1471 = vunpack.c.h.b16 %v369
    %v1472 = vunpack.c.l.b16 %v370
    %v1473 = vunpack.c.h.b16 %v370
    %v1474 = vunpack.c.l.b16 %v371
    %v1475 = vunpack.c.h.b16 %v371
    %v1476 = vunpack.c.l.b16 %v372
    %v1477 = vunpack.c.h.b16 %v372
    %v1478 = vunpack.c.l.b16 %v373
    %v1479 = vunpack.c.h.b16 %v373
    %v1480 = vunpack.c.l.b16 %v374
    %v1481 = vunpack.c.h.b16 %v374
    %v1482 = vunpack.c.l.b16 %v375
    %v1483 = vunpack.c.h.b16 %v375
    %v1484 = vunpack.c.l.b16 %v376
    %v1485 = vunpack.c.h.b16 %v376
    %v1486 = vunpack.c.l.b16 %v377
    %v1487 = vunpack.c.h.b16 %v377
    %v1488 = vunpack.c.l.b16 %v378
    %v1489 = vunpack.c.h.b16 %v378
    %v1490 = vunpack.c.l.b16 %v379
    %v1491 = vunpack.c.h.b16 %v379
    %v1492 = vunpack.c.l.b16 %v380
    %v1493 = vunpack.c.l.b16 %v381
    %v1494 = vunpack.c.h.b16 %v381
    %v1495 = vunpack.c.l.b16 %v382
    %v1496 = vunpack.c.h.b16 %v382
    %v1497 = vunpack.c.l.b16 %v383
    %v1498 = vunpack.c.h.b16 %v383
    %v1499 = vunpack.c.l.b16 %v384
    %v1500 = vunpack.c.h.b16 %v384
    %v1501 = vunpack.c.l.b16 %v385
    %v1502 = vunpack.c.h.b16 %v385
    %v1503 = vunpack.c.l.b16 %v386
    %v1504 = vunpack.c.h.b16 %v386
    %v1505 = vunpack.c.l.b16 %v387
    %v1506 = vunpack.c.h.b16 %v387
    %v1507 = vunpack.c.l.b16 %v388
    %v1508 = vunpack.c.h.b16 %v388
    %v1509 = vunpack.c.l.b16 %v389
    %v1510 = vunpack.c.h.b16 %v389
    %v1511 = vunpack.c.l.b16 %v390
    %v1512 = vunpack.c.h.b16 %v390
    %v1513 = vunpack.c.l.b16 %v391
    %v1514 = vunpack.c.h.b16 %v391
    %v1515 = vunpack.c.l.b16 %v392
    %v1516 = vunpack.c.h.b16 %v392
    %v1517 = vunpack.c.l.b16 %v393
    %v1518 = vunpack.c.h.b16 %v393
    %v1519 = vunpack.c.l.b16 %v394
    %v1520 = vunpack.c.h.b16 %v394
    %v1521 = vunpack.c.l.b16 %v395
    %v1522 = vunpack.c.h.b16 %v395
    %v1523 = vunpack.c.l.b16 %v396
    %v1524 = vunpack.c.h.b16 %v396
    %v1525 = vunpack.c.l.b16 %v397
    %v1526 = vunpack.c.h.b16 %v397
    %v1527 = vunpack.c.l.b16 %v398
    %v1528 = vunpack.c.h.b16 %v398
    %v1529 = vunpack.c.l.b16 %v399
    %v1530 = vunpack.c.h.b16 %v399
    %v1531 = vunpack.c.l.b16 %v400
    %v1532 = vunpack.c.h.b16 %v400
    %v1533 = vunpack.c.l.b16 %v401
    %v1534 = vunpack.c.h.b16 %v401
    %v1535 = vunpack.c.l.b16 %v402
    %v1536 = vunpack.c.h.b16 %v402
    %v1537 = vunpack.c.l.b16 %v403
    %v1538 = vunpack.c.h.b16 %v403
    %v1539 = vunpack.c.l.b16 %v404
    %v1540 = vunpack.c.h.b16 %v404
    %v1541 = vunpack.c.l.b16 %v405
    %v1542 = vunpack.c.l.b16 %v406
    %v1543 = vunpack.c.h.b16 %v406
    %v1544 = vunpack.c.l.b16 %v407
    %v1545 = vunpack.c.h.b16 %v407
    %v1546 = vunpack.c.l.b16 %v408
    %v1547 = vunpack.c.h.b16 %v408
    %v1548 = vunpack.c.l.b16 %v409
    %v1549 = vunpack.c.h.b16 %v409
    %v1550 = vunpack.c.l.b16 %v410
    %v1551 = vunpack.c.h.b16 %v410
    %v1552 = vunpack.c.l.b16 %v411
    %v1553 = vunpack.c.h.b16 %v411
    %v1554 = vunpack.c.l.b16 %v412
    %v1555 = vunpack.c.h.b16 %v412
    %v1556 = vunpack.c.l.b16 %v413
    %v1557 = vunpack.c.h.b16 %v413
    %v1558 = vunpack.c.l.b16 %v414
    %v1559 = vunpack.c.h.b16 %v414
    %v1560 = vunpack.c.l.b16 %v415
    %v1561 = vunpack.c.h.b16 %v415
    %v1562 = vunpack.c.l.b16 %v416
    %v1563 = vunpack.c.h.b16 %v416
    %v1564 = vunpack.c.l.b16 %v417
    %v1565 = vunpack.c.h.b16 %v417
    %v1566 = vunpack.c.l.b16 %v418
    %v1567 = vunpack.c.h.b16 %v418
    %v1568 = vunpack.c.l.b16 %v419
    %v1569 = vunpack.c.h.b16 %v419
    %v1570 = vunpack.c.l.b16 %v420
    %v1571 = vunpack.c.h.b16 %v420
    %v1572 = vunpack.c.l.b16 %v421
    %v1573 = vunpack.c.h.b16 %v421
    %v1574 = vunpack.c.l.b16 %v422
    %v1575 = vunpack.c.h.b16 %v422
    %v1576 = vunpack.c.l.b16 %v423
    %v1577 = vunpack.c.h.b16 %v423
    %v1578 = vunpack.c.l.b16 %v424
    %v1579 = vunpack.c.h.b16 %v424
    %v1580 = vunpack.c.l.b16 %v425
    %v1581 = vunpack.c.h.b16 %v425
    %v1582 = vunpack.c.l.b16 %v426
    %v1583 = vunpack.c.h.b16 %v426
    %v1584 = vunpack.c.l.b16 %v427
    %v1585 = vunpack.c.h.b16 %v427
    %v1586 = vunpack.c.l.b16 %v428
    %v1587 = vunpack.c.h.b16 %v428
    %v1588 = vunpack.c.l.b16 %v429
    %v1589 = vunpack.c.h.b16 %v429
    %v1590 = vunpack.c.l.b16 %v430
    %v1591 = vunpack.c.l.b16 %v431
    %v1592 = vunpack.c.h.b16 %v431
    %v1593 = vunpack.c.l.b16 %v432
    %v1594 = vunpack.c.h.b16 %v432
    %v1595 = vunpack.c.l.b16 %v433
    %v1596 = vunpack.c.h.b16 %v433
    %v1597 = vunpack.c.l.b16 %v434
    %v1598 = vunpack.c.h.b16 %v434
    %v1599 = vunpack.c.l.b16 %v435
    %v1600 = vunpack.c.h.b16 %v435
    %v1601 = vunpack.c.l.b16 %v436
    %v1602 = vunpack.c.h.b16 %v436
    %v1603 = vunpack.c.l.b16 %v437
    %v1604 = vunpack.c.h.b16 %v437
    %v1605 = vunpack.c.l.b16 %v438
    %v1606 = vunpack.c.h.b16 %v438
    %v1607 = vunpack.c.l.b16 %v439
    %v1608 = vunpack.c.h.b16 %v439
    %v1609 = vunpack.c.l.b16 %v440
    %v1610 = vunpack.c.h.b16 %v440
    %v1611 = vunpack.c.l.b16 %v441
    %v1612 = vunpack.c.h.b16 %v441
    %v1613 = vunpack.c.l.b16 %v442
    %v1614 = vunpack.c.h.b16 %v442
    %v1615 = vunpack.c.l.b16 %v443
    %v1616 = vunpack.c.h.b16 %v443
    %v1617 = vunpack.c.l.b16 %v444
    %v1618 = vunpack.c.h.b16 %v444
    %v1619 = vunpack.c.l.b16 %v445
    %v1620 = vunpack.c.h.b16 %v445
    %v1621 = vunpack.c.l.b16 %v446
    %v1622 = vunpack.c.h.b16 %v446
    %v1623 = vunpack.c.l.b16 %v447
    %v1624 = vunpack.c.h.b16 %v447
    %v1625 = vunpack.c.l.b16 %v448
    %v1626 = vunpack.c.h.b16 %v448
    %v1627 = vunpack.c.l.b16 %v449
    %v1628 = vunpack.c.h.b16 %v449
    %v1629 = vunpack.c.l.b16 %v450
    %v1630 = vunpack.c.h.b16 %v450
    %v1631 = vunpack.c.l.b16 %v451
    %v1632 = vunpack.c.h.b16 %v451
    %v1633 = vunpack.c.l.b16 %v452
    %v1634 = vunpack.c.h.b16 %v452
    %v1635 = vunpack.c.l.b16 %v453
    %v1636 = vunpack.c.h.b16 %v453
    %v1637 = vunpack.c.l.b16 %v454
    %v1638 = vunpack.c.h.b16 %v454
    %v1639 = vunpack.c.l.b16 %v455
    %v1640 = vpack.c.b16 %v905, %v856
    %v1641 = vpack.c.b16 %v906, %v857
    %v1642 = vpack.c.b16 %v907, %v858
    %v1643 = vpack.c.b16 %v908, %v859
    %v1644 = vpack.c.b16 %v909, %v860
    %v1645 = vpack.c.b16 %v910, %v861
    %v1646 = vpack.c.b16 %v911, %v862
    %v1647 = vpack.c.b16 %v912, %v863
    %v1648 = vpack.c.b16 %v913, %v864
    %v1649 = vpack.c.b16 %v914, %v865
    %v1650 = vpack.c.b16 %v915, %v866
    %v1651 = vpack.c.b16 %v916, %v867
    %v1652 = vpack.c.b16 %v917, %v868
    %v1653 = vpack.c.b16 %v918, %v869
    %v1654 = vpack.c.b16 %v919, %v870
    %v1655 = vpack.c.b16 %v920, %v871
    %v1656 = vpack.c.b16 %v921, %v872
    %v1657 = vpack.c.b16 %v922, %v873
    %v1658 = vpack.c.b16 %v923, %v874
    %v1659 = vpack.c.b16 %v924, %v875
    %v1660 = vpack.c.b16 %v925, %v876
    %v1661 = vpack.c.b16 %v926, %v877
    %v1662 = vpack.c.b16 %v927, %v878
    %v1663 = vpack.c.b16 %v928, %v879
    %v1664 = vpack.c.b16 %v929, %v880
    %v1665 = vpack.c.b16 %v930, %v881
    %v1666 = vpack.c.b16 %v931, %v882
    %v1667 = vpack.c.b16 %v932, %v883
    %v1668 = vpack.c.b16 %v933, %v884
    %v1669 = vpack.c.b16 %v934, %v885
    %v1670 = vpack.c.b16 %v935, %v886
    %v1671 = vpack.c.b16 %v936, %v887
    %v1672 = vpack.c.b16 %v937, %v888
    %v1673 = vpack.c.b16 %v938, %v889
    %v1674 = vpack.c.b16 %v939, %v890
    %v1675 = vpack.c.b16 %v940, %v891
    %v1676 = vpack.c.b16 %v941, %v892
    %v1677 = vpack.c.b16 %v942, %v893
    %v1678 = vpack.c.b16 %v943, %v894
    %v1679 = vpack.c.b16 %v944, %v895
    %v1680 = vpack.c.b16 %v945, %v896
    %v1681 = vpack.c.b16 %v946, %v897
    %v1682 = vpack.c.b16 %v947, %v898
    %v1683 = vpack.c.b16 %v948, %v899
    %v1684 = vpack.c.b16 %v949, %v900
    %v1685 = vpack.c.b16 %v950, %v901
    %v1686 = vpack.c.b16 %v951, %v902
    %v1687 = vpack.c.b16 %v952, %v903
    %v1688 = vpack.c.b16 %v953, %v904
    %v1689 = vpack.c.b16 %v1003, %v954
    %v1690 = vpack.c.b16 %v1004, %v955
    %v1691 = vpack.c.b16 %v1005, %v956
    %v1692 = vpack.c.b16 %v1006, %v957
    %v1693 = vpack.c.b16 %v1007, %v958
    %v1694 = vpack.c.b16 %v1008, %v959
    %v1695 = vpack.c.b16 %v1009, %v960
    %v1696 = vpack.c.b16 %v1010, %v961
    %v1697 = vpack.c.b16 %v1011, %v962
    %v1698 = vpack.c.b16 %v1012, %v963
    %v1699 = vpack.c.b16 %v1013, %v964
    %v1700 = vpack.c.b16 %v1014, %v965
    %v1701 = vpack.c.b16 %v1015, %v966
    %v1702 = vpack.c.b16 %v1016, %v967
    %v1703 = vpack.c.b16 %v1017, %v968
    %v1704 = vpack.c.b16 %v1018, %v969
    %v1705 = vpack.c.b16 %v1019, %v970
    %v1706 = vpack.c.b16 %v1020, %v971
    %v1707 = vpack.c.b16 %v1021, %v972
    %v1708 = vpack.c.b16 %v1022, %v973
    %v1709 = vpack.c.b16 %v1023, %v974
    %v1710 = vpack.c.b16 %v1024, %v975
    %v1711 = vpack.c.b16 %v1025, %v976
    %v1712 = vpack.c.b16 %v1026, %v977
    %v1713 = vpack.c.b16 %v1027, %v978
    %v1714 = vpack.c.b16 %v1028, %v979
    %v1715 = vpack.c.b16 %v1029, %v980
    %v1716 = vpack.c.b16 %v1030, %v981
    %v1717 = vpack.c.b16 %v1031, %v982
    %v1718 = vpack.c.b16 %v1032, %v983
    %v1719 = vpack.c.b16 %v1033, %v984
    %v1720 = vpack.c.b16 %v1034, %v985
    %v1721 = vpack.c.b16 %v1035, %v986
    %v1722 = vpack.c.b16 %v1036, %v987
    %v1723 = vpack.c.b16 %v1037, %v988
    %v1724 = vpack.c.b16 %v1038, %v989
    %v1725 = vpack.c.b16 %v1039, %v990
    %v1726 = vpack.c.b16 %v1040, %v991
    %v1727 = vpack.c.b16 %v1041, %v992
    %v1728 = vpack.c.b16 %v1042, %v993
    %v1729 = vpack.c.b16 %v1043, %v994
    %v1730 = vpack.c.b16 %v1044, %v995
    %v1731 = vpack.c.b16 %v1045, %v996
    %v1732 = vpack.c.b16 %v1046, %v997
    %v1733 = vpack.c.b16 %v1047, %v998
    %v1734 = vpack.c.b16 %v1048, %v999
    %v1735 = vpack.c.b16 %v1049, %v1000
    %v1736 = vpack.c.b16 %v1050, %v1001
    %v1737 = vpack.c.b16 %v1051, %v1002
    %v1738 = vpack.c.b16 %v1101, %v1052
    %v1739 = vpack.c.b16 %v1102, %v1053
    %v1740 = vpack.c.b16 %v1103, %v1054
    %v1741 = vpack.c.b16 %v1104, %v1055
    %v1742 = vpack.c.b16 %v1105, %v1056
    %v1743 = vpack.c.b16 %v1106, %v1057
    %v1744 = vpack.c.b16 %v1107, %v1058
    %v1745 = vpack.c.b16 %v1108, %v1059
    %v1746 = vpack.c.b16 %v1109, %v1060
    %v1747 = vpack.c.b16 %v1110, %v1061
    %v1748 = vpack.c.b16 %v1111, %v1062
    %v1749 = vpack.c.b16 %v1112, %v1063
    %v1750 = vpack.c.b16 %v1113, %v1064
    %v1751 = vpack.c.b16 %v1114, %v1065
    %v1752 = vpack.c.b16 %v1115, %v1066
    %v1753 = vpack.c.b16 %v1116, %v1067
    %v1754 = vpack.c.b16 %v1117, %v1068
    %v1755 = vpack.c.b16 %v1118, %v1069
    %v1756 = vpack.c.b16 %v1119, %v1070
    %v1757 = vpack.c.b16 %v1120, %v1071
    %v1758 = vpack.c.b16 %v1121, %v1072
    %v1759 = vpack.c.b16 %v1122, %v1073
    %v1760 = vpack.c.b16 %v1123, %v1074
    %v1761 = vpack.c.b16 %v1124, %v1075
    %v1762 = vpack.c.b16 %v1125, %v1076
    %v1763 = vpack.c.b16 %v1126, %v1077
    %v1764 = vpack.c.b16 %v1127, %v1078
    %v1765 = vpack.c.b16 %v1128, %v1079
    %v1766 = vpack.c.b16 %v1129, %v1080
    %v1767 = vpack.c.b16 %v1130, %v1081
    %v1768 = vpack.c.b16 %v1131, %v1082
    %v1769 = vpack.c.b16 %v1132, %v1083
    %v1770 = vpack.c.b16 %v1133, %v1084
    %v1771 = vpack.c.b16 %v1134, %v1085
    %v1772 = vpack.c.b16 %v1135, %v1086
    %v1773 = vpack.c.b16 %v1136, %v1087
    %v1774 = vpack.c.b16 %v1137, %v1088
    %v1775 = vpack.c.b16 %v1138, %v1089
    %v1776 = vpack.c.b16 %v1139, %v1090
    %v1777 = vpack.c.b16 %v1140, %v1091
    %v1778 = vpack.c.b16 %v1141, %v1092
    %v1779 = vpack.c.b16 %v1142, %v1093
    %v1780 = vpack.c.b16 %v1143, %v1094
    %v1781 = vpack.c.b16 %v1144, %v1095
    %v1782 = vpack.c.b16 %v1145, %v1096
    %v1783 = vpack.c.b16 %v1146, %v1097
    %v1784 = vpack.c.b16 %v1147, %v1098
    %v1785 = vpack.c.b16 %v1148, %v1099
    %v1786 = vpack.c.b16 %v1149, %v1100
    %v1787 = vpack.c.b16 %v1199, %v1150
    %v1788 = vpack.c.b16 %v1200, %v1151
    %v1789 = vpack.c.b16 %v1201, %v1152
    %v1790 = vpack.c.b16 %v1202, %v1153
    %v1791 = vpack.c.b16 %v1203, %v1154
    %v1792 = vpack.c.b16 %v1204, %v1155
    %v1793 = vpack.c.b16 %v1205, %v1156
    %v1794 = vpack.c.b16 %v1206, %v1157
    %v1795 = vpack.c.b16 %v1207, %v1158
    %v1796 = vpack.c.b16 %v1208, %v1159
    %v1797 = vpack.c.b16 %v1209, %v1160
    %v1798 = vpack.c.b16 %v1210, %v1161
    %v1799 = vpack.c.b16 %v1211, %v1162
    %v1800 = vpack.c.b16 %v1212, %v1163
    %v1801 = vpack.c.b16 %v1213, %v1164
    %v1802 = vpack.c.b16 %v1214, %v1165
    %v1803 = vpack.c.b16 %v1215, %v1166
    %v1804 = vpack.c.b16 %v1216, %v1167
    %v1805 = vpack.c.b16 %v1217, %v1168
    %v1806 = vpack.c.b16 %v1218, %v1169
    %v1807 = vpack.c.b16 %v1219, %v1170
    %v1808 = vpack.c.b16 %v1220, %v1171
    %v1809 = vpack.c.b16 %v1221, %v1172
    %v1810 = vpack.c.b16 %v1222, %v1173
    %v1811 = vpack.c.b16 %v1223, %v1174
    %v1812 = vpack.c.b16 %v1224, %v1175
    %v1813 = vpack.c.b16 %v1225, %v1176
    %v1814 = vpack.c.b16 %v1226, %v1177
    %v1815 = vpack.c.b16 %v1227, %v1178
    %v1816 = vpack.c.b16 %v1228, %v1179
    %v1817 = vpack.c.b16 %v1229, %v1180
    %v1818 = vpack.c.b16 %v1230, %v1181
    %v1819 = vpack.c.b16 %v1231, %v1182
    %v1820 = vpack.c.b16 %v1232, %v1183
    %v1821 = vpack.c.b16 %v1233, %v1184
    %v1822 = vpack.c.b16 %v1234, %v1185
    %v1823 = vpack.c.b16 %v1235, %v1186
    %v1824 = vpack.c.b16 %v1236, %v1187
    %v1825 = vpack.c.b16 %v1237, %v1188
    %v1826 = vpack.c.b16 %v1238, %v1189
    %v1827 = vpack.c.b16 %v1239, %v1190
    %v1828 = vpack.c.b16 %v1240, %v1191
    %v1829 = vpack.c.b16 %v1241, %v1192
    %v1830 = vpack.c.b16 %v1242, %v1193
    %v1831 = vpack.c.b16 %v1243, %v1194
    %v1832 = vpack.c.b16 %v1244, %v1195
    %v1833 = vpack.c.b16 %v1245, %v1196
    %v1834 = vpack.c.b16 %v1246, %v1197
    %v1835 = vpack.c.b16 %v1247, %v1198
    %v1836 = vpack.c.b16 %v1297, %v1248
    %v1837 = vpack.c.b16 %v1298, %v1249
    %v1838 = vpack.c.b16 %v1299, %v1250
    %v1839 = vpack.c.b16 %v1300, %v1251
    %v1840 = vpack.c.b16 %v1301, %v1252
    %v1841 = vpack.c.b16 %v1302, %v1253
    %v1842 = vpack.c.b16 %v1303, %v1254
    %v1843 = vpack.c.b16 %v1304, %v1255
    %v1844 = vpack.c.b16 %v1305, %v1256
    %v1845 = vpack.c.b16 %v1306, %v1257
    %v1846 = vpack.c.b16 %v1307, %v1258
    %v1847 = vpack.c.b16 %v1308, %v1259
    %v1848 = vpack.c.b16 %v1309, %v1260
    %v1849 = vpack.c.b16 %v1310, %v1261
    %v1850 = vpack.c.b16 %v1311, %v1262
    %v1851 = vpack.c.b16 %v1312, %v1263
    %v1852 = vpack.c.b16 %v1313, %v1264
    %v1853 = vpack.c.b16 %v1314, %v1265
    %v1854 = vpack.c.b16 %v1315, %v1266
    %v1855 = vpack.c.b16 %v1316, %v1267
    %v1856 = vpack.c.b16 %v1317, %v1268
    %v1857 = vpack.c.b16 %v1318, %v1269
    %v1858 = vpack.c.b16 %v1319, %v1270
    %v1859 = vpack.c.b16 %v1320, %v1271
    %v1860 = vpack.c.b16 %v1321, %v1272
    %v1861 = vpack.c.b16 %v1322, %v1273
    %v1862 = vpack.c.b16 %v1323, %v1274
    %v1863 = vpack.c.b16 %v1324, %v1275
    %v1864 = vpack.c.b16 %v1325, %v1276
    %v1865 = vpack.c.b16 %v1326, %v1277
    %v1866 = vpack.c.b16 %v1327, %v1278
    %v1867 = vpack.c.b16 %v1328, %v1279
    %v1868 = vpack.c.b16 %v1329, %v1280
    %v1869 = vpack.c.b16 %v1330, %v1281
    %v1870 = vpack.c.b16 %v1331, %v1282
    %v1871 = vpack.c.b16 %v1332, %v1283
    %v1872 = vpack.c.b16 %v1333, %v1284
    %v1873 = vpack.c.b16 %v1334, %v1285
    %v1874 = vpack.c.b16 %v1335, %v1286
    %v1875 = vpack.c.b16 %v1336, %v1287
    %v1876 = vpack.c.b16 %v1337, %v1288
    %v1877 = vpack.c.b16 %v1338, %v1289
    %v1878 = vpack.c.b16 %v1339, %v1290
    %v1879 = vpack.c.b16 %v1340, %v1291
    %v1880 = vpack.c.b16 %v1341, %v1292
    %v1881 = vpack.c.b16 %v1342, %v1293
    %v1882 = vpack.c.b16 %v1343, %v1294
    %v1883 = vpack.c.b16 %v1344, %v1295
    %v1884 = vpack.c.b16 %v1345, %v1296
    %v1885 = vpack.c.b16 %v1395, %v1346
    %v1886 = vpack.c.b16 %v1396, %v1347
    %v1887 = vpack.c.b16 %v1397, %v1348
    %v1888 = vpack.c.b16 %v1398, %v1349
    %v1889 = vpack.c.b16 %v1399, %v1350
    %v1890 = vpack.c.b16 %v1400, %v1351
    %v1891 = vpack.c.b16 %v1401, %v1352
    %v1892 = vpack.c.b16 %v1402, %v1353
    %v1893 = vpack.c.b16 %v1403, %v1354
    %v1894 = vpack.c.b16 %v1404, %v1355
    %v1895 = vpack.c.b16 %v1405, %v1356
    %v1896 = vpack.c.b16 %v1406, %v1357
    %v1897 = vpack.c.b16 %v1407, %v1358
    %v1898 = vpack.c.b16 %v1408, %v1359
    %v1899 = vpack.c.b16 %v1409, %v1360
    %v1900 = vpack.c.b16 %v1410, %v1361
    %v1901 = vpack.c.b16 %v1411, %v1362
    %v1902 = vpack.c.b16 %v1412, %v1363
    %v1903 = vpack.c.b16 %v1413, %v1364
    %v1904 = vpack.c.b16 %v1414, %v1365
    %v1905 = vpack.c.b16 %v1415, %v1366
    %v1906 = vpack.c.b16 %v1416, %v1367
    %v1907 = vpack.c.b16 %v1417, %v1368
    %v1908 = vpack.c.b16 %v1418, %v1369
    %v1909 = vpack.c.b16 %v1419, %v1370
    %v1910 = vpack.c.b16 %v1420, %v1371
    %v1911 = vpack.c.b16 %v1421, %v1372
    %v1912 = vpack.c.b16 %v1422, %v1373
    %v1913 = vpack.c.b16 %v1423, %v1374
    %v1914 = vpack.c.b16 %v1424, %v1375
    %v1915 = vpack.c.b16 %v1425, %v1376
    %v1916 = vpack.c.b16 %v1426, %v1377
    %v1917 = vpack.c.b16 %v1427, %v1378
    %v1918 = vpack.c.b16 %v1428, %v1379
    %v1919 = vpack.c.b16 %v1429, %v1380
    %v1920 = vpack.c.b16 %v1430, %v1381
    %v1921 = vpack.c.b16 %v1431, %v1382
    %v1922 = vpack.c.b16 %v1432, %v1383
    %v1923 = vpack.c.b16 %v1433, %v1384
    %v1924 = vpack.c.b16 %v1434, %v1385
    %v1925 = vpack.c.b16 %v1435, %v1386
    %v1926 = vpack.c.b16 %v1436, %v1387
    %v1927 = vpack.c.b16 %v1437, %v1388
    %v1928 = vpack.c.b16 %v1438, %v1389
    %v1929 = vpack.c.b16 %v1439, %v1390
    %v1930 = vpack.c.b16 %v1440, %v1391
    %v1931 = vpack.c.b16 %v1441, %v1392
    %v1932 = vpack.c.b16 %v1442, %v1393
    %v1933 = vpack.c.b16 %v1443, %v1394
    %v1934 = vpack.c.b16 %v1493, %v1444
    %v1935 = vpack.c.b16 %v1494, %v1445
    %v1936 = vpack.c.b16 %v1495, %v1446
    %v1937 = vpack.c.b16 %v1496, %v1447
    %v1938 = vpack.c.b16 %v1497, %v1448
    %v1939 = vpack.c.b16 %v1498, %v1449
    %v1940 = vpack.c.b16 %v1499, %v1450
    %v1941 = vpack.c.b16 %v1500, %v1451
    %v1942 = vpack.c.b16 %v1501, %v1452
    %v1943 = vpack.c.b16 %v1502, %v1453
    %v1944 = vpack.c.b16 %v1503, %v1454
    %v1945 = vpack.c.b16 %v1504, %v1455
    %v1946 = vpack.c.b16 %v1505, %v1456
    %v1947 = vpack.c.b16 %v1506, %v1457
    %v1948 = vpack.c.b16 %v1507, %v1458
    %v1949 = vpack.c.b16 %v1508, %v1459
    %v1950 = vpack.c.b16 %v1509, %v1460
    %v1951 = vpack.c.b16 %v1510, %v1461
    %v1952 = vpack.c.b16 %v1511, %v1462
    %v1953 = vpack.c.b16 %v1512, %v1463
    %v1954 = vpack.c.b16 %v1513, %v1464
    %v1955 = vpack.c.b16 %v1514, %v1465
    %v1956 = vpack.c.b16 %v1515, %v1466
    %v1957 = vpack.c.b16 %v1516, %v1467
    %v1958 = vpack.c.b16 %v1517, %v1468
    %v1959 = vpack.c.b16 %v1518, %v1469
    %v1960 = vpack.c.b16 %v1519, %v1470
    %v1961 = vpack.c.b16 %v1520, %v1471
    %v1962 = vpack.c.b16 %v1521, %v1472
    %v1963 = vpack.c.b16 %v1522, %v1473
    %v1964 = vpack.c.b16 %v1523, %v1474
    %v1965 = vpack.c.b16 %v1524, %v1475
    %v1966 = vpack.c.b16 %v1525, %v1476
    %v1967 = vpack.c.b16 %v1526, %v1477
    %v1968 = vpack.c.b16 %v1527, %v1478
    %v1969 = vpack.c.b16 %v1528, %v1479
    %v1970 = vpack.c.b16 %v1529, %v1480
    %v1971 = vpack.c.b16 %v1530, %v1481
    %v1972 = vpack.c.b16 %v1531, %v1482
    %v1973 = vpack.c.b16 %v1532, %v1483
    %v1974 = vpack.c.b16 %v1533, %v1484
    %v1975 = vpack.c.b16 %v1534, %v1485
    %v1976 = vpack.c.b16 %v1535, %v1486
    %v1977 = vpack.c.b16 %v1536, %v1487
    %v1978 = vpack.c.b16 %v1537, %v1488
    %v1979 = vpack.c.b16 %v1538, %v1489
    %v1980 = vpack.c.b16 %v1539, %v1490
    %v1981 = vpack.c.b16 %v1540, %v1491
    %v1982 = vpack.c.b16 %v1541, %v1492
    %v1983 = vpack.c.b16 %v1591, %v1542
    %v1984 = vpack.c.b16 %v1592, %v1543
    %v1985 = vpack.c.b16 %v1593, %v1544
    %v1986 = vpack.c.b16 %v1594, %v1545
    %v1987 = vpack.c.b16 %v1595, %v1546
    %v1988 = vpack.c.b16 %v1596, %v1547
    %v1989 = vpack.c.b16 %v1597, %v1548
    %v1990 = vpack.c.b16 %v1598, %v1549
    %v1991 = vpack.c.b16 %v1599, %v1550
    %v1992 = vpack.c.b16 %v1600, %v1551
    %v1993 = vpack.c.b16 %v1601, %v1552
    %v1994 = vpack.c.b16 %v1602, %v1553
    %v1995 = vpack.c.b16 %v1603, %v1554
    %v1996 = vpack.c.b16 %v1604, %v1555
    %v1997 = vpack.c.b16 %v1605, %v1556
    %v1998 = vpack.c.b16 %v1606, %v1557
    %v1999 = vpack.c.b16 %v1607, %v1558
    %v2000 = vpack.c.b16 %v1608, %v1559
    %v2001 = vpack.c.b16 %v1609, %v1560
    %v2002 = vpack.c.b16 %v1610, %v1561
    %v2003 = vpack.c.b16 %v1611, %v1562
    %v2004 = vpack.c.b16 %v1612, %v1563
    %v2005 = vpack.c.b16 %v1613, %v1564
    %v2006 = vpack.c.b16 %v1614, %v1565
    %v2007 = vpack.c.b16 %v1615, %v1566
    %v2008 = vpack.c.b16 %v1616, %v1567
    %v2009 = vpack.c.b16 %v1617, %v1568
    %v2010 = vpack.c.b16 %v1618, %v1569
    %v2011 = vpack.c.b16 %v1619, %v1570
    %v2012 = vpack.c.b16 %v1620, %v1571
    %v2013 = vpack.c.b16 %v1621, %v1572
    %v2014 = vpack.c.b16 %v1622, %v1573
    %v2015 = vpack.c.b16 %v1623, %v1574
    %v2016 = vpack.c.b16 %v1624, %v1575
    %v2017 = vpack.c.b16 %v1625, %v1576
    %v2018 = vpack.c.b16 %v1626, %v1577
    %v2019 = vpack.c.b16 %v1627, %v1578
    %v2020 = vpack.c.b16 %v1628, %v1579
    %v2021 = vpack.c.b16 %v1629, %v1580
    %v2022 = vpack.c.b16 %v1630, %v1581
    %v2023 = vpack.c.b16 %v1631, %v1582
    %v2024 = vpack.c.b16 %v1632, %v1583
    %v2025 = vpack.c.b16 %v1633, %v1584
    %v2026 = vpack.c.b16 %v1634, %v1585
    %v2027 = vpack.c.b16 %v1635, %v1586
    %v2028 = vpack.c.b16 %v1636, %v1587
    %v2029 = vpack.c.b16 %v1637, %v1588
    %v2030 = vpack.c.b16 %v1638, %v1589
    %v2031 = vpack.c.b16 %v1639, %v1590
    %2424 = vmatprep.subr.bf16.mxu0 %v1984
    %2425 = vmatpush1.bf16.msra.mxu0 %v1983
    %2426 = vmatprep.subr.bf16.mxu0 %v1935
    %2427 = vmatpush1.bf16.msra.mxu0 %v1934
    %2428 = vmatprep.subr.bf16.mxu0 %v1886
    %2429 = vmatpush1.bf16.msra.mxu0 %v1885
    %2430 = vmatprep.subr.bf16.mxu0 %v1837
    %2431 = vmatpush1.bf16.msra.mxu0 %v1836
    %2432 = vmatprep.subr.bf16.mxu0 %v1788
    %2433 = vmatpush1.bf16.msra.mxu0 %v1787
    %2434 = vmatprep.subr.bf16.mxu0 %v1739
    %2435 = vmatpush1.bf16.msra.mxu0 %v1738
    %2436 = vmatprep.subr.bf16.mxu0 %v1690
    %2437 = vmatpush1.bf16.msra.mxu0 %v1689
    %2438 = vmatprep.subr.bf16.mxu0 %v1641
    %2439 = vmatpush1.bf16.msra.mxu0 %v1640
    %2440 = vmatprep.subr.bf16.mxu0 0
    %2441 = vmatpush2.bf16.msra.mxu0 0
    %2442 = vmatprep.subr.bf16.mxu0 0
    %2443 = vmatpush2.bf16.msra.mxu0 0
    %2444 = vmatprep.subr.bf16.mxu0 0
    %2445 = vmatpush2.bf16.msra.mxu0 0
    %2446 = vmatprep.subr.bf16.mxu0 0
    %2447 = vmatpush2.bf16.msra.mxu0 0
    %2448 = vmatprep.subr.bf16.mxu0 0
    %2449 = vmatpush2.bf16.msra.mxu0 0
    %2450 = vmatprep.subr.bf16.mxu0 0
    %2451 = vmatpush2.bf16.msra.mxu0 0
    %2452 = vmatprep.subr.bf16.mxu0 0
    %2453 = vmatpush2.bf16.msra.mxu0 0
    %2454 = vmatprep.subr.bf16.mxu0 0
    %2455 = vmatpush2.bf16.msra.mxu0 0
    %2456 = vmatprep.mubr.bf16.mxu0 0
    %2457 = vmatmul.mubr.bf16.gmra.mxu0 %v55
    %v2458 = vpop.f32.mrf.mxu0
    %v2459 = vadd.f32 0.0, %v2458
    %v2460 = vpop.f32.mrf.mxu0
    %v2461 = vadd.f32 0.0, %v2460
    %v2462 = vpop.f32.mrf.mxu0
    %v2463 = vpop.f32.mrf.mxu0
    %2464 = vdwg.mxu0
    %2465 = vmatprep.subr.bf16.mxu0 %v1986
    %2466 = vmatpush1.bf16.msra.mxu0 %v1985
    %2467 = vmatprep.subr.bf16.mxu0 %v1937
    %2468 = vmatpush1.bf16.msra.mxu0 %v1936
    %2469 = vmatprep.subr.bf16.mxu0 %v1888
    %2470 = vmatpush1.bf16.msra.mxu0 %v1887
    %2471 = vmatprep.subr.bf16.mxu0 %v1839
    %2472 = vmatpush1.bf16.msra.mxu0 %v1838
    %2473 = vmatprep.subr.bf16.mxu0 %v1790
    %2474 = vmatpush1.bf16.msra.mxu0 %v1789
    %2475 = vmatprep.subr.bf16.mxu0 %v1741
    %2476 = vmatpush1.bf16.msra.mxu0 %v1740
    %2477 = vmatprep.subr.bf16.mxu0 %v1692
    %2478 = vmatpush1.bf16.msra.mxu0 %v1691
    %2479 = vmatprep.subr.bf16.mxu0 %v1643
    %2480 = vmatpush1.bf16.msra.mxu0 %v1642
    %2481 = vmatprep.subr.bf16.mxu0 0
    %2482 = vmatpush2.bf16.msra.mxu0 0
    %2483 = vmatprep.subr.bf16.mxu0 0
    %2484 = vmatpush2.bf16.msra.mxu0 0
    %2485 = vmatprep.subr.bf16.mxu0 0
    %2486 = vmatpush2.bf16.msra.mxu0 0
    %2487 = vmatprep.subr.bf16.mxu0 0
    %2488 = vmatpush2.bf16.msra.mxu0 0
    %2489 = vmatprep.subr.bf16.mxu0 0
    %2490 = vmatpush2.bf16.msra.mxu0 0
    %2491 = vmatprep.subr.bf16.mxu0 0
    %2492 = vmatpush2.bf16.msra.mxu0 0
    %2493 = vmatprep.subr.bf16.mxu0 0
    %2494 = vmatpush2.bf16.msra.mxu0 0
    %2495 = vmatprep.subr.bf16.mxu0 0
    %2496 = vmatpush2.bf16.msra.mxu0 0
    %2497 = vmatprep.mubr.bf16.mxu0 0
    %2498 = vmatmul.mubr.bf16.gmra.mxu0 %v55
    %v2499 = vpop.f32.mrf.mxu0
    %v2500 = vadd.f32 0.0, %v2499
    %v2501 = vpop.f32.mrf.mxu0
    %v2502 = vadd.f32 0.0, %v2501
    %v2503 = vpop.f32.mrf.mxu0
    %v2504 = vpop.f32.mrf.mxu0
    %2505 = vdwg.mxu0
    %2506 = vmatprep.subr.bf16.mxu0 %v1988
    %2507 = vmatpush1.bf16.msra.mxu0 %v1987
    %2508 = vmatprep.subr.bf16.mxu0 %v1939
    %2509 = vmatpush1.bf16.msra.mxu0 %v1938
    %2510 = vmatprep.subr.bf16.mxu0 %v1890
    %2511 = vmatpush1.bf16.msra.mxu0 %v1889
    %2512 = vmatprep.subr.bf16.mxu0 %v1841
    %2513 = vmatpush1.bf16.msra.mxu0 %v1840
    %2514 = vmatprep.subr.bf16.mxu0 %v1792
    %2515 = vmatpush1.bf16.msra.mxu0 %v1791
    %2516 = vmatprep.subr.bf16.mxu0 %v1743
    %2517 = vmatpush1.bf16.msra.mxu0 %v1742
    %2518 = vmatprep.subr.bf16.mxu0 %v1694
    %2519 = vmatpush1.bf16.msra.mxu0 %v1693
    %2520 = vmatprep.subr.bf16.mxu0 %v1645
    %2521 = vmatpush1.bf16.msra.mxu0 %v1644
    %2522 = vmatprep.subr.bf16.mxu0 0
    %2523 = vmatpush2.bf16.msra.mxu0 0
    %2524 = vmatprep.subr.bf16.mxu0 0
    %2525 = vmatpush2.bf16.msra.mxu0 0
    %2526 = vmatprep.subr.bf16.mxu0 0
    %2527 = vmatpush2.bf16.msra.mxu0 0
    %2528 = vmatprep.subr.bf16.mxu0 0
    %2529 = vmatpush2.bf16.msra.mxu0 0
    %2530 = vmatprep.subr.bf16.mxu0 0
    %2531 = vmatpush2.bf16.msra.mxu0 0
    %2532 = vmatprep.subr.bf16.mxu0 0
    %2533 = vmatpush2.bf16.msra.mxu0 0
    %2534 = vmatprep.subr.bf16.mxu0 0
    %2535 = vmatpush2.bf16.msra.mxu0 0
    %2536 = vmatprep.subr.bf16.mxu0 0
    %2537 = vmatpush2.bf16.msra.mxu0 0
    %2538 = vmatprep.mubr.bf16.mxu0 0
    %2539 = vmatmul.mubr.bf16.gmra.mxu0 %v55
    %v2540 = vpop.f32.mrf.mxu0
    %v2541 = vadd.f32 0.0, %v2540
    %v2542 = vpop.f32.mrf.mxu0
    %v2543 = vadd.f32 0.0, %v2542
    %v2544 = vpop.f32.mrf.mxu0
    %v2545 = vpop.f32.mrf.mxu0
    %2546 = vdwg.mxu0
    %2547 = vmatprep.subr.bf16.mxu0 %v1990
    %2548 = vmatpush1.bf16.msra.mxu0 %v1989
    %2549 = vmatprep.subr.bf16.mxu0 %v1941
    %2550 = vmatpush1.bf16.msra.mxu0 %v1940
    %2551 = vmatprep.subr.bf16.mxu0 %v1892
    %2552 = vmatpush1.bf16.msra.mxu0 %v1891
    %2553 = vmatprep.subr.bf16.mxu0 %v1843
    %2554 = vmatpush1.bf16.msra.mxu0 %v1842
    %2555 = vmatprep.subr.bf16.mxu0 %v1794
    %2556 = vmatpush1.bf16.msra.mxu0 %v1793
    %2557 = vmatprep.subr.bf16.mxu0 %v1745
    %2558 = vmatpush1.bf16.msra.mxu0 %v1744
    %2559 = vmatprep.subr.bf16.mxu0 %v1696
    %2560 = vmatpush1.bf16.msra.mxu0 %v1695
    %2561 = vmatprep.subr.bf16.mxu0 %v1647
    %2562 = vmatpush1.bf16.msra.mxu0 %v1646
    %2563 = vmatprep.subr.bf16.mxu0 0
    %2564 = vmatpush2.bf16.msra.mxu0 0
    %2565 = vmatprep.subr.bf16.mxu0 0
    %2566 = vmatpush2.bf16.msra.mxu0 0
    %2567 = vmatprep.subr.bf16.mxu0 0
    %2568 = vmatpush2.bf16.msra.mxu0 0
    %2569 = vmatprep.subr.bf16.mxu0 0
    %2570 = vmatpush2.bf16.msra.mxu0 0
    %2571 = vmatprep.subr.bf16.mxu0 0
    %2572 = vmatpush2.bf16.msra.mxu0 0
    %2573 = vmatprep.subr.bf16.mxu0 0
    %2574 = vmatpush2.bf16.msra.mxu0 0
    %2575 = vmatprep.subr.bf16.mxu0 0
    %2576 = vmatpush2.bf16.msra.mxu0 0
    %2577 = vmatprep.subr.bf16.mxu0 0
    %2578 = vmatpush2.bf16.msra.mxu0 0
    %2579 = vmatprep.mubr.bf16.mxu0 0
    %2580 = vmatmul.mubr.bf16.gmra.mxu0 %v55
    %v2581 = vpop.f32.mrf.mxu0
    %v2582 = vadd.f32 0.0, %v2581
    %v2583 = vpop.f32.mrf.mxu0
    %v2584 = vadd.f32 0.0, %v2583
    %v2585 = vpop.f32.mrf.mxu0
    %v2586 = vpop.f32.mrf.mxu0
    %2587 = vdwg.mxu0
    %2588 = vmatprep.subr.bf16.mxu0 %v1992
    %2589 = vmatpush1.bf16.msra.mxu0 %v1991
    %2590 = vmatprep.subr.bf16.mxu0 %v1943
    %2591 = vmatpush1.bf16.msra.mxu0 %v1942
    %2592 = vmatprep.subr.bf16.mxu0 %v1894
    %2593 = vmatpush1.bf16.msra.mxu0 %v1893
    %2594 = vmatprep.subr.bf16.mxu0 %v1845
    %2595 = vmatpush1.bf16.msra.mxu0 %v1844
    %2596 = vmatprep.subr.bf16.mxu0 %v1796
    %2597 = vmatpush1.bf16.msra.mxu0 %v1795
    %2598 = vmatprep.subr.bf16.mxu0 %v1747
    %2599 = vmatpush1.bf16.msra.mxu0 %v1746
    %2600 = vmatprep.subr.bf16.mxu0 %v1698
    %2601 = vmatpush1.bf16.msra.mxu0 %v1697
    %2602 = vmatprep.subr.bf16.mxu0 %v1649
    %2603 = vmatpush1.bf16.msra.mxu0 %v1648
    %2604 = vmatprep.subr.bf16.mxu0 0
    %2605 = vmatpush2.bf16.msra.mxu0 0
    %2606 = vmatprep.subr.bf16.mxu0 0
    %2607 = vmatpush2.bf16.msra.mxu0 0
    %2608 = vmatprep.subr.bf16.mxu0 0
    %2609 = vmatpush2.bf16.msra.mxu0 0
    %2610 = vmatprep.subr.bf16.mxu0 0
    %2611 = vmatpush2.bf16.msra.mxu0 0
    %2612 = vmatprep.subr.bf16.mxu0 0
    %2613 = vmatpush2.bf16.msra.mxu0 0
    %2614 = vmatprep.subr.bf16.mxu0 0
    %2615 = vmatpush2.bf16.msra.mxu0 0
    %2616 = vmatprep.subr.bf16.mxu0 0
    %2617 = vmatpush2.bf16.msra.mxu0 0
    %2618 = vmatprep.subr.bf16.mxu0 0
    %2619 = vmatpush2.bf16.msra.mxu0 0
    %2620 = vmatprep.mubr.bf16.mxu0 0
    %2621 = vmatmul.mubr.bf16.gmra.mxu0 %v55
    %v2622 = vpop.f32.mrf.mxu0
    %v2623 = vadd.f32 0.0, %v2622
    %v2624 = vpop.f32.mrf.mxu0
    %v2625 = vadd.f32 0.0, %v2624
    %v2626 = vpop.f32.mrf.mxu0
    %v2627 = vpop.f32.mrf.mxu0
    %2628 = vdwg.mxu0
    %2629 = vmatprep.subr.bf16.mxu0 %v1994
    %2630 = vmatpush1.bf16.msra.mxu0 %v1993
    %2631 = vmatprep.subr.bf16.mxu0 %v1945
    %2632 = vmatpush1.bf16.msra.mxu0 %v1944
    %2633 = vmatprep.subr.bf16.mxu0 %v1896
    %2634 = vmatpush1.bf16.msra.mxu0 %v1895
    %2635 = vmatprep.subr.bf16.mxu0 %v1847
    %2636 = vmatpush1.bf16.msra.mxu0 %v1846
    %2637 = vmatprep.subr.bf16.mxu0 %v1798
    %2638 = vmatpush1.bf16.msra.mxu0 %v1797
    %2639 = vmatprep.subr.bf16.mxu0 %v1749
    %2640 = vmatpush1.bf16.msra.mxu0 %v1748
    %2641 = vmatprep.subr.bf16.mxu0 %v1700
    %2642 = vmatpush1.bf16.msra.mxu0 %v1699
    %2643 = vmatprep.subr.bf16.mxu0 %v1651
    %2644 = vmatpush1.bf16.msra.mxu0 %v1650
    %2645 = vmatprep.subr.bf16.mxu0 0
    %2646 = vmatpush2.bf16.msra.mxu0 0
    %2647 = vmatprep.subr.bf16.mxu0 0
    %2648 = vmatpush2.bf16.msra.mxu0 0
    %2649 = vmatprep.subr.bf16.mxu0 0
    %2650 = vmatpush2.bf16.msra.mxu0 0
    %2651 = vmatprep.subr.bf16.mxu0 0
    %2652 = vmatpush2.bf16.msra.mxu0 0
    %2653 = vmatprep.subr.bf16.mxu0 0
    %2654 = vmatpush2.bf16.msra.mxu0 0
    %2655 = vmatprep.subr.bf16.mxu0 0
    %2656 = vmatpush2.bf16.msra.mxu0 0
    %2657 = vmatprep.subr.bf16.mxu0 0
    %2658 = vmatpush2.bf16.msra.mxu0 0
    %2659 = vmatprep.subr.bf16.mxu0 0
    %2660 = vmatpush2.bf16.msra.mxu0 0
    %2661 = vmatprep.mubr.bf16.mxu0 0
    %2662 = vmatmul.mubr.bf16.gmra.mxu0 %v55
    %v2663 = vpop.f32.mrf.mxu0
    %v2664 = vadd.f32 0.0, %v2663
    %v2665 = vpop.f32.mrf.mxu0
    %v2666 = vadd.f32 0.0, %v2665
    %v2667 = vpop.f32.mrf.mxu0
    %v2668 = vpop.f32.mrf.mxu0
    %2669 = vdwg.mxu0
    %2670 = vmatprep.subr.bf16.mxu0 %v1996
    %2671 = vmatpush1.bf16.msra.mxu0 %v1995
    %2672 = vmatprep.subr.bf16.mxu0 %v1947
    %2673 = vmatpush1.bf16.msra.mxu0 %v1946
    %2674 = vmatprep.subr.bf16.mxu0 %v1898
    %2675 = vmatpush1.bf16.msra.mxu0 %v1897
    %2676 = vmatprep.subr.bf16.mxu0 %v1849
    %2677 = vmatpush1.bf16.msra.mxu0 %v1848
    %2678 = vmatprep.subr.bf16.mxu0 %v1800
    %2679 = vmatpush1.bf16.msra.mxu0 %v1799
    %2680 = vmatprep.subr.bf16.mxu0 %v1751
    %2681 = vmatpush1.bf16.msra.mxu0 %v1750
    %2682 = vmatprep.subr.bf16.mxu0 %v1702
    %2683 = vmatpush1.bf16.msra.mxu0 %v1701
    %2684 = vmatprep.subr.bf16.mxu0 %v1653
    %2685 = vmatpush1.bf16.msra.mxu0 %v1652
    %2686 = vmatprep.subr.bf16.mxu0 0
    %2687 = vmatpush2.bf16.msra.mxu0 0
    %2688 = vmatprep.subr.bf16.mxu0 0
    %2689 = vmatpush2.bf16.msra.mxu0 0
    %2690 = vmatprep.subr.bf16.mxu0 0
    %2691 = vmatpush2.bf16.msra.mxu0 0
    %2692 = vmatprep.subr.bf16.mxu0 0
    %2693 = vmatpush2.bf16.msra.mxu0 0
    %2694 = vmatprep.subr.bf16.mxu0 0
    %2695 = vmatpush2.bf16.msra.mxu0 0
    %2696 = vmatprep.subr.bf16.mxu0 0
    %2697 = vmatpush2.bf16.msra.mxu0 0
    %2698 = vmatprep.subr.bf16.mxu0 0
    %2699 = vmatpush2.bf16.msra.mxu0 0
    %2700 = vmatprep.subr.bf16.mxu0 0
    %2701 = vmatpush2.bf16.msra.mxu0 0
    %2702 = vmatprep.mubr.bf16.mxu0 0
    %2703 = vmatmul.mubr.bf16.gmra.mxu0 %v55
    %v2704 = vpop.f32.mrf.mxu0
    %v2705 = vadd.f32 0.0, %v2704
    %v2706 = vpop.f32.mrf.mxu0
    %v2707 = vadd.f32 0.0, %v2706
    %v2708 = vpop.f32.mrf.mxu0
    %v2709 = vpop.f32.mrf.mxu0
    %2710 = vdwg.mxu0
    %2711 = vmatprep.subr.bf16.mxu0 %v1998
    %2712 = vmatpush1.bf16.msra.mxu0 %v1997
    %2713 = vmatprep.subr.bf16.mxu0 %v1949
    %2714 = vmatpush1.bf16.msra.mxu0 %v1948
    %2715 = vmatprep.subr.bf16.mxu0 %v1900
    %2716 = vmatpush1.bf16.msra.mxu0 %v1899
    %2717 = vmatprep.subr.bf16.mxu0 %v1851
    %2718 = vmatpush1.bf16.msra.mxu0 %v1850
    %2719 = vmatprep.subr.bf16.mxu0 %v1802
    %2720 = vmatpush1.bf16.msra.mxu0 %v1801
    %2721 = vmatprep.subr.bf16.mxu0 %v1753
    %2722 = vmatpush1.bf16.msra.mxu0 %v1752
    %2723 = vmatprep.subr.bf16.mxu0 %v1704
    %2724 = vmatpush1.bf16.msra.mxu0 %v1703
    %2725 = vmatprep.subr.bf16.mxu0 %v1655
    %2726 = vmatpush1.bf16.msra.mxu0 %v1654
    %2727 = vmatprep.subr.bf16.mxu0 0
    %2728 = vmatpush2.bf16.msra.mxu0 0
    %2729 = vmatprep.subr.bf16.mxu0 0
    %2730 = vmatpush2.bf16.msra.mxu0 0
    %2731 = vmatprep.subr.bf16.mxu0 0
    %2732 = vmatpush2.bf16.msra.mxu0 0
    %2733 = vmatprep.subr.bf16.mxu0 0
    %2734 = vmatpush2.bf16.msra.mxu0 0
    %2735 = vmatprep.subr.bf16.mxu0 0
    %2736 = vmatpush2.bf16.msra.mxu0 0
    %2737 = vmatprep.subr.bf16.mxu0 0
    %2738 = vmatpush2.bf16.msra.mxu0 0
    %2739 = vmatprep.subr.bf16.mxu0 0
    %2740 = vmatpush2.bf16.msra.mxu0 0
    %2741 = vmatprep.subr.bf16.mxu0 0
    %2742 = vmatpush2.bf16.msra.mxu0 0
    %2743 = vmatprep.mubr.bf16.mxu0 0
    %2744 = vmatmul.mubr.bf16.gmra.mxu0 %v55
    %v2745 = vpop.f32.mrf.mxu0
    %v2746 = vadd.f32 0.0, %v2745
    %v2747 = vpop.f32.mrf.mxu0
    %v2748 = vadd.f32 0.0, %v2747
    %v2749 = vpop.f32.mrf.mxu0
    %v2750 = vpop.f32.mrf.mxu0
    %2751 = vdwg.mxu0
    %2752 = vmatprep.subr.bf16.mxu0 %v2000
    %2753 = vmatpush1.bf16.msra.mxu0 %v1999
    %2754 = vmatprep.subr.bf16.mxu0 %v1951
    %2755 = vmatpush1.bf16.msra.mxu0 %v1950
    %2756 = vmatprep.subr.bf16.mxu0 %v1902
    %2757 = vmatpush1.bf16.msra.mxu0 %v1901
    %2758 = vmatprep.subr.bf16.mxu0 %v1853
    %2759 = vmatpush1.bf16.msra.mxu0 %v1852
    %2760 = vmatprep.subr.bf16.mxu0 %v1804
    %2761 = vmatpush1.bf16.msra.mxu0 %v1803
    %2762 = vmatprep.subr.bf16.mxu0 %v1755
    %2763 = vmatpush1.bf16.msra.mxu0 %v1754
    %2764 = vmatprep.subr.bf16.mxu0 %v1706
    %2765 = vmatpush1.bf16.msra.mxu0 %v1705
    %2766 = vmatprep.subr.bf16.mxu0 %v1657
    %2767 = vmatpush1.bf16.msra.mxu0 %v1656
    %2768 = vmatprep.subr.bf16.mxu0 0
    %2769 = vmatpush2.bf16.msra.mxu0 0
    %2770 = vmatprep.subr.bf16.mxu0 0
    %2771 = vmatpush2.bf16.msra.mxu0 0
    %2772 = vmatprep.subr.bf16.mxu0 0
    %2773 = vmatpush2.bf16.msra.mxu0 0
    %2774 = vmatprep.subr.bf16.mxu0 0
    %2775 = vmatpush2.bf16.msra.mxu0 0
    %2776 = vmatprep.subr.bf16.mxu0 0
    %2777 = vmatpush2.bf16.msra.mxu0 0
    %2778 = vmatprep.subr.bf16.mxu0 0
    %2779 = vmatpush2.bf16.msra.mxu0 0
    %2780 = vmatprep.subr.bf16.mxu0 0
    %2781 = vmatpush2.bf16.msra.mxu0 0
    %2782 = vmatprep.subr.bf16.mxu0 0
    %2783 = vmatpush2.bf16.msra.mxu0 0
    %2784 = vmatprep.mubr.bf16.mxu0 0
    %2785 = vmatmul.mubr.bf16.gmra.mxu0 %v55
    %v2786 = vpop.f32.mrf.mxu0
    %v2787 = vadd.f32 0.0, %v2786
    %v2788 = vpop.f32.mrf.mxu0
    %v2789 = vadd.f32 0.0, %v2788
    %v2790 = vpop.f32.mrf.mxu0
    %v2791 = vpop.f32.mrf.mxu0
    %2792 = vdwg.mxu0
    %2793 = vmatprep.subr.bf16.mxu0 %v2002
    %2794 = vmatpush1.bf16.msra.mxu0 %v2001
    %2795 = vmatprep.subr.bf16.mxu0 %v1953
    %2796 = vmatpush1.bf16.msra.mxu0 %v1952
    %2797 = vmatprep.subr.bf16.mxu0 %v1904
    %2798 = vmatpush1.bf16.msra.mxu0 %v1903
    %2799 = vmatprep.subr.bf16.mxu0 %v1855
    %2800 = vmatpush1.bf16.msra.mxu0 %v1854
    %2801 = vmatprep.subr.bf16.mxu0 %v1806
    %2802 = vmatpush1.bf16.msra.mxu0 %v1805
    %2803 = vmatprep.subr.bf16.mxu0 %v1757
    %2804 = vmatpush1.bf16.msra.mxu0 %v1756
    %2805 = vmatprep.subr.bf16.mxu0 %v1708
    %2806 = vmatpush1.bf16.msra.mxu0 %v1707
    %2807 = vmatprep.subr.bf16.mxu0 %v1659
    %2808 = vmatpush1.bf16.msra.mxu0 %v1658
    %2809 = vmatprep.subr.bf16.mxu0 0
    %2810 = vmatpush2.bf16.msra.mxu0 0
    %2811 = vmatprep.subr.bf16.mxu0 0
    %2812 = vmatpush2.bf16.msra.mxu0 0
    %2813 = vmatprep.subr.bf16.mxu0 0
    %2814 = vmatpush2.bf16.msra.mxu0 0
    %2815 = vmatprep.subr.bf16.mxu0 0
    %2816 = vmatpush2.bf16.msra.mxu0 0
    %2817 = vmatprep.subr.bf16.mxu0 0
    %2818 = vmatpush2.bf16.msra.mxu0 0
    %2819 = vmatprep.subr.bf16.mxu0 0
    %2820 = vmatpush2.bf16.msra.mxu0 0
    %2821 = vmatprep.subr.bf16.mxu0 0
    %2822 = vmatpush2.bf16.msra.mxu0 0
    %2823 = vmatprep.subr.bf16.mxu0 0
    %2824 = vmatpush2.bf16.msra.mxu0 0
    %2825 = vmatprep.mubr.bf16.mxu0 0
    %2826 = vmatmul.mubr.bf16.gmra.mxu0 %v55
    %v2827 = vpop.f32.mrf.mxu0
    %v2828 = vadd.f32 0.0, %v2827
    %v2829 = vpop.f32.mrf.mxu0
    %v2830 = vadd.f32 0.0, %v2829
    %v2831 = vpop.f32.mrf.mxu0
    %v2832 = vpop.f32.mrf.mxu0
    %2833 = vdwg.mxu0
    %2834 = vmatprep.subr.bf16.mxu0 %v2004
    %2835 = vmatpush1.bf16.msra.mxu0 %v2003
    %2836 = vmatprep.subr.bf16.mxu0 %v1955
    %2837 = vmatpush1.bf16.msra.mxu0 %v1954
    %2838 = vmatprep.subr.bf16.mxu0 %v1906
    %2839 = vmatpush1.bf16.msra.mxu0 %v1905
    %2840 = vmatprep.subr.bf16.mxu0 %v1857
    %2841 = vmatpush1.bf16.msra.mxu0 %v1856
    %2842 = vmatprep.subr.bf16.mxu0 %v1808
    %2843 = vmatpush1.bf16.msra.mxu0 %v1807
    %2844 = vmatprep.subr.bf16.mxu0 %v1759
    %2845 = vmatpush1.bf16.msra.mxu0 %v1758
    %2846 = vmatprep.subr.bf16.mxu0 %v1710
    %2847 = vmatpush1.bf16.msra.mxu0 %v1709
    %2848 = vmatprep.subr.bf16.mxu0 %v1661
    %2849 = vmatpush1.bf16.msra.mxu0 %v1660
    %2850 = vmatprep.subr.bf16.mxu0 0
    %2851 = vmatpush2.bf16.msra.mxu0 0
    %2852 = vmatprep.subr.bf16.mxu0 0
    %2853 = vmatpush2.bf16.msra.mxu0 0
    %2854 = vmatprep.subr.bf16.mxu0 0
    %2855 = vmatpush2.bf16.msra.mxu0 0
    %2856 = vmatprep.subr.bf16.mxu0 0
    %2857 = vmatpush2.bf16.msra.mxu0 0
    %2858 = vmatprep.subr.bf16.mxu0 0
    %2859 = vmatpush2.bf16.msra.mxu0 0
    %2860 = vmatprep.subr.bf16.mxu0 0
    %2861 = vmatpush2.bf16.msra.mxu0 0
    %2862 = vmatprep.subr.bf16.mxu0 0
    %2863 = vmatpush2.bf16.msra.mxu0 0
    %2864 = vmatprep.subr.bf16.mxu0 0
    %2865 = vmatpush2.bf16.msra.mxu0 0
    %2866 = vmatprep.mubr.bf16.mxu0 0
    %2867 = vmatmul.mubr.bf16.gmra.mxu0 %v55
    %v2868 = vpop.f32.mrf.mxu0
    %v2869 = vadd.f32 0.0, %v2868
    %v2870 = vpop.f32.mrf.mxu0
    %v2871 = vadd.f32 0.0, %v2870
    %v2872 = vpop.f32.mrf.mxu0
    %v2873 = vpop.f32.mrf.mxu0
    %2874 = vdwg.mxu0
    %2875 = vmatprep.subr.bf16.mxu0 %v2006
    %2876 = vmatpush1.bf16.msra.mxu0 %v2005
    %2877 = vmatprep.subr.bf16.mxu0 %v1957
    %2878 = vmatpush1.bf16.msra.mxu0 %v1956
    %2879 = vmatprep.subr.bf16.mxu0 %v1908
    %2880 = vmatpush1.bf16.msra.mxu0 %v1907
    %2881 = vmatprep.subr.bf16.mxu0 %v1859
    %2882 = vmatpush1.bf16.msra.mxu0 %v1858
    %2883 = vmatprep.subr.bf16.mxu0 %v1810
    %2884 = vmatpush1.bf16.msra.mxu0 %v1809
    %2885 = vmatprep.subr.bf16.mxu0 %v1761
    %2886 = vmatpush1.bf16.msra.mxu0 %v1760
    %2887 = vmatprep.subr.bf16.mxu0 %v1712
    %2888 = vmatpush1.bf16.msra.mxu0 %v1711
    %2889 = vmatprep.subr.bf16.mxu0 %v1663
    %2890 = vmatpush1.bf16.msra.mxu0 %v1662
    %2891 = vmatprep.subr.bf16.mxu0 0
    %2892 = vmatpush2.bf16.msra.mxu0 0
    %2893 = vmatprep.subr.bf16.mxu0 0
    %2894 = vmatpush2.bf16.msra.mxu0 0
    %2895 = vmatprep.subr.bf16.mxu0 0
    %2896 = vmatpush2.bf16.msra.mxu0 0
    %2897 = vmatprep.subr.bf16.mxu0 0
    %2898 = vmatpush2.bf16.msra.mxu0 0
    %2899 = vmatprep.subr.bf16.mxu0 0
    %2900 = vmatpush2.bf16.msra.mxu0 0
    %2901 = vmatprep.subr.bf16.mxu0 0
    %2902 = vmatpush2.bf16.msra.mxu0 0
    %2903 = vmatprep.subr.bf16.mxu0 0
    %2904 = vmatpush2.bf16.msra.mxu0 0
    %2905 = vmatprep.subr.bf16.mxu0 0
    %2906 = vmatpush2.bf16.msra.mxu0 0
    %2907 = vmatprep.mubr.bf16.mxu0 0
    %2908 = vmatmul.mubr.bf16.gmra.mxu0 %v55
    %v2909 = vpop.f32.mrf.mxu0
    %v2910 = vadd.f32 0.0, %v2909
    %v2911 = vpop.f32.mrf.mxu0
    %v2912 = vadd.f32 0.0, %v2911
    %v2913 = vpop.f32.mrf.mxu0
    %v2914 = vpop.f32.mrf.mxu0
    %2915 = vdwg.mxu0
    %2916 = vmatprep.subr.bf16.mxu0 %v2008
    %2917 = vmatpush1.bf16.msra.mxu0 %v2007
    %2918 = vmatprep.subr.bf16.mxu0 %v1959
    %2919 = vmatpush1.bf16.msra.mxu0 %v1958
    %2920 = vmatprep.subr.bf16.mxu0 %v1910
    %2921 = vmatpush1.bf16.msra.mxu0 %v1909
    %2922 = vmatprep.subr.bf16.mxu0 %v1861
    %2923 = vmatpush1.bf16.msra.mxu0 %v1860
    %2924 = vmatprep.subr.bf16.mxu0 %v1812
    %2925 = vmatpush1.bf16.msra.mxu0 %v1811
    %2926 = vmatprep.subr.bf16.mxu0 %v1763
    %2927 = vmatpush1.bf16.msra.mxu0 %v1762
    %2928 = vmatprep.subr.bf16.mxu0 %v1714
    %2929 = vmatpush1.bf16.msra.mxu0 %v1713
    %2930 = vmatprep.subr.bf16.mxu0 %v1665
    %2931 = vmatpush1.bf16.msra.mxu0 %v1664
    %2932 = vmatprep.subr.bf16.mxu0 0
    %2933 = vmatpush2.bf16.msra.mxu0 0
    %2934 = vmatprep.subr.bf16.mxu0 0
    %2935 = vmatpush2.bf16.msra.mxu0 0
    %2936 = vmatprep.subr.bf16.mxu0 0
    %2937 = vmatpush2.bf16.msra.mxu0 0
    %2938 = vmatprep.subr.bf16.mxu0 0
    %2939 = vmatpush2.bf16.msra.mxu0 0
    %2940 = vmatprep.subr.bf16.mxu0 0
    %2941 = vmatpush2.bf16.msra.mxu0 0
    %2942 = vmatprep.subr.bf16.mxu0 0
    %2943 = vmatpush2.bf16.msra.mxu0 0
    %2944 = vmatprep.subr.bf16.mxu0 0
    %2945 = vmatpush2.bf16.msra.mxu0 0
    %2946 = vmatprep.subr.bf16.mxu0 0
    %2947 = vmatpush2.bf16.msra.mxu0 0
    %2948 = vmatprep.mubr.bf16.mxu0 0
    %2949 = vmatmul.mubr.bf16.gmra.mxu0 %v55
    %v2950 = vpop.f32.mrf.mxu0
    %v2951 = vadd.f32 0.0, %v2950
    %v2952 = vpop.f32.mrf.mxu0
    %v2953 = vadd.f32 0.0, %v2952
    %v2954 = vpop.f32.mrf.mxu0
    %v2955 = vpop.f32.mrf.mxu0
    %2956 = vdwg.mxu0
    %2957 = vmatprep.subr.bf16.mxu0 %v2010
    %2958 = vmatpush1.bf16.msra.mxu0 %v2009
    %2959 = vmatprep.subr.bf16.mxu0 %v1961
    %2960 = vmatpush1.bf16.msra.mxu0 %v1960
    %2961 = vmatprep.subr.bf16.mxu0 %v1912
    %2962 = vmatpush1.bf16.msra.mxu0 %v1911
    %2963 = vmatprep.subr.bf16.mxu0 %v1863
    %2964 = vmatpush1.bf16.msra.mxu0 %v1862
    %2965 = vmatprep.subr.bf16.mxu0 %v1814
    %2966 = vmatpush1.bf16.msra.mxu0 %v1813
    %2967 = vmatprep.subr.bf16.mxu0 %v1765
    %2968 = vmatpush1.bf16.msra.mxu0 %v1764
    %2969 = vmatprep.subr.bf16.mxu0 %v1716
    %2970 = vmatpush1.bf16.msra.mxu0 %v1715
    %2971 = vmatprep.subr.bf16.mxu0 %v1667
    %2972 = vmatpush1.bf16.msra.mxu0 %v1666
    %2973 = vmatprep.subr.bf16.mxu0 0
    %2974 = vmatpush2.bf16.msra.mxu0 0
    %2975 = vmatprep.subr.bf16.mxu0 0
    %2976 = vmatpush2.bf16.msra.mxu0 0
    %2977 = vmatprep.subr.bf16.mxu0 0
    %2978 = vmatpush2.bf16.msra.mxu0 0
    %2979 = vmatprep.subr.bf16.mxu0 0
    %2980 = vmatpush2.bf16.msra.mxu0 0
    %2981 = vmatprep.subr.bf16.mxu0 0
    %2982 = vmatpush2.bf16.msra.mxu0 0
    %2983 = vmatprep.subr.bf16.mxu0 0
    %2984 = vmatpush2.bf16.msra.mxu0 0
    %2985 = vmatprep.subr.bf16.mxu0 0
    %2986 = vmatpush2.bf16.msra.mxu0 0
    %2987 = vmatprep.subr.bf16.mxu0 0
    %2988 = vmatpush2.bf16.msra.mxu0 0
    %2989 = vmatprep.mubr.bf16.mxu0 0
    %2990 = vmatmul.mubr.bf16.gmra.mxu0 %v55
    %v2991 = vpop.f32.mrf.mxu0
    %v2992 = vadd.f32 0.0, %v2991
    %v2993 = vpop.f32.mrf.mxu0
    %v2994 = vadd.f32 0.0, %v2993
    %v2995 = vpop.f32.mrf.mxu0
    %v2996 = vpop.f32.mrf.mxu0
    %2997 = vdwg.mxu0
    %2998 = vmatprep.subr.bf16.mxu0 %v2012
    %2999 = vmatpush1.bf16.msra.mxu0 %v2011
    %3000 = vmatprep.subr.bf16.mxu0 %v1963
    %3001 = vmatpush1.bf16.msra.mxu0 %v1962
    %3002 = vmatprep.subr.bf16.mxu0 %v1914
    %3003 = vmatpush1.bf16.msra.mxu0 %v1913
    %3004 = vmatprep.subr.bf16.mxu0 %v1865
    %3005 = vmatpush1.bf16.msra.mxu0 %v1864
    %3006 = vmatprep.subr.bf16.mxu0 %v1816
    %3007 = vmatpush1.bf16.msra.mxu0 %v1815
    %3008 = vmatprep.subr.bf16.mxu0 %v1767
    %3009 = vmatpush1.bf16.msra.mxu0 %v1766
    %3010 = vmatprep.subr.bf16.mxu0 %v1718
    %3011 = vmatpush1.bf16.msra.mxu0 %v1717
    %3012 = vmatprep.subr.bf16.mxu0 %v1669
    %3013 = vmatpush1.bf16.msra.mxu0 %v1668
    %3014 = vmatprep.subr.bf16.mxu0 0
    %3015 = vmatpush2.bf16.msra.mxu0 0
    %3016 = vmatprep.subr.bf16.mxu0 0
    %3017 = vmatpush2.bf16.msra.mxu0 0
    %3018 = vmatprep.subr.bf16.mxu0 0
    %3019 = vmatpush2.bf16.msra.mxu0 0
    %3020 = vmatprep.subr.bf16.mxu0 0
    %3021 = vmatpush2.bf16.msra.mxu0 0
    %3022 = vmatprep.subr.bf16.mxu0 0
    %3023 = vmatpush2.bf16.msra.mxu0 0
    %3024 = vmatprep.subr.bf16.mxu0 0
    %3025 = vmatpush2.bf16.msra.mxu0 0
    %3026 = vmatprep.subr.bf16.mxu0 0
    %3027 = vmatpush2.bf16.msra.mxu0 0
    %3028 = vmatprep.subr.bf16.mxu0 0
    %3029 = vmatpush2.bf16.msra.mxu0 0
    %3030 = vmatprep.mubr.bf16.mxu0 0
    %3031 = vmatmul.mubr.bf16.gmra.mxu0 %v55
    %v3032 = vpop.f32.mrf.mxu0
    %v3033 = vadd.f32 0.0, %v3032
    %v3034 = vpop.f32.mrf.mxu0
    %v3035 = vadd.f32 0.0, %v3034
    %v3036 = vpop.f32.mrf.mxu0
    %v3037 = vpop.f32.mrf.mxu0
    %3038 = vdwg.mxu0
    %3039 = vmatprep.subr.bf16.mxu0 %v2014
    %3040 = vmatpush1.bf16.msra.mxu0 %v2013
    %3041 = vmatprep.subr.bf16.mxu0 %v1965
    %3042 = vmatpush1.bf16.msra.mxu0 %v1964
    %3043 = vmatprep.subr.bf16.mxu0 %v1916
    %3044 = vmatpush1.bf16.msra.mxu0 %v1915
    %3045 = vmatprep.subr.bf16.mxu0 %v1867
    %3046 = vmatpush1.bf16.msra.mxu0 %v1866
    %3047 = vmatprep.subr.bf16.mxu0 %v1818
    %3048 = vmatpush1.bf16.msra.mxu0 %v1817
    %3049 = vmatprep.subr.bf16.mxu0 %v1769
    %3050 = vmatpush1.bf16.msra.mxu0 %v1768
    %3051 = vmatprep.subr.bf16.mxu0 %v1720
    %3052 = vmatpush1.bf16.msra.mxu0 %v1719
    %3053 = vmatprep.subr.bf16.mxu0 %v1671
    %3054 = vmatpush1.bf16.msra.mxu0 %v1670
    %3055 = vmatprep.subr.bf16.mxu0 0
    %3056 = vmatpush2.bf16.msra.mxu0 0
    %3057 = vmatprep.subr.bf16.mxu0 0
    %3058 = vmatpush2.bf16.msra.mxu0 0
    %3059 = vmatprep.subr.bf16.mxu0 0
    %3060 = vmatpush2.bf16.msra.mxu0 0
    %3061 = vmatprep.subr.bf16.mxu0 0
    %3062 = vmatpush2.bf16.msra.mxu0 0
    %3063 = vmatprep.subr.bf16.mxu0 0
    %3064 = vmatpush2.bf16.msra.mxu0 0
    %3065 = vmatprep.subr.bf16.mxu0 0
    %3066 = vmatpush2.bf16.msra.mxu0 0
    %3067 = vmatprep.subr.bf16.mxu0 0
    %3068 = vmatpush2.bf16.msra.mxu0 0
    %3069 = vmatprep.subr.bf16.mxu0 0
    %3070 = vmatpush2.bf16.msra.mxu0 0
    %3071 = vmatprep.mubr.bf16.mxu0 0
    %3072 = vmatmul.mubr.bf16.gmra.mxu0 %v55
    %v3073 = vpop.f32.mrf.mxu0
    %v3074 = vadd.f32 0.0, %v3073
    %v3075 = vpop.f32.mrf.mxu0
    %v3076 = vadd.f32 0.0, %v3075
    %v3077 = vpop.f32.mrf.mxu0
    %v3078 = vpop.f32.mrf.mxu0
    %3079 = vdwg.mxu0
    %3080 = vmatprep.subr.bf16.mxu0 %v2016
    %3081 = vmatpush1.bf16.msra.mxu0 %v2015
    %3082 = vmatprep.subr.bf16.mxu0 %v1967
    %3083 = vmatpush1.bf16.msra.mxu0 %v1966
    %3084 = vmatprep.subr.bf16.mxu0 %v1918
    %3085 = vmatpush1.bf16.msra.mxu0 %v1917
    %3086 = vmatprep.subr.bf16.mxu0 %v1869
    %3087 = vmatpush1.bf16.msra.mxu0 %v1868
    %3088 = vmatprep.subr.bf16.mxu0 %v1820
    %3089 = vmatpush1.bf16.msra.mxu0 %v1819
    %3090 = vmatprep.subr.bf16.mxu0 %v1771
    %3091 = vmatpush1.bf16.msra.mxu0 %v1770
    %3092 = vmatprep.subr.bf16.mxu0 %v1722
    %3093 = vmatpush1.bf16.msra.mxu0 %v1721
    %3094 = vmatprep.subr.bf16.mxu0 %v1673
    %3095 = vmatpush1.bf16.msra.mxu0 %v1672
    %3096 = vmatprep.subr.bf16.mxu0 0
    %3097 = vmatpush2.bf16.msra.mxu0 0
    %3098 = vmatprep.subr.bf16.mxu0 0
    %3099 = vmatpush2.bf16.msra.mxu0 0
    %3100 = vmatprep.subr.bf16.mxu0 0
    %3101 = vmatpush2.bf16.msra.mxu0 0
    %3102 = vmatprep.subr.bf16.mxu0 0
    %3103 = vmatpush2.bf16.msra.mxu0 0
    %3104 = vmatprep.subr.bf16.mxu0 0
    %3105 = vmatpush2.bf16.msra.mxu0 0
    %3106 = vmatprep.subr.bf16.mxu0 0
    %3107 = vmatpush2.bf16.msra.mxu0 0
    %3108 = vmatprep.subr.bf16.mxu0 0
    %3109 = vmatpush2.bf16.msra.mxu0 0
    %3110 = vmatprep.subr.bf16.mxu0 0
    %3111 = vmatpush2.bf16.msra.mxu0 0
    %3112 = vmatprep.mubr.bf16.mxu0 0
    %3113 = vmatmul.mubr.bf16.gmra.mxu0 %v55
    %v3114 = vpop.f32.mrf.mxu0
    %v3115 = vadd.f32 0.0, %v3114
    %v3116 = vpop.f32.mrf.mxu0
    %v3117 = vadd.f32 0.0, %v3116
    %v3118 = vpop.f32.mrf.mxu0
    %v3119 = vpop.f32.mrf.mxu0
    %3120 = vdwg.mxu0
    %3121 = vmatprep.subr.bf16.mxu0 %v2018
    %3122 = vmatpush1.bf16.msra.mxu0 %v2017
    %3123 = vmatprep.subr.bf16.mxu0 %v1969
    %3124 = vmatpush1.bf16.msra.mxu0 %v1968
    %3125 = vmatprep.subr.bf16.mxu0 %v1920
    %3126 = vmatpush1.bf16.msra.mxu0 %v1919
    %3127 = vmatprep.subr.bf16.mxu0 %v1871
    %3128 = vmatpush1.bf16.msra.mxu0 %v1870
    %3129 = vmatprep.subr.bf16.mxu0 %v1822
    %3130 = vmatpush1.bf16.msra.mxu0 %v1821
    %3131 = vmatprep.subr.bf16.mxu0 %v1773
    %3132 = vmatpush1.bf16.msra.mxu0 %v1772
    %3133 = vmatprep.subr.bf16.mxu0 %v1724
    %3134 = vmatpush1.bf16.msra.mxu0 %v1723
    %3135 = vmatprep.subr.bf16.mxu0 %v1675
    %3136 = vmatpush1.bf16.msra.mxu0 %v1674
    %3137 = vmatprep.subr.bf16.mxu0 0
    %3138 = vmatpush2.bf16.msra.mxu0 0
    %3139 = vmatprep.subr.bf16.mxu0 0
    %3140 = vmatpush2.bf16.msra.mxu0 0
    %3141 = vmatprep.subr.bf16.mxu0 0
    %3142 = vmatpush2.bf16.msra.mxu0 0
    %3143 = vmatprep.subr.bf16.mxu0 0
    %3144 = vmatpush2.bf16.msra.mxu0 0
    %3145 = vmatprep.subr.bf16.mxu0 0
    %3146 = vmatpush2.bf16.msra.mxu0 0
    %3147 = vmatprep.subr.bf16.mxu0 0
    %3148 = vmatpush2.bf16.msra.mxu0 0
    %3149 = vmatprep.subr.bf16.mxu0 0
    %3150 = vmatpush2.bf16.msra.mxu0 0
    %3151 = vmatprep.subr.bf16.mxu0 0
    %3152 = vmatpush2.bf16.msra.mxu0 0
    %3153 = vmatprep.mubr.bf16.mxu0 0
    %3154 = vmatmul.mubr.bf16.gmra.mxu0 %v55
    %v3155 = vpop.f32.mrf.mxu0
    %v3156 = vadd.f32 0.0, %v3155
    %v3157 = vpop.f32.mrf.mxu0
    %v3158 = vadd.f32 0.0, %v3157
    %v3159 = vpop.f32.mrf.mxu0
    %v3160 = vpop.f32.mrf.mxu0
    %3161 = vdwg.mxu0
    %3162 = vmatprep.subr.bf16.mxu0 %v2020
    %3163 = vmatpush1.bf16.msra.mxu0 %v2019
    %3164 = vmatprep.subr.bf16.mxu0 %v1971
    %3165 = vmatpush1.bf16.msra.mxu0 %v1970
    %3166 = vmatprep.subr.bf16.mxu0 %v1922
    %3167 = vmatpush1.bf16.msra.mxu0 %v1921
    %3168 = vmatprep.subr.bf16.mxu0 %v1873
    %3169 = vmatpush1.bf16.msra.mxu0 %v1872
    %3170 = vmatprep.subr.bf16.mxu0 %v1824
    %3171 = vmatpush1.bf16.msra.mxu0 %v1823
    %3172 = vmatprep.subr.bf16.mxu0 %v1775
    %3173 = vmatpush1.bf16.msra.mxu0 %v1774
    %3174 = vmatprep.subr.bf16.mxu0 %v1726
    %3175 = vmatpush1.bf16.msra.mxu0 %v1725
    %3176 = vmatprep.subr.bf16.mxu0 %v1677
    %3177 = vmatpush1.bf16.msra.mxu0 %v1676
    %3178 = vmatprep.subr.bf16.mxu0 0
    %3179 = vmatpush2.bf16.msra.mxu0 0
    %3180 = vmatprep.subr.bf16.mxu0 0
    %3181 = vmatpush2.bf16.msra.mxu0 0
    %3182 = vmatprep.subr.bf16.mxu0 0
    %3183 = vmatpush2.bf16.msra.mxu0 0
    %3184 = vmatprep.subr.bf16.mxu0 0
    %3185 = vmatpush2.bf16.msra.mxu0 0
    %3186 = vmatprep.subr.bf16.mxu0 0
    %3187 = vmatpush2.bf16.msra.mxu0 0
    %3188 = vmatprep.subr.bf16.mxu0 0
    %3189 = vmatpush2.bf16.msra.mxu0 0
    %3190 = vmatprep.subr.bf16.mxu0 0
    %3191 = vmatpush2.bf16.msra.mxu0 0
    %3192 = vmatprep.subr.bf16.mxu0 0
    %3193 = vmatpush2.bf16.msra.mxu0 0
    %3194 = vmatprep.mubr.bf16.mxu0 0
    %3195 = vmatmul.mubr.bf16.gmra.mxu0 %v55
    %v3196 = vpop.f32.mrf.mxu0
    %v3197 = vadd.f32 0.0, %v3196
    %v3198 = vpop.f32.mrf.mxu0
    %v3199 = vadd.f32 0.0, %v3198
    %v3200 = vpop.f32.mrf.mxu0
    %v3201 = vpop.f32.mrf.mxu0
    %3202 = vdwg.mxu0
    %3203 = vmatprep.subr.bf16.mxu0 %v2022
    %3204 = vmatpush1.bf16.msra.mxu0 %v2021
    %3205 = vmatprep.subr.bf16.mxu0 %v1973
    %3206 = vmatpush1.bf16.msra.mxu0 %v1972
    %3207 = vmatprep.subr.bf16.mxu0 %v1924
    %3208 = vmatpush1.bf16.msra.mxu0 %v1923
    %3209 = vmatprep.subr.bf16.mxu0 %v1875
    %3210 = vmatpush1.bf16.msra.mxu0 %v1874
    %3211 = vmatprep.subr.bf16.mxu0 %v1826
    %3212 = vmatpush1.bf16.msra.mxu0 %v1825
    %3213 = vmatprep.subr.bf16.mxu0 %v1777
    %3214 = vmatpush1.bf16.msra.mxu0 %v1776
    %3215 = vmatprep.subr.bf16.mxu0 %v1728
    %3216 = vmatpush1.bf16.msra.mxu0 %v1727
    %3217 = vmatprep.subr.bf16.mxu0 %v1679
    %3218 = vmatpush1.bf16.msra.mxu0 %v1678
    %3219 = vmatprep.subr.bf16.mxu0 0
    %3220 = vmatpush2.bf16.msra.mxu0 0
    %3221 = vmatprep.subr.bf16.mxu0 0
    %3222 = vmatpush2.bf16.msra.mxu0 0
    %3223 = vmatprep.subr.bf16.mxu0 0
    %3224 = vmatpush2.bf16.msra.mxu0 0
    %3225 = vmatprep.subr.bf16.mxu0 0
    %3226 = vmatpush2.bf16.msra.mxu0 0
    %3227 = vmatprep.subr.bf16.mxu0 0
    %3228 = vmatpush2.bf16.msra.mxu0 0
    %3229 = vmatprep.subr.bf16.mxu0 0
    %3230 = vmatpush2.bf16.msra.mxu0 0
    %3231 = vmatprep.subr.bf16.mxu0 0
    %3232 = vmatpush2.bf16.msra.mxu0 0
    %3233 = vmatprep.subr.bf16.mxu0 0
    %3234 = vmatpush2.bf16.msra.mxu0 0
    %3235 = vmatprep.mubr.bf16.mxu0 0
    %3236 = vmatmul.mubr.bf16.gmra.mxu0 %v55
    %v3237 = vpop.f32.mrf.mxu0
    %v3238 = vadd.f32 0.0, %v3237
    %v3239 = vpop.f32.mrf.mxu0
    %v3240 = vadd.f32 0.0, %v3239
    %v3241 = vpop.f32.mrf.mxu0
    %v3242 = vpop.f32.mrf.mxu0
    %3243 = vdwg.mxu0
    %3244 = vmatprep.subr.bf16.mxu0 %v2024
    %3245 = vmatpush1.bf16.msra.mxu0 %v2023
    %3246 = vmatprep.subr.bf16.mxu0 %v1975
    %3247 = vmatpush1.bf16.msra.mxu0 %v1974
    %3248 = vmatprep.subr.bf16.mxu0 %v1926
    %3249 = vmatpush1.bf16.msra.mxu0 %v1925
    %3250 = vmatprep.subr.bf16.mxu0 %v1877
    %3251 = vmatpush1.bf16.msra.mxu0 %v1876
    %3252 = vmatprep.subr.bf16.mxu0 %v1828
    %3253 = vmatpush1.bf16.msra.mxu0 %v1827
    %3254 = vmatprep.subr.bf16.mxu0 %v1779
    %3255 = vmatpush1.bf16.msra.mxu0 %v1778
    %3256 = vmatprep.subr.bf16.mxu0 %v1730
    %3257 = vmatpush1.bf16.msra.mxu0 %v1729
    %3258 = vmatprep.subr.bf16.mxu0 %v1681
    %3259 = vmatpush1.bf16.msra.mxu0 %v1680
    %3260 = vmatprep.subr.bf16.mxu0 0
    %3261 = vmatpush2.bf16.msra.mxu0 0
    %3262 = vmatprep.subr.bf16.mxu0 0
    %3263 = vmatpush2.bf16.msra.mxu0 0
    %3264 = vmatprep.subr.bf16.mxu0 0
    %3265 = vmatpush2.bf16.msra.mxu0 0
    %3266 = vmatprep.subr.bf16.mxu0 0
    %3267 = vmatpush2.bf16.msra.mxu0 0
    %3268 = vmatprep.subr.bf16.mxu0 0
    %3269 = vmatpush2.bf16.msra.mxu0 0
    %3270 = vmatprep.subr.bf16.mxu0 0
    %3271 = vmatpush2.bf16.msra.mxu0 0
    %3272 = vmatprep.subr.bf16.mxu0 0
    %3273 = vmatpush2.bf16.msra.mxu0 0
    %3274 = vmatprep.subr.bf16.mxu0 0
    %3275 = vmatpush2.bf16.msra.mxu0 0
    %3276 = vmatprep.mubr.bf16.mxu0 0
    %3277 = vmatmul.mubr.bf16.gmra.mxu0 %v55
    %v3278 = vpop.f32.mrf.mxu0
    %v3279 = vadd.f32 0.0, %v3278
    %v3280 = vpop.f32.mrf.mxu0
    %v3281 = vadd.f32 0.0, %v3280
    %v3282 = vpop.f32.mrf.mxu0
    %v3283 = vpop.f32.mrf.mxu0
    %3284 = vdwg.mxu0
    %3285 = vmatprep.subr.bf16.mxu0 %v2026
    %3286 = vmatpush1.bf16.msra.mxu0 %v2025
    %3287 = vmatprep.subr.bf16.mxu0 %v1977
    %3288 = vmatpush1.bf16.msra.mxu0 %v1976
    %3289 = vmatprep.subr.bf16.mxu0 %v1928
    %3290 = vmatpush1.bf16.msra.mxu0 %v1927
    %3291 = vmatprep.subr.bf16.mxu0 %v1879
    %3292 = vmatpush1.bf16.msra.mxu0 %v1878
    %3293 = vmatprep.subr.bf16.mxu0 %v1830
    %3294 = vmatpush1.bf16.msra.mxu0 %v1829
    %3295 = vmatprep.subr.bf16.mxu0 %v1781
    %3296 = vmatpush1.bf16.msra.mxu0 %v1780
    %3297 = vmatprep.subr.bf16.mxu0 %v1732
    %3298 = vmatpush1.bf16.msra.mxu0 %v1731
    %3299 = vmatprep.subr.bf16.mxu0 %v1683
    %3300 = vmatpush1.bf16.msra.mxu0 %v1682
    %3301 = vmatprep.subr.bf16.mxu0 0
    %3302 = vmatpush2.bf16.msra.mxu0 0
    %3303 = vmatprep.subr.bf16.mxu0 0
    %3304 = vmatpush2.bf16.msra.mxu0 0
    %3305 = vmatprep.subr.bf16.mxu0 0
    %3306 = vmatpush2.bf16.msra.mxu0 0
    %3307 = vmatprep.subr.bf16.mxu0 0
    %3308 = vmatpush2.bf16.msra.mxu0 0
    %3309 = vmatprep.subr.bf16.mxu0 0
    %3310 = vmatpush2.bf16.msra.mxu0 0
    %3311 = vmatprep.subr.bf16.mxu0 0
    %3312 = vmatpush2.bf16.msra.mxu0 0
    %3313 = vmatprep.subr.bf16.mxu0 0
    %3314 = vmatpush2.bf16.msra.mxu0 0
    %3315 = vmatprep.subr.bf16.mxu0 0
    %3316 = vmatpush2.bf16.msra.mxu0 0
    %3317 = vmatprep.mubr.bf16.mxu0 0
    %3318 = vmatmul.mubr.bf16.gmra.mxu0 %v55
    %v3319 = vpop.f32.mrf.mxu0
    %v3320 = vadd.f32 0.0, %v3319
    %v3321 = vpop.f32.mrf.mxu0
    %v3322 = vadd.f32 0.0, %v3321
    %v3323 = vpop.f32.mrf.mxu0
    %v3324 = vpop.f32.mrf.mxu0
    %3325 = vdwg.mxu0
    %3326 = vmatprep.subr.bf16.mxu0 %v2028
    %3327 = vmatpush1.bf16.msra.mxu0 %v2027
    %3328 = vmatprep.subr.bf16.mxu0 %v1979
    %3329 = vmatpush1.bf16.msra.mxu0 %v1978
    %3330 = vmatprep.subr.bf16.mxu0 %v1930
    %3331 = vmatpush1.bf16.msra.mxu0 %v1929
    %3332 = vmatprep.subr.bf16.mxu0 %v1881
    %3333 = vmatpush1.bf16.msra.mxu0 %v1880
    %3334 = vmatprep.subr.bf16.mxu0 %v1832
    %3335 = vmatpush1.bf16.msra.mxu0 %v1831
    %3336 = vmatprep.subr.bf16.mxu0 %v1783
    %3337 = vmatpush1.bf16.msra.mxu0 %v1782
    %3338 = vmatprep.subr.bf16.mxu0 %v1734
    %3339 = vmatpush1.bf16.msra.mxu0 %v1733
    %3340 = vmatprep.subr.bf16.mxu0 %v1685
    %3341 = vmatpush1.bf16.msra.mxu0 %v1684
    %3342 = vmatprep.subr.bf16.mxu0 0
    %3343 = vmatpush2.bf16.msra.mxu0 0
    %3344 = vmatprep.subr.bf16.mxu0 0
    %3345 = vmatpush2.bf16.msra.mxu0 0
    %3346 = vmatprep.subr.bf16.mxu0 0
    %3347 = vmatpush2.bf16.msra.mxu0 0
    %3348 = vmatprep.subr.bf16.mxu0 0
    %3349 = vmatpush2.bf16.msra.mxu0 0
    %3350 = vmatprep.subr.bf16.mxu0 0
    %3351 = vmatpush2.bf16.msra.mxu0 0
    %3352 = vmatprep.subr.bf16.mxu0 0
    %3353 = vmatpush2.bf16.msra.mxu0 0
    %3354 = vmatprep.subr.bf16.mxu0 0
    %3355 = vmatpush2.bf16.msra.mxu0 0
    %3356 = vmatprep.subr.bf16.mxu0 0
    %3357 = vmatpush2.bf16.msra.mxu0 0
    %3358 = vmatprep.mubr.bf16.mxu0 0
    %3359 = vmatmul.mubr.bf16.gmra.mxu0 %v55
    %v3360 = vpop.f32.mrf.mxu0
    %v3361 = vadd.f32 0.0, %v3360
    %v3362 = vpop.f32.mrf.mxu0
    %v3363 = vadd.f32 0.0, %v3362
    %v3364 = vpop.f32.mrf.mxu0
    %v3365 = vpop.f32.mrf.mxu0
    %3366 = vdwg.mxu0
    %3367 = vmatprep.subr.bf16.mxu0 %v2030
    %3368 = vmatpush1.bf16.msra.mxu0 %v2029
    %3369 = vmatprep.subr.bf16.mxu0 %v1981
    %3370 = vmatpush1.bf16.msra.mxu0 %v1980
    %3371 = vmatprep.subr.bf16.mxu0 %v1932
    %3372 = vmatpush1.bf16.msra.mxu0 %v1931
    %3373 = vmatprep.subr.bf16.mxu0 %v1883
    %3374 = vmatpush1.bf16.msra.mxu0 %v1882
    %3375 = vmatprep.subr.bf16.mxu0 %v1834
    %3376 = vmatpush1.bf16.msra.mxu0 %v1833
    %3377 = vmatprep.subr.bf16.mxu0 %v1785
    %3378 = vmatpush1.bf16.msra.mxu0 %v1784
    %3379 = vmatprep.subr.bf16.mxu0 %v1736
    %3380 = vmatpush1.bf16.msra.mxu0 %v1735
    %3381 = vmatprep.subr.bf16.mxu0 %v1687
    %3382 = vmatpush1.bf16.msra.mxu0 %v1686
    %3383 = vmatprep.subr.bf16.mxu0 0
    %3384 = vmatpush2.bf16.msra.mxu0 0
    %3385 = vmatprep.subr.bf16.mxu0 0
    %3386 = vmatpush2.bf16.msra.mxu0 0
    %3387 = vmatprep.subr.bf16.mxu0 0
    %3388 = vmatpush2.bf16.msra.mxu0 0
    %3389 = vmatprep.subr.bf16.mxu0 0
    %3390 = vmatpush2.bf16.msra.mxu0 0
    %3391 = vmatprep.subr.bf16.mxu0 0
    %3392 = vmatpush2.bf16.msra.mxu0 0
    %3393 = vmatprep.subr.bf16.mxu0 0
    %3394 = vmatpush2.bf16.msra.mxu0 0
    %3395 = vmatprep.subr.bf16.mxu0 0
    %3396 = vmatpush2.bf16.msra.mxu0 0
    %3397 = vmatprep.subr.bf16.mxu0 0
    %3398 = vmatpush2.bf16.msra.mxu0 0
    %3399 = vmatprep.mubr.bf16.mxu0 0
    %3400 = vmatmul.mubr.bf16.gmra.mxu0 %v55
    %v3401 = vpop.f32.mrf.mxu0
    %v3402 = vadd.f32 0.0, %v3401
    %v3403 = vpop.f32.mrf.mxu0
    %v3404 = vadd.f32 0.0, %v3403
    %v3405 = vpop.f32.mrf.mxu0
    %v3406 = vpop.f32.mrf.mxu0
    %3407 = vdwg.mxu0
    %3408 = vmatprep.subr.bf16.mxu0 0
    %3409 = vmatpush1.bf16.msra.mxu0 %v2031
    %3410 = vmatprep.subr.bf16.mxu0 0
    %3411 = vmatpush1.bf16.msra.mxu0 %v1982
    %3412 = vmatprep.subr.bf16.mxu0 0
    %3413 = vmatpush1.bf16.msra.mxu0 %v1933
    %3414 = vmatprep.subr.bf16.mxu0 0
    %3415 = vmatpush1.bf16.msra.mxu0 %v1884
    %3416 = vmatprep.subr.bf16.mxu0 0
    %3417 = vmatpush1.bf16.msra.mxu0 %v1835
    %3418 = vmatprep.subr.bf16.mxu0 0
    %3419 = vmatpush1.bf16.msra.mxu0 %v1786
    %3420 = vmatprep.subr.bf16.mxu0 0
    %3421 = vmatpush1.bf16.msra.mxu0 %v1737
    %3422 = vmatprep.subr.bf16.mxu0 0
    %3423 = vmatpush1.bf16.msra.mxu0 %v1688
    %3424 = vmatprep.subr.bf16.mxu0 0
    %3425 = vmatpush2.bf16.msra.mxu0 0
    %3426 = vmatprep.subr.bf16.mxu0 0
    %3427 = vmatpush2.bf16.msra.mxu0 0
    %3428 = vmatprep.subr.bf16.mxu0 0
    %3429 = vmatpush2.bf16.msra.mxu0 0
    %3430 = vmatprep.subr.bf16.mxu0 0
    %3431 = vmatpush2.bf16.msra.mxu0 0
    %3432 = vmatprep.subr.bf16.mxu0 0
    %3433 = vmatpush2.bf16.msra.mxu0 0
    %3434 = vmatprep.subr.bf16.mxu0 0
    %3435 = vmatpush2.bf16.msra.mxu0 0
    %3436 = vmatprep.subr.bf16.mxu0 0
    %3437 = vmatpush2.bf16.msra.mxu0 0
    %3438 = vmatprep.subr.bf16.mxu0 0
    %3439 = vmatpush2.bf16.msra.mxu0 0
    %3440 = vmatprep.mubr.bf16.mxu0 0
    %3441 = vmatmul.mubr.bf16.gmra.mxu0 %v55
    %v3442 = vpop.f32.mrf.mxu0
    %v3443 = vadd.f32 0.0, %v3442
    %v3444 = vpop.f32.mrf.mxu0
    %v3445 = vpop.f32.mrf.mxu0
    %v3446 = vpop.f32.mrf.mxu0
    %3447 = vdwg.mxu0
    %v3448 = vlaneseq
    %v3449 = vshrl.u32 %v3448, 7
    %vm3450 = vcmp.lt.s32.totalorder %v3449, 2
    %v3451 = vsel %vm3450, 1, 0
    %v3452 = vcvt.s32.f32 %v3451
    %v3453 = vmul.f32 %v2459, %v3452
    %v3454 = vmul.f32 %v2461, %v3452
    %v3455 = vmul.f32 %v2500, %v3452
    %v3456 = vmul.f32 %v2502, %v3452
    %v3457 = vmul.f32 %v2541, %v3452
    %v3458 = vmul.f32 %v2543, %v3452
    %v3459 = vmul.f32 %v2582, %v3452
    %v3460 = vmul.f32 %v2584, %v3452
    %v3461 = vmul.f32 %v2623, %v3452
    %v3462 = vmul.f32 %v2625, %v3452
    %v3463 = vmul.f32 %v2664, %v3452
    %v3464 = vmul.f32 %v2666, %v3452
    %v3465 = vmul.f32 %v2705, %v3452
    %v3466 = vmul.f32 %v2707, %v3452
    %v3467 = vmul.f32 %v2746, %v3452
    %v3468 = vmul.f32 %v2748, %v3452
    %v3469 = vmul.f32 %v2787, %v3452
    %v3470 = vmul.f32 %v2789, %v3452
    %v3471 = vmul.f32 %v2828, %v3452
    %v3472 = vmul.f32 %v2830, %v3452
    %v3473 = vmul.f32 %v2869, %v3452
    %v3474 = vmul.f32 %v2871, %v3452
    %v3475 = vmul.f32 %v2910, %v3452
    %v3476 = vmul.f32 %v2912, %v3452
    %v3477 = vmul.f32 %v2951, %v3452
    %v3478 = vmul.f32 %v2953, %v3452
    %v3479 = vmul.f32 %v2992, %v3452
    %v3480 = vmul.f32 %v2994, %v3452
    %v3481 = vmul.f32 %v3033, %v3452
    %v3482 = vmul.f32 %v3035, %v3452
    %v3483 = vmul.f32 %v3074, %v3452
    %v3484 = vmul.f32 %v3076, %v3452
    %v3485 = vmul.f32 %v3115, %v3452
    %v3486 = vmul.f32 %v3117, %v3452
    %v3487 = vmul.f32 %v3156, %v3452
    %v3488 = vmul.f32 %v3158, %v3452
    %v3489 = vmul.f32 %v3197, %v3452
    %v3490 = vmul.f32 %v3199, %v3452
    %v3491 = vmul.f32 %v3238, %v3452
    %v3492 = vmul.f32 %v3240, %v3452
    %v3493 = vmul.f32 %v3279, %v3452
    %v3494 = vmul.f32 %v3281, %v3452
    %v3495 = vmul.f32 %v3320, %v3452
    %v3496 = vmul.f32 %v3322, %v3452
    %v3497 = vmul.f32 %v3361, %v3452
    %v3498 = vmul.f32 %v3363, %v3452
    %v3499 = vmul.f32 %v3402, %v3452
    %v3500 = vmul.f32 %v3404, %v3452
    %v3501 = vmul.f32 %v3443, %v3452
    %v3502 = vrot.slane %v3453, 4
    %v3503 = vadd.f32 %v3453, %v3502
    %v3504 = vrot.slane %v3503, 2
    %v3505 = vadd.f32 %v3503, %v3504
    %v3506 = vrot.slane %v3505, 1
    %v3507 = vadd.f32 %v3505, %v3506
    %v3508 = vrot.slane %v3454, 4
    %v3509 = vadd.f32 %v3454, %v3508
    %v3510 = vrot.slane %v3509, 2
    %v3511 = vadd.f32 %v3509, %v3510
    %v3512 = vrot.slane %v3511, 1
    %v3513 = vadd.f32 %v3511, %v3512
    %v3514 = vrot.slane %v3455, 4
    %v3515 = vadd.f32 %v3455, %v3514
    %v3516 = vrot.slane %v3515, 2
    %v3517 = vadd.f32 %v3515, %v3516
    %v3518 = vrot.slane %v3517, 1
    %v3519 = vadd.f32 %v3517, %v3518
    %v3520 = vrot.slane %v3456, 4
    %v3521 = vadd.f32 %v3456, %v3520
    %v3522 = vrot.slane %v3521, 2
    %v3523 = vadd.f32 %v3521, %v3522
    %v3524 = vrot.slane %v3523, 1
    %v3525 = vadd.f32 %v3523, %v3524
    %v3526 = vrot.slane %v3457, 4
    %v3527 = vadd.f32 %v3457, %v3526
    %v3528 = vrot.slane %v3527, 2
    %v3529 = vadd.f32 %v3527, %v3528
    %v3530 = vrot.slane %v3529, 1
    %v3531 = vadd.f32 %v3529, %v3530
    %v3532 = vrot.slane %v3458, 4
    %v3533 = vadd.f32 %v3458, %v3532
    %v3534 = vrot.slane %v3533, 2
    %v3535 = vadd.f32 %v3533, %v3534
    %v3536 = vrot.slane %v3535, 1
    %v3537 = vadd.f32 %v3535, %v3536
    %v3538 = vrot.slane %v3459, 4
    %v3539 = vadd.f32 %v3459, %v3538
    %v3540 = vrot.slane %v3539, 2
    %v3541 = vadd.f32 %v3539, %v3540
    %v3542 = vrot.slane %v3541, 1
    %v3543 = vadd.f32 %v3541, %v3542
    %v3544 = vrot.slane %v3460, 4
    %v3545 = vadd.f32 %v3460, %v3544
    %v3546 = vrot.slane %v3545, 2
    %v3547 = vadd.f32 %v3545, %v3546
    %v3548 = vrot.slane %v3547, 1
    %v3549 = vadd.f32 %v3547, %v3548
    %v3550 = vrot.slane %v3461, 4
    %v3551 = vadd.f32 %v3461, %v3550
    %v3552 = vrot.slane %v3551, 2
    %v3553 = vadd.f32 %v3551, %v3552
    %v3554 = vrot.slane %v3553, 1
    %v3555 = vadd.f32 %v3553, %v3554
    %v3556 = vrot.slane %v3462, 4
    %v3557 = vadd.f32 %v3462, %v3556
    %v3558 = vrot.slane %v3557, 2
    %v3559 = vadd.f32 %v3557, %v3558
    %v3560 = vrot.slane %v3559, 1
    %v3561 = vadd.f32 %v3559, %v3560
    %v3562 = vrot.slane %v3463, 4
    %v3563 = vadd.f32 %v3463, %v3562
    %v3564 = vrot.slane %v3563, 2
    %v3565 = vadd.f32 %v3563, %v3564
    %v3566 = vrot.slane %v3565, 1
    %v3567 = vadd.f32 %v3565, %v3566
    %v3568 = vrot.slane %v3464, 4
    %v3569 = vadd.f32 %v3464, %v3568
    %v3570 = vrot.slane %v3569, 2
    %v3571 = vadd.f32 %v3569, %v3570
    %v3572 = vrot.slane %v3571, 1
    %v3573 = vadd.f32 %v3571, %v3572
    %v3574 = vrot.slane %v3465, 4
    %v3575 = vadd.f32 %v3465, %v3574
    %v3576 = vrot.slane %v3575, 2
    %v3577 = vadd.f32 %v3575, %v3576
    %v3578 = vrot.slane %v3577, 1
    %v3579 = vadd.f32 %v3577, %v3578
    %v3580 = vrot.slane %v3466, 4
    %v3581 = vadd.f32 %v3466, %v3580
    %v3582 = vrot.slane %v3581, 2
    %v3583 = vadd.f32 %v3581, %v3582
    %v3584 = vrot.slane %v3583, 1
    %v3585 = vadd.f32 %v3583, %v3584
    %v3586 = vrot.slane %v3467, 4
    %v3587 = vadd.f32 %v3467, %v3586
    %v3588 = vrot.slane %v3587, 2
    %v3589 = vadd.f32 %v3587, %v3588
    %v3590 = vrot.slane %v3589, 1
    %v3591 = vadd.f32 %v3589, %v3590
    %v3592 = vrot.slane %v3468, 4
    %v3593 = vadd.f32 %v3468, %v3592
    %v3594 = vrot.slane %v3593, 2
    %v3595 = vadd.f32 %v3593, %v3594
    %v3596 = vrot.slane %v3595, 1
    %v3597 = vadd.f32 %v3595, %v3596
    %v3598 = vrot.slane %v3469, 4
    %v3599 = vadd.f32 %v3469, %v3598
    %v3600 = vrot.slane %v3599, 2
    %v3601 = vadd.f32 %v3599, %v3600
    %v3602 = vrot.slane %v3601, 1
    %v3603 = vadd.f32 %v3601, %v3602
    %v3604 = vrot.slane %v3470, 4
    %v3605 = vadd.f32 %v3470, %v3604
    %v3606 = vrot.slane %v3605, 2
    %v3607 = vadd.f32 %v3605, %v3606
    %v3608 = vrot.slane %v3607, 1
    %v3609 = vadd.f32 %v3607, %v3608
    %v3610 = vrot.slane %v3471, 4
    %v3611 = vadd.f32 %v3471, %v3610
    %v3612 = vrot.slane %v3611, 2
    %v3613 = vadd.f32 %v3611, %v3612
    %v3614 = vrot.slane %v3613, 1
    %v3615 = vadd.f32 %v3613, %v3614
    %v3616 = vrot.slane %v3472, 4
    %v3617 = vadd.f32 %v3472, %v3616
    %v3618 = vrot.slane %v3617, 2
    %v3619 = vadd.f32 %v3617, %v3618
    %v3620 = vrot.slane %v3619, 1
    %v3621 = vadd.f32 %v3619, %v3620
    %v3622 = vrot.slane %v3473, 4
    %v3623 = vadd.f32 %v3473, %v3622
    %v3624 = vrot.slane %v3623, 2
    %v3625 = vadd.f32 %v3623, %v3624
    %v3626 = vrot.slane %v3625, 1
    %v3627 = vadd.f32 %v3625, %v3626
    %v3628 = vrot.slane %v3474, 4
    %v3629 = vadd.f32 %v3474, %v3628
    %v3630 = vrot.slane %v3629, 2
    %v3631 = vadd.f32 %v3629, %v3630
    %v3632 = vrot.slane %v3631, 1
    %v3633 = vadd.f32 %v3631, %v3632
    %v3634 = vrot.slane %v3475, 4
    %v3635 = vadd.f32 %v3475, %v3634
    %v3636 = vrot.slane %v3635, 2
    %v3637 = vadd.f32 %v3635, %v3636
    %v3638 = vrot.slane %v3637, 1
    %v3639 = vadd.f32 %v3637, %v3638
    %v3640 = vrot.slane %v3476, 4
    %v3641 = vadd.f32 %v3476, %v3640
    %v3642 = vrot.slane %v3641, 2
    %v3643 = vadd.f32 %v3641, %v3642
    %v3644 = vrot.slane %v3643, 1
    %v3645 = vadd.f32 %v3643, %v3644
    %v3646 = vrot.slane %v3477, 4
    %v3647 = vadd.f32 %v3477, %v3646
    %v3648 = vrot.slane %v3647, 2
    %v3649 = vadd.f32 %v3647, %v3648
    %v3650 = vrot.slane %v3649, 1
    %v3651 = vadd.f32 %v3649, %v3650
    %v3652 = vrot.slane %v3478, 4
    %v3653 = vadd.f32 %v3478, %v3652
    %v3654 = vrot.slane %v3653, 2
    %v3655 = vadd.f32 %v3653, %v3654
    %v3656 = vrot.slane %v3655, 1
    %v3657 = vadd.f32 %v3655, %v3656
    %v3658 = vrot.slane %v3479, 4
    %v3659 = vadd.f32 %v3479, %v3658
    %v3660 = vrot.slane %v3659, 2
    %v3661 = vadd.f32 %v3659, %v3660
    %v3662 = vrot.slane %v3661, 1
    %v3663 = vadd.f32 %v3661, %v3662
    %v3664 = vrot.slane %v3480, 4
    %v3665 = vadd.f32 %v3480, %v3664
    %v3666 = vrot.slane %v3665, 2
    %v3667 = vadd.f32 %v3665, %v3666
    %v3668 = vrot.slane %v3667, 1
    %v3669 = vadd.f32 %v3667, %v3668
    %v3670 = vrot.slane %v3481, 4
    %v3671 = vadd.f32 %v3481, %v3670
    %v3672 = vrot.slane %v3671, 2
    %v3673 = vadd.f32 %v3671, %v3672
    %v3674 = vrot.slane %v3673, 1
    %v3675 = vadd.f32 %v3673, %v3674
    %v3676 = vrot.slane %v3482, 4
    %v3677 = vadd.f32 %v3482, %v3676
    %v3678 = vrot.slane %v3677, 2
    %v3679 = vadd.f32 %v3677, %v3678
    %v3680 = vrot.slane %v3679, 1
    %v3681 = vadd.f32 %v3679, %v3680
    %v3682 = vrot.slane %v3483, 4
    %v3683 = vadd.f32 %v3483, %v3682
    %v3684 = vrot.slane %v3683, 2
    %v3685 = vadd.f32 %v3683, %v3684
    %v3686 = vrot.slane %v3685, 1
    %v3687 = vadd.f32 %v3685, %v3686
    %v3688 = vrot.slane %v3484, 4
    %v3689 = vadd.f32 %v3484, %v3688
    %v3690 = vrot.slane %v3689, 2
    %v3691 = vadd.f32 %v3689, %v3690
    %v3692 = vrot.slane %v3691, 1
    %v3693 = vadd.f32 %v3691, %v3692
    %v3694 = vrot.slane %v3485, 4
    %v3695 = vadd.f32 %v3485, %v3694
    %v3696 = vrot.slane %v3695, 2
    %v3697 = vadd.f32 %v3695, %v3696
    %v3698 = vrot.slane %v3697, 1
    %v3699 = vadd.f32 %v3697, %v3698
    %v3700 = vrot.slane %v3486, 4
    %v3701 = vadd.f32 %v3486, %v3700
    %v3702 = vrot.slane %v3701, 2
    %v3703 = vadd.f32 %v3701, %v3702
    %v3704 = vrot.slane %v3703, 1
    %v3705 = vadd.f32 %v3703, %v3704
    %v3706 = vrot.slane %v3487, 4
    %v3707 = vadd.f32 %v3487, %v3706
    %v3708 = vrot.slane %v3707, 2
    %v3709 = vadd.f32 %v3707, %v3708
    %v3710 = vrot.slane %v3709, 1
    %v3711 = vadd.f32 %v3709, %v3710
    %v3712 = vrot.slane %v3488, 4
    %v3713 = vadd.f32 %v3488, %v3712
    %v3714 = vrot.slane %v3713, 2
    %v3715 = vadd.f32 %v3713, %v3714
    %v3716 = vrot.slane %v3715, 1
    %v3717 = vadd.f32 %v3715, %v3716
    %v3718 = vrot.slane %v3489, 4
    %v3719 = vadd.f32 %v3489, %v3718
    %v3720 = vrot.slane %v3719, 2
    %v3721 = vadd.f32 %v3719, %v3720
    %v3722 = vrot.slane %v3721, 1
    %v3723 = vadd.f32 %v3721, %v3722
    %v3724 = vrot.slane %v3490, 4
    %v3725 = vadd.f32 %v3490, %v3724
    %v3726 = vrot.slane %v3725, 2
    %v3727 = vadd.f32 %v3725, %v3726
    %v3728 = vrot.slane %v3727, 1
    %v3729 = vadd.f32 %v3727, %v3728
    %v3730 = vrot.slane %v3491, 4
    %v3731 = vadd.f32 %v3491, %v3730
    %v3732 = vrot.slane %v3731, 2
    %v3733 = vadd.f32 %v3731, %v3732
    %v3734 = vrot.slane %v3733, 1
    %v3735 = vadd.f32 %v3733, %v3734
    %v3736 = vrot.slane %v3492, 4
    %v3737 = vadd.f32 %v3492, %v3736
    %v3738 = vrot.slane %v3737, 2
    %v3739 = vadd.f32 %v3737, %v3738
    %v3740 = vrot.slane %v3739, 1
    %v3741 = vadd.f32 %v3739, %v3740
    %v3742 = vrot.slane %v3493, 4
    %v3743 = vadd.f32 %v3493, %v3742
    %v3744 = vrot.slane %v3743, 2
    %v3745 = vadd.f32 %v3743, %v3744
    %v3746 = vrot.slane %v3745, 1
    %v3747 = vadd.f32 %v3745, %v3746
    %v3748 = vrot.slane %v3494, 4
    %v3749 = vadd.f32 %v3494, %v3748
    %v3750 = vrot.slane %v3749, 2
    %v3751 = vadd.f32 %v3749, %v3750
    %v3752 = vrot.slane %v3751, 1
    %v3753 = vadd.f32 %v3751, %v3752
    %v3754 = vrot.slane %v3495, 4
    %v3755 = vadd.f32 %v3495, %v3754
    %v3756 = vrot.slane %v3755, 2
    %v3757 = vadd.f32 %v3755, %v3756
    %v3758 = vrot.slane %v3757, 1
    %v3759 = vadd.f32 %v3757, %v3758
    %v3760 = vrot.slane %v3496, 4
    %v3761 = vadd.f32 %v3496, %v3760
    %v3762 = vrot.slane %v3761, 2
    %v3763 = vadd.f32 %v3761, %v3762
    %v3764 = vrot.slane %v3763, 1
    %v3765 = vadd.f32 %v3763, %v3764
    %v3766 = vrot.slane %v3497, 4
    %v3767 = vadd.f32 %v3497, %v3766
    %v3768 = vrot.slane %v3767, 2
    %v3769 = vadd.f32 %v3767, %v3768
    %v3770 = vrot.slane %v3769, 1
    %v3771 = vadd.f32 %v3769, %v3770
    %v3772 = vrot.slane %v3498, 4
    %v3773 = vadd.f32 %v3498, %v3772
    %v3774 = vrot.slane %v3773, 2
    %v3775 = vadd.f32 %v3773, %v3774
    %v3776 = vrot.slane %v3775, 1
    %v3777 = vadd.f32 %v3775, %v3776
    %v3778 = vrot.slane %v3499, 4
    %v3779 = vadd.f32 %v3499, %v3778
    %v3780 = vrot.slane %v3779, 2
    %v3781 = vadd.f32 %v3779, %v3780
    %v3782 = vrot.slane %v3781, 1
    %v3783 = vadd.f32 %v3781, %v3782
    %v3784 = vrot.slane %v3500, 4
    %v3785 = vadd.f32 %v3500, %v3784
    %v3786 = vrot.slane %v3785, 2
    %v3787 = vadd.f32 %v3785, %v3786
    %v3788 = vrot.slane %v3787, 1
    %v3789 = vadd.f32 %v3787, %v3788
    %v3790 = vrot.slane %v3501, 4
    %v3791 = vadd.f32 %v3501, %v3790
    %v3792 = vrot.slane %v3791, 2
    %v3793 = vadd.f32 %v3791, %v3792
    %v3794 = vrot.slane %v3793, 1
    %v3795 = vadd.f32 %v3793, %v3794
    %v3796 = vmul.f32 %v3507, 0.5
    %v3797 = vmul.f32 %v3513, 0.5
    %v3798 = vmul.f32 %v3519, 0.5
    %v3799 = vmul.f32 %v3525, 0.5
    %v3800 = vmul.f32 %v3531, 0.5
    %v3801 = vmul.f32 %v3537, 0.5
    %v3802 = vmul.f32 %v3543, 0.5
    %v3803 = vmul.f32 %v3549, 0.5
    %v3804 = vmul.f32 %v3555, 0.5
    %v3805 = vmul.f32 %v3561, 0.5
    %v3806 = vmul.f32 %v3567, 0.5
    %v3807 = vmul.f32 %v3573, 0.5
    %v3808 = vmul.f32 %v3579, 0.5
    %v3809 = vmul.f32 %v3585, 0.5
    %v3810 = vmul.f32 %v3591, 0.5
    %v3811 = vmul.f32 %v3597, 0.5
    %v3812 = vmul.f32 %v3603, 0.5
    %v3813 = vmul.f32 %v3609, 0.5
    %v3814 = vmul.f32 %v3615, 0.5
    %v3815 = vmul.f32 %v3621, 0.5
    %v3816 = vmul.f32 %v3627, 0.5
    %v3817 = vmul.f32 %v3633, 0.5
    %v3818 = vmul.f32 %v3639, 0.5
    %v3819 = vmul.f32 %v3645, 0.5
    %v3820 = vmul.f32 %v3651, 0.5
    %v3821 = vmul.f32 %v3657, 0.5
    %v3822 = vmul.f32 %v3663, 0.5
    %v3823 = vmul.f32 %v3669, 0.5
    %v3824 = vmul.f32 %v3675, 0.5
    %v3825 = vmul.f32 %v3681, 0.5
    %v3826 = vmul.f32 %v3687, 0.5
    %v3827 = vmul.f32 %v3693, 0.5
    %v3828 = vmul.f32 %v3699, 0.5
    %v3829 = vmul.f32 %v3705, 0.5
    %v3830 = vmul.f32 %v3711, 0.5
    %v3831 = vmul.f32 %v3717, 0.5
    %v3832 = vmul.f32 %v3723, 0.5
    %v3833 = vmul.f32 %v3729, 0.5
    %v3834 = vmul.f32 %v3735, 0.5
    %v3835 = vmul.f32 %v3741, 0.5
    %v3836 = vmul.f32 %v3747, 0.5
    %v3837 = vmul.f32 %v3753, 0.5
    %v3838 = vmul.f32 %v3759, 0.5
    %v3839 = vmul.f32 %v3765, 0.5
    %v3840 = vmul.f32 %v3771, 0.5
    %v3841 = vmul.f32 %v3777, 0.5
    %v3842 = vmul.f32 %v3783, 0.5
    %v3843 = vmul.f32 %v3789, 0.5
    %v3844 = vmul.f32 %v3795, 0.5
    %v3845 = vsub.f32 %v2459, %v3796
    %v3846 = vsub.f32 %v2461, %v3797
    %v3847 = vsub.f32 %v2500, %v3798
    %v3848 = vsub.f32 %v2502, %v3799
    %v3849 = vsub.f32 %v2541, %v3800
    %v3850 = vsub.f32 %v2543, %v3801
    %v3851 = vsub.f32 %v2582, %v3802
    %v3852 = vsub.f32 %v2584, %v3803
    %v3853 = vsub.f32 %v2623, %v3804
    %v3854 = vsub.f32 %v2625, %v3805
    %v3855 = vsub.f32 %v2664, %v3806
    %v3856 = vsub.f32 %v2666, %v3807
    %v3857 = vsub.f32 %v2705, %v3808
    %v3858 = vsub.f32 %v2707, %v3809
    %v3859 = vsub.f32 %v2746, %v3810
    %v3860 = vsub.f32 %v2748, %v3811
    %v3861 = vsub.f32 %v2787, %v3812
    %v3862 = vsub.f32 %v2789, %v3813
    %v3863 = vsub.f32 %v2828, %v3814
    %v3864 = vsub.f32 %v2830, %v3815
    %v3865 = vsub.f32 %v2869, %v3816
    %v3866 = vsub.f32 %v2871, %v3817
    %v3867 = vsub.f32 %v2910, %v3818
    %v3868 = vsub.f32 %v2912, %v3819
    %v3869 = vsub.f32 %v2951, %v3820
    %v3870 = vsub.f32 %v2953, %v3821
    %v3871 = vsub.f32 %v2992, %v3822
    %v3872 = vsub.f32 %v2994, %v3823
    %v3873 = vsub.f32 %v3033, %v3824
    %v3874 = vsub.f32 %v3035, %v3825
    %v3875 = vsub.f32 %v3074, %v3826
    %v3876 = vsub.f32 %v3076, %v3827
    %v3877 = vsub.f32 %v3115, %v3828
    %v3878 = vsub.f32 %v3117, %v3829
    %v3879 = vsub.f32 %v3156, %v3830
    %v3880 = vsub.f32 %v3158, %v3831
    %v3881 = vsub.f32 %v3197, %v3832
    %v3882 = vsub.f32 %v3199, %v3833
    %v3883 = vsub.f32 %v3238, %v3834
    %v3884 = vsub.f32 %v3240, %v3835
    %v3885 = vsub.f32 %v3279, %v3836
    %v3886 = vsub.f32 %v3281, %v3837
    %v3887 = vsub.f32 %v3320, %v3838
    %v3888 = vsub.f32 %v3322, %v3839
    %v3889 = vsub.f32 %v3361, %v3840
    %v3890 = vsub.f32 %v3363, %v3841
    %v3891 = vsub.f32 %v3402, %v3842
    %v3892 = vsub.f32 %v3404, %v3843
    %v3893 = vsub.f32 %v3443, %v3844
    %v3894 = vmul.f32 %v3845, %v3452
    %v3895 = vmul.f32 %v3846, %v3452
    %v3896 = vmul.f32 %v3847, %v3452
    %v3897 = vmul.f32 %v3848, %v3452
    %v3898 = vmul.f32 %v3849, %v3452
    %v3899 = vmul.f32 %v3850, %v3452
    %v3900 = vmul.f32 %v3851, %v3452
    %v3901 = vmul.f32 %v3852, %v3452
    %v3902 = vmul.f32 %v3853, %v3452
    %v3903 = vmul.f32 %v3854, %v3452
    %v3904 = vmul.f32 %v3855, %v3452
    %v3905 = vmul.f32 %v3856, %v3452
    %v3906 = vmul.f32 %v3857, %v3452
    %v3907 = vmul.f32 %v3858, %v3452
    %v3908 = vmul.f32 %v3859, %v3452
    %v3909 = vmul.f32 %v3860, %v3452
    %v3910 = vmul.f32 %v3861, %v3452
    %v3911 = vmul.f32 %v3862, %v3452
    %v3912 = vmul.f32 %v3863, %v3452
    %v3913 = vmul.f32 %v3864, %v3452
    %v3914 = vmul.f32 %v3865, %v3452
    %v3915 = vmul.f32 %v3866, %v3452
    %v3916 = vmul.f32 %v3867, %v3452
    %v3917 = vmul.f32 %v3868, %v3452
    %v3918 = vmul.f32 %v3869, %v3452
    %v3919 = vmul.f32 %v3870, %v3452
    %v3920 = vmul.f32 %v3871, %v3452
    %v3921 = vmul.f32 %v3872, %v3452
    %v3922 = vmul.f32 %v3873, %v3452
    %v3923 = vmul.f32 %v3874, %v3452
    %v3924 = vmul.f32 %v3875, %v3452
    %v3925 = vmul.f32 %v3876, %v3452
    %v3926 = vmul.f32 %v3877, %v3452
    %v3927 = vmul.f32 %v3878, %v3452
    %v3928 = vmul.f32 %v3879, %v3452
    %v3929 = vmul.f32 %v3880, %v3452
    %v3930 = vmul.f32 %v3881, %v3452
    %v3931 = vmul.f32 %v3882, %v3452
    %v3932 = vmul.f32 %v3883, %v3452
    %v3933 = vmul.f32 %v3884, %v3452
    %v3934 = vmul.f32 %v3885, %v3452
    %v3935 = vmul.f32 %v3886, %v3452
    %v3936 = vmul.f32 %v3887, %v3452
    %v3937 = vmul.f32 %v3888, %v3452
    %v3938 = vmul.f32 %v3889, %v3452
    %v3939 = vmul.f32 %v3890, %v3452
    %v3940 = vmul.f32 %v3891, %v3452
    %v3941 = vmul.f32 %v3892, %v3452
    %v3942 = vmul.f32 %v3893, %v3452
    %v3943 = vmul.f32 %v3894, %v3894
    %v3944 = vmul.f32 %v3895, %v3895
    %v3945 = vmul.f32 %v3896, %v3896
    %v3946 = vmul.f32 %v3897, %v3897
    %v3947 = vmul.f32 %v3898, %v3898
    %v3948 = vmul.f32 %v3899, %v3899
    %v3949 = vmul.f32 %v3900, %v3900
    %v3950 = vmul.f32 %v3901, %v3901
    %v3951 = vmul.f32 %v3902, %v3902
    %v3952 = vmul.f32 %v3903, %v3903
    %v3953 = vmul.f32 %v3904, %v3904
    %v3954 = vmul.f32 %v3905, %v3905
    %v3955 = vmul.f32 %v3906, %v3906
    %v3956 = vmul.f32 %v3907, %v3907
    %v3957 = vmul.f32 %v3908, %v3908
    %v3958 = vmul.f32 %v3909, %v3909
    %v3959 = vmul.f32 %v3910, %v3910
    %v3960 = vmul.f32 %v3911, %v3911
    %v3961 = vmul.f32 %v3912, %v3912
    %v3962 = vmul.f32 %v3913, %v3913
    %v3963 = vmul.f32 %v3914, %v3914
    %v3964 = vmul.f32 %v3915, %v3915
    %v3965 = vmul.f32 %v3916, %v3916
    %v3966 = vmul.f32 %v3917, %v3917
    %v3967 = vmul.f32 %v3918, %v3918
    %v3968 = vmul.f32 %v3919, %v3919
    %v3969 = vmul.f32 %v3920, %v3920
    %v3970 = vmul.f32 %v3921, %v3921
    %v3971 = vmul.f32 %v3922, %v3922
    %v3972 = vmul.f32 %v3923, %v3923
    %v3973 = vmul.f32 %v3924, %v3924
    %v3974 = vmul.f32 %v3925, %v3925
    %v3975 = vmul.f32 %v3926, %v3926
    %v3976 = vmul.f32 %v3927, %v3927
    %v3977 = vmul.f32 %v3928, %v3928
    %v3978 = vmul.f32 %v3929, %v3929
    %v3979 = vmul.f32 %v3930, %v3930
    %v3980 = vmul.f32 %v3931, %v3931
    %v3981 = vmul.f32 %v3932, %v3932
    %v3982 = vmul.f32 %v3933, %v3933
    %v3983 = vmul.f32 %v3934, %v3934
    %v3984 = vmul.f32 %v3935, %v3935
    %v3985 = vmul.f32 %v3936, %v3936
    %v3986 = vmul.f32 %v3937, %v3937
    %v3987 = vmul.f32 %v3938, %v3938
    %v3988 = vmul.f32 %v3939, %v3939
    %v3989 = vmul.f32 %v3940, %v3940
    %v3990 = vmul.f32 %v3941, %v3941
    %v3991 = vmul.f32 %v3942, %v3942
    %v3992 = vrot.slane %v3943, 4
    %v3993 = vadd.f32 %v3943, %v3992
    %v3994 = vrot.slane %v3993, 2
    %v3995 = vadd.f32 %v3993, %v3994
    %v3996 = vrot.slane %v3995, 1
    %v3997 = vadd.f32 %v3995, %v3996
    %v3998 = vrot.slane %v3944, 4
    %v3999 = vadd.f32 %v3944, %v3998
    %v4000 = vrot.slane %v3999, 2
    %v4001 = vadd.f32 %v3999, %v4000
    %v4002 = vrot.slane %v4001, 1
    %v4003 = vadd.f32 %v4001, %v4002
    %v4004 = vrot.slane %v3945, 4
    %v4005 = vadd.f32 %v3945, %v4004
    %v4006 = vrot.slane %v4005, 2
    %v4007 = vadd.f32 %v4005, %v4006
    %v4008 = vrot.slane %v4007, 1
    %v4009 = vadd.f32 %v4007, %v4008
    %v4010 = vrot.slane %v3946, 4
    %v4011 = vadd.f32 %v3946, %v4010
    %v4012 = vrot.slane %v4011, 2
    %v4013 = vadd.f32 %v4011, %v4012
    %v4014 = vrot.slane %v4013, 1
    %v4015 = vadd.f32 %v4013, %v4014
    %v4016 = vrot.slane %v3947, 4
    %v4017 = vadd.f32 %v3947, %v4016
    %v4018 = vrot.slane %v4017, 2
    %v4019 = vadd.f32 %v4017, %v4018
    %v4020 = vrot.slane %v4019, 1
    %v4021 = vadd.f32 %v4019, %v4020
    %v4022 = vrot.slane %v3948, 4
    %v4023 = vadd.f32 %v3948, %v4022
    %v4024 = vrot.slane %v4023, 2
    %v4025 = vadd.f32 %v4023, %v4024
    %v4026 = vrot.slane %v4025, 1
    %v4027 = vadd.f32 %v4025, %v4026
    %v4028 = vrot.slane %v3949, 4
    %v4029 = vadd.f32 %v3949, %v4028
    %v4030 = vrot.slane %v4029, 2
    %v4031 = vadd.f32 %v4029, %v4030
    %v4032 = vrot.slane %v4031, 1
    %v4033 = vadd.f32 %v4031, %v4032
    %v4034 = vrot.slane %v3950, 4
    %v4035 = vadd.f32 %v3950, %v4034
    %v4036 = vrot.slane %v4035, 2
    %v4037 = vadd.f32 %v4035, %v4036
    %v4038 = vrot.slane %v4037, 1
    %v4039 = vadd.f32 %v4037, %v4038
    %v4040 = vrot.slane %v3951, 4
    %v4041 = vadd.f32 %v3951, %v4040
    %v4042 = vrot.slane %v4041, 2
    %v4043 = vadd.f32 %v4041, %v4042
    %v4044 = vrot.slane %v4043, 1
    %v4045 = vadd.f32 %v4043, %v4044
    %v4046 = vrot.slane %v3952, 4
    %v4047 = vadd.f32 %v3952, %v4046
    %v4048 = vrot.slane %v4047, 2
    %v4049 = vadd.f32 %v4047, %v4048
    %v4050 = vrot.slane %v4049, 1
    %v4051 = vadd.f32 %v4049, %v4050
    %v4052 = vrot.slane %v3953, 4
    %v4053 = vadd.f32 %v3953, %v4052
    %v4054 = vrot.slane %v4053, 2
    %v4055 = vadd.f32 %v4053, %v4054
    %v4056 = vrot.slane %v4055, 1
    %v4057 = vadd.f32 %v4055, %v4056
    %v4058 = vrot.slane %v3954, 4
    %v4059 = vadd.f32 %v3954, %v4058
    %v4060 = vrot.slane %v4059, 2
    %v4061 = vadd.f32 %v4059, %v4060
    %v4062 = vrot.slane %v4061, 1
    %v4063 = vadd.f32 %v4061, %v4062
    %v4064 = vrot.slane %v3955, 4
    %v4065 = vadd.f32 %v3955, %v4064
    %v4066 = vrot.slane %v4065, 2
    %v4067 = vadd.f32 %v4065, %v4066
    %v4068 = vrot.slane %v4067, 1
    %v4069 = vadd.f32 %v4067, %v4068
    %v4070 = vrot.slane %v3956, 4
    %v4071 = vadd.f32 %v3956, %v4070
    %v4072 = vrot.slane %v4071, 2
    %v4073 = vadd.f32 %v4071, %v4072
    %v4074 = vrot.slane %v4073, 1
    %v4075 = vadd.f32 %v4073, %v4074
    %v4076 = vrot.slane %v3957, 4
    %v4077 = vadd.f32 %v3957, %v4076
    %v4078 = vrot.slane %v4077, 2
    %v4079 = vadd.f32 %v4077, %v4078
    %v4080 = vrot.slane %v4079, 1
    %v4081 = vadd.f32 %v4079, %v4080
    %v4082 = vrot.slane %v3958, 4
    %v4083 = vadd.f32 %v3958, %v4082
    %v4084 = vrot.slane %v4083, 2
    %v4085 = vadd.f32 %v4083, %v4084
    %v4086 = vrot.slane %v4085, 1
    %v4087 = vadd.f32 %v4085, %v4086
    %v4088 = vrot.slane %v3959, 4
    %v4089 = vadd.f32 %v3959, %v4088
    %v4090 = vrot.slane %v4089, 2
    %v4091 = vadd.f32 %v4089, %v4090
    %v4092 = vrot.slane %v4091, 1
    %v4093 = vadd.f32 %v4091, %v4092
    %v4094 = vrot.slane %v3960, 4
    %v4095 = vadd.f32 %v3960, %v4094
    %v4096 = vrot.slane %v4095, 2
    %v4097 = vadd.f32 %v4095, %v4096
    %v4098 = vrot.slane %v4097, 1
    %v4099 = vadd.f32 %v4097, %v4098
    %v4100 = vrot.slane %v3961, 4
    %v4101 = vadd.f32 %v3961, %v4100
    %v4102 = vrot.slane %v4101, 2
    %v4103 = vadd.f32 %v4101, %v4102
    %v4104 = vrot.slane %v4103, 1
    %v4105 = vadd.f32 %v4103, %v4104
    %v4106 = vrot.slane %v3962, 4
    %v4107 = vadd.f32 %v3962, %v4106
    %v4108 = vrot.slane %v4107, 2
    %v4109 = vadd.f32 %v4107, %v4108
    %v4110 = vrot.slane %v4109, 1
    %v4111 = vadd.f32 %v4109, %v4110
    %v4112 = vrot.slane %v3963, 4
    %v4113 = vadd.f32 %v3963, %v4112
    %v4114 = vrot.slane %v4113, 2
    %v4115 = vadd.f32 %v4113, %v4114
    %v4116 = vrot.slane %v4115, 1
    %v4117 = vadd.f32 %v4115, %v4116
    %v4118 = vrot.slane %v3964, 4
    %v4119 = vadd.f32 %v3964, %v4118
    %v4120 = vrot.slane %v4119, 2
    %v4121 = vadd.f32 %v4119, %v4120
    %v4122 = vrot.slane %v4121, 1
    %v4123 = vadd.f32 %v4121, %v4122
    %v4124 = vrot.slane %v3965, 4
    %v4125 = vadd.f32 %v3965, %v4124
    %v4126 = vrot.slane %v4125, 2
    %v4127 = vadd.f32 %v4125, %v4126
    %v4128 = vrot.slane %v4127, 1
    %v4129 = vadd.f32 %v4127, %v4128
    %v4130 = vrot.slane %v3966, 4
    %v4131 = vadd.f32 %v3966, %v4130
    %v4132 = vrot.slane %v4131, 2
    %v4133 = vadd.f32 %v4131, %v4132
    %v4134 = vrot.slane %v4133, 1
    %v4135 = vadd.f32 %v4133, %v4134
    %v4136 = vrot.slane %v3967, 4
    %v4137 = vadd.f32 %v3967, %v4136
    %v4138 = vrot.slane %v4137, 2
    %v4139 = vadd.f32 %v4137, %v4138
    %v4140 = vrot.slane %v4139, 1
    %v4141 = vadd.f32 %v4139, %v4140
    %v4142 = vrot.slane %v3968, 4
    %v4143 = vadd.f32 %v3968, %v4142
    %v4144 = vrot.slane %v4143, 2
    %v4145 = vadd.f32 %v4143, %v4144
    %v4146 = vrot.slane %v4145, 1
    %v4147 = vadd.f32 %v4145, %v4146
    %v4148 = vrot.slane %v3969, 4
    %v4149 = vadd.f32 %v3969, %v4148
    %v4150 = vrot.slane %v4149, 2
    %v4151 = vadd.f32 %v4149, %v4150
    %v4152 = vrot.slane %v4151, 1
    %v4153 = vadd.f32 %v4151, %v4152
    %v4154 = vrot.slane %v3970, 4
    %v4155 = vadd.f32 %v3970, %v4154
    %v4156 = vrot.slane %v4155, 2
    %v4157 = vadd.f32 %v4155, %v4156
    %v4158 = vrot.slane %v4157, 1
    %v4159 = vadd.f32 %v4157, %v4158
    %v4160 = vrot.slane %v3971, 4
    %v4161 = vadd.f32 %v3971, %v4160
    %v4162 = vrot.slane %v4161, 2
    %v4163 = vadd.f32 %v4161, %v4162
    %v4164 = vrot.slane %v4163, 1
    %v4165 = vadd.f32 %v4163, %v4164
    %v4166 = vrot.slane %v3972, 4
    %v4167 = vadd.f32 %v3972, %v4166
    %v4168 = vrot.slane %v4167, 2
    %v4169 = vadd.f32 %v4167, %v4168
    %v4170 = vrot.slane %v4169, 1
    %v4171 = vadd.f32 %v4169, %v4170
    %v4172 = vrot.slane %v3973, 4
    %v4173 = vadd.f32 %v3973, %v4172
    %v4174 = vrot.slane %v4173, 2
    %v4175 = vadd.f32 %v4173, %v4174
    %v4176 = vrot.slane %v4175, 1
    %v4177 = vadd.f32 %v4175, %v4176
    %v4178 = vrot.slane %v3974, 4
    %v4179 = vadd.f32 %v3974, %v4178
    %v4180 = vrot.slane %v4179, 2
    %v4181 = vadd.f32 %v4179, %v4180
    %v4182 = vrot.slane %v4181, 1
    %v4183 = vadd.f32 %v4181, %v4182
    %v4184 = vrot.slane %v3975, 4
    %v4185 = vadd.f32 %v3975, %v4184
    %v4186 = vrot.slane %v4185, 2
    %v4187 = vadd.f32 %v4185, %v4186
    %v4188 = vrot.slane %v4187, 1
    %v4189 = vadd.f32 %v4187, %v4188
    %v4190 = vrot.slane %v3976, 4
    %v4191 = vadd.f32 %v3976, %v4190
    %v4192 = vrot.slane %v4191, 2
    %v4193 = vadd.f32 %v4191, %v4192
    %v4194 = vrot.slane %v4193, 1
    %v4195 = vadd.f32 %v4193, %v4194
    %v4196 = vrot.slane %v3977, 4
    %v4197 = vadd.f32 %v3977, %v4196
    %v4198 = vrot.slane %v4197, 2
    %v4199 = vadd.f32 %v4197, %v4198
    %v4200 = vrot.slane %v4199, 1
    %v4201 = vadd.f32 %v4199, %v4200
    %v4202 = vrot.slane %v3978, 4
    %v4203 = vadd.f32 %v3978, %v4202
    %v4204 = vrot.slane %v4203, 2
    %v4205 = vadd.f32 %v4203, %v4204
    %v4206 = vrot.slane %v4205, 1
    %v4207 = vadd.f32 %v4205, %v4206
    %v4208 = vrot.slane %v3979, 4
    %v4209 = vadd.f32 %v3979, %v4208
    %v4210 = vrot.slane %v4209, 2
    %v4211 = vadd.f32 %v4209, %v4210
    %v4212 = vrot.slane %v4211, 1
    %v4213 = vadd.f32 %v4211, %v4212
    %v4214 = vrot.slane %v3980, 4
    %v4215 = vadd.f32 %v3980, %v4214
    %v4216 = vrot.slane %v4215, 2
    %v4217 = vadd.f32 %v4215, %v4216
    %v4218 = vrot.slane %v4217, 1
    %v4219 = vadd.f32 %v4217, %v4218
    %v4220 = vrot.slane %v3981, 4
    %v4221 = vadd.f32 %v3981, %v4220
    %v4222 = vrot.slane %v4221, 2
    %v4223 = vadd.f32 %v4221, %v4222
    %v4224 = vrot.slane %v4223, 1
    %v4225 = vadd.f32 %v4223, %v4224
    %v4226 = vrot.slane %v3982, 4
    %v4227 = vadd.f32 %v3982, %v4226
    %v4228 = vrot.slane %v4227, 2
    %v4229 = vadd.f32 %v4227, %v4228
    %v4230 = vrot.slane %v4229, 1
    %v4231 = vadd.f32 %v4229, %v4230
    %v4232 = vrot.slane %v3983, 4
    %v4233 = vadd.f32 %v3983, %v4232
    %v4234 = vrot.slane %v4233, 2
    %v4235 = vadd.f32 %v4233, %v4234
    %v4236 = vrot.slane %v4235, 1
    %v4237 = vadd.f32 %v4235, %v4236
    %v4238 = vrot.slane %v3984, 4
    %v4239 = vadd.f32 %v3984, %v4238
    %v4240 = vrot.slane %v4239, 2
    %v4241 = vadd.f32 %v4239, %v4240
    %v4242 = vrot.slane %v4241, 1
    %v4243 = vadd.f32 %v4241, %v4242
    %v4244 = vrot.slane %v3985, 4
    %v4245 = vadd.f32 %v3985, %v4244
    %v4246 = vrot.slane %v4245, 2
    %v4247 = vadd.f32 %v4245, %v4246
    %v4248 = vrot.slane %v4247, 1
    %v4249 = vadd.f32 %v4247, %v4248
    %v4250 = vrot.slane %v3986, 4
    %v4251 = vadd.f32 %v3986, %v4250
    %v4252 = vrot.slane %v4251, 2
    %v4253 = vadd.f32 %v4251, %v4252
    %v4254 = vrot.slane %v4253, 1
    %v4255 = vadd.f32 %v4253, %v4254
    %v4256 = vrot.slane %v3987, 4
    %v4257 = vadd.f32 %v3987, %v4256
    %v4258 = vrot.slane %v4257, 2
    %v4259 = vadd.f32 %v4257, %v4258
    %v4260 = vrot.slane %v4259, 1
    %v4261 = vadd.f32 %v4259, %v4260
    %v4262 = vrot.slane %v3988, 4
    %v4263 = vadd.f32 %v3988, %v4262
    %v4264 = vrot.slane %v4263, 2
    %v4265 = vadd.f32 %v4263, %v4264
    %v4266 = vrot.slane %v4265, 1
    %v4267 = vadd.f32 %v4265, %v4266
    %v4268 = vrot.slane %v3989, 4
    %v4269 = vadd.f32 %v3989, %v4268
    %v4270 = vrot.slane %v4269, 2
    %v4271 = vadd.f32 %v4269, %v4270
    %v4272 = vrot.slane %v4271, 1
    %v4273 = vadd.f32 %v4271, %v4272
    %v4274 = vrot.slane %v3990, 4
    %v4275 = vadd.f32 %v3990, %v4274
    %v4276 = vrot.slane %v4275, 2
    %v4277 = vadd.f32 %v4275, %v4276
    %v4278 = vrot.slane %v4277, 1
    %v4279 = vadd.f32 %v4277, %v4278
    %v4280 = vrot.slane %v3991, 4
    %v4281 = vadd.f32 %v3991, %v4280
    %v4282 = vrot.slane %v4281, 2
    %v4283 = vadd.f32 %v4281, %v4282
    %v4284 = vrot.slane %v4283, 1
    %v4285 = vadd.f32 %v4283, %v4284
    %v4286 = vmul.f32 %v3997, 0.5
    %v4287 = vmul.f32 %v4003, 0.5
    %v4288 = vmul.f32 %v4009, 0.5
    %v4289 = vmul.f32 %v4015, 0.5
    %v4290 = vmul.f32 %v4021, 0.5
    %v4291 = vmul.f32 %v4027, 0.5
    %v4292 = vmul.f32 %v4033, 0.5
    %v4293 = vmul.f32 %v4039, 0.5
    %v4294 = vmul.f32 %v4045, 0.5
    %v4295 = vmul.f32 %v4051, 0.5
    %v4296 = vmul.f32 %v4057, 0.5
    %v4297 = vmul.f32 %v4063, 0.5
    %v4298 = vmul.f32 %v4069, 0.5
    %v4299 = vmul.f32 %v4075, 0.5
    %v4300 = vmul.f32 %v4081, 0.5
    %v4301 = vmul.f32 %v4087, 0.5
    %v4302 = vmul.f32 %v4093, 0.5
    %v4303 = vmul.f32 %v4099, 0.5
    %v4304 = vmul.f32 %v4105, 0.5
    %v4305 = vmul.f32 %v4111, 0.5
    %v4306 = vmul.f32 %v4117, 0.5
    %v4307 = vmul.f32 %v4123, 0.5
    %v4308 = vmul.f32 %v4129, 0.5
    %v4309 = vmul.f32 %v4135, 0.5
    %v4310 = vmul.f32 %v4141, 0.5
    %v4311 = vmul.f32 %v4147, 0.5
    %v4312 = vmul.f32 %v4153, 0.5
    %v4313 = vmul.f32 %v4159, 0.5
    %v4314 = vmul.f32 %v4165, 0.5
    %v4315 = vmul.f32 %v4171, 0.5
    %v4316 = vmul.f32 %v4177, 0.5
    %v4317 = vmul.f32 %v4183, 0.5
    %v4318 = vmul.f32 %v4189, 0.5
    %v4319 = vmul.f32 %v4195, 0.5
    %v4320 = vmul.f32 %v4201, 0.5
    %v4321 = vmul.f32 %v4207, 0.5
    %v4322 = vmul.f32 %v4213, 0.5
    %v4323 = vmul.f32 %v4219, 0.5
    %v4324 = vmul.f32 %v4225, 0.5
    %v4325 = vmul.f32 %v4231, 0.5
    %v4326 = vmul.f32 %v4237, 0.5
    %v4327 = vmul.f32 %v4243, 0.5
    %v4328 = vmul.f32 %v4249, 0.5
    %v4329 = vmul.f32 %v4255, 0.5
    %v4330 = vmul.f32 %v4261, 0.5
    %v4331 = vmul.f32 %v4267, 0.5
    %v4332 = vmul.f32 %v4273, 0.5
    %v4333 = vmul.f32 %v4279, 0.5
    %v4334 = vmul.f32 %v4285, 0.5
    %v4335 = vadd.f32 %v4286, 1e-05
    %v4336 = vadd.f32 %v4287, 1e-05
    %v4337 = vadd.f32 %v4288, 1e-05
    %v4338 = vadd.f32 %v4289, 1e-05
    %v4339 = vadd.f32 %v4290, 1e-05
    %v4340 = vadd.f32 %v4291, 1e-05
    %v4341 = vadd.f32 %v4292, 1e-05
    %v4342 = vadd.f32 %v4293, 1e-05
    %v4343 = vadd.f32 %v4294, 1e-05
    %v4344 = vadd.f32 %v4295, 1e-05
    %v4345 = vadd.f32 %v4296, 1e-05
    %v4346 = vadd.f32 %v4297, 1e-05
    %v4347 = vadd.f32 %v4298, 1e-05
    %v4348 = vadd.f32 %v4299, 1e-05
    %v4349 = vadd.f32 %v4300, 1e-05
    %v4350 = vadd.f32 %v4301, 1e-05
    %v4351 = vadd.f32 %v4302, 1e-05
    %v4352 = vadd.f32 %v4303, 1e-05
    %v4353 = vadd.f32 %v4304, 1e-05
    %v4354 = vadd.f32 %v4305, 1e-05
    %v4355 = vadd.f32 %v4306, 1e-05
    %v4356 = vadd.f32 %v4307, 1e-05
    %v4357 = vadd.f32 %v4308, 1e-05
    %v4358 = vadd.f32 %v4309, 1e-05
    %v4359 = vadd.f32 %v4310, 1e-05
    %v4360 = vadd.f32 %v4311, 1e-05
    %v4361 = vadd.f32 %v4312, 1e-05
    %v4362 = vadd.f32 %v4313, 1e-05
    %v4363 = vadd.f32 %v4314, 1e-05
    %v4364 = vadd.f32 %v4315, 1e-05
    %v4365 = vadd.f32 %v4316, 1e-05
    %v4366 = vadd.f32 %v4317, 1e-05
    %v4367 = vadd.f32 %v4318, 1e-05
    %v4368 = vadd.f32 %v4319, 1e-05
    %v4369 = vadd.f32 %v4320, 1e-05
    %v4370 = vadd.f32 %v4321, 1e-05
    %v4371 = vadd.f32 %v4322, 1e-05
    %v4372 = vadd.f32 %v4323, 1e-05
    %v4373 = vadd.f32 %v4324, 1e-05
    %v4374 = vadd.f32 %v4325, 1e-05
    %v4375 = vadd.f32 %v4326, 1e-05
    %v4376 = vadd.f32 %v4327, 1e-05
    %v4377 = vadd.f32 %v4328, 1e-05
    %v4378 = vadd.f32 %v4329, 1e-05
    %v4379 = vadd.f32 %v4330, 1e-05
    %v4380 = vadd.f32 %v4331, 1e-05
    %v4381 = vadd.f32 %v4332, 1e-05
    %v4382 = vadd.f32 %v4333, 1e-05
    %v4383 = vadd.f32 %v4334, 1e-05
    %v4384 = vrsqrt.pop %v4335
    %v4385 = vrsqrt.pop %v4336
    %v4386 = vrsqrt.pop %v4337
    %v4387 = vrsqrt.pop %v4338
    %v4388 = vrsqrt.pop %v4339
    %v4389 = vrsqrt.pop %v4340
    %v4390 = vrsqrt.pop %v4341
    %v4391 = vrsqrt.pop %v4342
    %v4392 = vrsqrt.pop %v4343
    %v4393 = vrsqrt.pop %v4344
    %v4394 = vrsqrt.pop %v4345
    %v4395 = vrsqrt.pop %v4346
    %v4396 = vrsqrt.pop %v4347
    %v4397 = vrsqrt.pop %v4348
    %v4398 = vrsqrt.pop %v4349
    %v4399 = vrsqrt.pop %v4350
    %v4400 = vrsqrt.pop %v4351
    %v4401 = vrsqrt.pop %v4352
    %v4402 = vrsqrt.pop %v4353
    %v4403 = vrsqrt.pop %v4354
    %v4404 = vrsqrt.pop %v4355
    %v4405 = vrsqrt.pop %v4356
    %v4406 = vrsqrt.pop %v4357
    %v4407 = vrsqrt.pop %v4358
    %v4408 = vrsqrt.pop %v4359
    %v4409 = vrsqrt.pop %v4360
    %v4410 = vrsqrt.pop %v4361
    %v4411 = vrsqrt.pop %v4362
    %v4412 = vrsqrt.pop %v4363
    %v4413 = vrsqrt.pop %v4364
    %v4414 = vrsqrt.pop %v4365
    %v4415 = vrsqrt.pop %v4366
    %v4416 = vrsqrt.pop %v4367
    %v4417 = vrsqrt.pop %v4368
    %v4418 = vrsqrt.pop %v4369
    %v4419 = vrsqrt.pop %v4370
    %v4420 = vrsqrt.pop %v4371
    %v4421 = vrsqrt.pop %v4372
    %v4422 = vrsqrt.pop %v4373
    %v4423 = vrsqrt.pop %v4374
    %v4424 = vrsqrt.pop %v4375
    %v4425 = vrsqrt.pop %v4376
    %v4426 = vrsqrt.pop %v4377
    %v4427 = vrsqrt.pop %v4378
    %v4428 = vrsqrt.pop %v4379
    %v4429 = vrsqrt.pop %v4380
    %v4430 = vrsqrt.pop %v4381
    %v4431 = vrsqrt.pop %v4382
    %v4432 = vrsqrt.pop %v4383
    %v4433 = vmul.f32 %v3845, %v4384
    %v4434 = vmul.f32 %v3846, %v4385
    %v4435 = vmul.f32 %v3847, %v4386
    %v4436 = vmul.f32 %v3848, %v4387
    %v4437 = vmul.f32 %v3849, %v4388
    %v4438 = vmul.f32 %v3850, %v4389
    %v4439 = vmul.f32 %v3851, %v4390
    %v4440 = vmul.f32 %v3852, %v4391
    %v4441 = vmul.f32 %v3853, %v4392
    %v4442 = vmul.f32 %v3854, %v4393
    %v4443 = vmul.f32 %v3855, %v4394
    %v4444 = vmul.f32 %v3856, %v4395
    %v4445 = vmul.f32 %v3857, %v4396
    %v4446 = vmul.f32 %v3858, %v4397
    %v4447 = vmul.f32 %v3859, %v4398
    %v4448 = vmul.f32 %v3860, %v4399
    %v4449 = vmul.f32 %v3861, %v4400
    %v4450 = vmul.f32 %v3862, %v4401
    %v4451 = vmul.f32 %v3863, %v4402
    %v4452 = vmul.f32 %v3864, %v4403
    %v4453 = vmul.f32 %v3865, %v4404
    %v4454 = vmul.f32 %v3866, %v4405
    %v4455 = vmul.f32 %v3867, %v4406
    %v4456 = vmul.f32 %v3868, %v4407
    %v4457 = vmul.f32 %v3869, %v4408
    %v4458 = vmul.f32 %v3870, %v4409
    %v4459 = vmul.f32 %v3871, %v4410
    %v4460 = vmul.f32 %v3872, %v4411
    %v4461 = vmul.f32 %v3873, %v4412
    %v4462 = vmul.f32 %v3874, %v4413
    %v4463 = vmul.f32 %v3875, %v4414
    %v4464 = vmul.f32 %v3876, %v4415
    %v4465 = vmul.f32 %v3877, %v4416
    %v4466 = vmul.f32 %v3878, %v4417
    %v4467 = vmul.f32 %v3879, %v4418
    %v4468 = vmul.f32 %v3880, %v4419
    %v4469 = vmul.f32 %v3881, %v4420
    %v4470 = vmul.f32 %v3882, %v4421
    %v4471 = vmul.f32 %v3883, %v4422
    %v4472 = vmul.f32 %v3884, %v4423
    %v4473 = vmul.f32 %v3885, %v4424
    %v4474 = vmul.f32 %v3886, %v4425
    %v4475 = vmul.f32 %v3887, %v4426
    %v4476 = vmul.f32 %v3888, %v4427
    %v4477 = vmul.f32 %v3889, %v4428
    %v4478 = vmul.f32 %v3890, %v4429
    %v4479 = vmul.f32 %v3891, %v4430
    %v4480 = vmul.f32 %v3892, %v4431
    %v4481 = vmul.f32 %v3893, %v4432
    %v4482 = vld [vmem:[#allocation4] sm:$0xff]
    %v4483 = vld [vmem:[#allocation4 + $0x8] sm:$0xff]
    %v4484 = vld [vmem:[#allocation4 + $0x10] sm:$0xff]
    %v4485 = vld [vmem:[#allocation4 + $0x18] sm:$0xff]
    %v4486 = vld [vmem:[#allocation4 + $0x20] sm:$0xff]
    %v4487 = vld [vmem:[#allocation4 + $0x28] sm:$0xff]
    %v4488 = vld [vmem:[#allocation4 + $0x30] sm:$0x1]
    %v4496 = vlaneseq
    %v4497 = vshrl.u32 %v4496, 7
    %v4498 = vsub.s32 0, %v4497
    %v4499 = vrot.slane %v4482, %v4498
    %v4500 = vlaneseq
    %v4501 = vshrl.u32 %v4500, 7
    %v4502 = vsub.s32 1, %v4501
    %v4503 = vrot.slane %v4482, %v4502
    %v4504 = vlaneseq
    %v4505 = vshrl.u32 %v4504, 7
    %v4506 = vsub.s32 2, %v4505
    %v4507 = vrot.slane %v4482, %v4506
    %v4508 = vlaneseq
    %v4509 = vshrl.u32 %v4508, 7
    %v4510 = vsub.s32 3, %v4509
    %v4511 = vrot.slane %v4482, %v4510
    %v4512 = vlaneseq
    %v4513 = vshrl.u32 %v4512, 7
    %v4514 = vsub.s32 4, %v4513
    %v4515 = vrot.slane %v4482, %v4514
    %v4516 = vlaneseq
    %v4517 = vshrl.u32 %v4516, 7
    %v4518 = vsub.s32 5, %v4517
    %v4519 = vrot.slane %v4482, %v4518
    %v4520 = vlaneseq
    %v4521 = vshrl.u32 %v4520, 7
    %v4522 = vsub.s32 6, %v4521
    %v4523 = vrot.slane %v4482, %v4522
    %v4524 = vlaneseq
    %v4525 = vshrl.u32 %v4524, 7
    %v4526 = vsub.s32 7, %v4525
    %v4527 = vrot.slane %v4482, %v4526
    %v4528 = vlaneseq
    %v4529 = vshrl.u32 %v4528, 7
    %v4530 = vsub.s32 0, %v4529
    %v4531 = vrot.slane %v4483, %v4530
    %v4532 = vlaneseq
    %v4533 = vshrl.u32 %v4532, 7
    %v4534 = vsub.s32 1, %v4533
    %v4535 = vrot.slane %v4483, %v4534
    %v4536 = vlaneseq
    %v4537 = vshrl.u32 %v4536, 7
    %v4538 = vsub.s32 2, %v4537
    %v4539 = vrot.slane %v4483, %v4538
    %v4540 = vlaneseq
    %v4541 = vshrl.u32 %v4540, 7
    %v4542 = vsub.s32 3, %v4541
    %v4543 = vrot.slane %v4483, %v4542
    %v4544 = vlaneseq
    %v4545 = vshrl.u32 %v4544, 7
    %v4546 = vsub.s32 4, %v4545
    %v4547 = vrot.slane %v4483, %v4546
    %v4548 = vlaneseq
    %v4549 = vshrl.u32 %v4548, 7
    %v4550 = vsub.s32 5, %v4549
    %v4551 = vrot.slane %v4483, %v4550
    %v4552 = vlaneseq
    %v4553 = vshrl.u32 %v4552, 7
    %v4554 = vsub.s32 6, %v4553
    %v4555 = vrot.slane %v4483, %v4554
    %v4556 = vlaneseq
    %v4557 = vshrl.u32 %v4556, 7
    %v4558 = vsub.s32 7, %v4557
    %v4559 = vrot.slane %v4483, %v4558
    %v4560 = vlaneseq
    %v4561 = vshrl.u32 %v4560, 7
    %v4562 = vsub.s32 0, %v4561
    %v4563 = vrot.slane %v4484, %v4562
    %v4564 = vlaneseq
    %v4565 = vshrl.u32 %v4564, 7
    %v4566 = vsub.s32 1, %v4565
    %v4567 = vrot.slane %v4484, %v4566
    %v4568 = vlaneseq
    %v4569 = vshrl.u32 %v4568, 7
    %v4570 = vsub.s32 2, %v4569
    %v4571 = vrot.slane %v4484, %v4570
    %v4572 = vlaneseq
    %v4573 = vshrl.u32 %v4572, 7
    %v4574 = vsub.s32 3, %v4573
    %v4575 = vrot.slane %v4484, %v4574
    %v4576 = vlaneseq
    %v4577 = vshrl.u32 %v4576, 7
    %v4578 = vsub.s32 4, %v4577
    %v4579 = vrot.slane %v4484, %v4578
    %v4580 = vlaneseq
    %v4581 = vshrl.u32 %v4580, 7
    %v4582 = vsub.s32 5, %v4581
    %v4583 = vrot.slane %v4484, %v4582
    %v4584 = vlaneseq
    %v4585 = vshrl.u32 %v4584, 7
    %v4586 = vsub.s32 6, %v4585
    %v4587 = vrot.slane %v4484, %v4586
    %v4588 = vlaneseq
    %v4589 = vshrl.u32 %v4588, 7
    %v4590 = vsub.s32 7, %v4589
    %v4591 = vrot.slane %v4484, %v4590
    %v4592 = vlaneseq
    %v4593 = vshrl.u32 %v4592, 7
    %v4594 = vsub.s32 0, %v4593
    %v4595 = vrot.slane %v4485, %v4594
    %v4596 = vlaneseq
    %v4597 = vshrl.u32 %v4596, 7
    %v4598 = vsub.s32 1, %v4597
    %v4599 = vrot.slane %v4485, %v4598
    %v4600 = vlaneseq
    %v4601 = vshrl.u32 %v4600, 7
    %v4602 = vsub.s32 2, %v4601
    %v4603 = vrot.slane %v4485, %v4602
    %v4604 = vlaneseq
    %v4605 = vshrl.u32 %v4604, 7
    %v4606 = vsub.s32 3, %v4605
    %v4607 = vrot.slane %v4485, %v4606
    %v4608 = vlaneseq
    %v4609 = vshrl.u32 %v4608, 7
    %v4610 = vsub.s32 4, %v4609
    %v4611 = vrot.slane %v4485, %v4610
    %v4612 = vlaneseq
    %v4613 = vshrl.u32 %v4612, 7
    %v4614 = vsub.s32 5, %v4613
    %v4615 = vrot.slane %v4485, %v4614
    %v4616 = vlaneseq
    %v4617 = vshrl.u32 %v4616, 7
    %v4618 = vsub.s32 6, %v4617
    %v4619 = vrot.slane %v4485, %v4618
    %v4620 = vlaneseq
    %v4621 = vshrl.u32 %v4620, 7
    %v4622 = vsub.s32 7, %v4621
    %v4623 = vrot.slane %v4485, %v4622
    %v4624 = vlaneseq
    %v4625 = vshrl.u32 %v4624, 7
    %v4626 = vsub.s32 0, %v4625
    %v4627 = vrot.slane %v4486, %v4626
    %v4628 = vlaneseq
    %v4629 = vshrl.u32 %v4628, 7
    %v4630 = vsub.s32 1, %v4629
    %v4631 = vrot.slane %v4486, %v4630
    %v4632 = vlaneseq
    %v4633 = vshrl.u32 %v4632, 7
    %v4634 = vsub.s32 2, %v4633
    %v4635 = vrot.slane %v4486, %v4634
    %v4636 = vlaneseq
    %v4637 = vshrl.u32 %v4636, 7
    %v4638 = vsub.s32 3, %v4637
    %v4639 = vrot.slane %v4486, %v4638
    %v4640 = vlaneseq
    %v4641 = vshrl.u32 %v4640, 7
    %v4642 = vsub.s32 4, %v4641
    %v4643 = vrot.slane %v4486, %v4642
    %v4644 = vlaneseq
    %v4645 = vshrl.u32 %v4644, 7
    %v4646 = vsub.s32 5, %v4645
    %v4647 = vrot.slane %v4486, %v4646
    %v4648 = vlaneseq
    %v4649 = vshrl.u32 %v4648, 7
    %v4650 = vsub.s32 6, %v4649
    %v4651 = vrot.slane %v4486, %v4650
    %v4652 = vlaneseq
    %v4653 = vshrl.u32 %v4652, 7
    %v4654 = vsub.s32 7, %v4653
    %v4655 = vrot.slane %v4486, %v4654
    %v4656 = vlaneseq
    %v4657 = vshrl.u32 %v4656, 7
    %v4658 = vsub.s32 0, %v4657
    %v4659 = vrot.slane %v4487, %v4658
    %v4660 = vlaneseq
    %v4661 = vshrl.u32 %v4660, 7
    %v4662 = vsub.s32 1, %v4661
    %v4663 = vrot.slane %v4487, %v4662
    %v4664 = vlaneseq
    %v4665 = vshrl.u32 %v4664, 7
    %v4666 = vsub.s32 2, %v4665
    %v4667 = vrot.slane %v4487, %v4666
    %v4668 = vlaneseq
    %v4669 = vshrl.u32 %v4668, 7
    %v4670 = vsub.s32 3, %v4669
    %v4671 = vrot.slane %v4487, %v4670
    %v4672 = vlaneseq
    %v4673 = vshrl.u32 %v4672, 7
    %v4674 = vsub.s32 4, %v4673
    %v4675 = vrot.slane %v4487, %v4674
    %v4676 = vlaneseq
    %v4677 = vshrl.u32 %v4676, 7
    %v4678 = vsub.s32 5, %v4677
    %v4679 = vrot.slane %v4487, %v4678
    %v4680 = vlaneseq
    %v4681 = vshrl.u32 %v4680, 7
    %v4682 = vsub.s32 6, %v4681
    %v4683 = vrot.slane %v4487, %v4682
    %v4684 = vlaneseq
    %v4685 = vshrl.u32 %v4684, 7
    %v4686 = vsub.s32 7, %v4685
    %v4687 = vrot.slane %v4487, %v4686
    %v4688 = vlaneseq
    %v4689 = vshrl.u32 %v4688, 7
    %v4690 = vsub.s32 0, %v4689
    %v4691 = vrot.slane %v4488, %v4690
    %v4741 = vmul.f32 %v4433, %v4499
    %v4742 = vmul.f32 %v4434, %v4503
    %v4743 = vmul.f32 %v4435, %v4507
    %v4744 = vmul.f32 %v4436, %v4511
    %v4745 = vmul.f32 %v4437, %v4515
    %v4746 = vmul.f32 %v4438, %v4519
    %v4747 = vmul.f32 %v4439, %v4523
    %v4748 = vmul.f32 %v4440, %v4527
    %v4749 = vmul.f32 %v4441, %v4531
    %v4750 = vmul.f32 %v4442, %v4535
    %v4751 = vmul.f32 %v4443, %v4539
    %v4752 = vmul.f32 %v4444, %v4543
    %v4753 = vmul.f32 %v4445, %v4547
    %v4754 = vmul.f32 %v4446, %v4551
    %v4755 = vmul.f32 %v4447, %v4555
    %v4756 = vmul.f32 %v4448, %v4559
    %v4757 = vmul.f32 %v4449, %v4563
    %v4758 = vmul.f32 %v4450, %v4567
    %v4759 = vmul.f32 %v4451, %v4571
    %v4760 = vmul.f32 %v4452, %v4575
    %v4761 = vmul.f32 %v4453, %v4579
    %v4762 = vmul.f32 %v4454, %v4583
    %v4763 = vmul.f32 %v4455, %v4587
    %v4764 = vmul.f32 %v4456, %v4591
    %v4765 = vmul.f32 %v4457, %v4595
    %v4766 = vmul.f32 %v4458, %v4599
    %v4767 = vmul.f32 %v4459, %v4603
    %v4768 = vmul.f32 %v4460, %v4607
    %v4769 = vmul.f32 %v4461, %v4611
    %v4770 = vmul.f32 %v4462, %v4615
    %v4771 = vmul.f32 %v4463, %v4619
    %v4772 = vmul.f32 %v4464, %v4623
    %v4773 = vmul.f32 %v4465, %v4627
    %v4774 = vmul.f32 %v4466, %v4631
    %v4775 = vmul.f32 %v4467, %v4635
    %v4776 = vmul.f32 %v4468, %v4639
    %v4777 = vmul.f32 %v4469, %v4643
    %v4778 = vmul.f32 %v4470, %v4647
    %v4779 = vmul.f32 %v4471, %v4651
    %v4780 = vmul.f32 %v4472, %v4655
    %v4781 = vmul.f32 %v4473, %v4659
    %v4782 = vmul.f32 %v4474, %v4663
    %v4783 = vmul.f32 %v4475, %v4667
    %v4784 = vmul.f32 %v4476, %v4671
    %v4785 = vmul.f32 %v4477, %v4675
    %v4786 = vmul.f32 %v4478, %v4679
    %v4787 = vmul.f32 %v4479, %v4683
    %v4788 = vmul.f32 %v4480, %v4687
    %v4789 = vmul.f32 %v4481, %v4691
    %v4790 = vld [vmem:[#allocation6] sm:$0xff]
    %v4791 = vld [vmem:[#allocation6 + $0x8] sm:$0xff]
    %v4792 = vld [vmem:[#allocation6 + $0x10] sm:$0xff]
    %v4793 = vld [vmem:[#allocation6 + $0x18] sm:$0xff]
    %v4794 = vld [vmem:[#allocation6 + $0x20] sm:$0xff]
    %v4795 = vld [vmem:[#allocation6 + $0x28] sm:$0xff]
    %v4796 = vld [vmem:[#allocation6 + $0x30] sm:$0x1]
    %v4804 = vlaneseq
    %v4805 = vshrl.u32 %v4804, 7
    %v4806 = vsub.s32 0, %v4805
    %v4807 = vrot.slane %v4790, %v4806
    %v4808 = vlaneseq
    %v4809 = vshrl.u32 %v4808, 7
    %v4810 = vsub.s32 1, %v4809
    %v4811 = vrot.slane %v4790, %v4810
    %v4812 = vlaneseq
    %v4813 = vshrl.u32 %v4812, 7
    %v4814 = vsub.s32 2, %v4813
    %v4815 = vrot.slane %v4790, %v4814
    %v4816 = vlaneseq
    %v4817 = vshrl.u32 %v4816, 7
    %v4818 = vsub.s32 3, %v4817
    %v4819 = vrot.slane %v4790, %v4818
    %v4820 = vlaneseq
    %v4821 = vshrl.u32 %v4820, 7
    %v4822 = vsub.s32 4, %v4821
    %v4823 = vrot.slane %v4790, %v4822
    %v4824 = vlaneseq
    %v4825 = vshrl.u32 %v4824, 7
    %v4826 = vsub.s32 5, %v4825
    %v4827 = vrot.slane %v4790, %v4826
    %v4828 = vlaneseq
    %v4829 = vshrl.u32 %v4828, 7
    %v4830 = vsub.s32 6, %v4829
    %v4831 = vrot.slane %v4790, %v4830
    %v4832 = vlaneseq
    %v4833 = vshrl.u32 %v4832, 7
    %v4834 = vsub.s32 7, %v4833
    %v4835 = vrot.slane %v4790, %v4834
    %v4836 = vlaneseq
    %v4837 = vshrl.u32 %v4836, 7
    %v4838 = vsub.s32 0, %v4837
    %v4839 = vrot.slane %v4791, %v4838
    %v4840 = vlaneseq
    %v4841 = vshrl.u32 %v4840, 7
    %v4842 = vsub.s32 1, %v4841
    %v4843 = vrot.slane %v4791, %v4842
    %v4844 = vlaneseq
    %v4845 = vshrl.u32 %v4844, 7
    %v4846 = vsub.s32 2, %v4845
    %v4847 = vrot.slane %v4791, %v4846
    %v4848 = vlaneseq
    %v4849 = vshrl.u32 %v4848, 7
    %v4850 = vsub.s32 3, %v4849
    %v4851 = vrot.slane %v4791, %v4850
    %v4852 = vlaneseq
    %v4853 = vshrl.u32 %v4852, 7
    %v4854 = vsub.s32 4, %v4853
    %v4855 = vrot.slane %v4791, %v4854
    %v4856 = vlaneseq
    %v4857 = vshrl.u32 %v4856, 7
    %v4858 = vsub.s32 5, %v4857
    %v4859 = vrot.slane %v4791, %v4858
    %v4860 = vlaneseq
    %v4861 = vshrl.u32 %v4860, 7
    %v4862 = vsub.s32 6, %v4861
    %v4863 = vrot.slane %v4791, %v4862
    %v4864 = vlaneseq
    %v4865 = vshrl.u32 %v4864, 7
    %v4866 = vsub.s32 7, %v4865
    %v4867 = vrot.slane %v4791, %v4866
    %v4868 = vlaneseq
    %v4869 = vshrl.u32 %v4868, 7
    %v4870 = vsub.s32 0, %v4869
    %v4871 = vrot.slane %v4792, %v4870
    %v4872 = vlaneseq
    %v4873 = vshrl.u32 %v4872, 7
    %v4874 = vsub.s32 1, %v4873
    %v4875 = vrot.slane %v4792, %v4874
    %v4876 = vlaneseq
    %v4877 = vshrl.u32 %v4876, 7
    %v4878 = vsub.s32 2, %v4877
    %v4879 = vrot.slane %v4792, %v4878
    %v4880 = vlaneseq
    %v4881 = vshrl.u32 %v4880, 7
    %v4882 = vsub.s32 3, %v4881
    %v4883 = vrot.slane %v4792, %v4882
    %v4884 = vlaneseq
    %v4885 = vshrl.u32 %v4884, 7
    %v4886 = vsub.s32 4, %v4885
    %v4887 = vrot.slane %v4792, %v4886
    %v4888 = vlaneseq
    %v4889 = vshrl.u32 %v4888, 7
    %v4890 = vsub.s32 5, %v4889
    %v4891 = vrot.slane %v4792, %v4890
    %v4892 = vlaneseq
    %v4893 = vshrl.u32 %v4892, 7
    %v4894 = vsub.s32 6, %v4893
    %v4895 = vrot.slane %v4792, %v4894
    %v4896 = vlaneseq
    %v4897 = vshrl.u32 %v4896, 7
    %v4898 = vsub.s32 7, %v4897
    %v4899 = vrot.slane %v4792, %v4898
    %v4900 = vlaneseq
    %v4901 = vshrl.u32 %v4900, 7
    %v4902 = vsub.s32 0, %v4901
    %v4903 = vrot.slane %v4793, %v4902
    %v4904 = vlaneseq
    %v4905 = vshrl.u32 %v4904, 7
    %v4906 = vsub.s32 1, %v4905
    %v4907 = vrot.slane %v4793, %v4906
    %v4908 = vlaneseq
    %v4909 = vshrl.u32 %v4908, 7
    %v4910 = vsub.s32 2, %v4909
    %v4911 = vrot.slane %v4793, %v4910
    %v4912 = vlaneseq
    %v4913 = vshrl.u32 %v4912, 7
    %v4914 = vsub.s32 3, %v4913
    %v4915 = vrot.slane %v4793, %v4914
    %v4916 = vlaneseq
    %v4917 = vshrl.u32 %v4916, 7
    %v4918 = vsub.s32 4, %v4917
    %v4919 = vrot.slane %v4793, %v4918
    %v4920 = vlaneseq
    %v4921 = vshrl.u32 %v4920, 7
    %v4922 = vsub.s32 5, %v4921
    %v4923 = vrot.slane %v4793, %v4922
    %v4924 = vlaneseq
    %v4925 = vshrl.u32 %v4924, 7
    %v4926 = vsub.s32 6, %v4925
    %v4927 = vrot.slane %v4793, %v4926
    %v4928 = vlaneseq
    %v4929 = vshrl.u32 %v4928, 7
    %v4930 = vsub.s32 7, %v4929
    %v4931 = vrot.slane %v4793, %v4930
    %v4932 = vlaneseq
    %v4933 = vshrl.u32 %v4932, 7
    %v4934 = vsub.s32 0, %v4933
    %v4935 = vrot.slane %v4794, %v4934
    %v4936 = vlaneseq
    %v4937 = vshrl.u32 %v4936, 7
    %v4938 = vsub.s32 1, %v4937
    %v4939 = vrot.slane %v4794, %v4938
    %v4940 = vlaneseq
    %v4941 = vshrl.u32 %v4940, 7
    %v4942 = vsub.s32 2, %v4941
    %v4943 = vrot.slane %v4794, %v4942
    %v4944 = vlaneseq
    %v4945 = vshrl.u32 %v4944, 7
    %v4946 = vsub.s32 3, %v4945
    %v4947 = vrot.slane %v4794, %v4946
    %v4948 = vlaneseq
    %v4949 = vshrl.u32 %v4948, 7
    %v4950 = vsub.s32 4, %v4949
    %v4951 = vrot.slane %v4794, %v4950
    %v4952 = vlaneseq
    %v4953 = vshrl.u32 %v4952, 7
    %v4954 = vsub.s32 5, %v4953
    %v4955 = vrot.slane %v4794, %v4954
    %v4956 = vlaneseq
    %v4957 = vshrl.u32 %v4956, 7
    %v4958 = vsub.s32 6, %v4957
    %v4959 = vrot.slane %v4794, %v4958
    %v4960 = vlaneseq
    %v4961 = vshrl.u32 %v4960, 7
    %v4962 = vsub.s32 7, %v4961
    %v4963 = vrot.slane %v4794, %v4962
    %v4964 = vlaneseq
    %v4965 = vshrl.u32 %v4964, 7
    %v4966 = vsub.s32 0, %v4965
    %v4967 = vrot.slane %v4795, %v4966
    %v4968 = vlaneseq
    %v4969 = vshrl.u32 %v4968, 7
    %v4970 = vsub.s32 1, %v4969
    %v4971 = vrot.slane %v4795, %v4970
    %v4972 = vlaneseq
    %v4973 = vshrl.u32 %v4972, 7
    %v4974 = vsub.s32 2, %v4973
    %v4975 = vrot.slane %v4795, %v4974
    %v4976 = vlaneseq
    %v4977 = vshrl.u32 %v4976, 7
    %v4978 = vsub.s32 3, %v4977
    %v4979 = vrot.slane %v4795, %v4978
    %v4980 = vlaneseq
    %v4981 = vshrl.u32 %v4980, 7
    %v4982 = vsub.s32 4, %v4981
    %v4983 = vrot.slane %v4795, %v4982
    %v4984 = vlaneseq
    %v4985 = vshrl.u32 %v4984, 7
    %v4986 = vsub.s32 5, %v4985
    %v4987 = vrot.slane %v4795, %v4986
    %v4988 = vlaneseq
    %v4989 = vshrl.u32 %v4988, 7
    %v4990 = vsub.s32 6, %v4989
    %v4991 = vrot.slane %v4795, %v4990
    %v4992 = vlaneseq
    %v4993 = vshrl.u32 %v4992, 7
    %v4994 = vsub.s32 7, %v4993
    %v4995 = vrot.slane %v4795, %v4994
    %v4996 = vlaneseq
    %v4997 = vshrl.u32 %v4996, 7
    %v4998 = vsub.s32 0, %v4997
    %v4999 = vrot.slane %v4796, %v4998
    %v5049 = vadd.f32 %v4741, %v4807
    %v5050 = vadd.f32 %v4742, %v4811
    %v5051 = vadd.f32 %v4743, %v4815
    %v5052 = vadd.f32 %v4744, %v4819
    %v5053 = vadd.f32 %v4745, %v4823
    %v5054 = vadd.f32 %v4746, %v4827
    %v5055 = vadd.f32 %v4747, %v4831
    %v5056 = vadd.f32 %v4748, %v4835
    %v5057 = vadd.f32 %v4749, %v4839
    %v5058 = vadd.f32 %v4750, %v4843
    %v5059 = vadd.f32 %v4751, %v4847
    %v5060 = vadd.f32 %v4752, %v4851
    %v5061 = vadd.f32 %v4753, %v4855
    %v5062 = vadd.f32 %v4754, %v4859
    %v5063 = vadd.f32 %v4755, %v4863
    %v5064 = vadd.f32 %v4756, %v4867
    %v5065 = vadd.f32 %v4757, %v4871
    %v5066 = vadd.f32 %v4758, %v4875
    %v5067 = vadd.f32 %v4759, %v4879
    %v5068 = vadd.f32 %v4760, %v4883
    %v5069 = vadd.f32 %v4761, %v4887
    %v5070 = vadd.f32 %v4762, %v4891
    %v5071 = vadd.f32 %v4763, %v4895
    %v5072 = vadd.f32 %v4764, %v4899
    %v5073 = vadd.f32 %v4765, %v4903
    %v5074 = vadd.f32 %v4766, %v4907
    %v5075 = vadd.f32 %v4767, %v4911
    %v5076 = vadd.f32 %v4768, %v4915
    %v5077 = vadd.f32 %v4769, %v4919
    %v5078 = vadd.f32 %v4770, %v4923
    %v5079 = vadd.f32 %v4771, %v4927
    %v5080 = vadd.f32 %v4772, %v4931
    %v5081 = vadd.f32 %v4773, %v4935
    %v5082 = vadd.f32 %v4774, %v4939
    %v5083 = vadd.f32 %v4775, %v4943
    %v5084 = vadd.f32 %v4776, %v4947
    %v5085 = vadd.f32 %v4777, %v4951
    %v5086 = vadd.f32 %v4778, %v4955
    %v5087 = vadd.f32 %v4779, %v4959
    %v5088 = vadd.f32 %v4780, %v4963
    %v5089 = vadd.f32 %v4781, %v4967
    %v5090 = vadd.f32 %v4782, %v4971
    %v5091 = vadd.f32 %v4783, %v4975
    %v5092 = vadd.f32 %v4784, %v4979
    %v5093 = vadd.f32 %v4785, %v4983
    %v5094 = vadd.f32 %v4786, %v4987
    %v5095 = vadd.f32 %v4787, %v4991
    %v5096 = vadd.f32 %v4788, %v4995
    %v5097 = vadd.f32 %v4789, %v4999
    %vm5098 = vcmp.gt.f32.partialorder %v5049, 0.0
    %vm5099 = vcmp.gt.f32.partialorder %v5050, 0.0
    %vm5100 = vcmp.gt.f32.partialorder %v5051, 0.0
    %vm5101 = vcmp.gt.f32.partialorder %v5052, 0.0
    %vm5102 = vcmp.gt.f32.partialorder %v5053, 0.0
    %vm5103 = vcmp.gt.f32.partialorder %v5054, 0.0
    %vm5104 = vcmp.gt.f32.partialorder %v5055, 0.0
    %vm5105 = vcmp.gt.f32.partialorder %v5056, 0.0
    %vm5106 = vcmp.gt.f32.partialorder %v5057, 0.0
    %vm5107 = vcmp.gt.f32.partialorder %v5058, 0.0
    %vm5108 = vcmp.gt.f32.partialorder %v5059, 0.0
    %vm5109 = vcmp.gt.f32.partialorder %v5060, 0.0
    %vm5110 = vcmp.gt.f32.partialorder %v5061, 0.0
    %vm5111 = vcmp.gt.f32.partialorder %v5062, 0.0
    %vm5112 = vcmp.gt.f32.partialorder %v5063, 0.0
    %vm5113 = vcmp.gt.f32.partialorder %v5064, 0.0
    %vm5114 = vcmp.gt.f32.partialorder %v5065, 0.0
    %vm5115 = vcmp.gt.f32.partialorder %v5066, 0.0
    %vm5116 = vcmp.gt.f32.partialorder %v5067, 0.0
    %vm5117 = vcmp.gt.f32.partialorder %v5068, 0.0
    %vm5118 = vcmp.gt.f32.partialorder %v5069, 0.0
    %vm5119 = vcmp.gt.f32.partialorder %v5070, 0.0
    %vm5120 = vcmp.gt.f32.partialorder %v5071, 0.0
    %vm5121 = vcmp.gt.f32.partialorder %v5072, 0.0
    %vm5122 = vcmp.gt.f32.partialorder %v5073, 0.0
    %vm5123 = vcmp.gt.f32.partialorder %v5074, 0.0
    %vm5124 = vcmp.gt.f32.partialorder %v5075, 0.0
    %vm5125 = vcmp.gt.f32.partialorder %v5076, 0.0
    %vm5126 = vcmp.gt.f32.partialorder %v5077, 0.0
    %vm5127 = vcmp.gt.f32.partialorder %v5078, 0.0
    %vm5128 = vcmp.gt.f32.partialorder %v5079, 0.0
    %vm5129 = vcmp.gt.f32.partialorder %v5080, 0.0
    %vm5130 = vcmp.gt.f32.partialorder %v5081, 0.0
    %vm5131 = vcmp.gt.f32.partialorder %v5082, 0.0
    %vm5132 = vcmp.gt.f32.partialorder %v5083, 0.0
    %vm5133 = vcmp.gt.f32.partialorder %v5084, 0.0
    %vm5134 = vcmp.gt.f32.partialorder %v5085, 0.0
    %vm5135 = vcmp.gt.f32.partialorder %v5086, 0.0
    %vm5136 = vcmp.gt.f32.partialorder %v5087, 0.0
    %vm5137 = vcmp.gt.f32.partialorder %v5088, 0.0
    %vm5138 = vcmp.gt.f32.partialorder %v5089, 0.0
    %vm5139 = vcmp.gt.f32.partialorder %v5090, 0.0
    %vm5140 = vcmp.gt.f32.partialorder %v5091, 0.0
    %vm5141 = vcmp.gt.f32.partialorder %v5092, 0.0
    %vm5142 = vcmp.gt.f32.partialorder %v5093, 0.0
    %vm5143 = vcmp.gt.f32.partialorder %v5094, 0.0
    %vm5144 = vcmp.gt.f32.partialorder %v5095, 0.0
    %vm5145 = vcmp.gt.f32.partialorder %v5096, 0.0
    %vm5146 = vcmp.gt.f32.partialorder %v5097, 0.0
    %v5147 = vmin.f32 %v5049, 0.0
    %v5148 = vmin.f32 %v5050, 0.0
    %v5149 = vmin.f32 %v5051, 0.0
    %v5150 = vmin.f32 %v5052, 0.0
    %v5151 = vmin.f32 %v5053, 0.0
    %v5152 = vmin.f32 %v5054, 0.0
    %v5153 = vmin.f32 %v5055, 0.0
    %v5154 = vmin.f32 %v5056, 0.0
    %v5155 = vmin.f32 %v5057, 0.0
    %v5156 = vmin.f32 %v5058, 0.0
    %v5157 = vmin.f32 %v5059, 0.0
    %v5158 = vmin.f32 %v5060, 0.0
    %v5159 = vmin.f32 %v5061, 0.0
    %v5160 = vmin.f32 %v5062, 0.0
    %v5161 = vmin.f32 %v5063, 0.0
    %v5162 = vmin.f32 %v5064, 0.0
    %v5163 = vmin.f32 %v5065, 0.0
    %v5164 = vmin.f32 %v5066, 0.0
    %v5165 = vmin.f32 %v5067, 0.0
    %v5166 = vmin.f32 %v5068, 0.0
    %v5167 = vmin.f32 %v5069, 0.0
    %v5168 = vmin.f32 %v5070, 0.0
    %v5169 = vmin.f32 %v5071, 0.0
    %v5170 = vmin.f32 %v5072, 0.0
    %v5171 = vmin.f32 %v5073, 0.0
    %v5172 = vmin.f32 %v5074, 0.0
    %v5173 = vmin.f32 %v5075, 0.0
    %v5174 = vmin.f32 %v5076, 0.0
    %v5175 = vmin.f32 %v5077, 0.0
    %v5176 = vmin.f32 %v5078, 0.0
    %v5177 = vmin.f32 %v5079, 0.0
    %v5178 = vmin.f32 %v5080, 0.0
    %v5179 = vmin.f32 %v5081, 0.0
    %v5180 = vmin.f32 %v5082, 0.0
    %v5181 = vmin.f32 %v5083, 0.0
    %v5182 = vmin.f32 %v5084, 0.0
    %v5183 = vmin.f32 %v5085, 0.0
    %v5184 = vmin.f32 %v5086, 0.0
    %v5185 = vmin.f32 %v5087, 0.0
    %v5186 = vmin.f32 %v5088, 0.0
    %v5187 = vmin.f32 %v5089, 0.0
    %v5188 = vmin.f32 %v5090, 0.0
    %v5189 = vmin.f32 %v5091, 0.0
    %v5190 = vmin.f32 %v5092, 0.0
    %v5191 = vmin.f32 %v5093, 0.0
    %v5192 = vmin.f32 %v5094, 0.0
    %v5193 = vmin.f32 %v5095, 0.0
    %v5194 = vmin.f32 %v5096, 0.0
    %v5195 = vmin.f32 %v5097, 0.0
    %v5196 = vmul.f32 %v5147, 1.442695
    %v5197 = vpow.pop %v5196
    %v5198 = vmul.f32 %v5148, 1.442695
    %v5199 = vpow.pop %v5198
    %v5200 = vmul.f32 %v5149, 1.442695
    %v5201 = vpow.pop %v5200
    %v5202 = vmul.f32 %v5150, 1.442695
    %v5203 = vpow.pop %v5202
    %v5204 = vmul.f32 %v5151, 1.442695
    %v5205 = vpow.pop %v5204
    %v5206 = vmul.f32 %v5152, 1.442695
    %v5207 = vpow.pop %v5206
    %v5208 = vmul.f32 %v5153, 1.442695
    %v5209 = vpow.pop %v5208
    %v5210 = vmul.f32 %v5154, 1.442695
    %v5211 = vpow.pop %v5210
    %v5212 = vmul.f32 %v5155, 1.442695
    %v5213 = vpow.pop %v5212
    %v5214 = vmul.f32 %v5156, 1.442695
    %v5215 = vpow.pop %v5214
    %v5216 = vmul.f32 %v5157, 1.442695
    %v5217 = vpow.pop %v5216
    %v5218 = vmul.f32 %v5158, 1.442695
    %v5219 = vpow.pop %v5218
    %v5220 = vmul.f32 %v5159, 1.442695
    %v5221 = vpow.pop %v5220
    %v5222 = vmul.f32 %v5160, 1.442695
    %v5223 = vpow.pop %v5222
    %v5224 = vmul.f32 %v5161, 1.442695
    %v5225 = vpow.pop %v5224
    %v5226 = vmul.f32 %v5162, 1.442695
    %v5227 = vpow.pop %v5226
    %v5228 = vmul.f32 %v5163, 1.442695
    %v5229 = vpow.pop %v5228
    %v5230 = vmul.f32 %v5164, 1.442695
    %v5231 = vpow.pop %v5230
    %v5232 = vmul.f32 %v5165, 1.442695
    %v5233 = vpow.pop %v5232
    %v5234 = vmul.f32 %v5166, 1.442695
    %v5235 = vpow.pop %v5234
    %v5236 = vmul.f32 %v5167, 1.442695
    %v5237 = vpow.pop %v5236
    %v5238 = vmul.f32 %v5168, 1.442695
    %v5239 = vpow.pop %v5238
    %v5240 = vmul.f32 %v5169, 1.442695
    %v5241 = vpow.pop %v5240
    %v5242 = vmul.f32 %v5170, 1.442695
    %v5243 = vpow.pop %v5242
    %v5244 = vmul.f32 %v5171, 1.442695
    %v5245 = vpow.pop %v5244
    %v5246 = vmul.f32 %v5172, 1.442695
    %v5247 = vpow.pop %v5246
    %v5248 = vmul.f32 %v5173, 1.442695
    %v5249 = vpow.pop %v5248
    %v5250 = vmul.f32 %v5174, 1.442695
    %v5251 = vpow.pop %v5250
    %v5252 = vmul.f32 %v5175, 1.442695
    %v5253 = vpow.pop %v5252
    %v5254 = vmul.f32 %v5176, 1.442695
    %v5255 = vpow.pop %v5254
    %v5256 = vmul.f32 %v5177, 1.442695
    %v5257 = vpow.pop %v5256
    %v5258 = vmul.f32 %v5178, 1.442695
    %v5259 = vpow.pop %v5258
    %v5260 = vmul.f32 %v5179, 1.442695
    %v5261 = vpow.pop %v5260
    %v5262 = vmul.f32 %v5180, 1.442695
    %v5263 = vpow.pop %v5262
    %v5264 = vmul.f32 %v5181, 1.442695
    %v5265 = vpow.pop %v5264
    %v5266 = vmul.f32 %v5182, 1.442695
    %v5267 = vpow.pop %v5266
    %v5268 = vmul.f32 %v5183, 1.442695
    %v5269 = vpow.pop %v5268
    %v5270 = vmul.f32 %v5184, 1.442695
    %v5271 = vpow.pop %v5270
    %v5272 = vmul.f32 %v5185, 1.442695
    %v5273 = vpow.pop %v5272
    %v5274 = vmul.f32 %v5186, 1.442695
    %v5275 = vpow.pop %v5274
    %v5276 = vmul.f32 %v5187, 1.442695
    %v5277 = vpow.pop %v5276
    %v5278 = vmul.f32 %v5188, 1.442695
    %v5279 = vpow.pop %v5278
    %v5280 = vmul.f32 %v5189, 1.442695
    %v5281 = vpow.pop %v5280
    %v5282 = vmul.f32 %v5190, 1.442695
    %v5283 = vpow.pop %v5282
    %v5284 = vmul.f32 %v5191, 1.442695
    %v5285 = vpow.pop %v5284
    %v5286 = vmul.f32 %v5192, 1.442695
    %v5287 = vpow.pop %v5286
    %v5288 = vmul.f32 %v5193, 1.442695
    %v5289 = vpow.pop %v5288
    %v5290 = vmul.f32 %v5194, 1.442695
    %v5291 = vpow.pop %v5290
    %v5292 = vmul.f32 %v5195, 1.442695
    %v5293 = vpow.pop %v5292
    %v5294 = vsub.f32 %v5197, 1.0
    %v5295 = vsub.f32 %v5199, 1.0
    %v5296 = vsub.f32 %v5201, 1.0
    %v5297 = vsub.f32 %v5203, 1.0
    %v5298 = vsub.f32 %v5205, 1.0
    %v5299 = vsub.f32 %v5207, 1.0
    %v5300 = vsub.f32 %v5209, 1.0
    %v5301 = vsub.f32 %v5211, 1.0
    %v5302 = vsub.f32 %v5213, 1.0
    %v5303 = vsub.f32 %v5215, 1.0
    %v5304 = vsub.f32 %v5217, 1.0
    %v5305 = vsub.f32 %v5219, 1.0
    %v5306 = vsub.f32 %v5221, 1.0
    %v5307 = vsub.f32 %v5223, 1.0
    %v5308 = vsub.f32 %v5225, 1.0
    %v5309 = vsub.f32 %v5227, 1.0
    %v5310 = vsub.f32 %v5229, 1.0
    %v5311 = vsub.f32 %v5231, 1.0
    %v5312 = vsub.f32 %v5233, 1.0
    %v5313 = vsub.f32 %v5235, 1.0
    %v5314 = vsub.f32 %v5237, 1.0
    %v5315 = vsub.f32 %v5239, 1.0
    %v5316 = vsub.f32 %v5241, 1.0
    %v5317 = vsub.f32 %v5243, 1.0
    %v5318 = vsub.f32 %v5245, 1.0
    %v5319 = vsub.f32 %v5247, 1.0
    %v5320 = vsub.f32 %v5249, 1.0
    %v5321 = vsub.f32 %v5251, 1.0
    %v5322 = vsub.f32 %v5253, 1.0
    %v5323 = vsub.f32 %v5255, 1.0
    %v5324 = vsub.f32 %v5257, 1.0
    %v5325 = vsub.f32 %v5259, 1.0
    %v5326 = vsub.f32 %v5261, 1.0
    %v5327 = vsub.f32 %v5263, 1.0
    %v5328 = vsub.f32 %v5265, 1.0
    %v5329 = vsub.f32 %v5267, 1.0
    %v5330 = vsub.f32 %v5269, 1.0
    %v5331 = vsub.f32 %v5271, 1.0
    %v5332 = vsub.f32 %v5273, 1.0
    %v5333 = vsub.f32 %v5275, 1.0
    %v5334 = vsub.f32 %v5277, 1.0
    %v5335 = vsub.f32 %v5279, 1.0
    %v5336 = vsub.f32 %v5281, 1.0
    %v5337 = vsub.f32 %v5283, 1.0
    %v5338 = vsub.f32 %v5285, 1.0
    %v5339 = vsub.f32 %v5287, 1.0
    %v5340 = vsub.f32 %v5289, 1.0
    %v5341 = vsub.f32 %v5291, 1.0
    %v5342 = vsub.f32 %v5293, 1.0
    %v5343 = vsel %vm5098, %v5049, %v5294
    %v5344 = vsel %vm5099, %v5050, %v5295
    %v5345 = vsel %vm5100, %v5051, %v5296
    %v5346 = vsel %vm5101, %v5052, %v5297
    %v5347 = vsel %vm5102, %v5053, %v5298
    %v5348 = vsel %vm5103, %v5054, %v5299
    %v5349 = vsel %vm5104, %v5055, %v5300
    %v5350 = vsel %vm5105, %v5056, %v5301
    %v5351 = vsel %vm5106, %v5057, %v5302
    %v5352 = vsel %vm5107, %v5058, %v5303
    %v5353 = vsel %vm5108, %v5059, %v5304
    %v5354 = vsel %vm5109, %v5060, %v5305
    %v5355 = vsel %vm5110, %v5061, %v5306
    %v5356 = vsel %vm5111, %v5062, %v5307
    %v5357 = vsel %vm5112, %v5063, %v5308
    %v5358 = vsel %vm5113, %v5064, %v5309
    %v5359 = vsel %vm5114, %v5065, %v5310
    %v5360 = vsel %vm5115, %v5066, %v5311
    %v5361 = vsel %vm5116, %v5067, %v5312
    %v5362 = vsel %vm5117, %v5068, %v5313
    %v5363 = vsel %vm5118, %v5069, %v5314
    %v5364 = vsel %vm5119, %v5070, %v5315
    %v5365 = vsel %vm5120, %v5071, %v5316
    %v5366 = vsel %vm5121, %v5072, %v5317
    %v5367 = vsel %vm5122, %v5073, %v5318
    %v5368 = vsel %vm5123, %v5074, %v5319
    %v5369 = vsel %vm5124, %v5075, %v5320
    %v5370 = vsel %vm5125, %v5076, %v5321
    %v5371 = vsel %vm5126, %v5077, %v5322
    %v5372 = vsel %vm5127, %v5078, %v5323
    %v5373 = vsel %vm5128, %v5079, %v5324
    %v5374 = vsel %vm5129, %v5080, %v5325
    %v5375 = vsel %vm5130, %v5081, %v5326
    %v5376 = vsel %vm5131, %v5082, %v5327
    %v5377 = vsel %vm5132, %v5083, %v5328
    %v5378 = vsel %vm5133, %v5084, %v5329
    %v5379 = vsel %vm5134, %v5085, %v5330
    %v5380 = vsel %vm5135, %v5086, %v5331
    %v5381 = vsel %vm5136, %v5087, %v5332
    %v5382 = vsel %vm5137, %v5088, %v5333
    %v5383 = vsel %vm5138, %v5089, %v5334
    %v5384 = vsel %vm5139, %v5090, %v5335
    %v5385 = vsel %vm5140, %v5091, %v5336
    %v5386 = vsel %vm5141, %v5092, %v5337
    %v5387 = vsel %vm5142, %v5093, %v5338
    %v5388 = vsel %vm5143, %v5094, %v5339
    %v5389 = vsel %vm5144, %v5095, %v5340
    %v5390 = vsel %vm5145, %v5096, %v5341
    %v5391 = vsel %vm5146, %v5097, %v5342
    %v5392 = vpack.c.bf16 %v5343, %v5343
    %v5393 = vpack.c.bf16 %v5344, %v5344
    %v5394 = vpack.c.bf16 %v5345, %v5345
    %v5395 = vpack.c.bf16 %v5346, %v5346
    %v5396 = vpack.c.bf16 %v5347, %v5347
    %v5397 = vpack.c.bf16 %v5348, %v5348
    %v5398 = vpack.c.bf16 %v5349, %v5349
    %v5399 = vpack.c.bf16 %v5350, %v5350
    %v5400 = vpack.c.bf16 %v5351, %v5351
    %v5401 = vpack.c.bf16 %v5352, %v5352
    %v5402 = vpack.c.bf16 %v5353, %v5353
    %v5403 = vpack.c.bf16 %v5354, %v5354
    %v5404 = vpack.c.bf16 %v5355, %v5355
    %v5405 = vpack.c.bf16 %v5356, %v5356
    %v5406 = vpack.c.bf16 %v5357, %v5357
    %v5407 = vpack.c.bf16 %v5358, %v5358
    %v5408 = vpack.c.bf16 %v5359, %v5359
    %v5409 = vpack.c.bf16 %v5360, %v5360
    %v5410 = vpack.c.bf16 %v5361, %v5361
    %v5411 = vpack.c.bf16 %v5362, %v5362
    %v5412 = vpack.c.bf16 %v5363, %v5363
    %v5413 = vpack.c.bf16 %v5364, %v5364
    %v5414 = vpack.c.bf16 %v5365, %v5365
    %v5415 = vpack.c.bf16 %v5366, %v5366
    %v5416 = vpack.c.bf16 %v5367, %v5367
    %v5417 = vpack.c.bf16 %v5368, %v5368
    %v5418 = vpack.c.bf16 %v5369, %v5369
    %v5419 = vpack.c.bf16 %v5370, %v5370
    %v5420 = vpack.c.bf16 %v5371, %v5371
    %v5421 = vpack.c.bf16 %v5372, %v5372
    %v5422 = vpack.c.bf16 %v5373, %v5373
    %v5423 = vpack.c.bf16 %v5374, %v5374
    %v5424 = vpack.c.bf16 %v5375, %v5375
    %v5425 = vpack.c.bf16 %v5376, %v5376
    %v5426 = vpack.c.bf16 %v5377, %v5377
    %v5427 = vpack.c.bf16 %v5378, %v5378
    %v5428 = vpack.c.bf16 %v5379, %v5379
    %v5429 = vpack.c.bf16 %v5380, %v5380
    %v5430 = vpack.c.bf16 %v5381, %v5381
    %v5431 = vpack.c.bf16 %v5382, %v5382
    %v5432 = vpack.c.bf16 %v5383, %v5383
    %v5433 = vpack.c.bf16 %v5384, %v5384
    %v5434 = vpack.c.bf16 %v5385, %v5385
    %v5435 = vpack.c.bf16 %v5386, %v5386
    %v5436 = vpack.c.bf16 %v5387, %v5387
    %v5437 = vpack.c.bf16 %v5388, %v5388
    %v5438 = vpack.c.bf16 %v5389, %v5389
    %v5439 = vpack.c.bf16 %v5390, %v5390
    %v5440 = vpack.c.bf16 %v5391, %v5391
    %v5490 = vunpack.c.l.b16 %v5392
    %v5491 = vunpack.c.l.b16 %v5393
    %v5492 = vunpack.c.l.b16 %v5394
    %v5493 = vunpack.c.l.b16 %v5395
    %v5494 = vunpack.c.l.b16 %v5396
    %v5495 = vunpack.c.l.b16 %v5397
    %v5496 = vunpack.c.l.b16 %v5398
    %v5497 = vunpack.c.l.b16 %v5399
    %v5498 = vunpack.c.l.b16 %v5400
    %v5499 = vunpack.c.l.b16 %v5401
    %v5500 = vunpack.c.l.b16 %v5402
    %v5501 = vunpack.c.l.b16 %v5403
    %v5502 = vunpack.c.l.b16 %v5404
    %v5503 = vunpack.c.l.b16 %v5405
    %v5504 = vunpack.c.l.b16 %v5406
    %v5505 = vunpack.c.l.b16 %v5407
    %v5506 = vunpack.c.l.b16 %v5408
    %v5507 = vunpack.c.l.b16 %v5409
    %v5508 = vunpack.c.l.b16 %v5410
    %v5509 = vunpack.c.l.b16 %v5411
    %v5510 = vunpack.c.l.b16 %v5412
    %v5511 = vunpack.c.l.b16 %v5413
    %v5512 = vunpack.c.l.b16 %v5414
    %v5513 = vunpack.c.l.b16 %v5415
    %v5514 = vunpack.c.l.b16 %v5416
    %v5515 = vunpack.c.l.b16 %v5417
    %v5516 = vunpack.c.l.b16 %v5418
    %v5517 = vunpack.c.l.b16 %v5419
    %v5518 = vunpack.c.l.b16 %v5420
    %v5519 = vunpack.c.l.b16 %v5421
    %v5520 = vunpack.c.l.b16 %v5422
    %v5521 = vunpack.c.l.b16 %v5423
    %v5522 = vunpack.c.l.b16 %v5424
    %v5523 = vunpack.c.l.b16 %v5425
    %v5524 = vunpack.c.l.b16 %v5426
    %v5525 = vunpack.c.l.b16 %v5427
    %v5526 = vunpack.c.l.b16 %v5428
    %v5527 = vunpack.c.l.b16 %v5429
    %v5528 = vunpack.c.l.b16 %v5430
    %v5529 = vunpack.c.l.b16 %v5431
    %v5530 = vunpack.c.l.b16 %v5432
    %v5531 = vunpack.c.l.b16 %v5433
    %v5532 = vunpack.c.l.b16 %v5434
    %v5533 = vunpack.c.l.b16 %v5435
    %v5534 = vunpack.c.l.b16 %v5436
    %v5535 = vunpack.c.l.b16 %v5437
    %v5536 = vunpack.c.l.b16 %v5438
    %v5537 = vunpack.c.l.b16 %v5439
    %v5538 = vunpack.c.l.b16 %v5440
    %v5539 = vpack.c.b16 %v5491, %v5490
    %v5540 = vpack.c.b16 %v5493, %v5492
    %v5541 = vpack.c.b16 %v5495, %v5494
    %v5542 = vpack.c.b16 %v5497, %v5496
    %v5543 = vpack.c.b16 %v5499, %v5498
    %v5544 = vpack.c.b16 %v5501, %v5500
    %v5545 = vpack.c.b16 %v5503, %v5502
    %v5546 = vpack.c.b16 %v5505, %v5504
    %v5547 = vpack.c.b16 %v5507, %v5506
    %v5548 = vpack.c.b16 %v5509, %v5508
    %v5549 = vpack.c.b16 %v5511, %v5510
    %v5550 = vpack.c.b16 %v5513, %v5512
    %v5551 = vpack.c.b16 %v5515, %v5514
    %v5552 = vpack.c.b16 %v5517, %v5516
    %v5553 = vpack.c.b16 %v5519, %v5518
    %v5554 = vpack.c.b16 %v5521, %v5520
    %v5555 = vpack.c.b16 %v5523, %v5522
    %v5556 = vpack.c.b16 %v5525, %v5524
    %v5557 = vpack.c.b16 %v5527, %v5526
    %v5558 = vpack.c.b16 %v5529, %v5528
    %v5559 = vpack.c.b16 %v5531, %v5530
    %v5560 = vpack.c.b16 %v5533, %v5532
    %v5561 = vpack.c.b16 %v5535, %v5534
    %v5562 = vpack.c.b16 %v5537, %v5536
    %v5563 = vpack.c.b16 %v5538, %v5538
    %5589 = vst [vmem:[%s4] sm:$0xff] %v5539
    %5590 = vst [vmem:[%s4 + $0x8] sm:$0xff] %v5540
    %5591 = vst [vmem:[%s4 + $0x10] sm:$0xff] %v5541
    %5592 = vst [vmem:[%s4 + $0x18] sm:$0xff] %v5542
    %5593 = vst [vmem:[%s4 + $0x20] sm:$0xff] %v5543
    %5594 = vst [vmem:[%s4 + $0x28] sm:$0xff] %v5544
    %5595 = vst [vmem:[%s4 + $0x30] sm:$0xff] %v5545
    %5596 = vst [vmem:[%s4 + $0x38] sm:$0xff] %v5546
    %5597 = vst [vmem:[%s4 + $0x40] sm:$0xff] %v5547
    %5598 = vst [vmem:[%s4 + $0x48] sm:$0xff] %v5548
    %5599 = vst [vmem:[%s4 + $0x50] sm:$0xff] %v5549
    %5600 = vst [vmem:[%s4 + $0x58] sm:$0xff] %v5550
    %5601 = vst [vmem:[%s4 + $0x60] sm:$0xff] %v5551
    %5602 = vst [vmem:[%s4 + $0x68] sm:$0xff] %v5552
    %5603 = vst [vmem:[%s4 + $0x70] sm:$0xff] %v5553
    %5604 = vst [vmem:[%s4 + $0x78] sm:$0xff] %v5554
    %5605 = vst [vmem:[%s4 + $0x80] sm:$0xff] %v5555
    %5606 = vst [vmem:[%s4 + $0x88] sm:$0xff] %v5556
    %5607 = vst [vmem:[%s4 + $0x90] sm:$0xff] %v5557
    %5608 = vst [vmem:[%s4 + $0x98] sm:$0xff] %v5558
    %5609 = vst [vmem:[%s4 + $0xa0] sm:$0xff] %v5559
    %5610 = vst [vmem:[%s4 + $0xa8] sm:$0xff] %v5560
    %5611 = vst [vmem:[%s4 + $0xb0] sm:$0xff] %v5561
    %5612 = vst [vmem:[%s4 + $0xb8] sm:$0xff] %v5562
    %5613 = vst [vmem:[%s4 + $0xc0] sm:$0xf] %v5563
    // Predicated region
    $region30: #{_lambda_.4} parent=1 // pred_check
      _
    $region31: #{_lambda_.4} parent=1 // pred_check_branch
      %5615 = sbr.rel (0) target = $region33
    $region32: #{_lambda_.4} parent=1 // pred_region
      _
    $region33: #{_lambda_.4} parent=1 // pred_fallthru
      _
    // Predicated region
    $region34: #{_lambda_.4} parent=1 // pred_check
      _
    $region35: #{_lambda_.4} parent=1 // pred_check_branch
      %5617 = sbr.rel (0) target = $region37
    $region36: #{_lambda_.4} parent=1 // pred_region
      _
    $region37: #{_lambda_.4} parent=1 // pred_fallthru
      _
    %5618 = vsyncpa [#allocation3], 1
    %5619 = vsyncpa [#allocation5], 1

// kernel: _lambda_.6
$region0: #{_lambda_.6}
  #allocation0 [shape = 'u32[]', space=smem, size = 0x4, offset = 0x4, fixed_abs, tag = 'smem constant byte address 0x4 - core index']
  #allocation1 [shape = 'u32[144,128]{1,0:T(1,128)}', space=vmem, size = 0x12000, scoped, tag = 'internal scratch']
  %s0 = inlined_call_operand.vmem [shape: bf16[392,256], index: 0, kind: input, shape index: {}]
  %s1 = inlined_call_operand.vmem [shape: bf16[256,128], index: 1, kind: input, shape index: {}]
  %s2 = inlined_call_operand.vmem [shape: f32[392,128], index: 2, kind: input, shape index: {}]
  %s3 = inlined_call_operand.vmem [shape: f32[128,128], index: 3, kind: input, shape index: {}]
  %s4 = inlined_call_operand.vmem [shape: f32[1,128], index: 4, kind: input, shape index: {}]
  %s5 = inlined_call_operand.vmem [shape: f32[1,128], index: 5, kind: input, shape index: {}]
  %s6 = inlined_call_operand.vmem [shape: bf16[392,128], index: 6, kind: output, shape index: {}]
  %s7 = sld [smem:[#allocation0]]
  $region34: #{_lambda_.6} parent=0
    _
  %s9 = ssub.s32 1, %s7
  %s10 = scalar_select 0, %s9, %s7
  // Predicated region
  $region2: #{_lambda_.6} parent=0 // pred_check
    _
  $region3: #{_lambda_.6} parent=0 // pred_check_branch
    %12 = sbr.rel (0) target = $region5
  $region4: #{_lambda_.6} parent=0 // pred_region
    _
  $region5: #{_lambda_.6} parent=0 // pred_fallthru
    _
  // Predicated region
  $region6: #{_lambda_.6} parent=0 // pred_check
    _
  $region7: #{_lambda_.6} parent=0 // pred_check_branch
    %14 = sbr.rel (0) target = $region9
  $region8: #{_lambda_.6} parent=0 // pred_region
    _
  $region9: #{_lambda_.6} parent=0 // pred_fallthru
    _
  // Predicated region
  $region10: #{_lambda_.6} parent=0 // pred_check
    _
  $region11: #{_lambda_.6} parent=0 // pred_check_branch
    %16 = sbr.rel (0) target = $region13
  $region12: #{_lambda_.6} parent=0 // pred_region
    _
  $region13: #{_lambda_.6} parent=0 // pred_fallthru
    _
  // Predicated region
  $region14: #{_lambda_.6} parent=0 // pred_check
    _
  $region15: #{_lambda_.6} parent=0 // pred_check_branch
    %18 = sbr.rel (0) target = $region17
  $region16: #{_lambda_.6} parent=0 // pred_region
    _
  $region17: #{_lambda_.6} parent=0 // pred_fallthru
    _
  // Predicated region
  $region18: #{_lambda_.6} parent=0 // pred_check
    _
  $region19: #{_lambda_.6} parent=0 // pred_check_branch
    %20 = sbr.rel (0) target = $region21
  $region20: #{_lambda_.6} parent=0 // pred_region
    _
  $region21: #{_lambda_.6} parent=0 // pred_fallthru
    _
  // Predicated region
  $region22: #{_lambda_.6} parent=0 // pred_check
    _
  $region23: #{_lambda_.6} parent=0 // pred_check_branch
    %22 = sbr.rel (0) target = $region25
  $region24: #{_lambda_.6} parent=0 // pred_region
    _
  $region25: #{_lambda_.6} parent=0 // pred_fallthru
    _
  %v24 = vld [vmem:[%s0] sm:$0xff]
  %v25 = vld [vmem:[%s0 + $0x8] sm:$0xff]
  %v26 = vld [vmem:[%s0 + $0x10] sm:$0xff]
  %v27 = vld [vmem:[%s0 + $0x18] sm:$0xff]
  %v28 = vld [vmem:[%s0 + $0x20] sm:$0xff]
  %v29 = vld [vmem:[%s0 + $0x28] sm:$0xff]
  %v30 = vld [vmem:[%s0 + $0x30] sm:$0xff]
  %v31 = vld [vmem:[%s0 + $0x38] sm:$0xff]
  %v32 = vld [vmem:[%s0 + $0x40] sm:$0xff]
  %v33 = vld [vmem:[%s0 + $0x48] sm:$0xff]
  %v34 = vld [vmem:[%s0 + $0x50] sm:$0xff]
  %v35 = vld [vmem:[%s0 + $0x58] sm:$0xff]
  %v36 = vld [vmem:[%s0 + $0x60] sm:$0xff]
  %v37 = vld [vmem:[%s0 + $0x68] sm:$0xff]
  %v38 = vld [vmem:[%s0 + $0x70] sm:$0xff]
  %v39 = vld [vmem:[%s0 + $0x78] sm:$0xff]
  %v40 = vld [vmem:[%s0 + $0x80] sm:$0xff]
  %v41 = vld [vmem:[%s0 + $0x88] sm:$0xff]
  %v42 = vld [vmem:[%s0 + $0x90] sm:$0xff]
  %v43 = vld [vmem:[%s0 + $0x98] sm:$0xff]
  %v44 = vld [vmem:[%s0 + $0xa0] sm:$0xff]
  %v45 = vld [vmem:[%s0 + $0xa8] sm:$0xff]
  %v46 = vld [vmem:[%s0 + $0xb0] sm:$0xff]
  %v47 = vld [vmem:[%s0 + $0xb8] sm:$0xff]
  %v48 = vld [vmem:[%s0 + $0xc0] sm:$0xff]
  %v49 = vld [vmem:[%s0 + $0xc8] sm:$0xff]
  %v50 = vld [vmem:[%s0 + $0xd0] sm:$0xff]
  %v51 = vld [vmem:[%s0 + $0xd8] sm:$0xff]
  %v52 = vld [vmem:[%s0 + $0xe0] sm:$0xff]
  %v53 = vld [vmem:[%s0 + $0xe8] sm:$0xff]
  %v54 = vld [vmem:[%s0 + $0xf0] sm:$0xff]
  %v55 = vld [vmem:[%s0 + $0xf8] sm:$0xff]
  %v56 = vld [vmem:[%s0 + $0x100] sm:$0xff]
  %v57 = vld [vmem:[%s0 + $0x108] sm:$0xff]
  %v58 = vld [vmem:[%s0 + $0x110] sm:$0xff]
  %v59 = vld [vmem:[%s0 + $0x118] sm:$0xff]
  %v60 = vld [vmem:[%s0 + $0x120] sm:$0xff]
  %v61 = vld [vmem:[%s0 + $0x128] sm:$0xff]
  %v62 = vld [vmem:[%s0 + $0x130] sm:$0xff]
  %v63 = vld [vmem:[%s0 + $0x138] sm:$0xff]
  %v64 = vld [vmem:[%s0 + $0x140] sm:$0xff]
  %v65 = vld [vmem:[%s0 + $0x148] sm:$0xff]
  %v66 = vld [vmem:[%s0 + $0x150] sm:$0xff]
  %v67 = vld [vmem:[%s0 + $0x158] sm:$0xff]
  %v68 = vld [vmem:[%s0 + $0x160] sm:$0xff]
  %v69 = vld [vmem:[%s0 + $0x168] sm:$0xff]
  %v70 = vld [vmem:[%s0 + $0x170] sm:$0xff]
  %v71 = vld [vmem:[%s0 + $0x178] sm:$0xff]
  %v72 = vld [vmem:[%s0 + $0x180] sm:$0xff]
  %v73 = vld [vmem:[%s1] sm:$0xf]
  %v74 = vld [vmem:[%s1 + $0x4] sm:$0xf]
  %v75 = vld [vmem:[%s1 + $0x8] sm:$0xf]
  %v76 = vld [vmem:[%s1 + $0xc] sm:$0xf]
  %v77 = vld [vmem:[%s1 + $0x10] sm:$0xf]
  %v78 = vld [vmem:[%s1 + $0x14] sm:$0xf]
  %v79 = vld [vmem:[%s1 + $0x18] sm:$0xf]
  %v80 = vld [vmem:[%s1 + $0x1c] sm:$0xf]
  %v81 = vld [vmem:[%s1 + $0x20] sm:$0xf]
  %v82 = vld [vmem:[%s1 + $0x24] sm:$0xf]
  %v83 = vld [vmem:[%s1 + $0x28] sm:$0xf]
  %v84 = vld [vmem:[%s1 + $0x2c] sm:$0xf]
  %v85 = vld [vmem:[%s1 + $0x30] sm:$0xf]
  %v86 = vld [vmem:[%s1 + $0x34] sm:$0xf]
  %v87 = vld [vmem:[%s1 + $0x38] sm:$0xf]
  %v88 = vld [vmem:[%s1 + $0x3c] sm:$0xf]
  %v89 = vld [vmem:[%s1 + $0x40] sm:$0xf]
  %v90 = vld [vmem:[%s1 + $0x44] sm:$0xf]
  %v91 = vld [vmem:[%s1 + $0x48] sm:$0xf]
  %v92 = vld [vmem:[%s1 + $0x4c] sm:$0xf]
  %v93 = vld [vmem:[%s1 + $0x50] sm:$0xf]
  %v94 = vld [vmem:[%s1 + $0x54] sm:$0xf]
  %v95 = vld [vmem:[%s1 + $0x58] sm:$0xf]
  %v96 = vld [vmem:[%s1 + $0x5c] sm:$0xf]
  %v97 = vld [vmem:[%s1 + $0x60] sm:$0xf]
  %v98 = vld [vmem:[%s1 + $0x64] sm:$0xf]
  %v99 = vld [vmem:[%s1 + $0x68] sm:$0xf]
  %v100 = vld [vmem:[%s1 + $0x6c] sm:$0xf]
  %v101 = vld [vmem:[%s1 + $0x70] sm:$0xf]
  %v102 = vld [vmem:[%s1 + $0x74] sm:$0xf]
  %v103 = vld [vmem:[%s1 + $0x78] sm:$0xf]
  %v104 = vld [vmem:[%s1 + $0x7c] sm:$0xf]
  %v154 = vunpack.c.l.b16 %v24
  %v155 = vunpack.c.h.b16 %v24
  %v156 = vunpack.c.l.b16 %v25
  %v157 = vunpack.c.h.b16 %v25
  %v158 = vunpack.c.l.b16 %v26
  %v159 = vunpack.c.h.b16 %v26
  %v160 = vunpack.c.l.b16 %v27
  %v161 = vunpack.c.h.b16 %v27
  %v162 = vunpack.c.l.b16 %v28
  %v163 = vunpack.c.h.b16 %v28
  %v164 = vunpack.c.l.b16 %v29
  %v165 = vunpack.c.h.b16 %v29
  %v166 = vunpack.c.l.b16 %v30
  %v167 = vunpack.c.h.b16 %v30
  %v168 = vunpack.c.l.b16 %v31
  %v169 = vunpack.c.h.b16 %v31
  %v170 = vunpack.c.l.b16 %v32
  %v171 = vunpack.c.h.b16 %v32
  %v172 = vunpack.c.l.b16 %v33
  %v173 = vunpack.c.h.b16 %v33
  %v174 = vunpack.c.l.b16 %v34
  %v175 = vunpack.c.h.b16 %v34
  %v176 = vunpack.c.l.b16 %v35
  %v177 = vunpack.c.h.b16 %v35
  %v178 = vunpack.c.l.b16 %v36
  %v179 = vunpack.c.h.b16 %v36
  %v180 = vunpack.c.l.b16 %v37
  %v181 = vunpack.c.h.b16 %v37
  %v182 = vunpack.c.l.b16 %v38
  %v183 = vunpack.c.h.b16 %v38
  %v184 = vunpack.c.l.b16 %v39
  %v185 = vunpack.c.h.b16 %v39
  %v186 = vunpack.c.l.b16 %v40
  %v187 = vunpack.c.h.b16 %v40
  %v188 = vunpack.c.l.b16 %v41
  %v189 = vunpack.c.h.b16 %v41
  %v190 = vunpack.c.l.b16 %v42
  %v191 = vunpack.c.h.b16 %v42
  %v192 = vunpack.c.l.b16 %v43
  %v193 = vunpack.c.h.b16 %v43
  %v194 = vunpack.c.l.b16 %v44
  %v195 = vunpack.c.h.b16 %v44
  %v196 = vunpack.c.l.b16 %v45
  %v197 = vunpack.c.h.b16 %v45
  %v198 = vunpack.c.l.b16 %v46
  %v199 = vunpack.c.h.b16 %v46
  %v200 = vunpack.c.l.b16 %v47
  %v201 = vunpack.c.h.b16 %v47
  %v202 = vunpack.c.l.b16 %v48
  %v203 = vunpack.c.h.b16 %v48
  %v204 = vunpack.c.l.b16 %v49
  %v205 = vunpack.c.h.b16 %v49
  %v206 = vunpack.c.l.b16 %v50
  %v207 = vunpack.c.h.b16 %v50
  %v208 = vunpack.c.l.b16 %v51
  %v209 = vunpack.c.h.b16 %v51
  %v210 = vunpack.c.l.b16 %v52
  %v211 = vunpack.c.h.b16 %v52
  %v212 = vunpack.c.l.b16 %v53
  %v213 = vunpack.c.h.b16 %v53
  %v214 = vunpack.c.l.b16 %v54
  %v215 = vunpack.c.h.b16 %v54
  %v216 = vunpack.c.l.b16 %v55
  %v217 = vunpack.c.h.b16 %v55
  %v218 = vunpack.c.l.b16 %v56
  %v219 = vunpack.c.h.b16 %v56
  %v220 = vunpack.c.l.b16 %v57
  %v221 = vunpack.c.h.b16 %v57
  %v222 = vunpack.c.l.b16 %v58
  %v223 = vunpack.c.h.b16 %v58
  %v224 = vunpack.c.l.b16 %v59
  %v225 = vunpack.c.h.b16 %v59
  %v226 = vunpack.c.l.b16 %v60
  %v227 = vunpack.c.h.b16 %v60
  %v228 = vunpack.c.l.b16 %v61
  %v229 = vunpack.c.h.b16 %v61
  %v230 = vunpack.c.l.b16 %v62
  %v231 = vunpack.c.h.b16 %v62
  %v232 = vunpack.c.l.b16 %v63
  %v233 = vunpack.c.h.b16 %v63
  %v234 = vunpack.c.l.b16 %v64
  %v235 = vunpack.c.h.b16 %v64
  %v236 = vunpack.c.l.b16 %v65
  %v237 = vunpack.c.h.b16 %v65
  %v238 = vunpack.c.l.b16 %v66
  %v239 = vunpack.c.h.b16 %v66
  %v240 = vunpack.c.l.b16 %v67
  %v241 = vunpack.c.h.b16 %v67
  %v242 = vunpack.c.l.b16 %v68
  %v243 = vunpack.c.h.b16 %v68
  %v244 = vunpack.c.l.b16 %v69
  %v245 = vunpack.c.h.b16 %v69
  %v246 = vunpack.c.l.b16 %v70
  %v247 = vunpack.c.h.b16 %v70
  %v248 = vunpack.c.l.b16 %v71
  %v249 = vunpack.c.h.b16 %v71
  %v250 = vunpack.c.l.b16 %v72
  %v251 = vunpack.c.h.b16 %v72
  %v252 = vpack.c.b16 %v156, %v154
  %v253 = vpack.c.b16 %v157, %v155
  %v254 = vpack.c.b16 %v160, %v158
  %v255 = vpack.c.b16 %v161, %v159
  %v256 = vpack.c.b16 %v164, %v162
  %v257 = vpack.c.b16 %v165, %v163
  %v258 = vpack.c.b16 %v168, %v166
  %v259 = vpack.c.b16 %v169, %v167
  %v260 = vpack.c.b16 %v172, %v170
  %v261 = vpack.c.b16 %v173, %v171
  %v262 = vpack.c.b16 %v176, %v174
  %v263 = vpack.c.b16 %v177, %v175
  %v264 = vpack.c.b16 %v180, %v178
  %v265 = vpack.c.b16 %v181, %v179
  %v266 = vpack.c.b16 %v184, %v182
  %v267 = vpack.c.b16 %v185, %v183
  %v268 = vpack.c.b16 %v188, %v186
  %v269 = vpack.c.b16 %v189, %v187
  %v270 = vpack.c.b16 %v192, %v190
  %v271 = vpack.c.b16 %v193, %v191
  %v272 = vpack.c.b16 %v196, %v194
  %v273 = vpack.c.b16 %v197, %v195
  %v274 = vpack.c.b16 %v200, %v198
  %v275 = vpack.c.b16 %v201, %v199
  %v276 = vpack.c.b16 %v204, %v202
  %v277 = vpack.c.b16 %v205, %v203
  %v278 = vpack.c.b16 %v208, %v206
  %v279 = vpack.c.b16 %v209, %v207
  %v280 = vpack.c.b16 %v212, %v210
  %v281 = vpack.c.b16 %v213, %v211
  %v282 = vpack.c.b16 %v216, %v214
  %v283 = vpack.c.b16 %v217, %v215
  %v284 = vpack.c.b16 %v220, %v218
  %v285 = vpack.c.b16 %v221, %v219
  %v286 = vpack.c.b16 %v224, %v222
  %v287 = vpack.c.b16 %v225, %v223
  %v288 = vpack.c.b16 %v228, %v226
  %v289 = vpack.c.b16 %v229, %v227
  %v290 = vpack.c.b16 %v232, %v230
  %v291 = vpack.c.b16 %v233, %v231
  %v292 = vpack.c.b16 %v236, %v234
  %v293 = vpack.c.b16 %v237, %v235
  %v294 = vpack.c.b16 %v240, %v238
  %v295 = vpack.c.b16 %v241, %v239
  %v296 = vpack.c.b16 %v244, %v242
  %v297 = vpack.c.b16 %v245, %v243
  %v298 = vpack.c.b16 %v248, %v246
  %v299 = vpack.c.b16 %v249, %v247
  %v300 = vpack.c.b16 %v250, %v250
  %v301 = vpack.c.b16 %v251, %v251
  %v384 = vunpack.c.l.b16 %v73
  %v385 = vunpack.c.l.b16 %v74
  %v386 = vunpack.c.l.b16 %v75
  %v387 = vunpack.c.l.b16 %v76
  %v388 = vunpack.c.l.b16 %v77
  %v389 = vunpack.c.l.b16 %v78
  %v390 = vunpack.c.l.b16 %v79
  %v391 = vunpack.c.l.b16 %v80
  %v392 = vunpack.c.l.b16 %v81
  %v393 = vunpack.c.l.b16 %v82
  %v394 = vunpack.c.l.b16 %v83
  %v395 = vunpack.c.l.b16 %v84
  %v396 = vunpack.c.l.b16 %v85
  %v397 = vunpack.c.l.b16 %v86
  %v398 = vunpack.c.l.b16 %v87
  %v399 = vunpack.c.l.b16 %v88
  %v400 = vunpack.c.l.b16 %v89
  %v401 = vunpack.c.l.b16 %v90
  %v402 = vunpack.c.l.b16 %v91
  %v403 = vunpack.c.l.b16 %v92
  %v404 = vunpack.c.l.b16 %v93
  %v405 = vunpack.c.l.b16 %v94
  %v406 = vunpack.c.l.b16 %v95
  %v407 = vunpack.c.l.b16 %v96
  %v408 = vunpack.c.l.b16 %v97
  %v409 = vunpack.c.l.b16 %v98
  %v410 = vunpack.c.l.b16 %v99
  %v411 = vunpack.c.l.b16 %v100
  %v412 = vunpack.c.l.b16 %v101
  %v413 = vunpack.c.l.b16 %v102
  %v414 = vunpack.c.l.b16 %v103
  %v415 = vunpack.c.l.b16 %v104
  %v416 = vpack.c.b16 %v385, %v384
  %v417 = vpack.c.b16 %v387, %v386
  %v418 = vpack.c.b16 %v389, %v388
  %v419 = vpack.c.b16 %v391, %v390
  %v420 = vpack.c.b16 %v393, %v392
  %v421 = vpack.c.b16 %v395, %v394
  %v422 = vpack.c.b16 %v397, %v396
  %v423 = vpack.c.b16 %v399, %v398
  %v424 = vpack.c.b16 %v401, %v400
  %v425 = vpack.c.b16 %v403, %v402
  %v426 = vpack.c.b16 %v405, %v404
  %v427 = vpack.c.b16 %v407, %v406
  %v428 = vpack.c.b16 %v409, %v408
  %v429 = vpack.c.b16 %v411, %v410
  %v430 = vpack.c.b16 %v413, %v412
  %v431 = vpack.c.b16 %v415, %v414
  %448 = vmatprep.subr.bf16.mxu0 0
  %449 = vmatpush1.bf16.msra.mxu0 %v423
  %450 = vmatprep.subr.bf16.mxu0 0
  %451 = vmatpush1.bf16.msra.mxu0 %v422
  %452 = vmatprep.subr.bf16.mxu0 0
  %453 = vmatpush1.bf16.msra.mxu0 %v421
  %454 = vmatprep.subr.bf16.mxu0 0
  %455 = vmatpush1.bf16.msra.mxu0 %v420
  %456 = vmatprep.subr.bf16.mxu0 0
  %457 = vmatpush1.bf16.msra.mxu0 %v419
  %458 = vmatprep.subr.bf16.mxu0 0
  %459 = vmatpush1.bf16.msra.mxu0 %v418
  %460 = vmatprep.subr.bf16.mxu0 0
  %461 = vmatpush1.bf16.msra.mxu0 %v417
  %462 = vmatprep.subr.bf16.mxu0 0
  %463 = vmatpush1.bf16.msra.mxu0 %v416
  %464 = vmatprep.subr.bf16.mxu0 0
  %465 = vmatpush2.bf16.msra.mxu0 %v431
  %466 = vmatprep.subr.bf16.mxu0 0
  %467 = vmatpush2.bf16.msra.mxu0 %v430
  %468 = vmatprep.subr.bf16.mxu0 0
  %469 = vmatpush2.bf16.msra.mxu0 %v429
  %470 = vmatprep.subr.bf16.mxu0 0
  %471 = vmatpush2.bf16.msra.mxu0 %v428
  %472 = vmatprep.subr.bf16.mxu0 0
  %473 = vmatpush2.bf16.msra.mxu0 %v427
  %474 = vmatprep.subr.bf16.mxu0 0
  %475 = vmatpush2.bf16.msra.mxu0 %v426
  %476 = vmatprep.subr.bf16.mxu0 0
  %477 = vmatpush2.bf16.msra.mxu0 %v425
  %478 = vmatprep.subr.bf16.mxu0 0
  %479 = vmatpush2.bf16.msra.mxu0 %v424
  %480 = vmatprep.mubr.bf16.mxu0 %v253
  %481 = vmatmul.mubr.bf16.gmra.mxu0 %v252
  %v482 = vpop.f32.mrf.mxu0
  %v483 = vadd.f32 0.0, %v482
  %v484 = vpop.f32.mrf.mxu0
  %v485 = vpop.f32.mrf.mxu0
  %v486 = vadd.f32 0.0, %v485
  %v487 = vpop.f32.mrf.mxu0
  %488 = vmatprep.mubr.bf16.mxu0 %v255
  %489 = vmatmul.mubr.bf16.gmra.mxu0 %v254
  %v490 = vpop.f32.mrf.mxu0
  %v491 = vadd.f32 0.0, %v490
  %v492 = vpop.f32.mrf.mxu0
  %v493 = vpop.f32.mrf.mxu0
  %v494 = vadd.f32 0.0, %v493
  %v495 = vpop.f32.mrf.mxu0
  %496 = vmatprep.mubr.bf16.mxu0 %v257
  %497 = vmatmul.mubr.bf16.gmra.mxu0 %v256
  %v498 = vpop.f32.mrf.mxu0
  %v499 = vadd.f32 0.0, %v498
  %v500 = vpop.f32.mrf.mxu0
  %v501 = vpop.f32.mrf.mxu0
  %v502 = vadd.f32 0.0, %v501
  %v503 = vpop.f32.mrf.mxu0
  %504 = vmatprep.mubr.bf16.mxu0 %v259
  %505 = vmatmul.mubr.bf16.gmra.mxu0 %v258
  %v506 = vpop.f32.mrf.mxu0
  %v507 = vadd.f32 0.0, %v506
  %v508 = vpop.f32.mrf.mxu0
  %v509 = vpop.f32.mrf.mxu0
  %v510 = vadd.f32 0.0, %v509
  %v511 = vpop.f32.mrf.mxu0
  %512 = vmatprep.mubr.bf16.mxu0 %v261
  %513 = vmatmul.mubr.bf16.gmra.mxu0 %v260
  %v514 = vpop.f32.mrf.mxu0
  %v515 = vadd.f32 0.0, %v514
  %v516 = vpop.f32.mrf.mxu0
  %v517 = vpop.f32.mrf.mxu0
  %v518 = vadd.f32 0.0, %v517
  %v519 = vpop.f32.mrf.mxu0
  %520 = vmatprep.mubr.bf16.mxu0 %v263
  %521 = vmatmul.mubr.bf16.gmra.mxu0 %v262
  %v522 = vpop.f32.mrf.mxu0
  %v523 = vadd.f32 0.0, %v522
  %v524 = vpop.f32.mrf.mxu0
  %v525 = vpop.f32.mrf.mxu0
  %v526 = vadd.f32 0.0, %v525
  %v527 = vpop.f32.mrf.mxu0
  %528 = vmatprep.mubr.bf16.mxu0 %v265
  %529 = vmatmul.mubr.bf16.gmra.mxu0 %v264
  %v530 = vpop.f32.mrf.mxu0
  %v531 = vadd.f32 0.0, %v530
  %v532 = vpop.f32.mrf.mxu0
  %v533 = vpop.f32.mrf.mxu0
  %v534 = vadd.f32 0.0, %v533
  %v535 = vpop.f32.mrf.mxu0
  %536 = vmatprep.mubr.bf16.mxu0 %v267
  %537 = vmatmul.mubr.bf16.gmra.mxu0 %v266
  %v538 = vpop.f32.mrf.mxu0
  %v539 = vadd.f32 0.0, %v538
  %v540 = vpop.f32.mrf.mxu0
  %v541 = vpop.f32.mrf.mxu0
  %v542 = vadd.f32 0.0, %v541
  %v543 = vpop.f32.mrf.mxu0
  %544 = vmatprep.mubr.bf16.mxu0 %v269
  %545 = vmatmul.mubr.bf16.gmra.mxu0 %v268
  %v546 = vpop.f32.mrf.mxu0
  %v547 = vadd.f32 0.0, %v546
  %v548 = vpop.f32.mrf.mxu0
  %v549 = vpop.f32.mrf.mxu0
  %v550 = vadd.f32 0.0, %v549
  %v551 = vpop.f32.mrf.mxu0
  %552 = vmatprep.mubr.bf16.mxu0 %v271
  %553 = vmatmul.mubr.bf16.gmra.mxu0 %v270
  %v554 = vpop.f32.mrf.mxu0
  %v555 = vadd.f32 0.0, %v554
  %v556 = vpop.f32.mrf.mxu0
  %v557 = vpop.f32.mrf.mxu0
  %v558 = vadd.f32 0.0, %v557
  %v559 = vpop.f32.mrf.mxu0
  %560 = vmatprep.mubr.bf16.mxu0 %v273
  %561 = vmatmul.mubr.bf16.gmra.mxu0 %v272
  %v562 = vpop.f32.mrf.mxu0
  %v563 = vadd.f32 0.0, %v562
  %v564 = vpop.f32.mrf.mxu0
  %v565 = vpop.f32.mrf.mxu0
  %v566 = vadd.f32 0.0, %v565
  %v567 = vpop.f32.mrf.mxu0
  %568 = vmatprep.mubr.bf16.mxu0 %v275
  %569 = vmatmul.mubr.bf16.gmra.mxu0 %v274
  %v570 = vpop.f32.mrf.mxu0
  %v571 = vadd.f32 0.0, %v570
  %v572 = vpop.f32.mrf.mxu0
  %v573 = vpop.f32.mrf.mxu0
  %v574 = vadd.f32 0.0, %v573
  %v575 = vpop.f32.mrf.mxu0
  %576 = vmatprep.mubr.bf16.mxu0 %v277
  %577 = vmatmul.mubr.bf16.gmra.mxu0 %v276
  %v578 = vpop.f32.mrf.mxu0
  %v579 = vadd.f32 0.0, %v578
  %v580 = vpop.f32.mrf.mxu0
  %v581 = vpop.f32.mrf.mxu0
  %v582 = vadd.f32 0.0, %v581
  %v583 = vpop.f32.mrf.mxu0
  %584 = vmatprep.mubr.bf16.mxu0 %v279
  %585 = vmatmul.mubr.bf16.gmra.mxu0 %v278
  %v586 = vpop.f32.mrf.mxu0
  %v587 = vadd.f32 0.0, %v586
  %v588 = vpop.f32.mrf.mxu0
  %v589 = vpop.f32.mrf.mxu0
  %v590 = vadd.f32 0.0, %v589
  %v591 = vpop.f32.mrf.mxu0
  %592 = vmatprep.mubr.bf16.mxu0 %v281
  %593 = vmatmul.mubr.bf16.gmra.mxu0 %v280
  %v594 = vpop.f32.mrf.mxu0
  %v595 = vadd.f32 0.0, %v594
  %v596 = vpop.f32.mrf.mxu0
  %v597 = vpop.f32.mrf.mxu0
  %v598 = vadd.f32 0.0, %v597
  %v599 = vpop.f32.mrf.mxu0
  %600 = vmatprep.mubr.bf16.mxu0 %v283
  %601 = vmatmul.mubr.bf16.gmra.mxu0 %v282
  %v602 = vpop.f32.mrf.mxu0
  %v603 = vadd.f32 0.0, %v602
  %v604 = vpop.f32.mrf.mxu0
  %v605 = vpop.f32.mrf.mxu0
  %v606 = vadd.f32 0.0, %v605
  %v607 = vpop.f32.mrf.mxu0
  %608 = vmatprep.mubr.bf16.mxu0 %v285
  %609 = vmatmul.mubr.bf16.gmra.mxu0 %v284
  %v610 = vpop.f32.mrf.mxu0
  %v611 = vadd.f32 0.0, %v610
  %v612 = vpop.f32.mrf.mxu0
  %v613 = vpop.f32.mrf.mxu0
  %v614 = vadd.f32 0.0, %v613
  %v615 = vpop.f32.mrf.mxu0
  %616 = vmatprep.mubr.bf16.mxu0 %v287
  %617 = vmatmul.mubr.bf16.gmra.mxu0 %v286
  %v618 = vpop.f32.mrf.mxu0
  %v619 = vadd.f32 0.0, %v618
  %v620 = vpop.f32.mrf.mxu0
  %v621 = vpop.f32.mrf.mxu0
  %v622 = vadd.f32 0.0, %v621
  %v623 = vpop.f32.mrf.mxu0
  %624 = vmatprep.mubr.bf16.mxu0 %v289
  %625 = vmatmul.mubr.bf16.gmra.mxu0 %v288
  %v626 = vpop.f32.mrf.mxu0
  %v627 = vadd.f32 0.0, %v626
  %v628 = vpop.f32.mrf.mxu0
  %v629 = vpop.f32.mrf.mxu0
  %v630 = vadd.f32 0.0, %v629
  %v631 = vpop.f32.mrf.mxu0
  %632 = vmatprep.mubr.bf16.mxu0 %v291
  %633 = vmatmul.mubr.bf16.gmra.mxu0 %v290
  %v634 = vpop.f32.mrf.mxu0
  %v635 = vadd.f32 0.0, %v634
  %v636 = vpop.f32.mrf.mxu0
  %v637 = vpop.f32.mrf.mxu0
  %v638 = vadd.f32 0.0, %v637
  %v639 = vpop.f32.mrf.mxu0
  %640 = vmatprep.mubr.bf16.mxu0 %v293
  %641 = vmatmul.mubr.bf16.gmra.mxu0 %v292
  %v642 = vpop.f32.mrf.mxu0
  %v643 = vadd.f32 0.0, %v642
  %v644 = vpop.f32.mrf.mxu0
  %v645 = vpop.f32.mrf.mxu0
  %v646 = vadd.f32 0.0, %v645
  %v647 = vpop.f32.mrf.mxu0
  %648 = vmatprep.mubr.bf16.mxu0 %v295
  %649 = vmatmul.mubr.bf16.gmra.mxu0 %v294
  %v650 = vpop.f32.mrf.mxu0
  %v651 = vadd.f32 0.0, %v650
  %v652 = vpop.f32.mrf.mxu0
  %v653 = vpop.f32.mrf.mxu0
  %v654 = vadd.f32 0.0, %v653
  %v655 = vpop.f32.mrf.mxu0
  %656 = vmatprep.mubr.bf16.mxu0 %v297
  %657 = vmatmul.mubr.bf16.gmra.mxu0 %v296
  %v658 = vpop.f32.mrf.mxu0
  %v659 = vadd.f32 0.0, %v658
  %v660 = vpop.f32.mrf.mxu0
  %v661 = vpop.f32.mrf.mxu0
  %v662 = vadd.f32 0.0, %v661
  %v663 = vpop.f32.mrf.mxu0
  %664 = vmatprep.mubr.bf16.mxu0 %v299
  %665 = vmatmul.mubr.bf16.gmra.mxu0 %v298
  %v666 = vpop.f32.mrf.mxu0
  %v667 = vadd.f32 0.0, %v666
  %v668 = vpop.f32.mrf.mxu0
  %v669 = vpop.f32.mrf.mxu0
  %v670 = vadd.f32 0.0, %v669
  %v671 = vpop.f32.mrf.mxu0
  %672 = vmatprep.mubr.bf16.mxu0 %v301
  %673 = vmatmul.mubr.bf16.gmra.mxu0 %v300
  %v674 = vpop.f32.mrf.mxu0
  %v675 = vadd.f32 0.0, %v674
  %v676 = vpop.f32.mrf.mxu0
  %v677 = vpop.f32.mrf.mxu0
  %v678 = vpop.f32.mrf.mxu0
  %679 = vdwg.mxu0
  %v680 = vld [vmem:[%s2] sm:$0xff]
  %v681 = vld [vmem:[%s2 + $0x8] sm:$0xff]
  %v682 = vld [vmem:[%s2 + $0x10] sm:$0xff]
  %v683 = vld [vmem:[%s2 + $0x18] sm:$0xff]
  %v684 = vld [vmem:[%s2 + $0x20] sm:$0xff]
  %v685 = vld [vmem:[%s2 + $0x28] sm:$0xff]
  %v686 = vld [vmem:[%s2 + $0x30] sm:$0xff]
  %v687 = vld [vmem:[%s2 + $0x38] sm:$0xff]
  %v688 = vld [vmem:[%s2 + $0x40] sm:$0xff]
  %v689 = vld [vmem:[%s2 + $0x48] sm:$0xff]
  %v690 = vld [vmem:[%s2 + $0x50] sm:$0xff]
  %v691 = vld [vmem:[%s2 + $0x58] sm:$0xff]
  %v692 = vld [vmem:[%s2 + $0x60] sm:$0xff]
  %v693 = vld [vmem:[%s2 + $0x68] sm:$0xff]
  %v694 = vld [vmem:[%s2 + $0x70] sm:$0xff]
  %v695 = vld [vmem:[%s2 + $0x78] sm:$0xff]
  %v696 = vld [vmem:[%s2 + $0x80] sm:$0xff]
  %v697 = vld [vmem:[%s2 + $0x88] sm:$0xff]
  %v698 = vld [vmem:[%s2 + $0x90] sm:$0xff]
  %v699 = vld [vmem:[%s2 + $0x98] sm:$0xff]
  %v700 = vld [vmem:[%s2 + $0xa0] sm:$0xff]
  %v701 = vld [vmem:[%s2 + $0xa8] sm:$0xff]
  %v702 = vld [vmem:[%s2 + $0xb0] sm:$0xff]
  %v703 = vld [vmem:[%s2 + $0xb8] sm:$0xff]
  %v704 = vld [vmem:[%s2 + $0xc0] sm:$0xff]
  %v705 = vld [vmem:[%s2 + $0xc8] sm:$0xff]
  %v706 = vld [vmem:[%s2 + $0xd0] sm:$0xff]
  %v707 = vld [vmem:[%s2 + $0xd8] sm:$0xff]
  %v708 = vld [vmem:[%s2 + $0xe0] sm:$0xff]
  %v709 = vld [vmem:[%s2 + $0xe8] sm:$0xff]
  %v710 = vld [vmem:[%s2 + $0xf0] sm:$0xff]
  %v711 = vld [vmem:[%s2 + $0xf8] sm:$0xff]
  %v712 = vld [vmem:[%s2 + $0x100] sm:$0xff]
  %v713 = vld [vmem:[%s2 + $0x108] sm:$0xff]
  %v714 = vld [vmem:[%s2 + $0x110] sm:$0xff]
  %v715 = vld [vmem:[%s2 + $0x118] sm:$0xff]
  %v716 = vld [vmem:[%s2 + $0x120] sm:$0xff]
  %v717 = vld [vmem:[%s2 + $0x128] sm:$0xff]
  %v718 = vld [vmem:[%s2 + $0x130] sm:$0xff]
  %v719 = vld [vmem:[%s2 + $0x138] sm:$0xff]
  %v720 = vld [vmem:[%s2 + $0x140] sm:$0xff]
  %v721 = vld [vmem:[%s2 + $0x148] sm:$0xff]
  %v722 = vld [vmem:[%s2 + $0x150] sm:$0xff]
  %v723 = vld [vmem:[%s2 + $0x158] sm:$0xff]
  %v724 = vld [vmem:[%s2 + $0x160] sm:$0xff]
  %v725 = vld [vmem:[%s2 + $0x168] sm:$0xff]
  %v726 = vld [vmem:[%s2 + $0x170] sm:$0xff]
  %v727 = vld [vmem:[%s2 + $0x178] sm:$0xff]
  %v728 = vld [vmem:[%s2 + $0x180] sm:$0xff]
  %v729 = vmul.f32 %v483, %v680
  %v730 = vmul.f32 %v486, %v681
  %v731 = vmul.f32 %v491, %v682
  %v732 = vmul.f32 %v494, %v683
  %v733 = vmul.f32 %v499, %v684
  %v734 = vmul.f32 %v502, %v685
  %v735 = vmul.f32 %v507, %v686
  %v736 = vmul.f32 %v510, %v687
  %v737 = vmul.f32 %v515, %v688
  %v738 = vmul.f32 %v518, %v689
  %v739 = vmul.f32 %v523, %v690
  %v740 = vmul.f32 %v526, %v691
  %v741 = vmul.f32 %v531, %v692
  %v742 = vmul.f32 %v534, %v693
  %v743 = vmul.f32 %v539, %v694
  %v744 = vmul.f32 %v542, %v695
  %v745 = vmul.f32 %v547, %v696
  %v746 = vmul.f32 %v550, %v697
  %v747 = vmul.f32 %v555, %v698
  %v748 = vmul.f32 %v558, %v699
  %v749 = vmul.f32 %v563, %v700
  %v750 = vmul.f32 %v566, %v701
  %v751 = vmul.f32 %v571, %v702
  %v752 = vmul.f32 %v574, %v703
  %v753 = vmul.f32 %v579, %v704
  %v754 = vmul.f32 %v582, %v705
  %v755 = vmul.f32 %v587, %v706
  %v756 = vmul.f32 %v590, %v707
  %v757 = vmul.f32 %v595, %v708
  %v758 = vmul.f32 %v598, %v709
  %v759 = vmul.f32 %v603, %v710
  %v760 = vmul.f32 %v606, %v711
  %v761 = vmul.f32 %v611, %v712
  %v762 = vmul.f32 %v614, %v713
  %v763 = vmul.f32 %v619, %v714
  %v764 = vmul.f32 %v622, %v715
  %v765 = vmul.f32 %v627, %v716
  %v766 = vmul.f32 %v630, %v717
  %v767 = vmul.f32 %v635, %v718
  %v768 = vmul.f32 %v638, %v719
  %v769 = vmul.f32 %v643, %v720
  %v770 = vmul.f32 %v646, %v721
  %v771 = vmul.f32 %v651, %v722
  %v772 = vmul.f32 %v654, %v723
  %v773 = vmul.f32 %v659, %v724
  %v774 = vmul.f32 %v662, %v725
  %v775 = vmul.f32 %v667, %v726
  %v776 = vmul.f32 %v670, %v727
  %v777 = vmul.f32 %v675, %v728
  %v778 = vadd.f32 %v729, %v730
  %v779 = vadd.f32 %v778, %v731
  %v780 = vadd.f32 %v779, %v732
  %v781 = vadd.f32 %v780, %v733
  %v782 = vadd.f32 %v781, %v734
  %v783 = vadd.f32 %v782, %v735
  %v784 = vadd.f32 %v783, %v736
  %v785 = vadd.f32 %v784, %v737
  %v786 = vadd.f32 %v785, %v738
  %v787 = vadd.f32 %v786, %v739
  %v788 = vadd.f32 %v787, %v740
  %v789 = vadd.f32 %v788, %v741
  %v790 = vadd.f32 %v789, %v742
  %v791 = vadd.f32 %v790, %v743
  %v792 = vadd.f32 %v791, %v744
  %v793 = vadd.f32 %v792, %v745
  %v794 = vadd.f32 %v793, %v746
  %v795 = vadd.f32 %v794, %v747
  %v796 = vadd.f32 %v795, %v748
  %v797 = vadd.f32 %v796, %v749
  %v798 = vadd.f32 %v797, %v750
  %v799 = vadd.f32 %v798, %v751
  %v800 = vadd.f32 %v799, %v752
  %v801 = vadd.f32 %v800, %v753
  %v802 = vadd.f32 %v801, %v754
  %v803 = vadd.f32 %v802, %v755
  %v804 = vadd.f32 %v803, %v756
  %v805 = vadd.f32 %v804, %v757
  %v806 = vadd.f32 %v805, %v758
  %v807 = vadd.f32 %v806, %v759
  %v808 = vadd.f32 %v807, %v760
  %v809 = vadd.f32 %v808, %v761
  %v810 = vadd.f32 %v809, %v762
  %v811 = vadd.f32 %v810, %v763
  %v812 = vadd.f32 %v811, %v764
  %v813 = vadd.f32 %v812, %v765
  %v814 = vadd.f32 %v813, %v766
  %v815 = vadd.f32 %v814, %v767
  %v816 = vadd.f32 %v815, %v768
  %v817 = vadd.f32 %v816, %v769
  %v818 = vadd.f32 %v817, %v770
  %v819 = vadd.f32 %v818, %v771
  %v820 = vadd.f32 %v819, %v772
  %v821 = vadd.f32 %v820, %v773
  %v822 = vadd.f32 %v821, %v774
  %v823 = vadd.f32 %v822, %v775
  %v824 = vadd.f32 %v823, %v776
  %v825 = vadd.f32 %v824, %v777
  %v826 = vrot.slane %v825, 4
  %v827 = vadd.f32 %v825, %v826
  %v828 = vrot.slane %v827, 2
  %v829 = vadd.f32 %v827, %v828
  %v830 = vrot.slane %v829, 1
  %v831 = vadd.f32 %v829, %v830
  %v832 = vld [vmem:[%s3] sm:$0xff]
  %v833 = vld [vmem:[%s3 + $0x8] sm:$0xff]
  %v834 = vld [vmem:[%s3 + $0x10] sm:$0xff]
  %v835 = vld [vmem:[%s3 + $0x18] sm:$0xff]
  %v836 = vld [vmem:[%s3 + $0x20] sm:$0xff]
  %v837 = vld [vmem:[%s3 + $0x28] sm:$0xff]
  %v838 = vld [vmem:[%s3 + $0x30] sm:$0xff]
  %v839 = vld [vmem:[%s3 + $0x38] sm:$0xff]
  %v840 = vld [vmem:[%s3 + $0x40] sm:$0xff]
  %v841 = vld [vmem:[%s3 + $0x48] sm:$0xff]
  %v842 = vld [vmem:[%s3 + $0x50] sm:$0xff]
  %v843 = vld [vmem:[%s3 + $0x58] sm:$0xff]
  %v844 = vld [vmem:[%s3 + $0x60] sm:$0xff]
  %v845 = vld [vmem:[%s3 + $0x68] sm:$0xff]
  %v846 = vld [vmem:[%s3 + $0x70] sm:$0xff]
  %v847 = vld [vmem:[%s3 + $0x78] sm:$0xff]
  %848 = vmatprep.subr.mxu0 0.0
  %849 = vmatpush1.msra.mxu0 %v847
  %850 = vmatprep.subr.mxu0 0.0
  %851 = vmatpush1.msra.mxu0 %v846
  %852 = vmatprep.subr.mxu0 0.0
  %853 = vmatpush1.msra.mxu0 %v845
  %854 = vmatprep.subr.mxu0 0.0
  %855 = vmatpush1.msra.mxu0 %v844
  %856 = vmatprep.subr.mxu0 0.0
  %857 = vmatpush1.msra.mxu0 %v843
  %858 = vmatprep.subr.mxu0 0.0
  %859 = vmatpush1.msra.mxu0 %v842
  %860 = vmatprep.subr.mxu0 0.0
  %861 = vmatpush1.msra.mxu0 %v841
  %862 = vmatprep.subr.mxu0 0.0
  %863 = vmatpush1.msra.mxu0 %v840
  %864 = vmatprep.subr.mxu0 0.0
  %865 = vmatpush1.msra.mxu0 %v839
  %866 = vmatprep.subr.mxu0 0.0
  %867 = vmatpush1.msra.mxu0 %v838
  %868 = vmatprep.subr.mxu0 0.0
  %869 = vmatpush1.msra.mxu0 %v837
  %870 = vmatprep.subr.mxu0 0.0
  %871 = vmatpush1.msra.mxu0 %v836
  %872 = vmatprep.subr.mxu0 0.0
  %873 = vmatpush1.msra.mxu0 %v835
  %874 = vmatprep.subr.mxu0 0.0
  %875 = vmatpush1.msra.mxu0 %v834
  %876 = vmatprep.subr.mxu0 0.0
  %877 = vmatpush1.msra.mxu0 %v833
  %878 = vmatprep.subr.mxu0 0.0
  %879 = vmatpush1.msra.mxu0 %v832
  %880 = vmatprep.subr.mxu0 0.0
  %881 = vmatpush2.msra.mxu0 0.0
  %882 = vmatprep.subr.mxu0 0.0
  %883 = vmatpush2.msra.mxu0 0.0
  %884 = vmatprep.subr.mxu0 0.0
  %885 = vmatpush2.msra.mxu0 0.0
  %886 = vmatprep.subr.mxu0 0.0
  %887 = vmatpush2.msra.mxu0 0.0
  %888 = vmatprep.subr.mxu0 0.0
  %889 = vmatpush2.msra.mxu0 0.0
  %890 = vmatprep.subr.mxu0 0.0
  %891 = vmatpush2.msra.mxu0 0.0
  %892 = vmatprep.subr.mxu0 0.0
  %893 = vmatpush2.msra.mxu0 0.0
  %894 = vmatprep.subr.mxu0 0.0
  %895 = vmatpush2.msra.mxu0 0.0
  %896 = vmatprep.subr.mxu0 0.0
  %897 = vmatpush2.msra.mxu0 0.0
  %898 = vmatprep.subr.mxu0 0.0
  %899 = vmatpush2.msra.mxu0 0.0
  %900 = vmatprep.subr.mxu0 0.0
  %901 = vmatpush2.msra.mxu0 0.0
  %902 = vmatprep.subr.mxu0 0.0
  %903 = vmatpush2.msra.mxu0 0.0
  %904 = vmatprep.subr.mxu0 0.0
  %905 = vmatpush2.msra.mxu0 0.0
  %906 = vmatprep.subr.mxu0 0.0
  %907 = vmatpush2.msra.mxu0 0.0
  %908 = vmatprep.subr.mxu0 0.0
  %909 = vmatpush2.msra.mxu0 0.0
  %910 = vmatprep.subr.mxu0 0.0
  %911 = vmatpush2.msra.mxu0 0.0
  %912 = vmatprep.mubr.f32.mxu0 0.0
  %913 = vmatmul.mubr.f32.gmra.mxu0 %v831
  %v914 = vpop.f32.mrf.mxu0
  %v915 = vadd.f32 0.0, %v914
  %v916 = vpop.f32.mrf.mxu0
  %917 = vdwg.mxu0
  %v918 = vmul.f32 %v915, 0.00068587105
  %v919 = vlaneseq
  %v920 = vshrl.u32 %v919, 7
  %v921 = vsub.s32 0, %v920
  %v922 = vrot.slane %v918, %v921
  %v923 = vsub.f32 %v483, %v922
  %v924 = vsub.f32 %v486, %v922
  %v925 = vsub.f32 %v491, %v922
  %v926 = vsub.f32 %v494, %v922
  %v927 = vsub.f32 %v499, %v922
  %v928 = vsub.f32 %v502, %v922
  %v929 = vsub.f32 %v507, %v922
  %v930 = vsub.f32 %v510, %v922
  %v931 = vsub.f32 %v515, %v922
  %v932 = vsub.f32 %v518, %v922
  %v933 = vsub.f32 %v523, %v922
  %v934 = vsub.f32 %v526, %v922
  %v935 = vsub.f32 %v531, %v922
  %v936 = vsub.f32 %v534, %v922
  %v937 = vsub.f32 %v539, %v922
  %v938 = vsub.f32 %v542, %v922
  %v939 = vsub.f32 %v547, %v922
  %v940 = vsub.f32 %v550, %v922
  %v941 = vsub.f32 %v555, %v922
  %v942 = vsub.f32 %v558, %v922
  %v943 = vsub.f32 %v563, %v922
  %v944 = vsub.f32 %v566, %v922
  %v945 = vsub.f32 %v571, %v922
  %v946 = vsub.f32 %v574, %v922
  %v947 = vsub.f32 %v579, %v922
  %v948 = vsub.f32 %v582, %v922
  %v949 = vsub.f32 %v587, %v922
  %v950 = vsub.f32 %v590, %v922
  %v951 = vsub.f32 %v595, %v922
  %v952 = vsub.f32 %v598, %v922
  %v953 = vsub.f32 %v603, %v922
  %v954 = vsub.f32 %v606, %v922
  %v955 = vsub.f32 %v611, %v922
  %v956 = vsub.f32 %v614, %v922
  %v957 = vsub.f32 %v619, %v922
  %v958 = vsub.f32 %v622, %v922
  %v959 = vsub.f32 %v627, %v922
  %v960 = vsub.f32 %v630, %v922
  %v961 = vsub.f32 %v635, %v922
  %v962 = vsub.f32 %v638, %v922
  %v963 = vsub.f32 %v643, %v922
  %v964 = vsub.f32 %v646, %v922
  %v965 = vsub.f32 %v651, %v922
  %v966 = vsub.f32 %v654, %v922
  %v967 = vsub.f32 %v659, %v922
  %v968 = vsub.f32 %v662, %v922
  %v969 = vsub.f32 %v667, %v922
  %v970 = vsub.f32 %v670, %v922
  %v971 = vsub.f32 %v675, %v922
  %v972 = vmul.f32 %v923, %v680
  %v973 = vmul.f32 %v924, %v681
  %v974 = vmul.f32 %v925, %v682
  %v975 = vmul.f32 %v926, %v683
  %v976 = vmul.f32 %v927, %v684
  %v977 = vmul.f32 %v928, %v685
  %v978 = vmul.f32 %v929, %v686
  %v979 = vmul.f32 %v930, %v687
  %v980 = vmul.f32 %v931, %v688
  %v981 = vmul.f32 %v932, %v689
  %v982 = vmul.f32 %v933, %v690
  %v983 = vmul.f32 %v934, %v691
  %v984 = vmul.f32 %v935, %v692
  %v985 = vmul.f32 %v936, %v693
  %v986 = vmul.f32 %v937, %v694
  %v987 = vmul.f32 %v938, %v695
  %v988 = vmul.f32 %v939, %v696
  %v989 = vmul.f32 %v940, %v697
  %v990 = vmul.f32 %v941, %v698
  %v991 = vmul.f32 %v942, %v699
  %v992 = vmul.f32 %v943, %v700
  %v993 = vmul.f32 %v944, %v701
  %v994 = vmul.f32 %v945, %v702
  %v995 = vmul.f32 %v946, %v703
  %v996 = vmul.f32 %v947, %v704
  %v997 = vmul.f32 %v948, %v705
  %v998 = vmul.f32 %v949, %v706
  %v999 = vmul.f32 %v950, %v707
  %v1000 = vmul.f32 %v951, %v708
  %v1001 = vmul.f32 %v952, %v709
  %v1002 = vmul.f32 %v953, %v710
  %v1003 = vmul.f32 %v954, %v711
  %v1004 = vmul.f32 %v955, %v712
  %v1005 = vmul.f32 %v956, %v713
  %v1006 = vmul.f32 %v957, %v714
  %v1007 = vmul.f32 %v958, %v715
  %v1008 = vmul.f32 %v959, %v716
  %v1009 = vmul.f32 %v960, %v717
  %v1010 = vmul.f32 %v961, %v718
  %v1011 = vmul.f32 %v962, %v719
  %v1012 = vmul.f32 %v963, %v720
  %v1013 = vmul.f32 %v964, %v721
  %v1014 = vmul.f32 %v965, %v722
  %v1015 = vmul.f32 %v966, %v723
  %v1016 = vmul.f32 %v967, %v724
  %v1017 = vmul.f32 %v968, %v725
  %v1018 = vmul.f32 %v969, %v726
  %v1019 = vmul.f32 %v970, %v727
  %v1020 = vmul.f32 %v971, %v728
  %v1021 = vmul.f32 %v972, %v972
  %v1022 = vmul.f32 %v973, %v973
  %v1023 = vmul.f32 %v974, %v974
  %v1024 = vmul.f32 %v975, %v975
  %v1025 = vmul.f32 %v976, %v976
  %v1026 = vmul.f32 %v977, %v977
  %v1027 = vmul.f32 %v978, %v978
  %v1028 = vmul.f32 %v979, %v979
  %v1029 = vmul.f32 %v980, %v980
  %v1030 = vmul.f32 %v981, %v981
  %v1031 = vmul.f32 %v982, %v982
  %v1032 = vmul.f32 %v983, %v983
  %v1033 = vmul.f32 %v984, %v984
  %v1034 = vmul.f32 %v985, %v985
  %v1035 = vmul.f32 %v986, %v986
  %v1036 = vmul.f32 %v987, %v987
  %v1037 = vmul.f32 %v988, %v988
  %v1038 = vmul.f32 %v989, %v989
  %v1039 = vmul.f32 %v990, %v990
  %v1040 = vmul.f32 %v991, %v991
  %v1041 = vmul.f32 %v992, %v992
  %v1042 = vmul.f32 %v993, %v993
  %v1043 = vmul.f32 %v994, %v994
  %v1044 = vmul.f32 %v995, %v995
  %v1045 = vmul.f32 %v996, %v996
  %v1046 = vmul.f32 %v997, %v997
  %v1047 = vmul.f32 %v998, %v998
  %v1048 = vmul.f32 %v999, %v999
  %v1049 = vmul.f32 %v1000, %v1000
  %v1050 = vmul.f32 %v1001, %v1001
  %v1051 = vmul.f32 %v1002, %v1002
  %v1052 = vmul.f32 %v1003, %v1003
  %v1053 = vmul.f32 %v1004, %v1004
  %v1054 = vmul.f32 %v1005, %v1005
  %v1055 = vmul.f32 %v1006, %v1006
  %v1056 = vmul.f32 %v1007, %v1007
  %v1057 = vmul.f32 %v1008, %v1008
  %v1058 = vmul.f32 %v1009, %v1009
  %v1059 = vmul.f32 %v1010, %v1010
  %v1060 = vmul.f32 %v1011, %v1011
  %v1061 = vmul.f32 %v1012, %v1012
  %v1062 = vmul.f32 %v1013, %v1013
  %v1063 = vmul.f32 %v1014, %v1014
  %v1064 = vmul.f32 %v1015, %v1015
  %v1065 = vmul.f32 %v1016, %v1016
  %v1066 = vmul.f32 %v1017, %v1017
  %v1067 = vmul.f32 %v1018, %v1018
  %v1068 = vmul.f32 %v1019, %v1019
  %v1069 = vmul.f32 %v1020, %v1020
  %v1070 = vadd.f32 %v1021, %v1022
  %v1071 = vadd.f32 %v1070, %v1023
  %v1072 = vadd.f32 %v1071, %v1024
  %v1073 = vadd.f32 %v1072, %v1025
  %v1074 = vadd.f32 %v1073, %v1026
  %v1075 = vadd.f32 %v1074, %v1027
  %v1076 = vadd.f32 %v1075, %v1028
  %v1077 = vadd.f32 %v1076, %v1029
  %v1078 = vadd.f32 %v1077, %v1030
  %v1079 = vadd.f32 %v1078, %v1031
  %v1080 = vadd.f32 %v1079, %v1032
  %v1081 = vadd.f32 %v1080, %v1033
  %v1082 = vadd.f32 %v1081, %v1034
  %v1083 = vadd.f32 %v1082, %v1035
  %v1084 = vadd.f32 %v1083, %v1036
  %v1085 = vadd.f32 %v1084, %v1037
  %v1086 = vadd.f32 %v1085, %v1038
  %v1087 = vadd.f32 %v1086, %v1039
  %v1088 = vadd.f32 %v1087, %v1040
  %v1089 = vadd.f32 %v1088, %v1041
  %v1090 = vadd.f32 %v1089, %v1042
  %v1091 = vadd.f32 %v1090, %v1043
  %v1092 = vadd.f32 %v1091, %v1044
  %v1093 = vadd.f32 %v1092, %v1045
  %v1094 = vadd.f32 %v1093, %v1046
  %v1095 = vadd.f32 %v1094, %v1047
  %v1096 = vadd.f32 %v1095, %v1048
  %v1097 = vadd.f32 %v1096, %v1049
  %v1098 = vadd.f32 %v1097, %v1050
  %v1099 = vadd.f32 %v1098, %v1051
  %v1100 = vadd.f32 %v1099, %v1052
  %v1101 = vadd.f32 %v1100, %v1053
  %v1102 = vadd.f32 %v1101, %v1054
  %v1103 = vadd.f32 %v1102, %v1055
  %v1104 = vadd.f32 %v1103, %v1056
  %v1105 = vadd.f32 %v1104, %v1057
  %v1106 = vadd.f32 %v1105, %v1058
  %v1107 = vadd.f32 %v1106, %v1059
  %v1108 = vadd.f32 %v1107, %v1060
  %v1109 = vadd.f32 %v1108, %v1061
  %v1110 = vadd.f32 %v1109, %v1062
  %v1111 = vadd.f32 %v1110, %v1063
  %v1112 = vadd.f32 %v1111, %v1064
  %v1113 = vadd.f32 %v1112, %v1065
  %v1114 = vadd.f32 %v1113, %v1066
  %v1115 = vadd.f32 %v1114, %v1067
  %v1116 = vadd.f32 %v1115, %v1068
  %v1117 = vadd.f32 %v1116, %v1069
  %v1118 = vrot.slane %v1117, 4
  %v1119 = vadd.f32 %v1117, %v1118
  %v1120 = vrot.slane %v1119, 2
  %v1121 = vadd.f32 %v1119, %v1120
  %v1122 = vrot.slane %v1121, 1
  %v1123 = vadd.f32 %v1121, %v1122
  %1124 = vmatprep.subr.mxu0 0.0
  %1125 = vmatpush1.msra.mxu0 %v847
  %1126 = vmatprep.subr.mxu0 0.0
  %1127 = vmatpush1.msra.mxu0 %v846
  %1128 = vmatprep.subr.mxu0 0.0
  %1129 = vmatpush1.msra.mxu0 %v845
  %1130 = vmatprep.subr.mxu0 0.0
  %1131 = vmatpush1.msra.mxu0 %v844
  %1132 = vmatprep.subr.mxu0 0.0
  %1133 = vmatpush1.msra.mxu0 %v843
  %1134 = vmatprep.subr.mxu0 0.0
  %1135 = vmatpush1.msra.mxu0 %v842
  %1136 = vmatprep.subr.mxu0 0.0
  %1137 = vmatpush1.msra.mxu0 %v841
  %1138 = vmatprep.subr.mxu0 0.0
  %1139 = vmatpush1.msra.mxu0 %v840
  %1140 = vmatprep.subr.mxu0 0.0
  %1141 = vmatpush1.msra.mxu0 %v839
  %1142 = vmatprep.subr.mxu0 0.0
  %1143 = vmatpush1.msra.mxu0 %v838
  %1144 = vmatprep.subr.mxu0 0.0
  %1145 = vmatpush1.msra.mxu0 %v837
  %1146 = vmatprep.subr.mxu0 0.0
  %1147 = vmatpush1.msra.mxu0 %v836
  %1148 = vmatprep.subr.mxu0 0.0
  %1149 = vmatpush1.msra.mxu0 %v835
  %1150 = vmatprep.subr.mxu0 0.0
  %1151 = vmatpush1.msra.mxu0 %v834
  %1152 = vmatprep.subr.mxu0 0.0
  %1153 = vmatpush1.msra.mxu0 %v833
  %1154 = vmatprep.subr.mxu0 0.0
  %1155 = vmatpush1.msra.mxu0 %v832
  %1156 = vmatprep.subr.mxu0 0.0
  %1157 = vmatpush2.msra.mxu0 0.0
  %1158 = vmatprep.subr.mxu0 0.0
  %1159 = vmatpush2.msra.mxu0 0.0
  %1160 = vmatprep.subr.mxu0 0.0
  %1161 = vmatpush2.msra.mxu0 0.0
  %1162 = vmatprep.subr.mxu0 0.0
  %1163 = vmatpush2.msra.mxu0 0.0
  %1164 = vmatprep.subr.mxu0 0.0
  %1165 = vmatpush2.msra.mxu0 0.0
  %1166 = vmatprep.subr.mxu0 0.0
  %1167 = vmatpush2.msra.mxu0 0.0
  %1168 = vmatprep.subr.mxu0 0.0
  %1169 = vmatpush2.msra.mxu0 0.0
  %1170 = vmatprep.subr.mxu0 0.0
  %1171 = vmatpush2.msra.mxu0 0.0
  %1172 = vmatprep.subr.mxu0 0.0
  %1173 = vmatpush2.msra.mxu0 0.0
  %1174 = vmatprep.subr.mxu0 0.0
  %1175 = vmatpush2.msra.mxu0 0.0
  %1176 = vmatprep.subr.mxu0 0.0
  %1177 = vmatpush2.msra.mxu0 0.0
  %1178 = vmatprep.subr.mxu0 0.0
  %1179 = vmatpush2.msra.mxu0 0.0
  %1180 = vmatprep.subr.mxu0 0.0
  %1181 = vmatpush2.msra.mxu0 0.0
  %1182 = vmatprep.subr.mxu0 0.0
  %1183 = vmatpush2.msra.mxu0 0.0
  %1184 = vmatprep.subr.mxu0 0.0
  %1185 = vmatpush2.msra.mxu0 0.0
  %1186 = vmatprep.subr.mxu0 0.0
  %1187 = vmatpush2.msra.mxu0 0.0
  %1188 = vmatprep.mubr.f32.mxu0 0.0
  %1189 = vmatmul.mubr.f32.gmra.mxu0 %v1123
  %v1190 = vpop.f32.mrf.mxu0
  %v1191 = vadd.f32 0.0, %v1190
  %v1192 = vpop.f32.mrf.mxu0
  %1193 = vdwg.mxu0
  %v1194 = vmul.f32 %v1191, 0.00068587105
  %v1195 = vadd.f32 %v1194, 1e-05
  %v1196 = vrsqrt.pop %v1195
  %v1197 = vlaneseq
  %v1198 = vshrl.u32 %v1197, 7
  %v1199 = vsub.s32 0, %v1198
  %v1200 = vrot.slane %v1196, %v1199
  %v1201 = vmul.f32 %v923, %v1200
  %v1202 = vmul.f32 %v924, %v1200
  %v1203 = vmul.f32 %v925, %v1200
  %v1204 = vmul.f32 %v926, %v1200
  %v1205 = vmul.f32 %v927, %v1200
  %v1206 = vmul.f32 %v928, %v1200
  %v1207 = vmul.f32 %v929, %v1200
  %v1208 = vmul.f32 %v930, %v1200
  %v1209 = vmul.f32 %v931, %v1200
  %v1210 = vmul.f32 %v932, %v1200
  %v1211 = vmul.f32 %v933, %v1200
  %v1212 = vmul.f32 %v934, %v1200
  %v1213 = vmul.f32 %v935, %v1200
  %v1214 = vmul.f32 %v936, %v1200
  %v1215 = vmul.f32 %v937, %v1200
  %v1216 = vmul.f32 %v938, %v1200
  %v1217 = vmul.f32 %v939, %v1200
  %v1218 = vmul.f32 %v940, %v1200
  %v1219 = vmul.f32 %v941, %v1200
  %v1220 = vmul.f32 %v942, %v1200
  %v1221 = vmul.f32 %v943, %v1200
  %v1222 = vmul.f32 %v944, %v1200
  %v1223 = vmul.f32 %v945, %v1200
  %v1224 = vmul.f32 %v946, %v1200
  %v1225 = vmul.f32 %v947, %v1200
  %v1226 = vmul.f32 %v948, %v1200
  %v1227 = vmul.f32 %v949, %v1200
  %v1228 = vmul.f32 %v950, %v1200
  %v1229 = vmul.f32 %v951, %v1200
  %v1230 = vmul.f32 %v952, %v1200
  %v1231 = vmul.f32 %v953, %v1200
  %v1232 = vmul.f32 %v954, %v1200
  %v1233 = vmul.f32 %v955, %v1200
  %v1234 = vmul.f32 %v956, %v1200
  %v1235 = vmul.f32 %v957, %v1200
  %v1236 = vmul.f32 %v958, %v1200
  %v1237 = vmul.f32 %v959, %v1200
  %v1238 = vmul.f32 %v960, %v1200
  %v1239 = vmul.f32 %v961, %v1200
  %v1240 = vmul.f32 %v962, %v1200
  %v1241 = vmul.f32 %v963, %v1200
  %v1242 = vmul.f32 %v964, %v1200
  %v1243 = vmul.f32 %v965, %v1200
  %v1244 = vmul.f32 %v966, %v1200
  %v1245 = vmul.f32 %v967, %v1200
  %v1246 = vmul.f32 %v968, %v1200
  %v1247 = vmul.f32 %v969, %v1200
  %v1248 = vmul.f32 %v970, %v1200
  %v1249 = vmul.f32 %v971, %v1200
  %v1250 = vld [vmem:[%s4] sm:$0x1]
  %v1252 = vlaneseq
  %v1253 = vshrl.u32 %v1252, 7
  %v1254 = vsub.s32 0, %v1253
  %v1255 = vrot.slane %v1250, %v1254
  %v1257 = vmul.f32 %v1201, %v1255
  %v1258 = vmul.f32 %v1202, %v1255
  %v1259 = vmul.f32 %v1203, %v1255
  %v1260 = vmul.f32 %v1204, %v1255
  %v1261 = vmul.f32 %v1205, %v1255
  %v1262 = vmul.f32 %v1206, %v1255
  %v1263 = vmul.f32 %v1207, %v1255
  %v1264 = vmul.f32 %v1208, %v1255
  %v1265 = vmul.f32 %v1209, %v1255
  %v1266 = vmul.f32 %v1210, %v1255
  %v1267 = vmul.f32 %v1211, %v1255
  %v1268 = vmul.f32 %v1212, %v1255
  %v1269 = vmul.f32 %v1213, %v1255
  %v1270 = vmul.f32 %v1214, %v1255
  %v1271 = vmul.f32 %v1215, %v1255
  %v1272 = vmul.f32 %v1216, %v1255
  %v1273 = vmul.f32 %v1217, %v1255
  %v1274 = vmul.f32 %v1218, %v1255
  %v1275 = vmul.f32 %v1219, %v1255
  %v1276 = vmul.f32 %v1220, %v1255
  %v1277 = vmul.f32 %v1221, %v1255
  %v1278 = vmul.f32 %v1222, %v1255
  %v1279 = vmul.f32 %v1223, %v1255
  %v1280 = vmul.f32 %v1224, %v1255
  %v1281 = vmul.f32 %v1225, %v1255
  %v1282 = vmul.f32 %v1226, %v1255
  %v1283 = vmul.f32 %v1227, %v1255
  %v1284 = vmul.f32 %v1228, %v1255
  %v1285 = vmul.f32 %v1229, %v1255
  %v1286 = vmul.f32 %v1230, %v1255
  %v1287 = vmul.f32 %v1231, %v1255
  %v1288 = vmul.f32 %v1232, %v1255
  %v1289 = vmul.f32 %v1233, %v1255
  %v1290 = vmul.f32 %v1234, %v1255
  %v1291 = vmul.f32 %v1235, %v1255
  %v1292 = vmul.f32 %v1236, %v1255
  %v1293 = vmul.f32 %v1237, %v1255
  %v1294 = vmul.f32 %v1238, %v1255
  %v1295 = vmul.f32 %v1239, %v1255
  %v1296 = vmul.f32 %v1240, %v1255
  %v1297 = vmul.f32 %v1241, %v1255
  %v1298 = vmul.f32 %v1242, %v1255
  %v1299 = vmul.f32 %v1243, %v1255
  %v1300 = vmul.f32 %v1244, %v1255
  %v1301 = vmul.f32 %v1245, %v1255
  %v1302 = vmul.f32 %v1246, %v1255
  %v1303 = vmul.f32 %v1247, %v1255
  %v1304 = vmul.f32 %v1248, %v1255
  %v1305 = vmul.f32 %v1249, %v1255
  %v1306 = vld [vmem:[%s5] sm:$0x1]
  %v1308 = vlaneseq
  %v1309 = vshrl.u32 %v1308, 7
  %v1310 = vsub.s32 0, %v1309
  %v1311 = vrot.slane %v1306, %v1310
  %v1313 = vadd.f32 %v1257, %v1311
  %v1314 = vadd.f32 %v1258, %v1311
  %v1315 = vadd.f32 %v1259, %v1311
  %v1316 = vadd.f32 %v1260, %v1311
  %v1317 = vadd.f32 %v1261, %v1311
  %v1318 = vadd.f32 %v1262, %v1311
  %v1319 = vadd.f32 %v1263, %v1311
  %v1320 = vadd.f32 %v1264, %v1311
  %v1321 = vadd.f32 %v1265, %v1311
  %v1322 = vadd.f32 %v1266, %v1311
  %v1323 = vadd.f32 %v1267, %v1311
  %v1324 = vadd.f32 %v1268, %v1311
  %v1325 = vadd.f32 %v1269, %v1311
  %v1326 = vadd.f32 %v1270, %v1311
  %v1327 = vadd.f32 %v1271, %v1311
  %v1328 = vadd.f32 %v1272, %v1311
  %v1329 = vadd.f32 %v1273, %v1311
  %v1330 = vadd.f32 %v1274, %v1311
  %v1331 = vadd.f32 %v1275, %v1311
  %v1332 = vadd.f32 %v1276, %v1311
  %v1333 = vadd.f32 %v1277, %v1311
  %v1334 = vadd.f32 %v1278, %v1311
  %v1335 = vadd.f32 %v1279, %v1311
  %v1336 = vadd.f32 %v1280, %v1311
  %v1337 = vadd.f32 %v1281, %v1311
  %v1338 = vadd.f32 %v1282, %v1311
  %v1339 = vadd.f32 %v1283, %v1311
  %v1340 = vadd.f32 %v1284, %v1311
  %v1341 = vadd.f32 %v1285, %v1311
  %v1342 = vadd.f32 %v1286, %v1311
  %v1343 = vadd.f32 %v1287, %v1311
  %v1344 = vadd.f32 %v1288, %v1311
  %v1345 = vadd.f32 %v1289, %v1311
  %v1346 = vadd.f32 %v1290, %v1311
  %v1347 = vadd.f32 %v1291, %v1311
  %v1348 = vadd.f32 %v1292, %v1311
  %v1349 = vadd.f32 %v1293, %v1311
  %v1350 = vadd.f32 %v1294, %v1311
  %v1351 = vadd.f32 %v1295, %v1311
  %v1352 = vadd.f32 %v1296, %v1311
  %v1353 = vadd.f32 %v1297, %v1311
  %v1354 = vadd.f32 %v1298, %v1311
  %v1355 = vadd.f32 %v1299, %v1311
  %v1356 = vadd.f32 %v1300, %v1311
  %v1357 = vadd.f32 %v1301, %v1311
  %v1358 = vadd.f32 %v1302, %v1311
  %v1359 = vadd.f32 %v1303, %v1311
  %v1360 = vadd.f32 %v1304, %v1311
  %v1361 = vadd.f32 %v1305, %v1311
  %v1362 = vmax.f32 %v1313, 0.0
  %v1363 = vmax.f32 %v1314, 0.0
  %v1364 = vmax.f32 %v1315, 0.0
  %v1365 = vmax.f32 %v1316, 0.0
  %v1366 = vmax.f32 %v1317, 0.0
  %v1367 = vmax.f32 %v1318, 0.0
  %v1368 = vmax.f32 %v1319, 0.0
  %v1369 = vmax.f32 %v1320, 0.0
  %v1370 = vmax.f32 %v1321, 0.0
  %v1371 = vmax.f32 %v1322, 0.0
  %v1372 = vmax.f32 %v1323, 0.0
  %v1373 = vmax.f32 %v1324, 0.0
  %v1374 = vmax.f32 %v1325, 0.0
  %v1375 = vmax.f32 %v1326, 0.0
  %v1376 = vmax.f32 %v1327, 0.0
  %v1377 = vmax.f32 %v1328, 0.0
  %v1378 = vmax.f32 %v1329, 0.0
  %v1379 = vmax.f32 %v1330, 0.0
  %v1380 = vmax.f32 %v1331, 0.0
  %v1381 = vmax.f32 %v1332, 0.0
  %v1382 = vmax.f32 %v1333, 0.0
  %v1383 = vmax.f32 %v1334, 0.0
  %v1384 = vmax.f32 %v1335, 0.0
  %v1385 = vmax.f32 %v1336, 0.0
  %v1386 = vmax.f32 %v1337, 0.0
  %v1387 = vmax.f32 %v1338, 0.0
  %v1388 = vmax.f32 %v1339, 0.0
  %v1389 = vmax.f32 %v1340, 0.0
  %v1390 = vmax.f32 %v1341, 0.0
  %v1391 = vmax.f32 %v1342, 0.0
  %v1392 = vmax.f32 %v1343, 0.0
  %v1393 = vmax.f32 %v1344, 0.0
  %v1394 = vmax.f32 %v1345, 0.0
  %v1395 = vmax.f32 %v1346, 0.0
  %v1396 = vmax.f32 %v1347, 0.0
  %v1397 = vmax.f32 %v1348, 0.0
  %v1398 = vmax.f32 %v1349, 0.0
  %v1399 = vmax.f32 %v1350, 0.0
  %v1400 = vmax.f32 %v1351, 0.0
  %v1401 = vmax.f32 %v1352, 0.0
  %v1402 = vmax.f32 %v1353, 0.0
  %v1403 = vmax.f32 %v1354, 0.0
  %v1404 = vmax.f32 %v1355, 0.0
  %v1405 = vmax.f32 %v1356, 0.0
  %v1406 = vmax.f32 %v1357, 0.0
  %v1407 = vmax.f32 %v1358, 0.0
  %v1408 = vmax.f32 %v1359, 0.0
  %v1409 = vmax.f32 %v1360, 0.0
  %v1410 = vmax.f32 %v1361, 0.0
  %v1411 = vpack.c.bf16 %v1363, %v1362
  %v1412 = vpack.c.bf16 %v1365, %v1364
  %v1413 = vpack.c.bf16 %v1367, %v1366
  %v1414 = vpack.c.bf16 %v1369, %v1368
  %v1415 = vpack.c.bf16 %v1371, %v1370
  %v1416 = vpack.c.bf16 %v1373, %v1372
  %v1417 = vpack.c.bf16 %v1375, %v1374
  %v1418 = vpack.c.bf16 %v1377, %v1376
  %v1419 = vpack.c.bf16 %v1379, %v1378
  %v1420 = vpack.c.bf16 %v1381, %v1380
  %v1421 = vpack.c.bf16 %v1383, %v1382
  %v1422 = vpack.c.bf16 %v1385, %v1384
  %v1423 = vpack.c.bf16 %v1387, %v1386
  %v1424 = vpack.c.bf16 %v1389, %v1388
  %v1425 = vpack.c.bf16 %v1391, %v1390
  %v1426 = vpack.c.bf16 %v1393, %v1392
  %v1427 = vpack.c.bf16 %v1395, %v1394
  %v1428 = vpack.c.bf16 %v1397, %v1396
  %v1429 = vpack.c.bf16 %v1399, %v1398
  %v1430 = vpack.c.bf16 %v1401, %v1400
  %v1431 = vpack.c.bf16 %v1403, %v1402
  %v1432 = vpack.c.bf16 %v1405, %v1404
  %v1433 = vpack.c.bf16 %v1407, %v1406
  %v1434 = vpack.c.bf16 %v1409, %v1408
  %v1435 = vpack.c.bf16 %v1410, %v1410
  %v1461 = vunpack.c.l.b16 %v1411
  %v1462 = vunpack.c.h.b16 %v1411
  %v1463 = vunpack.c.l.b16 %v1412
  %v1464 = vunpack.c.h.b16 %v1412
  %v1465 = vunpack.c.l.b16 %v1413
  %v1466 = vunpack.c.h.b16 %v1413
  %v1467 = vunpack.c.l.b16 %v1414
  %v1468 = vunpack.c.h.b16 %v1414
  %v1469 = vunpack.c.l.b16 %v1415
  %v1470 = vunpack.c.h.b16 %v1415
  %v1471 = vunpack.c.l.b16 %v1416
  %v1472 = vunpack.c.h.b16 %v1416
  %v1473 = vunpack.c.l.b16 %v1417
  %v1474 = vunpack.c.h.b16 %v1417
  %v1475 = vunpack.c.l.b16 %v1418
  %v1476 = vunpack.c.h.b16 %v1418
  %v1477 = vunpack.c.l.b16 %v1419
  %v1478 = vunpack.c.h.b16 %v1419
  %v1479 = vunpack.c.l.b16 %v1420
  %v1480 = vunpack.c.h.b16 %v1420
  %v1481 = vunpack.c.l.b16 %v1421
  %v1482 = vunpack.c.h.b16 %v1421
  %v1483 = vunpack.c.l.b16 %v1422
  %v1484 = vunpack.c.h.b16 %v1422
  %v1485 = vunpack.c.l.b16 %v1423
  %v1486 = vunpack.c.h.b16 %v1423
  %v1487 = vunpack.c.l.b16 %v1424
  %v1488 = vunpack.c.h.b16 %v1424
  %v1489 = vunpack.c.l.b16 %v1425
  %v1490 = vunpack.c.h.b16 %v1425
  %v1491 = vunpack.c.l.b16 %v1426
  %v1492 = vunpack.c.h.b16 %v1426
  %v1493 = vunpack.c.l.b16 %v1427
  %v1494 = vunpack.c.h.b16 %v1427
  %v1495 = vunpack.c.l.b16 %v1428
  %v1496 = vunpack.c.h.b16 %v1428
  %v1497 = vunpack.c.l.b16 %v1429
  %v1498 = vunpack.c.h.b16 %v1429
  %v1499 = vunpack.c.l.b16 %v1430
  %v1500 = vunpack.c.h.b16 %v1430
  %v1501 = vunpack.c.l.b16 %v1431
  %v1502 = vunpack.c.h.b16 %v1431
  %v1503 = vunpack.c.l.b16 %v1432
  %v1504 = vunpack.c.h.b16 %v1432
  %v1505 = vunpack.c.l.b16 %v1433
  %v1506 = vunpack.c.h.b16 %v1433
  %v1507 = vunpack.c.l.b16 %v1434
  %v1508 = vunpack.c.h.b16 %v1434
  %v1509 = vunpack.c.l.b16 %v1435
  %v1510 = vpack.c.b16 %v1461, %v1461
  %v1511 = vpack.c.b16 %v1462, %v1462
  %v1512 = vpack.c.b16 %v1463, %v1463
  %v1513 = vpack.c.b16 %v1464, %v1464
  %v1514 = vpack.c.b16 %v1465, %v1465
  %v1515 = vpack.c.b16 %v1466, %v1466
  %v1516 = vpack.c.b16 %v1467, %v1467
  %v1517 = vpack.c.b16 %v1468, %v1468
  %v1518 = vpack.c.b16 %v1469, %v1469
  %v1519 = vpack.c.b16 %v1470, %v1470
  %v1520 = vpack.c.b16 %v1471, %v1471
  %v1521 = vpack.c.b16 %v1472, %v1472
  %v1522 = vpack.c.b16 %v1473, %v1473
  %v1523 = vpack.c.b16 %v1474, %v1474
  %v1524 = vpack.c.b16 %v1475, %v1475
  %v1525 = vpack.c.b16 %v1476, %v1476
  %v1526 = vpack.c.b16 %v1477, %v1477
  %v1527 = vpack.c.b16 %v1478, %v1478
  %v1528 = vpack.c.b16 %v1479, %v1479
  %v1529 = vpack.c.b16 %v1480, %v1480
  %v1530 = vpack.c.b16 %v1481, %v1481
  %v1531 = vpack.c.b16 %v1482, %v1482
  %v1532 = vpack.c.b16 %v1483, %v1483
  %v1533 = vpack.c.b16 %v1484, %v1484
  %v1534 = vpack.c.b16 %v1485, %v1485
  %v1535 = vpack.c.b16 %v1486, %v1486
  %v1536 = vpack.c.b16 %v1487, %v1487
  %v1537 = vpack.c.b16 %v1488, %v1488
  %v1538 = vpack.c.b16 %v1489, %v1489
  %v1539 = vpack.c.b16 %v1490, %v1490
  %v1540 = vpack.c.b16 %v1491, %v1491
  %v1541 = vpack.c.b16 %v1492, %v1492
  %v1542 = vpack.c.b16 %v1493, %v1493
  %v1543 = vpack.c.b16 %v1494, %v1494
  %v1544 = vpack.c.b16 %v1495, %v1495
  %v1545 = vpack.c.b16 %v1496, %v1496
  %v1546 = vpack.c.b16 %v1497, %v1497
  %v1547 = vpack.c.b16 %v1498, %v1498
  %v1548 = vpack.c.b16 %v1499, %v1499
  %v1549 = vpack.c.b16 %v1500, %v1500
  %v1550 = vpack.c.b16 %v1501, %v1501
  %v1551 = vpack.c.b16 %v1502, %v1502
  %v1552 = vpack.c.b16 %v1503, %v1503
  %v1553 = vpack.c.b16 %v1504, %v1504
  %v1554 = vpack.c.b16 %v1505, %v1505
  %v1555 = vpack.c.b16 %v1506, %v1506
  %v1556 = vpack.c.b16 %v1507, %v1507
  %v1557 = vpack.c.b16 %v1508, %v1508
  %v1558 = vpack.c.b16 %v1509, %v1509
  %1608 = vst [vmem:[%s6] sm:$0xf] %v1510
  %1609 = vst [vmem:[%s6 + $0x4] sm:$0xf] %v1511
  %1610 = vst [vmem:[%s6 + $0x8] sm:$0xf] %v1512
  %1611 = vst [vmem:[%s6 + $0xc] sm:$0xf] %v1513
  %1612 = vst [vmem:[%s6 + $0x10] sm:$0xf] %v1514
  %1613 = vst [vmem:[%s6 + $0x14] sm:$0xf] %v1515
  %1614 = vst [vmem:[%s6 + $0x18] sm:$0xf] %v1516
  %1615 = vst [vmem:[%s6 + $0x1c] sm:$0xf] %v1517
  %1616 = vst [vmem:[%s6 + $0x20] sm:$0xf] %v1518
  %1617 = vst [vmem:[%s6 + $0x24] sm:$0xf] %v1519
  %1618 = vst [vmem:[%s6 + $0x28] sm:$0xf] %v1520
  %1619 = vst [vmem:[%s6 + $0x2c] sm:$0xf] %v1521
  %1620 = vst [vmem:[%s6 + $0x30] sm:$0xf] %v1522
  %1621 = vst [vmem:[%s6 + $0x34] sm:$0xf] %v1523
  %1622 = vst [vmem:[%s6 + $0x38] sm:$0xf] %v1524
  %1623 = vst [vmem:[%s6 + $0x3c] sm:$0xf] %v1525
  %1624 = vst [vmem:[%s6 + $0x40] sm:$0xf] %v1526
  %1625 = vst [vmem:[%s6 + $0x44] sm:$0xf] %v1527
  %1626 = vst [vmem:[%s6 + $0x48] sm:$0xf] %v1528
  %1627 = vst [vmem:[%s6 + $0x4c] sm:$0xf] %v1529
  %1628 = vst [vmem:[%s6 + $0x50] sm:$0xf] %v1530
  %1629 = vst [vmem:[%s6 + $0x54] sm:$0xf] %v1531
  %1630 = vst [vmem:[%s6 + $0x58] sm:$0xf] %v1532
  %1631 = vst [vmem:[%s6 + $0x5c] sm:$0xf] %v1533
  %1632 = vst [vmem:[%s6 + $0x60] sm:$0xf] %v1534
  %1633 = vst [vmem:[%s6 + $0x64] sm:$0xf] %v1535
  %1634 = vst [vmem:[%s6 + $0x68] sm:$0xf] %v1536
  %1635 = vst [vmem:[%s6 + $0x6c] sm:$0xf] %v1537
  %1636 = vst [vmem:[%s6 + $0x70] sm:$0xf] %v1538
  %1637 = vst [vmem:[%s6 + $0x74] sm:$0xf] %v1539
  %1638 = vst [vmem:[%s6 + $0x78] sm:$0xf] %v1540
  %1639 = vst [vmem:[%s6 + $0x7c] sm:$0xf] %v1541
  %1640 = vst [vmem:[%s6 + $0x80] sm:$0xf] %v1542
  %1641 = vst [vmem:[%s6 + $0x84] sm:$0xf] %v1543
  %1642 = vst [vmem:[%s6 + $0x88] sm:$0xf] %v1544
  %1643 = vst [vmem:[%s6 + $0x8c] sm:$0xf] %v1545
  %1644 = vst [vmem:[%s6 + $0x90] sm:$0xf] %v1546
  %1645 = vst [vmem:[%s6 + $0x94] sm:$0xf] %v1547
  %1646 = vst [vmem:[%s6 + $0x98] sm:$0xf] %v1548
  %1647 = vst [vmem:[%s6 + $0x9c] sm:$0xf] %v1549
  %1648 = vst [vmem:[%s6 + $0xa0] sm:$0xf] %v1550
  %1649 = vst [vmem:[%s6 + $0xa4] sm:$0xf] %v1551
  %1650 = vst [vmem:[%s6 + $0xa8] sm:$0xf] %v1552
  %1651 = vst [vmem:[%s6 + $0xac] sm:$0xf] %v1553
  %1652 = vst [vmem:[%s6 + $0xb0] sm:$0xf] %v1554
  %1653 = vst [vmem:[%s6 + $0xb4] sm:$0xf] %v1555
  %1654 = vst [vmem:[%s6 + $0xb8] sm:$0xf] %v1556
  %1655 = vst [vmem:[%s6 + $0xbc] sm:$0xf] %v1557
  %1656 = vst [vmem:[%s6 + $0xc0] sm:$0xf] %v1558
  // Predicated region
  $region26: #{_lambda_.6} parent=0 // pred_check
    _
  $region27: #{_lambda_.6} parent=0 // pred_check_branch
    %1658 = sbr.rel (0) target = $region29
  $region28: #{_lambda_.6} parent=0 // pred_region
    _
  $region29: #{_lambda_.6} parent=0 // pred_fallthru
    _
  // Predicated region
  $region30: #{_lambda_.6} parent=0 // pred_check
    _
  $region31: #{_lambda_.6} parent=0 // pred_check_branch
    %1660 = sbr.rel (0) target = $region33
  $region32: #{_lambda_.6} parent=0 // pred_region
    _
  $region33: #{_lambda_.6} parent=0 // pred_fallthru
    _

// kernel: _lambda_.7
$region0: #{_lambda_.7}
  #allocation0 [shape = 'u32[]', space=smem, size = 0x4, offset = 0x4, fixed_abs, tag = 'smem constant byte address 0x4 - core index']
  #allocation1 [shape = 'u32[144,128]{1,0:T(1,128)}', space=vmem, size = 0x12000, scoped, tag = 'internal scratch']
  %s0 = inlined_call_operand.vmem [shape: bf16[1568,128], index: 0, kind: input, shape index: {}]
  %s1 = inlined_call_operand.vmem [shape: bf16[128,128], index: 1, kind: input, shape index: {}]
  %s2 = inlined_call_operand.vmem [shape: f32[1,128], index: 2, kind: input, shape index: {}]
  %s3 = inlined_call_operand.vmem [shape: f32[1568,128], index: 3, kind: output, shape index: {}]
  %s4 = sld [smem:[#allocation0]]
  $region22: #{_lambda_.7} parent=0
    _
  %s6 = ssub.s32 1, %s4
  %s7 = scalar_select 0, %s6, %s4
  // Predicated region
  $region2: #{_lambda_.7} parent=0 // pred_check
    _
  $region3: #{_lambda_.7} parent=0 // pred_check_branch
    %9 = sbr.rel (0) target = $region5
  $region4: #{_lambda_.7} parent=0 // pred_region
    _
  $region5: #{_lambda_.7} parent=0 // pred_fallthru
    _
  // Predicated region
  $region6: #{_lambda_.7} parent=0 // pred_check
    _
  $region7: #{_lambda_.7} parent=0 // pred_check_branch
    %11 = sbr.rel (0) target = $region9
  $region8: #{_lambda_.7} parent=0 // pred_region
    _
  $region9: #{_lambda_.7} parent=0 // pred_fallthru
    _
  // Predicated region
  $region10: #{_lambda_.7} parent=0 // pred_check
    _
  $region11: #{_lambda_.7} parent=0 // pred_check_branch
    %13 = sbr.rel (0) target = $region13
  $region12: #{_lambda_.7} parent=0 // pred_region
    _
  $region13: #{_lambda_.7} parent=0 // pred_fallthru
    _
  %v15 = vld [vmem:[%s0] sm:$0xf]
  %v16 = vld [vmem:[%s0 + $0x4] sm:$0xf]
  %v17 = vld [vmem:[%s0 + $0x8] sm:$0xf]
  %v18 = vld [vmem:[%s0 + $0xc] sm:$0xf]
  %v19 = vld [vmem:[%s0 + $0x10] sm:$0xf]
  %v20 = vld [vmem:[%s0 + $0x14] sm:$0xf]
  %v21 = vld [vmem:[%s0 + $0x18] sm:$0xf]
  %v22 = vld [vmem:[%s0 + $0x1c] sm:$0xf]
  %v23 = vld [vmem:[%s0 + $0x20] sm:$0xf]
  %v24 = vld [vmem:[%s0 + $0x24] sm:$0xf]
  %v25 = vld [vmem:[%s0 + $0x28] sm:$0xf]
  %v26 = vld [vmem:[%s0 + $0x2c] sm:$0xf]
  %v27 = vld [vmem:[%s0 + $0x30] sm:$0xf]
  %v28 = vld [vmem:[%s0 + $0x34] sm:$0xf]
  %v29 = vld [vmem:[%s0 + $0x38] sm:$0xf]
  %v30 = vld [vmem:[%s0 + $0x3c] sm:$0xf]
  %v31 = vld [vmem:[%s0 + $0x40] sm:$0xf]
  %v32 = vld [vmem:[%s0 + $0x44] sm:$0xf]
  %v33 = vld [vmem:[%s0 + $0x48] sm:$0xf]
  %v34 = vld [vmem:[%s0 + $0x4c] sm:$0xf]
  %v35 = vld [vmem:[%s0 + $0x50] sm:$0xf]
  %v36 = vld [vmem:[%s0 + $0x54] sm:$0xf]
  %v37 = vld [vmem:[%s0 + $0x58] sm:$0xf]
  %v38 = vld [vmem:[%s0 + $0x5c] sm:$0xf]
  %v39 = vld [vmem:[%s0 + $0x60] sm:$0xf]
  %v40 = vld [vmem:[%s0 + $0x64] sm:$0xf]
  %v41 = vld [vmem:[%s0 + $0x68] sm:$0xf]
  %v42 = vld [vmem:[%s0 + $0x6c] sm:$0xf]
  %v43 = vld [vmem:[%s0 + $0x70] sm:$0xf]
  %v44 = vld [vmem:[%s0 + $0x74] sm:$0xf]
  %v45 = vld [vmem:[%s0 + $0x78] sm:$0xf]
  %v46 = vld [vmem:[%s0 + $0x7c] sm:$0xf]
  %v47 = vld [vmem:[%s0 + $0x80] sm:$0xf]
  %v48 = vld [vmem:[%s0 + $0x84] sm:$0xf]
  %v49 = vld [vmem:[%s0 + $0x88] sm:$0xf]
  %v50 = vld [vmem:[%s0 + $0x8c] sm:$0xf]
  %v51 = vld [vmem:[%s0 + $0x90] sm:$0xf]
  %v52 = vld [vmem:[%s0 + $0x94] sm:$0xf]
  %v53 = vld [vmem:[%s0 + $0x98] sm:$0xf]
  %v54 = vld [vmem:[%s0 + $0x9c] sm:$0xf]
  %v55 = vld [vmem:[%s0 + $0xa0] sm:$0xf]
  %v56 = vld [vmem:[%s0 + $0xa4] sm:$0xf]
  %v57 = vld [vmem:[%s0 + $0xa8] sm:$0xf]
  %v58 = vld [vmem:[%s0 + $0xac] sm:$0xf]
  %v59 = vld [vmem:[%s0 + $0xb0] sm:$0xf]
  %v60 = vld [vmem:[%s0 + $0xb4] sm:$0xf]
  %v61 = vld [vmem:[%s0 + $0xb8] sm:$0xf]
  %v62 = vld [vmem:[%s0 + $0xbc] sm:$0xf]
  %v63 = vld [vmem:[%s0 + $0xc0] sm:$0xf]
  %v64 = vld [vmem:[%s0 + $0xc4] sm:$0xf]
  %v65 = vld [vmem:[%s0 + $0xc8] sm:$0xf]
  %v66 = vld [vmem:[%s0 + $0xcc] sm:$0xf]
  %v67 = vld [vmem:[%s0 + $0xd0] sm:$0xf]
  %v68 = vld [vmem:[%s0 + $0xd4] sm:$0xf]
  %v69 = vld [vmem:[%s0 + $0xd8] sm:$0xf]
  %v70 = vld [vmem:[%s0 + $0xdc] sm:$0xf]
  %v71 = vld [vmem:[%s0 + $0xe0] sm:$0xf]
  %v72 = vld [vmem:[%s0 + $0xe4] sm:$0xf]
  %v73 = vld [vmem:[%s0 + $0xe8] sm:$0xf]
  %v74 = vld [vmem:[%s0 + $0xec] sm:$0xf]
  %v75 = vld [vmem:[%s0 + $0xf0] sm:$0xf]
  %v76 = vld [vmem:[%s0 + $0xf4] sm:$0xf]
  %v77 = vld [vmem:[%s0 + $0xf8] sm:$0xf]
  %v78 = vld [vmem:[%s0 + $0xfc] sm:$0xf]
  %v79 = vld [vmem:[%s0 + $0x100] sm:$0xf]
  %v80 = vld [vmem:[%s0 + $0x104] sm:$0xf]
  %v81 = vld [vmem:[%s0 + $0x108] sm:$0xf]
  %v82 = vld [vmem:[%s0 + $0x10c] sm:$0xf]
  %v83 = vld [vmem:[%s0 + $0x110] sm:$0xf]
  %v84 = vld [vmem:[%s0 + $0x114] sm:$0xf]
  %v85 = vld [vmem:[%s0 + $0x118] sm:$0xf]
  %v86 = vld [vmem:[%s0 + $0x11c] sm:$0xf]
  %v87 = vld [vmem:[%s0 + $0x120] sm:$0xf]
  %v88 = vld [vmem:[%s0 + $0x124] sm:$0xf]
  %v89 = vld [vmem:[%s0 + $0x128] sm:$0xf]
  %v90 = vld [vmem:[%s0 + $0x12c] sm:$0xf]
  %v91 = vld [vmem:[%s0 + $0x130] sm:$0xf]
  %v92 = vld [vmem:[%s0 + $0x134] sm:$0xf]
  %v93 = vld [vmem:[%s0 + $0x138] sm:$0xf]
  %v94 = vld [vmem:[%s0 + $0x13c] sm:$0xf]
  %v95 = vld [vmem:[%s0 + $0x140] sm:$0xf]
  %v96 = vld [vmem:[%s0 + $0x144] sm:$0xf]
  %v97 = vld [vmem:[%s0 + $0x148] sm:$0xf]
  %v98 = vld [vmem:[%s0 + $0x14c] sm:$0xf]
  %v99 = vld [vmem:[%s0 + $0x150] sm:$0xf]
  %v100 = vld [vmem:[%s0 + $0x154] sm:$0xf]
  %v101 = vld [vmem:[%s0 + $0x158] sm:$0xf]
  %v102 = vld [vmem:[%s0 + $0x15c] sm:$0xf]
  %v103 = vld [vmem:[%s0 + $0x160] sm:$0xf]
  %v104 = vld [vmem:[%s0 + $0x164] sm:$0xf]
  %v105 = vld [vmem:[%s0 + $0x168] sm:$0xf]
  %v106 = vld [vmem:[%s0 + $0x16c] sm:$0xf]
  %v107 = vld [vmem:[%s0 + $0x170] sm:$0xf]
  %v108 = vld [vmem:[%s0 + $0x174] sm:$0xf]
  %v109 = vld [vmem:[%s0 + $0x178] sm:$0xf]
  %v110 = vld [vmem:[%s0 + $0x17c] sm:$0xf]
  %v111 = vld [vmem:[%s0 + $0x180] sm:$0xf]
  %v112 = vld [vmem:[%s0 + $0x184] sm:$0xf]
  %v113 = vld [vmem:[%s0 + $0x188] sm:$0xf]
  %v114 = vld [vmem:[%s0 + $0x18c] sm:$0xf]
  %v115 = vld [vmem:[%s0 + $0x190] sm:$0xf]
  %v116 = vld [vmem:[%s0 + $0x194] sm:$0xf]
  %v117 = vld [vmem:[%s0 + $0x198] sm:$0xf]
  %v118 = vld [vmem:[%s0 + $0x19c] sm:$0xf]
  %v119 = vld [vmem:[%s0 + $0x1a0] sm:$0xf]
  %v120 = vld [vmem:[%s0 + $0x1a4] sm:$0xf]
  %v121 = vld [vmem:[%s0 + $0x1a8] sm:$0xf]
  %v122 = vld [vmem:[%s0 + $0x1ac] sm:$0xf]
  %v123 = vld [vmem:[%s0 + $0x1b0] sm:$0xf]
  %v124 = vld [vmem:[%s0 + $0x1b4] sm:$0xf]
  %v125 = vld [vmem:[%s0 + $0x1b8] sm:$0xf]
  %v126 = vld [vmem:[%s0 + $0x1bc] sm:$0xf]
  %v127 = vld [vmem:[%s0 + $0x1c0] sm:$0xf]
  %v128 = vld [vmem:[%s0 + $0x1c4] sm:$0xf]
  %v129 = vld [vmem:[%s0 + $0x1c8] sm:$0xf]
  %v130 = vld [vmem:[%s0 + $0x1cc] sm:$0xf]
  %v131 = vld [vmem:[%s0 + $0x1d0] sm:$0xf]
  %v132 = vld [vmem:[%s0 + $0x1d4] sm:$0xf]
  %v133 = vld [vmem:[%s0 + $0x1d8] sm:$0xf]
  %v134 = vld [vmem:[%s0 + $0x1dc] sm:$0xf]
  %v135 = vld [vmem:[%s0 + $0x1e0] sm:$0xf]
  %v136 = vld [vmem:[%s0 + $0x1e4] sm:$0xf]
  %v137 = vld [vmem:[%s0 + $0x1e8] sm:$0xf]
  %v138 = vld [vmem:[%s0 + $0x1ec] sm:$0xf]
  %v139 = vld [vmem:[%s0 + $0x1f0] sm:$0xf]
  %v140 = vld [vmem:[%s0 + $0x1f4] sm:$0xf]
  %v141 = vld [vmem:[%s0 + $0x1f8] sm:$0xf]
  %v142 = vld [vmem:[%s0 + $0x1fc] sm:$0xf]
  %v143 = vld [vmem:[%s0 + $0x200] sm:$0xf]
  %v144 = vld [vmem:[%s0 + $0x204] sm:$0xf]
  %v145 = vld [vmem:[%s0 + $0x208] sm:$0xf]
  %v146 = vld [vmem:[%s0 + $0x20c] sm:$0xf]
  %v147 = vld [vmem:[%s0 + $0x210] sm:$0xf]
  %v148 = vld [vmem:[%s0 + $0x214] sm:$0xf]
  %v149 = vld [vmem:[%s0 + $0x218] sm:$0xf]
  %v150 = vld [vmem:[%s0 + $0x21c] sm:$0xf]
  %v151 = vld [vmem:[%s0 + $0x220] sm:$0xf]
  %v152 = vld [vmem:[%s0 + $0x224] sm:$0xf]
  %v153 = vld [vmem:[%s0 + $0x228] sm:$0xf]
  %v154 = vld [vmem:[%s0 + $0x22c] sm:$0xf]
  %v155 = vld [vmem:[%s0 + $0x230] sm:$0xf]
  %v156 = vld [vmem:[%s0 + $0x234] sm:$0xf]
  %v157 = vld [vmem:[%s0 + $0x238] sm:$0xf]
  %v158 = vld [vmem:[%s0 + $0x23c] sm:$0xf]
  %v159 = vld [vmem:[%s0 + $0x240] sm:$0xf]
  %v160 = vld [vmem:[%s0 + $0x244] sm:$0xf]
  %v161 = vld [vmem:[%s0 + $0x248] sm:$0xf]
  %v162 = vld [vmem:[%s0 + $0x24c] sm:$0xf]
  %v163 = vld [vmem:[%s0 + $0x250] sm:$0xf]
  %v164 = vld [vmem:[%s0 + $0x254] sm:$0xf]
  %v165 = vld [vmem:[%s0 + $0x258] sm:$0xf]
  %v166 = vld [vmem:[%s0 + $0x25c] sm:$0xf]
  %v167 = vld [vmem:[%s0 + $0x260] sm:$0xf]
  %v168 = vld [vmem:[%s0 + $0x264] sm:$0xf]
  %v169 = vld [vmem:[%s0 + $0x268] sm:$0xf]
  %v170 = vld [vmem:[%s0 + $0x26c] sm:$0xf]
  %v171 = vld [vmem:[%s0 + $0x270] sm:$0xf]
  %v172 = vld [vmem:[%s0 + $0x274] sm:$0xf]
  %v173 = vld [vmem:[%s0 + $0x278] sm:$0xf]
  %v174 = vld [vmem:[%s0 + $0x27c] sm:$0xf]
  %v175 = vld [vmem:[%s0 + $0x280] sm:$0xf]
  %v176 = vld [vmem:[%s0 + $0x284] sm:$0xf]
  %v177 = vld [vmem:[%s0 + $0x288] sm:$0xf]
  %v178 = vld [vmem:[%s0 + $0x28c] sm:$0xf]
  %v179 = vld [vmem:[%s0 + $0x290] sm:$0xf]
  %v180 = vld [vmem:[%s0 + $0x294] sm:$0xf]
  %v181 = vld [vmem:[%s0 + $0x298] sm:$0xf]
  %v182 = vld [vmem:[%s0 + $0x29c] sm:$0xf]
  %v183 = vld [vmem:[%s0 + $0x2a0] sm:$0xf]
  %v184 = vld [vmem:[%s0 + $0x2a4] sm:$0xf]
  %v185 = vld [vmem:[%s0 + $0x2a8] sm:$0xf]
  %v186 = vld [vmem:[%s0 + $0x2ac] sm:$0xf]
  %v187 = vld [vmem:[%s0 + $0x2b0] sm:$0xf]
  %v188 = vld [vmem:[%s0 + $0x2b4] sm:$0xf]
  %v189 = vld [vmem:[%s0 + $0x2b8] sm:$0xf]
  %v190 = vld [vmem:[%s0 + $0x2bc] sm:$0xf]
  %v191 = vld [vmem:[%s0 + $0x2c0] sm:$0xf]
  %v192 = vld [vmem:[%s0 + $0x2c4] sm:$0xf]
  %v193 = vld [vmem:[%s0 + $0x2c8] sm:$0xf]
  %v194 = vld [vmem:[%s0 + $0x2cc] sm:$0xf]
  %v195 = vld [vmem:[%s0 + $0x2d0] sm:$0xf]
  %v196 = vld [vmem:[%s0 + $0x2d4] sm:$0xf]
  %v197 = vld [vmem:[%s0 + $0x2d8] sm:$0xf]
  %v198 = vld [vmem:[%s0 + $0x2dc] sm:$0xf]
  %v199 = vld [vmem:[%s0 + $0x2e0] sm:$0xf]
  %v200 = vld [vmem:[%s0 + $0x2e4] sm:$0xf]
  %v201 = vld [vmem:[%s0 + $0x2e8] sm:$0xf]
  %v202 = vld [vmem:[%s0 + $0x2ec] sm:$0xf]
  %v203 = vld [vmem:[%s0 + $0x2f0] sm:$0xf]
  %v204 = vld [vmem:[%s0 + $0x2f4] sm:$0xf]
  %v205 = vld [vmem:[%s0 + $0x2f8] sm:$0xf]
  %v206 = vld [vmem:[%s0 + $0x2fc] sm:$0xf]
  %v207 = vld [vmem:[%s0 + $0x300] sm:$0xf]
  %v208 = vld [vmem:[%s0 + $0x304] sm:$0xf]
  %v209 = vld [vmem:[%s0 + $0x308] sm:$0xf]
  %v210 = vld [vmem:[%s0 + $0x30c] sm:$0xf]
  %v211 = vld [vmem:[%s1] sm:$0xf]
  %v212 = vld [vmem:[%s1 + $0x4] sm:$0xf]
  %v213 = vld [vmem:[%s1 + $0x8] sm:$0xf]
  %v214 = vld [vmem:[%s1 + $0xc] sm:$0xf]
  %v215 = vld [vmem:[%s1 + $0x10] sm:$0xf]
  %v216 = vld [vmem:[%s1 + $0x14] sm:$0xf]
  %v217 = vld [vmem:[%s1 + $0x18] sm:$0xf]
  %v218 = vld [vmem:[%s1 + $0x1c] sm:$0xf]
  %v219 = vld [vmem:[%s1 + $0x20] sm:$0xf]
  %v220 = vld [vmem:[%s1 + $0x24] sm:$0xf]
  %v221 = vld [vmem:[%s1 + $0x28] sm:$0xf]
  %v222 = vld [vmem:[%s1 + $0x2c] sm:$0xf]
  %v223 = vld [vmem:[%s1 + $0x30] sm:$0xf]
  %v224 = vld [vmem:[%s1 + $0x34] sm:$0xf]
  %v225 = vld [vmem:[%s1 + $0x38] sm:$0xf]
  %v226 = vld [vmem:[%s1 + $0x3c] sm:$0xf]
  %v227 = vld [vmem:[%s2] sm:$0x1]
  %v229 = vlaneseq
  %v230 = vshrl.u32 %v229, 7
  %v231 = vsub.s32 0, %v230
  %v232 = vrot.slane %v227, %v231
  %v430 = vunpack.c.l.b16 %v15
  %v431 = vunpack.c.l.b16 %v16
  %v432 = vunpack.c.l.b16 %v17
  %v433 = vunpack.c.l.b16 %v18
  %v434 = vunpack.c.l.b16 %v19
  %v435 = vunpack.c.l.b16 %v20
  %v436 = vunpack.c.l.b16 %v21
  %v437 = vunpack.c.l.b16 %v22
  %v438 = vunpack.c.l.b16 %v23
  %v439 = vunpack.c.l.b16 %v24
  %v440 = vunpack.c.l.b16 %v25
  %v441 = vunpack.c.l.b16 %v26
  %v442 = vunpack.c.l.b16 %v27
  %v443 = vunpack.c.l.b16 %v28
  %v444 = vunpack.c.l.b16 %v29
  %v445 = vunpack.c.l.b16 %v30
  %v446 = vunpack.c.l.b16 %v31
  %v447 = vunpack.c.l.b16 %v32
  %v448 = vunpack.c.l.b16 %v33
  %v449 = vunpack.c.l.b16 %v34
  %v450 = vunpack.c.l.b16 %v35
  %v451 = vunpack.c.l.b16 %v36
  %v452 = vunpack.c.l.b16 %v37
  %v453 = vunpack.c.l.b16 %v38
  %v454 = vunpack.c.l.b16 %v39
  %v455 = vunpack.c.l.b16 %v40
  %v456 = vunpack.c.l.b16 %v41
  %v457 = vunpack.c.l.b16 %v42
  %v458 = vunpack.c.l.b16 %v43
  %v459 = vunpack.c.l.b16 %v44
  %v460 = vunpack.c.l.b16 %v45
  %v461 = vunpack.c.l.b16 %v46
  %v462 = vunpack.c.l.b16 %v47
  %v463 = vunpack.c.l.b16 %v48
  %v464 = vunpack.c.l.b16 %v49
  %v465 = vunpack.c.l.b16 %v50
  %v466 = vunpack.c.l.b16 %v51
  %v467 = vunpack.c.l.b16 %v52
  %v468 = vunpack.c.l.b16 %v53
  %v469 = vunpack.c.l.b16 %v54
  %v470 = vunpack.c.l.b16 %v55
  %v471 = vunpack.c.l.b16 %v56
  %v472 = vunpack.c.l.b16 %v57
  %v473 = vunpack.c.l.b16 %v58
  %v474 = vunpack.c.l.b16 %v59
  %v475 = vunpack.c.l.b16 %v60
  %v476 = vunpack.c.l.b16 %v61
  %v477 = vunpack.c.l.b16 %v62
  %v478 = vunpack.c.l.b16 %v63
  %v479 = vunpack.c.l.b16 %v64
  %v480 = vunpack.c.l.b16 %v65
  %v481 = vunpack.c.l.b16 %v66
  %v482 = vunpack.c.l.b16 %v67
  %v483 = vunpack.c.l.b16 %v68
  %v484 = vunpack.c.l.b16 %v69
  %v485 = vunpack.c.l.b16 %v70
  %v486 = vunpack.c.l.b16 %v71
  %v487 = vunpack.c.l.b16 %v72
  %v488 = vunpack.c.l.b16 %v73
  %v489 = vunpack.c.l.b16 %v74
  %v490 = vunpack.c.l.b16 %v75
  %v491 = vunpack.c.l.b16 %v76
  %v492 = vunpack.c.l.b16 %v77
  %v493 = vunpack.c.l.b16 %v78
  %v494 = vunpack.c.l.b16 %v79
  %v495 = vunpack.c.l.b16 %v80
  %v496 = vunpack.c.l.b16 %v81
  %v497 = vunpack.c.l.b16 %v82
  %v498 = vunpack.c.l.b16 %v83
  %v499 = vunpack.c.l.b16 %v84
  %v500 = vunpack.c.l.b16 %v85
  %v501 = vunpack.c.l.b16 %v86
  %v502 = vunpack.c.l.b16 %v87
  %v503 = vunpack.c.l.b16 %v88
  %v504 = vunpack.c.l.b16 %v89
  %v505 = vunpack.c.l.b16 %v90
  %v506 = vunpack.c.l.b16 %v91
  %v507 = vunpack.c.l.b16 %v92
  %v508 = vunpack.c.l.b16 %v93
  %v509 = vunpack.c.l.b16 %v94
  %v510 = vunpack.c.l.b16 %v95
  %v511 = vunpack.c.l.b16 %v96
  %v512 = vunpack.c.l.b16 %v97
  %v513 = vunpack.c.l.b16 %v98
  %v514 = vunpack.c.l.b16 %v99
  %v515 = vunpack.c.l.b16 %v100
  %v516 = vunpack.c.l.b16 %v101
  %v517 = vunpack.c.l.b16 %v102
  %v518 = vunpack.c.l.b16 %v103
  %v519 = vunpack.c.l.b16 %v104
  %v520 = vunpack.c.l.b16 %v105
  %v521 = vunpack.c.l.b16 %v106
  %v522 = vunpack.c.l.b16 %v107
  %v523 = vunpack.c.l.b16 %v108
  %v524 = vunpack.c.l.b16 %v109
  %v525 = vunpack.c.l.b16 %v110
  %v526 = vunpack.c.l.b16 %v111
  %v527 = vunpack.c.l.b16 %v112
  %v528 = vunpack.c.l.b16 %v113
  %v529 = vunpack.c.l.b16 %v114
  %v530 = vunpack.c.l.b16 %v115
  %v531 = vunpack.c.l.b16 %v116
  %v532 = vunpack.c.l.b16 %v117
  %v533 = vunpack.c.l.b16 %v118
  %v534 = vunpack.c.l.b16 %v119
  %v535 = vunpack.c.l.b16 %v120
  %v536 = vunpack.c.l.b16 %v121
  %v537 = vunpack.c.l.b16 %v122
  %v538 = vunpack.c.l.b16 %v123
  %v539 = vunpack.c.l.b16 %v124
  %v540 = vunpack.c.l.b16 %v125
  %v541 = vunpack.c.l.b16 %v126
  %v542 = vunpack.c.l.b16 %v127
  %v543 = vunpack.c.l.b16 %v128
  %v544 = vunpack.c.l.b16 %v129
  %v545 = vunpack.c.l.b16 %v130
  %v546 = vunpack.c.l.b16 %v131
  %v547 = vunpack.c.l.b16 %v132
  %v548 = vunpack.c.l.b16 %v133
  %v549 = vunpack.c.l.b16 %v134
  %v550 = vunpack.c.l.b16 %v135
  %v551 = vunpack.c.l.b16 %v136
  %v552 = vunpack.c.l.b16 %v137
  %v553 = vunpack.c.l.b16 %v138
  %v554 = vunpack.c.l.b16 %v139
  %v555 = vunpack.c.l.b16 %v140
  %v556 = vunpack.c.l.b16 %v141
  %v557 = vunpack.c.l.b16 %v142
  %v558 = vunpack.c.l.b16 %v143
  %v559 = vunpack.c.l.b16 %v144
  %v560 = vunpack.c.l.b16 %v145
  %v561 = vunpack.c.l.b16 %v146
  %v562 = vunpack.c.l.b16 %v147
  %v563 = vunpack.c.l.b16 %v148
  %v564 = vunpack.c.l.b16 %v149
  %v565 = vunpack.c.l.b16 %v150
  %v566 = vunpack.c.l.b16 %v151
  %v567 = vunpack.c.l.b16 %v152
  %v568 = vunpack.c.l.b16 %v153
  %v569 = vunpack.c.l.b16 %v154
  %v570 = vunpack.c.l.b16 %v155
  %v571 = vunpack.c.l.b16 %v156
  %v572 = vunpack.c.l.b16 %v157
  %v573 = vunpack.c.l.b16 %v158
  %v574 = vunpack.c.l.b16 %v159
  %v575 = vunpack.c.l.b16 %v160
  %v576 = vunpack.c.l.b16 %v161
  %v577 = vunpack.c.l.b16 %v162
  %v578 = vunpack.c.l.b16 %v163
  %v579 = vunpack.c.l.b16 %v164
  %v580 = vunpack.c.l.b16 %v165
  %v581 = vunpack.c.l.b16 %v166
  %v582 = vunpack.c.l.b16 %v167
  %v583 = vunpack.c.l.b16 %v168
  %v584 = vunpack.c.l.b16 %v169
  %v585 = vunpack.c.l.b16 %v170
  %v586 = vunpack.c.l.b16 %v171
  %v587 = vunpack.c.l.b16 %v172
  %v588 = vunpack.c.l.b16 %v173
  %v589 = vunpack.c.l.b16 %v174
  %v590 = vunpack.c.l.b16 %v175
  %v591 = vunpack.c.l.b16 %v176
  %v592 = vunpack.c.l.b16 %v177
  %v593 = vunpack.c.l.b16 %v178
  %v594 = vunpack.c.l.b16 %v179
  %v595 = vunpack.c.l.b16 %v180
  %v596 = vunpack.c.l.b16 %v181
  %v597 = vunpack.c.l.b16 %v182
  %v598 = vunpack.c.l.b16 %v183
  %v599 = vunpack.c.l.b16 %v184
  %v600 = vunpack.c.l.b16 %v185
  %v601 = vunpack.c.l.b16 %v186
  %v602 = vunpack.c.l.b16 %v187
  %v603 = vunpack.c.l.b16 %v188
  %v604 = vunpack.c.l.b16 %v189
  %v605 = vunpack.c.l.b16 %v190
  %v606 = vunpack.c.l.b16 %v191
  %v607 = vunpack.c.l.b16 %v192
  %v608 = vunpack.c.l.b16 %v193
  %v609 = vunpack.c.l.b16 %v194
  %v610 = vunpack.c.l.b16 %v195
  %v611 = vunpack.c.l.b16 %v196
  %v612 = vunpack.c.l.b16 %v197
  %v613 = vunpack.c.l.b16 %v198
  %v614 = vunpack.c.l.b16 %v199
  %v615 = vunpack.c.l.b16 %v200
  %v616 = vunpack.c.l.b16 %v201
  %v617 = vunpack.c.l.b16 %v202
  %v618 = vunpack.c.l.b16 %v203
  %v619 = vunpack.c.l.b16 %v204
  %v620 = vunpack.c.l.b16 %v205
  %v621 = vunpack.c.l.b16 %v206
  %v622 = vunpack.c.l.b16 %v207
  %v623 = vunpack.c.l.b16 %v208
  %v624 = vunpack.c.l.b16 %v209
  %v625 = vunpack.c.l.b16 %v210
  %v626 = vpack.c.b16 %v431, %v430
  %v627 = vpack.c.b16 %v433, %v432
  %v628 = vpack.c.b16 %v435, %v434
  %v629 = vpack.c.b16 %v437, %v436
  %v630 = vpack.c.b16 %v439, %v438
  %v631 = vpack.c.b16 %v441, %v440
  %v632 = vpack.c.b16 %v443, %v442
  %v633 = vpack.c.b16 %v445, %v444
  %v634 = vpack.c.b16 %v447, %v446
  %v635 = vpack.c.b16 %v449, %v448
  %v636 = vpack.c.b16 %v451, %v450
  %v637 = vpack.c.b16 %v453, %v452
  %v638 = vpack.c.b16 %v455, %v454
  %v639 = vpack.c.b16 %v457, %v456
  %v640 = vpack.c.b16 %v459, %v458
  %v641 = vpack.c.b16 %v461, %v460
  %v642 = vpack.c.b16 %v463, %v462
  %v643 = vpack.c.b16 %v465, %v464
  %v644 = vpack.c.b16 %v467, %v466
  %v645 = vpack.c.b16 %v469, %v468
  %v646 = vpack.c.b16 %v471, %v470
  %v647 = vpack.c.b16 %v473, %v472
  %v648 = vpack.c.b16 %v475, %v474
  %v649 = vpack.c.b16 %v477, %v476
  %v650 = vpack.c.b16 %v479, %v478
  %v651 = vpack.c.b16 %v481, %v480
  %v652 = vpack.c.b16 %v483, %v482
  %v653 = vpack.c.b16 %v485, %v484
  %v654 = vpack.c.b16 %v487, %v486
  %v655 = vpack.c.b16 %v489, %v488
  %v656 = vpack.c.b16 %v491, %v490
  %v657 = vpack.c.b16 %v493, %v492
  %v658 = vpack.c.b16 %v495, %v494
  %v659 = vpack.c.b16 %v497, %v496
  %v660 = vpack.c.b16 %v499, %v498
  %v661 = vpack.c.b16 %v501, %v500
  %v662 = vpack.c.b16 %v503, %v502
  %v663 = vpack.c.b16 %v505, %v504
  %v664 = vpack.c.b16 %v507, %v506
  %v665 = vpack.c.b16 %v509, %v508
  %v666 = vpack.c.b16 %v511, %v510
  %v667 = vpack.c.b16 %v513, %v512
  %v668 = vpack.c.b16 %v515, %v514
  %v669 = vpack.c.b16 %v517, %v516
  %v670 = vpack.c.b16 %v519, %v518
  %v671 = vpack.c.b16 %v521, %v520
  %v672 = vpack.c.b16 %v523, %v522
  %v673 = vpack.c.b16 %v525, %v524
  %v674 = vpack.c.b16 %v527, %v526
  %v675 = vpack.c.b16 %v529, %v528
  %v676 = vpack.c.b16 %v531, %v530
  %v677 = vpack.c.b16 %v533, %v532
  %v678 = vpack.c.b16 %v535, %v534
  %v679 = vpack.c.b16 %v537, %v536
  %v680 = vpack.c.b16 %v539, %v538
  %v681 = vpack.c.b16 %v541, %v540
  %v682 = vpack.c.b16 %v543, %v542
  %v683 = vpack.c.b16 %v545, %v544
  %v684 = vpack.c.b16 %v547, %v546
  %v685 = vpack.c.b16 %v549, %v548
  %v686 = vpack.c.b16 %v551, %v550
  %v687 = vpack.c.b16 %v553, %v552
  %v688 = vpack.c.b16 %v555, %v554
  %v689 = vpack.c.b16 %v557, %v556
  %v690 = vpack.c.b16 %v559, %v558
  %v691 = vpack.c.b16 %v561, %v560
  %v692 = vpack.c.b16 %v563, %v562
  %v693 = vpack.c.b16 %v565, %v564
  %v694 = vpack.c.b16 %v567, %v566
  %v695 = vpack.c.b16 %v569, %v568
  %v696 = vpack.c.b16 %v571, %v570
  %v697 = vpack.c.b16 %v573, %v572
  %v698 = vpack.c.b16 %v575, %v574
  %v699 = vpack.c.b16 %v577, %v576
  %v700 = vpack.c.b16 %v579, %v578
  %v701 = vpack.c.b16 %v581, %v580
  %v702 = vpack.c.b16 %v583, %v582
  %v703 = vpack.c.b16 %v585, %v584
  %v704 = vpack.c.b16 %v587, %v586
  %v705 = vpack.c.b16 %v589, %v588
  %v706 = vpack.c.b16 %v591, %v590
  %v707 = vpack.c.b16 %v593, %v592
  %v708 = vpack.c.b16 %v595, %v594
  %v709 = vpack.c.b16 %v597, %v596
  %v710 = vpack.c.b16 %v599, %v598
  %v711 = vpack.c.b16 %v601, %v600
  %v712 = vpack.c.b16 %v603, %v602
  %v713 = vpack.c.b16 %v605, %v604
  %v714 = vpack.c.b16 %v607, %v606
  %v715 = vpack.c.b16 %v609, %v608
  %v716 = vpack.c.b16 %v611, %v610
  %v717 = vpack.c.b16 %v613, %v612
  %v718 = vpack.c.b16 %v615, %v614
  %v719 = vpack.c.b16 %v617, %v616
  %v720 = vpack.c.b16 %v619, %v618
  %v721 = vpack.c.b16 %v621, %v620
  %v722 = vpack.c.b16 %v623, %v622
  %v723 = vpack.c.b16 %v625, %v624
  %v838 = vunpack.c.l.b16 %v211
  %v839 = vunpack.c.l.b16 %v212
  %v840 = vunpack.c.l.b16 %v213
  %v841 = vunpack.c.l.b16 %v214
  %v842 = vunpack.c.l.b16 %v215
  %v843 = vunpack.c.l.b16 %v216
  %v844 = vunpack.c.l.b16 %v217
  %v845 = vunpack.c.l.b16 %v218
  %v846 = vunpack.c.l.b16 %v219
  %v847 = vunpack.c.l.b16 %v220
  %v848 = vunpack.c.l.b16 %v221
  %v849 = vunpack.c.l.b16 %v222
  %v850 = vunpack.c.l.b16 %v223
  %v851 = vunpack.c.l.b16 %v224
  %v852 = vunpack.c.l.b16 %v225
  %v853 = vunpack.c.l.b16 %v226
  %v854 = vpack.c.b16 %v839, %v838
  %v855 = vpack.c.b16 %v841, %v840
  %v856 = vpack.c.b16 %v843, %v842
  %v857 = vpack.c.b16 %v845, %v844
  %v858 = vpack.c.b16 %v847, %v846
  %v859 = vpack.c.b16 %v849, %v848
  %v860 = vpack.c.b16 %v851, %v850
  %v861 = vpack.c.b16 %v853, %v852
  %870 = vmatprep.subr.bf16.mxu0 0
  %871 = vmatpush1.bf16.msra.mxu0 %v861
  %872 = vmatprep.subr.bf16.mxu0 0
  %873 = vmatpush1.bf16.msra.mxu0 %v860
  %874 = vmatprep.subr.bf16.mxu0 0
  %875 = vmatpush1.bf16.msra.mxu0 %v859
  %876 = vmatprep.subr.bf16.mxu0 0
  %877 = vmatpush1.bf16.msra.mxu0 %v858
  %878 = vmatprep.subr.bf16.mxu0 0
  %879 = vmatpush1.bf16.msra.mxu0 %v857
  %880 = vmatprep.subr.bf16.mxu0 0
  %881 = vmatpush1.bf16.msra.mxu0 %v856
  %882 = vmatprep.subr.bf16.mxu0 0
  %883 = vmatpush1.bf16.msra.mxu0 %v855
  %884 = vmatprep.subr.bf16.mxu0 0
  %885 = vmatpush1.bf16.msra.mxu0 %v854
  %886 = vmatprep.subr.bf16.mxu0 0
  %887 = vmatpush2.bf16.msra.mxu0 0
  %888 = vmatprep.subr.bf16.mxu0 0
  %889 = vmatpush2.bf16.msra.mxu0 0
  %890 = vmatprep.subr.bf16.mxu0 0
  %891 = vmatpush2.bf16.msra.mxu0 0
  %892 = vmatprep.subr.bf16.mxu0 0
  %893 = vmatpush2.bf16.msra.mxu0 0
  %894 = vmatprep.subr.bf16.mxu0 0
  %895 = vmatpush2.bf16.msra.mxu0 0
  %896 = vmatprep.subr.bf16.mxu0 0
  %897 = vmatpush2.bf16.msra.mxu0 0
  %898 = vmatprep.subr.bf16.mxu0 0
  %899 = vmatpush2.bf16.msra.mxu0 0
  %900 = vmatprep.subr.bf16.mxu0 0
  %901 = vmatpush2.bf16.msra.mxu0 0
  %902 = vmatprep.mubr.bf16.mxu0 0
  %903 = vmatmul.mubr.bf16.gmra.mxu0 %v626
  %v904 = vpop.f32.mrf.mxu0
  %v905 = vadd.f32 %v232, %v904
  %v906 = vpop.f32.mrf.mxu0
  %v907 = vpop.f32.mrf.mxu0
  %v908 = vadd.f32 %v232, %v907
  %v909 = vpop.f32.mrf.mxu0
  %910 = vmatprep.mubr.bf16.mxu0 0
  %911 = vmatmul.mubr.bf16.gmra.mxu0 %v627
  %v912 = vpop.f32.mrf.mxu0
  %v913 = vadd.f32 %v232, %v912
  %v914 = vpop.f32.mrf.mxu0
  %v915 = vpop.f32.mrf.mxu0
  %v916 = vadd.f32 %v232, %v915
  %v917 = vpop.f32.mrf.mxu0
  %918 = vmatprep.mubr.bf16.mxu0 0
  %919 = vmatmul.mubr.bf16.gmra.mxu0 %v628
  %v920 = vpop.f32.mrf.mxu0
  %v921 = vadd.f32 %v232, %v920
  %v922 = vpop.f32.mrf.mxu0
  %v923 = vpop.f32.mrf.mxu0
  %v924 = vadd.f32 %v232, %v923
  %v925 = vpop.f32.mrf.mxu0
  %926 = vmatprep.mubr.bf16.mxu0 0
  %927 = vmatmul.mubr.bf16.gmra.mxu0 %v629
  %v928 = vpop.f32.mrf.mxu0
  %v929 = vadd.f32 %v232, %v928
  %v930 = vpop.f32.mrf.mxu0
  %v931 = vpop.f32.mrf.mxu0
  %v932 = vadd.f32 %v232, %v931
  %v933 = vpop.f32.mrf.mxu0
  %934 = vmatprep.mubr.bf16.mxu0 0
  %935 = vmatmul.mubr.bf16.gmra.mxu0 %v630
  %v936 = vpop.f32.mrf.mxu0
  %v937 = vadd.f32 %v232, %v936
  %v938 = vpop.f32.mrf.mxu0
  %v939 = vpop.f32.mrf.mxu0
  %v940 = vadd.f32 %v232, %v939
  %v941 = vpop.f32.mrf.mxu0
  %942 = vmatprep.mubr.bf16.mxu0 0
  %943 = vmatmul.mubr.bf16.gmra.mxu0 %v631
  %v944 = vpop.f32.mrf.mxu0
  %v945 = vadd.f32 %v232, %v944
  %v946 = vpop.f32.mrf.mxu0
  %v947 = vpop.f32.mrf.mxu0
  %v948 = vadd.f32 %v232, %v947
  %v949 = vpop.f32.mrf.mxu0
  %950 = vmatprep.mubr.bf16.mxu0 0
  %951 = vmatmul.mubr.bf16.gmra.mxu0 %v632
  %v952 = vpop.f32.mrf.mxu0
  %v953 = vadd.f32 %v232, %v952
  %v954 = vpop.f32.mrf.mxu0
  %v955 = vpop.f32.mrf.mxu0
  %v956 = vadd.f32 %v232, %v955
  %v957 = vpop.f32.mrf.mxu0
  %958 = vmatprep.mubr.bf16.mxu0 0
  %959 = vmatmul.mubr.bf16.gmra.mxu0 %v633
  %v960 = vpop.f32.mrf.mxu0
  %v961 = vadd.f32 %v232, %v960
  %v962 = vpop.f32.mrf.mxu0
  %v963 = vpop.f32.mrf.mxu0
  %v964 = vadd.f32 %v232, %v963
  %v965 = vpop.f32.mrf.mxu0
  %966 = vmatprep.mubr.bf16.mxu0 0
  %967 = vmatmul.mubr.bf16.gmra.mxu0 %v634
  %v968 = vpop.f32.mrf.mxu0
  %v969 = vadd.f32 %v232, %v968
  %v970 = vpop.f32.mrf.mxu0
  %v971 = vpop.f32.mrf.mxu0
  %v972 = vadd.f32 %v232, %v971
  %v973 = vpop.f32.mrf.mxu0
  %974 = vmatprep.mubr.bf16.mxu0 0
  %975 = vmatmul.mubr.bf16.gmra.mxu0 %v635
  %v976 = vpop.f32.mrf.mxu0
  %v977 = vadd.f32 %v232, %v976
  %v978 = vpop.f32.mrf.mxu0
  %v979 = vpop.f32.mrf.mxu0
  %v980 = vadd.f32 %v232, %v979
  %v981 = vpop.f32.mrf.mxu0
  %982 = vmatprep.mubr.bf16.mxu0 0
  %983 = vmatmul.mubr.bf16.gmra.mxu0 %v636
  %v984 = vpop.f32.mrf.mxu0
  %v985 = vadd.f32 %v232, %v984
  %v986 = vpop.f32.mrf.mxu0
  %v987 = vpop.f32.mrf.mxu0
  %v988 = vadd.f32 %v232, %v987
  %v989 = vpop.f32.mrf.mxu0
  %990 = vmatprep.mubr.bf16.mxu0 0
  %991 = vmatmul.mubr.bf16.gmra.mxu0 %v637
  %v992 = vpop.f32.mrf.mxu0
  %v993 = vadd.f32 %v232, %v992
  %v994 = vpop.f32.mrf.mxu0
  %v995 = vpop.f32.mrf.mxu0
  %v996 = vadd.f32 %v232, %v995
  %v997 = vpop.f32.mrf.mxu0
  %998 = vmatprep.mubr.bf16.mxu0 0
  %999 = vmatmul.mubr.bf16.gmra.mxu0 %v638
  %v1000 = vpop.f32.mrf.mxu0
  %v1001 = vadd.f32 %v232, %v1000
  %v1002 = vpop.f32.mrf.mxu0
  %v1003 = vpop.f32.mrf.mxu0
  %v1004 = vadd.f32 %v232, %v1003
  %v1005 = vpop.f32.mrf.mxu0
  %1006 = vmatprep.mubr.bf16.mxu0 0
  %1007 = vmatmul.mubr.bf16.gmra.mxu0 %v639
  %v1008 = vpop.f32.mrf.mxu0
  %v1009 = vadd.f32 %v232, %v1008
  %v1010 = vpop.f32.mrf.mxu0
  %v1011 = vpop.f32.mrf.mxu0
  %v1012 = vadd.f32 %v232, %v1011
  %v1013 = vpop.f32.mrf.mxu0
  %1014 = vmatprep.mubr.bf16.mxu0 0
  %1015 = vmatmul.mubr.bf16.gmra.mxu0 %v640
  %v1016 = vpop.f32.mrf.mxu0
  %v1017 = vadd.f32 %v232, %v1016
  %v1018 = vpop.f32.mrf.mxu0
  %v1019 = vpop.f32.mrf.mxu0
  %v1020 = vadd.f32 %v232, %v1019
  %v1021 = vpop.f32.mrf.mxu0
  %1022 = vmatprep.mubr.bf16.mxu0 0
  %1023 = vmatmul.mubr.bf16.gmra.mxu0 %v641
  %v1024 = vpop.f32.mrf.mxu0
  %v1025 = vadd.f32 %v232, %v1024
  %v1026 = vpop.f32.mrf.mxu0
  %v1027 = vpop.f32.mrf.mxu0
  %v1028 = vadd.f32 %v232, %v1027
  %v1029 = vpop.f32.mrf.mxu0
  %1030 = vmatprep.mubr.bf16.mxu0 0
  %1031 = vmatmul.mubr.bf16.gmra.mxu0 %v642
  %v1032 = vpop.f32.mrf.mxu0
  %v1033 = vadd.f32 %v232, %v1032
  %v1034 = vpop.f32.mrf.mxu0
  %v1035 = vpop.f32.mrf.mxu0
  %v1036 = vadd.f32 %v232, %v1035
  %v1037 = vpop.f32.mrf.mxu0
  %1038 = vmatprep.mubr.bf16.mxu0 0
  %1039 = vmatmul.mubr.bf16.gmra.mxu0 %v643
  %v1040 = vpop.f32.mrf.mxu0
  %v1041 = vadd.f32 %v232, %v1040
  %v1042 = vpop.f32.mrf.mxu0
  %v1043 = vpop.f32.mrf.mxu0
  %v1044 = vadd.f32 %v232, %v1043
  %v1045 = vpop.f32.mrf.mxu0
  %1046 = vmatprep.mubr.bf16.mxu0 0
  %1047 = vmatmul.mubr.bf16.gmra.mxu0 %v644
  %v1048 = vpop.f32.mrf.mxu0
  %v1049 = vadd.f32 %v232, %v1048
  %v1050 = vpop.f32.mrf.mxu0
  %v1051 = vpop.f32.mrf.mxu0
  %v1052 = vadd.f32 %v232, %v1051
  %v1053 = vpop.f32.mrf.mxu0
  %1054 = vmatprep.mubr.bf16.mxu0 0
  %1055 = vmatmul.mubr.bf16.gmra.mxu0 %v645
  %v1056 = vpop.f32.mrf.mxu0
  %v1057 = vadd.f32 %v232, %v1056
  %v1058 = vpop.f32.mrf.mxu0
  %v1059 = vpop.f32.mrf.mxu0
  %v1060 = vadd.f32 %v232, %v1059
  %v1061 = vpop.f32.mrf.mxu0
  %1062 = vmatprep.mubr.bf16.mxu0 0
  %1063 = vmatmul.mubr.bf16.gmra.mxu0 %v646
  %v1064 = vpop.f32.mrf.mxu0
  %v1065 = vadd.f32 %v232, %v1064
  %v1066 = vpop.f32.mrf.mxu0
  %v1067 = vpop.f32.mrf.mxu0
  %v1068 = vadd.f32 %v232, %v1067
  %v1069 = vpop.f32.mrf.mxu0
  %1070 = vmatprep.mubr.bf16.mxu0 0
  %1071 = vmatmul.mubr.bf16.gmra.mxu0 %v647
  %v1072 = vpop.f32.mrf.mxu0
  %v1073 = vadd.f32 %v232, %v1072
  %v1074 = vpop.f32.mrf.mxu0
  %v1075 = vpop.f32.mrf.mxu0
  %v1076 = vadd.f32 %v232, %v1075
  %v1077 = vpop.f32.mrf.mxu0
  %1078 = vmatprep.mubr.bf16.mxu0 0
  %1079 = vmatmul.mubr.bf16.gmra.mxu0 %v648
  %v1080 = vpop.f32.mrf.mxu0
  %v1081 = vadd.f32 %v232, %v1080
  %v1082 = vpop.f32.mrf.mxu0
  %v1083 = vpop.f32.mrf.mxu0
  %v1084 = vadd.f32 %v232, %v1083
  %v1085 = vpop.f32.mrf.mxu0
  %1086 = vmatprep.mubr.bf16.mxu0 0
  %1087 = vmatmul.mubr.bf16.gmra.mxu0 %v649
  %v1088 = vpop.f32.mrf.mxu0
  %v1089 = vadd.f32 %v232, %v1088
  %v1090 = vpop.f32.mrf.mxu0
  %v1091 = vpop.f32.mrf.mxu0
  %v1092 = vadd.f32 %v232, %v1091
  %v1093 = vpop.f32.mrf.mxu0
  %1094 = vmatprep.mubr.bf16.mxu0 0
  %1095 = vmatmul.mubr.bf16.gmra.mxu0 %v650
  %v1096 = vpop.f32.mrf.mxu0
  %v1097 = vadd.f32 %v232, %v1096
  %v1098 = vpop.f32.mrf.mxu0
  %v1099 = vpop.f32.mrf.mxu0
  %v1100 = vadd.f32 %v232, %v1099
  %v1101 = vpop.f32.mrf.mxu0
  %1102 = vmatprep.mubr.bf16.mxu0 0
  %1103 = vmatmul.mubr.bf16.gmra.mxu0 %v651
  %v1104 = vpop.f32.mrf.mxu0
  %v1105 = vadd.f32 %v232, %v1104
  %v1106 = vpop.f32.mrf.mxu0
  %v1107 = vpop.f32.mrf.mxu0
  %v1108 = vadd.f32 %v232, %v1107
  %v1109 = vpop.f32.mrf.mxu0
  %1110 = vmatprep.mubr.bf16.mxu0 0
  %1111 = vmatmul.mubr.bf16.gmra.mxu0 %v652
  %v1112 = vpop.f32.mrf.mxu0
  %v1113 = vadd.f32 %v232, %v1112
  %v1114 = vpop.f32.mrf.mxu0
  %v1115 = vpop.f32.mrf.mxu0
  %v1116 = vadd.f32 %v232, %v1115
  %v1117 = vpop.f32.mrf.mxu0
  %1118 = vmatprep.mubr.bf16.mxu0 0
  %1119 = vmatmul.mubr.bf16.gmra.mxu0 %v653
  %v1120 = vpop.f32.mrf.mxu0
  %v1121 = vadd.f32 %v232, %v1120
  %v1122 = vpop.f32.mrf.mxu0
  %v1123 = vpop.f32.mrf.mxu0
  %v1124 = vadd.f32 %v232, %v1123
  %v1125 = vpop.f32.mrf.mxu0
  %1126 = vmatprep.mubr.bf16.mxu0 0
  %1127 = vmatmul.mubr.bf16.gmra.mxu0 %v654
  %v1128 = vpop.f32.mrf.mxu0
  %v1129 = vadd.f32 %v232, %v1128
  %v1130 = vpop.f32.mrf.mxu0
  %v1131 = vpop.f32.mrf.mxu0
  %v1132 = vadd.f32 %v232, %v1131
  %v1133 = vpop.f32.mrf.mxu0
  %1134 = vmatprep.mubr.bf16.mxu0 0
  %1135 = vmatmul.mubr.bf16.gmra.mxu0 %v655
  %v1136 = vpop.f32.mrf.mxu0
  %v1137 = vadd.f32 %v232, %v1136
  %v1138 = vpop.f32.mrf.mxu0
  %v1139 = vpop.f32.mrf.mxu0
  %v1140 = vadd.f32 %v232, %v1139
  %v1141 = vpop.f32.mrf.mxu0
  %1142 = vmatprep.mubr.bf16.mxu0 0
  %1143 = vmatmul.mubr.bf16.gmra.mxu0 %v656
  %v1144 = vpop.f32.mrf.mxu0
  %v1145 = vadd.f32 %v232, %v1144
  %v1146 = vpop.f32.mrf.mxu0
  %v1147 = vpop.f32.mrf.mxu0
  %v1148 = vadd.f32 %v232, %v1147
  %v1149 = vpop.f32.mrf.mxu0
  %1150 = vmatprep.mubr.bf16.mxu0 0
  %1151 = vmatmul.mubr.bf16.gmra.mxu0 %v657
  %v1152 = vpop.f32.mrf.mxu0
  %v1153 = vadd.f32 %v232, %v1152
  %v1154 = vpop.f32.mrf.mxu0
  %v1155 = vpop.f32.mrf.mxu0
  %v1156 = vadd.f32 %v232, %v1155
  %v1157 = vpop.f32.mrf.mxu0
  %1158 = vmatprep.mubr.bf16.mxu0 0
  %1159 = vmatmul.mubr.bf16.gmra.mxu0 %v658
  %v1160 = vpop.f32.mrf.mxu0
  %v1161 = vadd.f32 %v232, %v1160
  %v1162 = vpop.f32.mrf.mxu0
  %v1163 = vpop.f32.mrf.mxu0
  %v1164 = vadd.f32 %v232, %v1163
  %v1165 = vpop.f32.mrf.mxu0
  %1166 = vmatprep.mubr.bf16.mxu0 0
  %1167 = vmatmul.mubr.bf16.gmra.mxu0 %v659
  %v1168 = vpop.f32.mrf.mxu0
  %v1169 = vadd.f32 %v232, %v1168
  %v1170 = vpop.f32.mrf.mxu0
  %v1171 = vpop.f32.mrf.mxu0
  %v1172 = vadd.f32 %v232, %v1171
  %v1173 = vpop.f32.mrf.mxu0
  %1174 = vmatprep.mubr.bf16.mxu0 0
  %1175 = vmatmul.mubr.bf16.gmra.mxu0 %v660
  %v1176 = vpop.f32.mrf.mxu0
  %v1177 = vadd.f32 %v232, %v1176
  %v1178 = vpop.f32.mrf.mxu0
  %v1179 = vpop.f32.mrf.mxu0
  %v1180 = vadd.f32 %v232, %v1179
  %v1181 = vpop.f32.mrf.mxu0
  %1182 = vmatprep.mubr.bf16.mxu0 0
  %1183 = vmatmul.mubr.bf16.gmra.mxu0 %v661
  %v1184 = vpop.f32.mrf.mxu0
  %v1185 = vadd.f32 %v232, %v1184
  %v1186 = vpop.f32.mrf.mxu0
  %v1187 = vpop.f32.mrf.mxu0
  %v1188 = vadd.f32 %v232, %v1187
  %v1189 = vpop.f32.mrf.mxu0
  %1190 = vmatprep.mubr.bf16.mxu0 0
  %1191 = vmatmul.mubr.bf16.gmra.mxu0 %v662
  %v1192 = vpop.f32.mrf.mxu0
  %v1193 = vadd.f32 %v232, %v1192
  %v1194 = vpop.f32.mrf.mxu0
  %v1195 = vpop.f32.mrf.mxu0
  %v1196 = vadd.f32 %v232, %v1195
  %v1197 = vpop.f32.mrf.mxu0
  %1198 = vmatprep.mubr.bf16.mxu0 0
  %1199 = vmatmul.mubr.bf16.gmra.mxu0 %v663
  %v1200 = vpop.f32.mrf.mxu0
  %v1201 = vadd.f32 %v232, %v1200
  %v1202 = vpop.f32.mrf.mxu0
  %v1203 = vpop.f32.mrf.mxu0
  %v1204 = vadd.f32 %v232, %v1203
  %v1205 = vpop.f32.mrf.mxu0
  %1206 = vmatprep.mubr.bf16.mxu0 0
  %1207 = vmatmul.mubr.bf16.gmra.mxu0 %v664
  %v1208 = vpop.f32.mrf.mxu0
  %v1209 = vadd.f32 %v232, %v1208
  %v1210 = vpop.f32.mrf.mxu0
  %v1211 = vpop.f32.mrf.mxu0
  %v1212 = vadd.f32 %v232, %v1211
  %v1213 = vpop.f32.mrf.mxu0
  %1214 = vmatprep.mubr.bf16.mxu0 0
  %1215 = vmatmul.mubr.bf16.gmra.mxu0 %v665
  %v1216 = vpop.f32.mrf.mxu0
  %v1217 = vadd.f32 %v232, %v1216
  %v1218 = vpop.f32.mrf.mxu0
  %v1219 = vpop.f32.mrf.mxu0
  %v1220 = vadd.f32 %v232, %v1219
  %v1221 = vpop.f32.mrf.mxu0
  %1222 = vmatprep.mubr.bf16.mxu0 0
  %1223 = vmatmul.mubr.bf16.gmra.mxu0 %v666
  %v1224 = vpop.f32.mrf.mxu0
  %v1225 = vadd.f32 %v232, %v1224
  %v1226 = vpop.f32.mrf.mxu0
  %v1227 = vpop.f32.mrf.mxu0
  %v1228 = vadd.f32 %v232, %v1227
  %v1229 = vpop.f32.mrf.mxu0
  %1230 = vmatprep.mubr.bf16.mxu0 0
  %1231 = vmatmul.mubr.bf16.gmra.mxu0 %v667
  %v1232 = vpop.f32.mrf.mxu0
  %v1233 = vadd.f32 %v232, %v1232
  %v1234 = vpop.f32.mrf.mxu0
  %v1235 = vpop.f32.mrf.mxu0
  %v1236 = vadd.f32 %v232, %v1235
  %v1237 = vpop.f32.mrf.mxu0
  %1238 = vmatprep.mubr.bf16.mxu0 0
  %1239 = vmatmul.mubr.bf16.gmra.mxu0 %v668
  %v1240 = vpop.f32.mrf.mxu0
  %v1241 = vadd.f32 %v232, %v1240
  %v1242 = vpop.f32.mrf.mxu0
  %v1243 = vpop.f32.mrf.mxu0
  %v1244 = vadd.f32 %v232, %v1243
  %v1245 = vpop.f32.mrf.mxu0
  %1246 = vmatprep.mubr.bf16.mxu0 0
  %1247 = vmatmul.mubr.bf16.gmra.mxu0 %v669
  %v1248 = vpop.f32.mrf.mxu0
  %v1249 = vadd.f32 %v232, %v1248
  %v1250 = vpop.f32.mrf.mxu0
  %v1251 = vpop.f32.mrf.mxu0
  %v1252 = vadd.f32 %v232, %v1251
  %v1253 = vpop.f32.mrf.mxu0
  %1254 = vmatprep.mubr.bf16.mxu0 0
  %1255 = vmatmul.mubr.bf16.gmra.mxu0 %v670
  %v1256 = vpop.f32.mrf.mxu0
  %v1257 = vadd.f32 %v232, %v1256
  %v1258 = vpop.f32.mrf.mxu0
  %v1259 = vpop.f32.mrf.mxu0
  %v1260 = vadd.f32 %v232, %v1259
  %v1261 = vpop.f32.mrf.mxu0
  %1262 = vmatprep.mubr.bf16.mxu0 0
  %1263 = vmatmul.mubr.bf16.gmra.mxu0 %v671
  %v1264 = vpop.f32.mrf.mxu0
  %v1265 = vadd.f32 %v232, %v1264
  %v1266 = vpop.f32.mrf.mxu0
  %v1267 = vpop.f32.mrf.mxu0
  %v1268 = vadd.f32 %v232, %v1267
  %v1269 = vpop.f32.mrf.mxu0
  %1270 = vmatprep.mubr.bf16.mxu0 0
  %1271 = vmatmul.mubr.bf16.gmra.mxu0 %v672
  %v1272 = vpop.f32.mrf.mxu0
  %v1273 = vadd.f32 %v232, %v1272
  %v1274 = vpop.f32.mrf.mxu0
  %v1275 = vpop.f32.mrf.mxu0
  %v1276 = vadd.f32 %v232, %v1275
  %v1277 = vpop.f32.mrf.mxu0
  %1278 = vmatprep.mubr.bf16.mxu0 0
  %1279 = vmatmul.mubr.bf16.gmra.mxu0 %v673
  %v1280 = vpop.f32.mrf.mxu0
  %v1281 = vadd.f32 %v232, %v1280
  %v1282 = vpop.f32.mrf.mxu0
  %v1283 = vpop.f32.mrf.mxu0
  %v1284 = vadd.f32 %v232, %v1283
  %v1285 = vpop.f32.mrf.mxu0
  %1286 = vmatprep.mubr.bf16.mxu0 0
  %1287 = vmatmul.mubr.bf16.gmra.mxu0 %v674
  %v1288 = vpop.f32.mrf.mxu0
  %v1289 = vadd.f32 %v232, %v1288
  %v1290 = vpop.f32.mrf.mxu0
  %v1291 = vpop.f32.mrf.mxu0
  %v1292 = vadd.f32 %v232, %v1291
  %v1293 = vpop.f32.mrf.mxu0
  %1294 = vmatprep.mubr.bf16.mxu0 0
  %1295 = vmatmul.mubr.bf16.gmra.mxu0 %v675
  %v1296 = vpop.f32.mrf.mxu0
  %v1297 = vadd.f32 %v232, %v1296
  %v1298 = vpop.f32.mrf.mxu0
  %v1299 = vpop.f32.mrf.mxu0
  %v1300 = vadd.f32 %v232, %v1299
  %v1301 = vpop.f32.mrf.mxu0
  %1302 = vmatprep.mubr.bf16.mxu0 0
  %1303 = vmatmul.mubr.bf16.gmra.mxu0 %v676
  %v1304 = vpop.f32.mrf.mxu0
  %v1305 = vadd.f32 %v232, %v1304
  %v1306 = vpop.f32.mrf.mxu0
  %v1307 = vpop.f32.mrf.mxu0
  %v1308 = vadd.f32 %v232, %v1307
  %v1309 = vpop.f32.mrf.mxu0
  %1310 = vmatprep.mubr.bf16.mxu0 0
  %1311 = vmatmul.mubr.bf16.gmra.mxu0 %v677
  %v1312 = vpop.f32.mrf.mxu0
  %v1313 = vadd.f32 %v232, %v1312
  %v1314 = vpop.f32.mrf.mxu0
  %v1315 = vpop.f32.mrf.mxu0
  %v1316 = vadd.f32 %v232, %v1315
  %v1317 = vpop.f32.mrf.mxu0
  %1318 = vmatprep.mubr.bf16.mxu0 0
  %1319 = vmatmul.mubr.bf16.gmra.mxu0 %v678
  %v1320 = vpop.f32.mrf.mxu0
  %v1321 = vadd.f32 %v232, %v1320
  %v1322 = vpop.f32.mrf.mxu0
  %v1323 = vpop.f32.mrf.mxu0
  %v1324 = vadd.f32 %v232, %v1323
  %v1325 = vpop.f32.mrf.mxu0
  %1326 = vmatprep.mubr.bf16.mxu0 0
  %1327 = vmatmul.mubr.bf16.gmra.mxu0 %v679
  %v1328 = vpop.f32.mrf.mxu0
  %v1329 = vadd.f32 %v232, %v1328
  %v1330 = vpop.f32.mrf.mxu0
  %v1331 = vpop.f32.mrf.mxu0
  %v1332 = vadd.f32 %v232, %v1331
  %v1333 = vpop.f32.mrf.mxu0
  %1334 = vmatprep.mubr.bf16.mxu0 0
  %1335 = vmatmul.mubr.bf16.gmra.mxu0 %v680
  %v1336 = vpop.f32.mrf.mxu0
  %v1337 = vadd.f32 %v232, %v1336
  %v1338 = vpop.f32.mrf.mxu0
  %v1339 = vpop.f32.mrf.mxu0
  %v1340 = vadd.f32 %v232, %v1339
  %v1341 = vpop.f32.mrf.mxu0
  %1342 = vmatprep.mubr.bf16.mxu0 0
  %1343 = vmatmul.mubr.bf16.gmra.mxu0 %v681
  %v1344 = vpop.f32.mrf.mxu0
  %v1345 = vadd.f32 %v232, %v1344
  %v1346 = vpop.f32.mrf.mxu0
  %v1347 = vpop.f32.mrf.mxu0
  %v1348 = vadd.f32 %v232, %v1347
  %v1349 = vpop.f32.mrf.mxu0
  %1350 = vmatprep.mubr.bf16.mxu0 0
  %1351 = vmatmul.mubr.bf16.gmra.mxu0 %v682
  %v1352 = vpop.f32.mrf.mxu0
  %v1353 = vadd.f32 %v232, %v1352
  %v1354 = vpop.f32.mrf.mxu0
  %v1355 = vpop.f32.mrf.mxu0
  %v1356 = vadd.f32 %v232, %v1355
  %v1357 = vpop.f32.mrf.mxu0
  %1358 = vmatprep.mubr.bf16.mxu0 0
  %1359 = vmatmul.mubr.bf16.gmra.mxu0 %v683
  %v1360 = vpop.f32.mrf.mxu0
  %v1361 = vadd.f32 %v232, %v1360
  %v1362 = vpop.f32.mrf.mxu0
  %v1363 = vpop.f32.mrf.mxu0
  %v1364 = vadd.f32 %v232, %v1363
  %v1365 = vpop.f32.mrf.mxu0
  %1366 = vmatprep.mubr.bf16.mxu0 0
  %1367 = vmatmul.mubr.bf16.gmra.mxu0 %v684
  %v1368 = vpop.f32.mrf.mxu0
  %v1369 = vadd.f32 %v232, %v1368
  %v1370 = vpop.f32.mrf.mxu0
  %v1371 = vpop.f32.mrf.mxu0
  %v1372 = vadd.f32 %v232, %v1371
  %v1373 = vpop.f32.mrf.mxu0
  %1374 = vmatprep.mubr.bf16.mxu0 0
  %1375 = vmatmul.mubr.bf16.gmra.mxu0 %v685
  %v1376 = vpop.f32.mrf.mxu0
  %v1377 = vadd.f32 %v232, %v1376
  %v1378 = vpop.f32.mrf.mxu0
  %v1379 = vpop.f32.mrf.mxu0
  %v1380 = vadd.f32 %v232, %v1379
  %v1381 = vpop.f32.mrf.mxu0
  %1382 = vmatprep.mubr.bf16.mxu0 0
  %1383 = vmatmul.mubr.bf16.gmra.mxu0 %v686
  %v1384 = vpop.f32.mrf.mxu0
  %v1385 = vadd.f32 %v232, %v1384
  %v1386 = vpop.f32.mrf.mxu0
  %v1387 = vpop.f32.mrf.mxu0
  %v1388 = vadd.f32 %v232, %v1387
  %v1389 = vpop.f32.mrf.mxu0
  %1390 = vmatprep.mubr.bf16.mxu0 0
  %1391 = vmatmul.mubr.bf16.gmra.mxu0 %v687
  %v1392 = vpop.f32.mrf.mxu0
  %v1393 = vadd.f32 %v232, %v1392
  %v1394 = vpop.f32.mrf.mxu0
  %v1395 = vpop.f32.mrf.mxu0
  %v1396 = vadd.f32 %v232, %v1395
  %v1397 = vpop.f32.mrf.mxu0
  %1398 = vmatprep.mubr.bf16.mxu0 0
  %1399 = vmatmul.mubr.bf16.gmra.mxu0 %v688
  %v1400 = vpop.f32.mrf.mxu0
  %v1401 = vadd.f32 %v232, %v1400
  %v1402 = vpop.f32.mrf.mxu0
  %v1403 = vpop.f32.mrf.mxu0
  %v1404 = vadd.f32 %v232, %v1403
  %v1405 = vpop.f32.mrf.mxu0
  %1406 = vmatprep.mubr.bf16.mxu0 0
  %1407 = vmatmul.mubr.bf16.gmra.mxu0 %v689
  %v1408 = vpop.f32.mrf.mxu0
  %v1409 = vadd.f32 %v232, %v1408
  %v1410 = vpop.f32.mrf.mxu0
  %v1411 = vpop.f32.mrf.mxu0
  %v1412 = vadd.f32 %v232, %v1411
  %v1413 = vpop.f32.mrf.mxu0
  %1414 = vmatprep.mubr.bf16.mxu0 0
  %1415 = vmatmul.mubr.bf16.gmra.mxu0 %v690
  %v1416 = vpop.f32.mrf.mxu0
  %v1417 = vadd.f32 %v232, %v1416
  %v1418 = vpop.f32.mrf.mxu0
  %v1419 = vpop.f32.mrf.mxu0
  %v1420 = vadd.f32 %v232, %v1419
  %v1421 = vpop.f32.mrf.mxu0
  %1422 = vmatprep.mubr.bf16.mxu0 0
  %1423 = vmatmul.mubr.bf16.gmra.mxu0 %v691
  %v1424 = vpop.f32.mrf.mxu0
  %v1425 = vadd.f32 %v232, %v1424
  %v1426 = vpop.f32.mrf.mxu0
  %v1427 = vpop.f32.mrf.mxu0
  %v1428 = vadd.f32 %v232, %v1427
  %v1429 = vpop.f32.mrf.mxu0
  %1430 = vmatprep.mubr.bf16.mxu0 0
  %1431 = vmatmul.mubr.bf16.gmra.mxu0 %v692
  %v1432 = vpop.f32.mrf.mxu0
  %v1433 = vadd.f32 %v232, %v1432
  %v1434 = vpop.f32.mrf.mxu0
  %v1435 = vpop.f32.mrf.mxu0
  %v1436 = vadd.f32 %v232, %v1435
  %v1437 = vpop.f32.mrf.mxu0
  %1438 = vmatprep.mubr.bf16.mxu0 0
  %1439 = vmatmul.mubr.bf16.gmra.mxu0 %v693
  %v1440 = vpop.f32.mrf.mxu0
  %v1441 = vadd.f32 %v232, %v1440
  %v1442 = vpop.f32.mrf.mxu0
  %v1443 = vpop.f32.mrf.mxu0
  %v1444 = vadd.f32 %v232, %v1443
  %v1445 = vpop.f32.mrf.mxu0
  %1446 = vmatprep.mubr.bf16.mxu0 0
  %1447 = vmatmul.mubr.bf16.gmra.mxu0 %v694
  %v1448 = vpop.f32.mrf.mxu0
  %v1449 = vadd.f32 %v232, %v1448
  %v1450 = vpop.f32.mrf.mxu0
  %v1451 = vpop.f32.mrf.mxu0
  %v1452 = vadd.f32 %v232, %v1451
  %v1453 = vpop.f32.mrf.mxu0
  %1454 = vmatprep.mubr.bf16.mxu0 0
  %1455 = vmatmul.mubr.bf16.gmra.mxu0 %v695
  %v1456 = vpop.f32.mrf.mxu0
  %v1457 = vadd.f32 %v232, %v1456
  %v1458 = vpop.f32.mrf.mxu0
  %v1459 = vpop.f32.mrf.mxu0
  %v1460 = vadd.f32 %v232, %v1459
  %v1461 = vpop.f32.mrf.mxu0
  %1462 = vmatprep.mubr.bf16.mxu0 0
  %1463 = vmatmul.mubr.bf16.gmra.mxu0 %v696
  %v1464 = vpop.f32.mrf.mxu0
  %v1465 = vadd.f32 %v232, %v1464
  %v1466 = vpop.f32.mrf.mxu0
  %v1467 = vpop.f32.mrf.mxu0
  %v1468 = vadd.f32 %v232, %v1467
  %v1469 = vpop.f32.mrf.mxu0
  %1470 = vmatprep.mubr.bf16.mxu0 0
  %1471 = vmatmul.mubr.bf16.gmra.mxu0 %v697
  %v1472 = vpop.f32.mrf.mxu0
  %v1473 = vadd.f32 %v232, %v1472
  %v1474 = vpop.f32.mrf.mxu0
  %v1475 = vpop.f32.mrf.mxu0
  %v1476 = vadd.f32 %v232, %v1475
  %v1477 = vpop.f32.mrf.mxu0
  %1478 = vmatprep.mubr.bf16.mxu0 0
  %1479 = vmatmul.mubr.bf16.gmra.mxu0 %v698
  %v1480 = vpop.f32.mrf.mxu0
  %v1481 = vadd.f32 %v232, %v1480
  %v1482 = vpop.f32.mrf.mxu0
  %v1483 = vpop.f32.mrf.mxu0
  %v1484 = vadd.f32 %v232, %v1483
  %v1485 = vpop.f32.mrf.mxu0
  %1486 = vmatprep.mubr.bf16.mxu0 0
  %1487 = vmatmul.mubr.bf16.gmra.mxu0 %v699
  %v1488 = vpop.f32.mrf.mxu0
  %v1489 = vadd.f32 %v232, %v1488
  %v1490 = vpop.f32.mrf.mxu0
  %v1491 = vpop.f32.mrf.mxu0
  %v1492 = vadd.f32 %v232, %v1491
  %v1493 = vpop.f32.mrf.mxu0
  %1494 = vmatprep.mubr.bf16.mxu0 0
  %1495 = vmatmul.mubr.bf16.gmra.mxu0 %v700
  %v1496 = vpop.f32.mrf.mxu0
  %v1497 = vadd.f32 %v232, %v1496
  %v1498 = vpop.f32.mrf.mxu0
  %v1499 = vpop.f32.mrf.mxu0
  %v1500 = vadd.f32 %v232, %v1499
  %v1501 = vpop.f32.mrf.mxu0
  %1502 = vmatprep.mubr.bf16.mxu0 0
  %1503 = vmatmul.mubr.bf16.gmra.mxu0 %v701
  %v1504 = vpop.f32.mrf.mxu0
  %v1505 = vadd.f32 %v232, %v1504
  %v1506 = vpop.f32.mrf.mxu0
  %v1507 = vpop.f32.mrf.mxu0
  %v1508 = vadd.f32 %v232, %v1507
  %v1509 = vpop.f32.mrf.mxu0
  %1510 = vmatprep.mubr.bf16.mxu0 0
  %1511 = vmatmul.mubr.bf16.gmra.mxu0 %v702
  %v1512 = vpop.f32.mrf.mxu0
  %v1513 = vadd.f32 %v232, %v1512
  %v1514 = vpop.f32.mrf.mxu0
  %v1515 = vpop.f32.mrf.mxu0
  %v1516 = vadd.f32 %v232, %v1515
  %v1517 = vpop.f32.mrf.mxu0
  %1518 = vmatprep.mubr.bf16.mxu0 0
  %1519 = vmatmul.mubr.bf16.gmra.mxu0 %v703
  %v1520 = vpop.f32.mrf.mxu0
  %v1521 = vadd.f32 %v232, %v1520
  %v1522 = vpop.f32.mrf.mxu0
  %v1523 = vpop.f32.mrf.mxu0
  %v1524 = vadd.f32 %v232, %v1523
  %v1525 = vpop.f32.mrf.mxu0
  %1526 = vmatprep.mubr.bf16.mxu0 0
  %1527 = vmatmul.mubr.bf16.gmra.mxu0 %v704
  %v1528 = vpop.f32.mrf.mxu0
  %v1529 = vadd.f32 %v232, %v1528
  %v1530 = vpop.f32.mrf.mxu0
  %v1531 = vpop.f32.mrf.mxu0
  %v1532 = vadd.f32 %v232, %v1531
  %v1533 = vpop.f32.mrf.mxu0
  %1534 = vmatprep.mubr.bf16.mxu0 0
  %1535 = vmatmul.mubr.bf16.gmra.mxu0 %v705
  %v1536 = vpop.f32.mrf.mxu0
  %v1537 = vadd.f32 %v232, %v1536
  %v1538 = vpop.f32.mrf.mxu0
  %v1539 = vpop.f32.mrf.mxu0
  %v1540 = vadd.f32 %v232, %v1539
  %v1541 = vpop.f32.mrf.mxu0
  %1542 = vmatprep.mubr.bf16.mxu0 0
  %1543 = vmatmul.mubr.bf16.gmra.mxu0 %v706
  %v1544 = vpop.f32.mrf.mxu0
  %v1545 = vadd.f32 %v232, %v1544
  %v1546 = vpop.f32.mrf.mxu0
  %v1547 = vpop.f32.mrf.mxu0
  %v1548 = vadd.f32 %v232, %v1547
  %v1549 = vpop.f32.mrf.mxu0
  %1550 = vmatprep.mubr.bf16.mxu0 0
  %1551 = vmatmul.mubr.bf16.gmra.mxu0 %v707
  %v1552 = vpop.f32.mrf.mxu0
  %v1553 = vadd.f32 %v232, %v1552
  %v1554 = vpop.f32.mrf.mxu0
  %v1555 = vpop.f32.mrf.mxu0
  %v1556 = vadd.f32 %v232, %v1555
  %v1557 = vpop.f32.mrf.mxu0
  %1558 = vmatprep.mubr.bf16.mxu0 0
  %1559 = vmatmul.mubr.bf16.gmra.mxu0 %v708
  %v1560 = vpop.f32.mrf.mxu0
  %v1561 = vadd.f32 %v232, %v1560
  %v1562 = vpop.f32.mrf.mxu0
  %v1563 = vpop.f32.mrf.mxu0
  %v1564 = vadd.f32 %v232, %v1563
  %v1565 = vpop.f32.mrf.mxu0
  %1566 = vmatprep.mubr.bf16.mxu0 0
  %1567 = vmatmul.mubr.bf16.gmra.mxu0 %v709
  %v1568 = vpop.f32.mrf.mxu0
  %v1569 = vadd.f32 %v232, %v1568
  %v1570 = vpop.f32.mrf.mxu0
  %v1571 = vpop.f32.mrf.mxu0
  %v1572 = vadd.f32 %v232, %v1571
  %v1573 = vpop.f32.mrf.mxu0
  %1574 = vmatprep.mubr.bf16.mxu0 0
  %1575 = vmatmul.mubr.bf16.gmra.mxu0 %v710
  %v1576 = vpop.f32.mrf.mxu0
  %v1577 = vadd.f32 %v232, %v1576
  %v1578 = vpop.f32.mrf.mxu0
  %v1579 = vpop.f32.mrf.mxu0
  %v1580 = vadd.f32 %v232, %v1579
  %v1581 = vpop.f32.mrf.mxu0
  %1582 = vmatprep.mubr.bf16.mxu0 0
  %1583 = vmatmul.mubr.bf16.gmra.mxu0 %v711
  %v1584 = vpop.f32.mrf.mxu0
  %v1585 = vadd.f32 %v232, %v1584
  %v1586 = vpop.f32.mrf.mxu0
  %v1587 = vpop.f32.mrf.mxu0
  %v1588 = vadd.f32 %v232, %v1587
  %v1589 = vpop.f32.mrf.mxu0
  %1590 = vmatprep.mubr.bf16.mxu0 0
  %1591 = vmatmul.mubr.bf16.gmra.mxu0 %v712
  %v1592 = vpop.f32.mrf.mxu0
  %v1593 = vadd.f32 %v232, %v1592
  %v1594 = vpop.f32.mrf.mxu0
  %v1595 = vpop.f32.mrf.mxu0
  %v1596 = vadd.f32 %v232, %v1595
  %v1597 = vpop.f32.mrf.mxu0
  %1598 = vmatprep.mubr.bf16.mxu0 0
  %1599 = vmatmul.mubr.bf16.gmra.mxu0 %v713
  %v1600 = vpop.f32.mrf.mxu0
  %v1601 = vadd.f32 %v232, %v1600
  %v1602 = vpop.f32.mrf.mxu0
  %v1603 = vpop.f32.mrf.mxu0
  %v1604 = vadd.f32 %v232, %v1603
  %v1605 = vpop.f32.mrf.mxu0
  %1606 = vmatprep.mubr.bf16.mxu0 0
  %1607 = vmatmul.mubr.bf16.gmra.mxu0 %v714
  %v1608 = vpop.f32.mrf.mxu0
  %v1609 = vadd.f32 %v232, %v1608
  %v1610 = vpop.f32.mrf.mxu0
  %v1611 = vpop.f32.mrf.mxu0
  %v1612 = vadd.f32 %v232, %v1611
  %v1613 = vpop.f32.mrf.mxu0
  %1614 = vmatprep.mubr.bf16.mxu0 0
  %1615 = vmatmul.mubr.bf16.gmra.mxu0 %v715
  %v1616 = vpop.f32.mrf.mxu0
  %v1617 = vadd.f32 %v232, %v1616
  %v1618 = vpop.f32.mrf.mxu0
  %v1619 = vpop.f32.mrf.mxu0
  %v1620 = vadd.f32 %v232, %v1619
  %v1621 = vpop.f32.mrf.mxu0
  %1622 = vmatprep.mubr.bf16.mxu0 0
  %1623 = vmatmul.mubr.bf16.gmra.mxu0 %v716
  %v1624 = vpop.f32.mrf.mxu0
  %v1625 = vadd.f32 %v232, %v1624
  %v1626 = vpop.f32.mrf.mxu0
  %v1627 = vpop.f32.mrf.mxu0
  %v1628 = vadd.f32 %v232, %v1627
  %v1629 = vpop.f32.mrf.mxu0
  %1630 = vmatprep.mubr.bf16.mxu0 0
  %1631 = vmatmul.mubr.bf16.gmra.mxu0 %v717
  %v1632 = vpop.f32.mrf.mxu0
  %v1633 = vadd.f32 %v232, %v1632
  %v1634 = vpop.f32.mrf.mxu0
  %v1635 = vpop.f32.mrf.mxu0
  %v1636 = vadd.f32 %v232, %v1635
  %v1637 = vpop.f32.mrf.mxu0
  %1638 = vmatprep.mubr.bf16.mxu0 0
  %1639 = vmatmul.mubr.bf16.gmra.mxu0 %v718
  %v1640 = vpop.f32.mrf.mxu0
  %v1641 = vadd.f32 %v232, %v1640
  %v1642 = vpop.f32.mrf.mxu0
  %v1643 = vpop.f32.mrf.mxu0
  %v1644 = vadd.f32 %v232, %v1643
  %v1645 = vpop.f32.mrf.mxu0
  %1646 = vmatprep.mubr.bf16.mxu0 0
  %1647 = vmatmul.mubr.bf16.gmra.mxu0 %v719
  %v1648 = vpop.f32.mrf.mxu0
  %v1649 = vadd.f32 %v232, %v1648
  %v1650 = vpop.f32.mrf.mxu0
  %v1651 = vpop.f32.mrf.mxu0
  %v1652 = vadd.f32 %v232, %v1651
  %v1653 = vpop.f32.mrf.mxu0
  %1654 = vmatprep.mubr.bf16.mxu0 0
  %1655 = vmatmul.mubr.bf16.gmra.mxu0 %v720
  %v1656 = vpop.f32.mrf.mxu0
  %v1657 = vadd.f32 %v232, %v1656
  %v1658 = vpop.f32.mrf.mxu0
  %v1659 = vpop.f32.mrf.mxu0
  %v1660 = vadd.f32 %v232, %v1659
  %v1661 = vpop.f32.mrf.mxu0
  %1662 = vmatprep.mubr.bf16.mxu0 0
  %1663 = vmatmul.mubr.bf16.gmra.mxu0 %v721
  %v1664 = vpop.f32.mrf.mxu0
  %v1665 = vadd.f32 %v232, %v1664
  %v1666 = vpop.f32.mrf.mxu0
  %v1667 = vpop.f32.mrf.mxu0
  %v1668 = vadd.f32 %v232, %v1667
  %v1669 = vpop.f32.mrf.mxu0
  %1670 = vmatprep.mubr.bf16.mxu0 0
  %1671 = vmatmul.mubr.bf16.gmra.mxu0 %v722
  %v1672 = vpop.f32.mrf.mxu0
  %v1673 = vadd.f32 %v232, %v1672
  %v1674 = vpop.f32.mrf.mxu0
  %v1675 = vpop.f32.mrf.mxu0
  %v1676 = vadd.f32 %v232, %v1675
  %v1677 = vpop.f32.mrf.mxu0
  %1678 = vmatprep.mubr.bf16.mxu0 0
  %1679 = vmatmul.mubr.bf16.gmra.mxu0 %v723
  %v1680 = vpop.f32.mrf.mxu0
  %v1681 = vadd.f32 %v232, %v1680
  %v1682 = vpop.f32.mrf.mxu0
  %v1683 = vpop.f32.mrf.mxu0
  %v1684 = vadd.f32 %v232, %v1683
  %v1685 = vpop.f32.mrf.mxu0
  %1686 = vdwg.mxu0
  %v1687 = vxor.u32 %v905, 2147483648
  %v1688 = vxor.u32 %v908, 2147483648
  %v1689 = vxor.u32 %v913, 2147483648
  %v1690 = vxor.u32 %v916, 2147483648
  %v1691 = vxor.u32 %v921, 2147483648
  %v1692 = vxor.u32 %v924, 2147483648
  %v1693 = vxor.u32 %v929, 2147483648
  %v1694 = vxor.u32 %v932, 2147483648
  %v1695 = vxor.u32 %v937, 2147483648
  %v1696 = vxor.u32 %v940, 2147483648
  %v1697 = vxor.u32 %v945, 2147483648
  %v1698 = vxor.u32 %v948, 2147483648
  %v1699 = vxor.u32 %v953, 2147483648
  %v1700 = vxor.u32 %v956, 2147483648
  %v1701 = vxor.u32 %v961, 2147483648
  %v1702 = vxor.u32 %v964, 2147483648
  %v1703 = vxor.u32 %v969, 2147483648
  %v1704 = vxor.u32 %v972, 2147483648
  %v1705 = vxor.u32 %v977, 2147483648
  %v1706 = vxor.u32 %v980, 2147483648
  %v1707 = vxor.u32 %v985, 2147483648
  %v1708 = vxor.u32 %v988, 2147483648
  %v1709 = vxor.u32 %v993, 2147483648
  %v1710 = vxor.u32 %v996, 2147483648
  %v1711 = vxor.u32 %v1001, 2147483648
  %v1712 = vxor.u32 %v1004, 2147483648
  %v1713 = vxor.u32 %v1009, 2147483648
  %v1714 = vxor.u32 %v1012, 2147483648
  %v1715 = vxor.u32 %v1017, 2147483648
  %v1716 = vxor.u32 %v1020, 2147483648
  %v1717 = vxor.u32 %v1025, 2147483648
  %v1718 = vxor.u32 %v1028, 2147483648
  %v1719 = vxor.u32 %v1033, 2147483648
  %v1720 = vxor.u32 %v1036, 2147483648
  %v1721 = vxor.u32 %v1041, 2147483648
  %v1722 = vxor.u32 %v1044, 2147483648
  %v1723 = vxor.u32 %v1049, 2147483648
  %v1724 = vxor.u32 %v1052, 2147483648
  %v1725 = vxor.u32 %v1057, 2147483648
  %v1726 = vxor.u32 %v1060, 2147483648
  %v1727 = vxor.u32 %v1065, 2147483648
  %v1728 = vxor.u32 %v1068, 2147483648
  %v1729 = vxor.u32 %v1073, 2147483648
  %v1730 = vxor.u32 %v1076, 2147483648
  %v1731 = vxor.u32 %v1081, 2147483648
  %v1732 = vxor.u32 %v1084, 2147483648
  %v1733 = vxor.u32 %v1089, 2147483648
  %v1734 = vxor.u32 %v1092, 2147483648
  %v1735 = vxor.u32 %v1097, 2147483648
  %v1736 = vxor.u32 %v1100, 2147483648
  %v1737 = vxor.u32 %v1105, 2147483648
  %v1738 = vxor.u32 %v1108, 2147483648
  %v1739 = vxor.u32 %v1113, 2147483648
  %v1740 = vxor.u32 %v1116, 2147483648
  %v1741 = vxor.u32 %v1121, 2147483648
  %v1742 = vxor.u32 %v1124, 2147483648
  %v1743 = vxor.u32 %v1129, 2147483648
  %v1744 = vxor.u32 %v1132, 2147483648
  %v1745 = vxor.u32 %v1137, 2147483648
  %v1746 = vxor.u32 %v1140, 2147483648
  %v1747 = vxor.u32 %v1145, 2147483648
  %v1748 = vxor.u32 %v1148, 2147483648
  %v1749 = vxor.u32 %v1153, 2147483648
  %v1750 = vxor.u32 %v1156, 2147483648
  %v1751 = vxor.u32 %v1161, 2147483648
  %v1752 = vxor.u32 %v1164, 2147483648
  %v1753 = vxor.u32 %v1169, 2147483648
  %v1754 = vxor.u32 %v1172, 2147483648
  %v1755 = vxor.u32 %v1177, 2147483648
  %v1756 = vxor.u32 %v1180, 2147483648
  %v1757 = vxor.u32 %v1185, 2147483648
  %v1758 = vxor.u32 %v1188, 2147483648
  %v1759 = vxor.u32 %v1193, 2147483648
  %v1760 = vxor.u32 %v1196, 2147483648
  %v1761 = vxor.u32 %v1201, 2147483648
  %v1762 = vxor.u32 %v1204, 2147483648
  %v1763 = vxor.u32 %v1209, 2147483648
  %v1764 = vxor.u32 %v1212, 2147483648
  %v1765 = vxor.u32 %v1217, 2147483648
  %v1766 = vxor.u32 %v1220, 2147483648
  %v1767 = vxor.u32 %v1225, 2147483648
  %v1768 = vxor.u32 %v1228, 2147483648
  %v1769 = vxor.u32 %v1233, 2147483648
  %v1770 = vxor.u32 %v1236, 2147483648
  %v1771 = vxor.u32 %v1241, 2147483648
  %v1772 = vxor.u32 %v1244, 2147483648
  %v1773 = vxor.u32 %v1249, 2147483648
  %v1774 = vxor.u32 %v1252, 2147483648
  %v1775 = vxor.u32 %v1257, 2147483648
  %v1776 = vxor.u32 %v1260, 2147483648
  %v1777 = vxor.u32 %v1265, 2147483648
  %v1778 = vxor.u32 %v1268, 2147483648
  %v1779 = vxor.u32 %v1273, 2147483648
  %v1780 = vxor.u32 %v1276, 2147483648
  %v1781 = vxor.u32 %v1281, 2147483648
  %v1782 = vxor.u32 %v1284, 2147483648
  %v1783 = vxor.u32 %v1289, 2147483648
  %v1784 = vxor.u32 %v1292, 2147483648
  %v1785 = vxor.u32 %v1297, 2147483648
  %v1786 = vxor.u32 %v1300, 2147483648
  %v1787 = vxor.u32 %v1305, 2147483648
  %v1788 = vxor.u32 %v1308, 2147483648
  %v1789 = vxor.u32 %v1313, 2147483648
  %v1790 = vxor.u32 %v1316, 2147483648
  %v1791 = vxor.u32 %v1321, 2147483648
  %v1792 = vxor.u32 %v1324, 2147483648
  %v1793 = vxor.u32 %v1329, 2147483648
  %v1794 = vxor.u32 %v1332, 2147483648
  %v1795 = vxor.u32 %v1337, 2147483648
  %v1796 = vxor.u32 %v1340, 2147483648
  %v1797 = vxor.u32 %v1345, 2147483648
  %v1798 = vxor.u32 %v1348, 2147483648
  %v1799 = vxor.u32 %v1353, 2147483648
  %v1800 = vxor.u32 %v1356, 2147483648
  %v1801 = vxor.u32 %v1361, 2147483648
  %v1802 = vxor.u32 %v1364, 2147483648
  %v1803 = vxor.u32 %v1369, 2147483648
  %v1804 = vxor.u32 %v1372, 2147483648
  %v1805 = vxor.u32 %v1377, 2147483648
  %v1806 = vxor.u32 %v1380, 2147483648
  %v1807 = vxor.u32 %v1385, 2147483648
  %v1808 = vxor.u32 %v1388, 2147483648
  %v1809 = vxor.u32 %v1393, 2147483648
  %v1810 = vxor.u32 %v1396, 2147483648
  %v1811 = vxor.u32 %v1401, 2147483648
  %v1812 = vxor.u32 %v1404, 2147483648
  %v1813 = vxor.u32 %v1409, 2147483648
  %v1814 = vxor.u32 %v1412, 2147483648
  %v1815 = vxor.u32 %v1417, 2147483648
  %v1816 = vxor.u32 %v1420, 2147483648
  %v1817 = vxor.u32 %v1425, 2147483648
  %v1818 = vxor.u32 %v1428, 2147483648
  %v1819 = vxor.u32 %v1433, 2147483648
  %v1820 = vxor.u32 %v1436, 2147483648
  %v1821 = vxor.u32 %v1441, 2147483648
  %v1822 = vxor.u32 %v1444, 2147483648
  %v1823 = vxor.u32 %v1449, 2147483648
  %v1824 = vxor.u32 %v1452, 2147483648
  %v1825 = vxor.u32 %v1457, 2147483648
  %v1826 = vxor.u32 %v1460, 2147483648
  %v1827 = vxor.u32 %v1465, 2147483648
  %v1828 = vxor.u32 %v1468, 2147483648
  %v1829 = vxor.u32 %v1473, 2147483648
  %v1830 = vxor.u32 %v1476, 2147483648
  %v1831 = vxor.u32 %v1481, 2147483648
  %v1832 = vxor.u32 %v1484, 2147483648
  %v1833 = vxor.u32 %v1489, 2147483648
  %v1834 = vxor.u32 %v1492, 2147483648
  %v1835 = vxor.u32 %v1497, 2147483648
  %v1836 = vxor.u32 %v1500, 2147483648
  %v1837 = vxor.u32 %v1505, 2147483648
  %v1838 = vxor.u32 %v1508, 2147483648
  %v1839 = vxor.u32 %v1513, 2147483648
  %v1840 = vxor.u32 %v1516, 2147483648
  %v1841 = vxor.u32 %v1521, 2147483648
  %v1842 = vxor.u32 %v1524, 2147483648
  %v1843 = vxor.u32 %v1529, 2147483648
  %v1844 = vxor.u32 %v1532, 2147483648
  %v1845 = vxor.u32 %v1537, 2147483648
  %v1846 = vxor.u32 %v1540, 2147483648
  %v1847 = vxor.u32 %v1545, 2147483648
  %v1848 = vxor.u32 %v1548, 2147483648
  %v1849 = vxor.u32 %v1553, 2147483648
  %v1850 = vxor.u32 %v1556, 2147483648
  %v1851 = vxor.u32 %v1561, 2147483648
  %v1852 = vxor.u32 %v1564, 2147483648
  %v1853 = vxor.u32 %v1569, 2147483648
  %v1854 = vxor.u32 %v1572, 2147483648
  %v1855 = vxor.u32 %v1577, 2147483648
  %v1856 = vxor.u32 %v1580, 2147483648
  %v1857 = vxor.u32 %v1585, 2147483648
  %v1858 = vxor.u32 %v1588, 2147483648
  %v1859 = vxor.u32 %v1593, 2147483648
  %v1860 = vxor.u32 %v1596, 2147483648
  %v1861 = vxor.u32 %v1601, 2147483648
  %v1862 = vxor.u32 %v1604, 2147483648
  %v1863 = vxor.u32 %v1609, 2147483648
  %v1864 = vxor.u32 %v1612, 2147483648
  %v1865 = vxor.u32 %v1617, 2147483648
  %v1866 = vxor.u32 %v1620, 2147483648
  %v1867 = vxor.u32 %v1625, 2147483648
  %v1868 = vxor.u32 %v1628, 2147483648
  %v1869 = vxor.u32 %v1633, 2147483648
  %v1870 = vxor.u32 %v1636, 2147483648
  %v1871 = vxor.u32 %v1641, 2147483648
  %v1872 = vxor.u32 %v1644, 2147483648
  %v1873 = vxor.u32 %v1649, 2147483648
  %v1874 = vxor.u32 %v1652, 2147483648
  %v1875 = vxor.u32 %v1657, 2147483648
  %v1876 = vxor.u32 %v1660, 2147483648
  %v1877 = vxor.u32 %v1665, 2147483648
  %v1878 = vxor.u32 %v1668, 2147483648
  %v1879 = vxor.u32 %v1673, 2147483648
  %v1880 = vxor.u32 %v1676, 2147483648
  %v1881 = vxor.u32 %v1681, 2147483648
  %v1882 = vxor.u32 %v1684, 2147483648
  %v1883 = vmul.f32 %v1687, 1.442695
  %v1884 = vpow.pop %v1883
  %v1885 = vmul.f32 %v1688, 1.442695
  %v1886 = vpow.pop %v1885
  %v1887 = vmul.f32 %v1689, 1.442695
  %v1888 = vpow.pop %v1887
  %v1889 = vmul.f32 %v1690, 1.442695
  %v1890 = vpow.pop %v1889
  %v1891 = vmul.f32 %v1691, 1.442695
  %v1892 = vpow.pop %v1891
  %v1893 = vmul.f32 %v1692, 1.442695
  %v1894 = vpow.pop %v1893
  %v1895 = vmul.f32 %v1693, 1.442695
  %v1896 = vpow.pop %v1895
  %v1897 = vmul.f32 %v1694, 1.442695
  %v1898 = vpow.pop %v1897
  %v1899 = vmul.f32 %v1695, 1.442695
  %v1900 = vpow.pop %v1899
  %v1901 = vmul.f32 %v1696, 1.442695
  %v1902 = vpow.pop %v1901
  %v1903 = vmul.f32 %v1697, 1.442695
  %v1904 = vpow.pop %v1903
  %v1905 = vmul.f32 %v1698, 1.442695
  %v1906 = vpow.pop %v1905
  %v1907 = vmul.f32 %v1699, 1.442695
  %v1908 = vpow.pop %v1907
  %v1909 = vmul.f32 %v1700, 1.442695
  %v1910 = vpow.pop %v1909
  %v1911 = vmul.f32 %v1701, 1.442695
  %v1912 = vpow.pop %v1911
  %v1913 = vmul.f32 %v1702, 1.442695
  %v1914 = vpow.pop %v1913
  %v1915 = vmul.f32 %v1703, 1.442695
  %v1916 = vpow.pop %v1915
  %v1917 = vmul.f32 %v1704, 1.442695
  %v1918 = vpow.pop %v1917
  %v1919 = vmul.f32 %v1705, 1.442695
  %v1920 = vpow.pop %v1919
  %v1921 = vmul.f32 %v1706, 1.442695
  %v1922 = vpow.pop %v1921
  %v1923 = vmul.f32 %v1707, 1.442695
  %v1924 = vpow.pop %v1923
  %v1925 = vmul.f32 %v1708, 1.442695
  %v1926 = vpow.pop %v1925
  %v1927 = vmul.f32 %v1709, 1.442695
  %v1928 = vpow.pop %v1927
  %v1929 = vmul.f32 %v1710, 1.442695
  %v1930 = vpow.pop %v1929
  %v1931 = vmul.f32 %v1711, 1.442695
  %v1932 = vpow.pop %v1931
  %v1933 = vmul.f32 %v1712, 1.442695
  %v1934 = vpow.pop %v1933
  %v1935 = vmul.f32 %v1713, 1.442695
  %v1936 = vpow.pop %v1935
  %v1937 = vmul.f32 %v1714, 1.442695
  %v1938 = vpow.pop %v1937
  %v1939 = vmul.f32 %v1715, 1.442695
  %v1940 = vpow.pop %v1939
  %v1941 = vmul.f32 %v1716, 1.442695
  %v1942 = vpow.pop %v1941
  %v1943 = vmul.f32 %v1717, 1.442695
  %v1944 = vpow.pop %v1943
  %v1945 = vmul.f32 %v1718, 1.442695
  %v1946 = vpow.pop %v1945
  %v1947 = vmul.f32 %v1719, 1.442695
  %v1948 = vpow.pop %v1947
  %v1949 = vmul.f32 %v1720, 1.442695
  %v1950 = vpow.pop %v1949
  %v1951 = vmul.f32 %v1721, 1.442695
  %v1952 = vpow.pop %v1951
  %v1953 = vmul.f32 %v1722, 1.442695
  %v1954 = vpow.pop %v1953
  %v1955 = vmul.f32 %v1723, 1.442695
  %v1956 = vpow.pop %v1955
  %v1957 = vmul.f32 %v1724, 1.442695
  %v1958 = vpow.pop %v1957
  %v1959 = vmul.f32 %v1725, 1.442695
  %v1960 = vpow.pop %v1959
  %v1961 = vmul.f32 %v1726, 1.442695
  %v1962 = vpow.pop %v1961
  %v1963 = vmul.f32 %v1727, 1.442695
  %v1964 = vpow.pop %v1963
  %v1965 = vmul.f32 %v1728, 1.442695
  %v1966 = vpow.pop %v1965
  %v1967 = vmul.f32 %v1729, 1.442695
  %v1968 = vpow.pop %v1967
  %v1969 = vmul.f32 %v1730, 1.442695
  %v1970 = vpow.pop %v1969
  %v1971 = vmul.f32 %v1731, 1.442695
  %v1972 = vpow.pop %v1971
  %v1973 = vmul.f32 %v1732, 1.442695
  %v1974 = vpow.pop %v1973
  %v1975 = vmul.f32 %v1733, 1.442695
  %v1976 = vpow.pop %v1975
  %v1977 = vmul.f32 %v1734, 1.442695
  %v1978 = vpow.pop %v1977
  %v1979 = vmul.f32 %v1735, 1.442695
  %v1980 = vpow.pop %v1979
  %v1981 = vmul.f32 %v1736, 1.442695
  %v1982 = vpow.pop %v1981
  %v1983 = vmul.f32 %v1737, 1.442695
  %v1984 = vpow.pop %v1983
  %v1985 = vmul.f32 %v1738, 1.442695
  %v1986 = vpow.pop %v1985
  %v1987 = vmul.f32 %v1739, 1.442695
  %v1988 = vpow.pop %v1987
  %v1989 = vmul.f32 %v1740, 1.442695
  %v1990 = vpow.pop %v1989
  %v1991 = vmul.f32 %v1741, 1.442695
  %v1992 = vpow.pop %v1991
  %v1993 = vmul.f32 %v1742, 1.442695
  %v1994 = vpow.pop %v1993
  %v1995 = vmul.f32 %v1743, 1.442695
  %v1996 = vpow.pop %v1995
  %v1997 = vmul.f32 %v1744, 1.442695
  %v1998 = vpow.pop %v1997
  %v1999 = vmul.f32 %v1745, 1.442695
  %v2000 = vpow.pop %v1999
  %v2001 = vmul.f32 %v1746, 1.442695
  %v2002 = vpow.pop %v2001
  %v2003 = vmul.f32 %v1747, 1.442695
  %v2004 = vpow.pop %v2003
  %v2005 = vmul.f32 %v1748, 1.442695
  %v2006 = vpow.pop %v2005
  %v2007 = vmul.f32 %v1749, 1.442695
  %v2008 = vpow.pop %v2007
  %v2009 = vmul.f32 %v1750, 1.442695
  %v2010 = vpow.pop %v2009
  %v2011 = vmul.f32 %v1751, 1.442695
  %v2012 = vpow.pop %v2011
  %v2013 = vmul.f32 %v1752, 1.442695
  %v2014 = vpow.pop %v2013
  %v2015 = vmul.f32 %v1753, 1.442695
  %v2016 = vpow.pop %v2015
  %v2017 = vmul.f32 %v1754, 1.442695
  %v2018 = vpow.pop %v2017
  %v2019 = vmul.f32 %v1755, 1.442695
  %v2020 = vpow.pop %v2019
  %v2021 = vmul.f32 %v1756, 1.442695
  %v2022 = vpow.pop %v2021
  %v2023 = vmul.f32 %v1757, 1.442695
  %v2024 = vpow.pop %v2023
  %v2025 = vmul.f32 %v1758, 1.442695
  %v2026 = vpow.pop %v2025
  %v2027 = vmul.f32 %v1759, 1.442695
  %v2028 = vpow.pop %v2027
  %v2029 = vmul.f32 %v1760, 1.442695
  %v2030 = vpow.pop %v2029
  %v2031 = vmul.f32 %v1761, 1.442695
  %v2032 = vpow.pop %v2031
  %v2033 = vmul.f32 %v1762, 1.442695
  %v2034 = vpow.pop %v2033
  %v2035 = vmul.f32 %v1763, 1.442695
  %v2036 = vpow.pop %v2035
  %v2037 = vmul.f32 %v1764, 1.442695
  %v2038 = vpow.pop %v2037
  %v2039 = vmul.f32 %v1765, 1.442695
  %v2040 = vpow.pop %v2039
  %v2041 = vmul.f32 %v1766, 1.442695
  %v2042 = vpow.pop %v2041
  %v2043 = vmul.f32 %v1767, 1.442695
  %v2044 = vpow.pop %v2043
  %v2045 = vmul.f32 %v1768, 1.442695
  %v2046 = vpow.pop %v2045
  %v2047 = vmul.f32 %v1769, 1.442695
  %v2048 = vpow.pop %v2047
  %v2049 = vmul.f32 %v1770, 1.442695
  %v2050 = vpow.pop %v2049
  %v2051 = vmul.f32 %v1771, 1.442695
  %v2052 = vpow.pop %v2051
  %v2053 = vmul.f32 %v1772, 1.442695
  %v2054 = vpow.pop %v2053
  %v2055 = vmul.f32 %v1773, 1.442695
  %v2056 = vpow.pop %v2055
  %v2057 = vmul.f32 %v1774, 1.442695
  %v2058 = vpow.pop %v2057
  %v2059 = vmul.f32 %v1775, 1.442695
  %v2060 = vpow.pop %v2059
  %v2061 = vmul.f32 %v1776, 1.442695
  %v2062 = vpow.pop %v2061
  %v2063 = vmul.f32 %v1777, 1.442695
  %v2064 = vpow.pop %v2063
  %v2065 = vmul.f32 %v1778, 1.442695
  %v2066 = vpow.pop %v2065
  %v2067 = vmul.f32 %v1779, 1.442695
  %v2068 = vpow.pop %v2067
  %v2069 = vmul.f32 %v1780, 1.442695
  %v2070 = vpow.pop %v2069
  %v2071 = vmul.f32 %v1781, 1.442695
  %v2072 = vpow.pop %v2071
  %v2073 = vmul.f32 %v1782, 1.442695
  %v2074 = vpow.pop %v2073
  %v2075 = vmul.f32 %v1783, 1.442695
  %v2076 = vpow.pop %v2075
  %v2077 = vmul.f32 %v1784, 1.442695
  %v2078 = vpow.pop %v2077
  %v2079 = vmul.f32 %v1785, 1.442695
  %v2080 = vpow.pop %v2079
  %v2081 = vmul.f32 %v1786, 1.442695
  %v2082 = vpow.pop %v2081
  %v2083 = vmul.f32 %v1787, 1.442695
  %v2084 = vpow.pop %v2083
  %v2085 = vmul.f32 %v1788, 1.442695
  %v2086 = vpow.pop %v2085
  %v2087 = vmul.f32 %v1789, 1.442695
  %v2088 = vpow.pop %v2087
  %v2089 = vmul.f32 %v1790, 1.442695
  %v2090 = vpow.pop %v2089
  %v2091 = vmul.f32 %v1791, 1.442695
  %v2092 = vpow.pop %v2091
  %v2093 = vmul.f32 %v1792, 1.442695
  %v2094 = vpow.pop %v2093
  %v2095 = vmul.f32 %v1793, 1.442695
  %v2096 = vpow.pop %v2095
  %v2097 = vmul.f32 %v1794, 1.442695
  %v2098 = vpow.pop %v2097
  %v2099 = vmul.f32 %v1795, 1.442695
  %v2100 = vpow.pop %v2099
  %v2101 = vmul.f32 %v1796, 1.442695
  %v2102 = vpow.pop %v2101
  %v2103 = vmul.f32 %v1797, 1.442695
  %v2104 = vpow.pop %v2103
  %v2105 = vmul.f32 %v1798, 1.442695
  %v2106 = vpow.pop %v2105
  %v2107 = vmul.f32 %v1799, 1.442695
  %v2108 = vpow.pop %v2107
  %v2109 = vmul.f32 %v1800, 1.442695
  %v2110 = vpow.pop %v2109
  %v2111 = vmul.f32 %v1801, 1.442695
  %v2112 = vpow.pop %v2111
  %v2113 = vmul.f32 %v1802, 1.442695
  %v2114 = vpow.pop %v2113
  %v2115 = vmul.f32 %v1803, 1.442695
  %v2116 = vpow.pop %v2115
  %v2117 = vmul.f32 %v1804, 1.442695
  %v2118 = vpow.pop %v2117
  %v2119 = vmul.f32 %v1805, 1.442695
  %v2120 = vpow.pop %v2119
  %v2121 = vmul.f32 %v1806, 1.442695
  %v2122 = vpow.pop %v2121
  %v2123 = vmul.f32 %v1807, 1.442695
  %v2124 = vpow.pop %v2123
  %v2125 = vmul.f32 %v1808, 1.442695
  %v2126 = vpow.pop %v2125
  %v2127 = vmul.f32 %v1809, 1.442695
  %v2128 = vpow.pop %v2127
  %v2129 = vmul.f32 %v1810, 1.442695
  %v2130 = vpow.pop %v2129
  %v2131 = vmul.f32 %v1811, 1.442695
  %v2132 = vpow.pop %v2131
  %v2133 = vmul.f32 %v1812, 1.442695
  %v2134 = vpow.pop %v2133
  %v2135 = vmul.f32 %v1813, 1.442695
  %v2136 = vpow.pop %v2135
  %v2137 = vmul.f32 %v1814, 1.442695
  %v2138 = vpow.pop %v2137
  %v2139 = vmul.f32 %v1815, 1.442695
  %v2140 = vpow.pop %v2139
  %v2141 = vmul.f32 %v1816, 1.442695
  %v2142 = vpow.pop %v2141
  %v2143 = vmul.f32 %v1817, 1.442695
  %v2144 = vpow.pop %v2143
  %v2145 = vmul.f32 %v1818, 1.442695
  %v2146 = vpow.pop %v2145
  %v2147 = vmul.f32 %v1819, 1.442695
  %v2148 = vpow.pop %v2147
  %v2149 = vmul.f32 %v1820, 1.442695
  %v2150 = vpow.pop %v2149
  %v2151 = vmul.f32 %v1821, 1.442695
  %v2152 = vpow.pop %v2151
  %v2153 = vmul.f32 %v1822, 1.442695
  %v2154 = vpow.pop %v2153
  %v2155 = vmul.f32 %v1823, 1.442695
  %v2156 = vpow.pop %v2155
  %v2157 = vmul.f32 %v1824, 1.442695
  %v2158 = vpow.pop %v2157
  %v2159 = vmul.f32 %v1825, 1.442695
  %v2160 = vpow.pop %v2159
  %v2161 = vmul.f32 %v1826, 1.442695
  %v2162 = vpow.pop %v2161
  %v2163 = vmul.f32 %v1827, 1.442695
  %v2164 = vpow.pop %v2163
  %v2165 = vmul.f32 %v1828, 1.442695
  %v2166 = vpow.pop %v2165
  %v2167 = vmul.f32 %v1829, 1.442695
  %v2168 = vpow.pop %v2167
  %v2169 = vmul.f32 %v1830, 1.442695
  %v2170 = vpow.pop %v2169
  %v2171 = vmul.f32 %v1831, 1.442695
  %v2172 = vpow.pop %v2171
  %v2173 = vmul.f32 %v1832, 1.442695
  %v2174 = vpow.pop %v2173
  %v2175 = vmul.f32 %v1833, 1.442695
  %v2176 = vpow.pop %v2175
  %v2177 = vmul.f32 %v1834, 1.442695
  %v2178 = vpow.pop %v2177
  %v2179 = vmul.f32 %v1835, 1.442695
  %v2180 = vpow.pop %v2179
  %v2181 = vmul.f32 %v1836, 1.442695
  %v2182 = vpow.pop %v2181
  %v2183 = vmul.f32 %v1837, 1.442695
  %v2184 = vpow.pop %v2183
  %v2185 = vmul.f32 %v1838, 1.442695
  %v2186 = vpow.pop %v2185
  %v2187 = vmul.f32 %v1839, 1.442695
  %v2188 = vpow.pop %v2187
  %v2189 = vmul.f32 %v1840, 1.442695
  %v2190 = vpow.pop %v2189
  %v2191 = vmul.f32 %v1841, 1.442695
  %v2192 = vpow.pop %v2191
  %v2193 = vmul.f32 %v1842, 1.442695
  %v2194 = vpow.pop %v2193
  %v2195 = vmul.f32 %v1843, 1.442695
  %v2196 = vpow.pop %v2195
  %v2197 = vmul.f32 %v1844, 1.442695
  %v2198 = vpow.pop %v2197
  %v2199 = vmul.f32 %v1845, 1.442695
  %v2200 = vpow.pop %v2199
  %v2201 = vmul.f32 %v1846, 1.442695
  %v2202 = vpow.pop %v2201
  %v2203 = vmul.f32 %v1847, 1.442695
  %v2204 = vpow.pop %v2203
  %v2205 = vmul.f32 %v1848, 1.442695
  %v2206 = vpow.pop %v2205
  %v2207 = vmul.f32 %v1849, 1.442695
  %v2208 = vpow.pop %v2207
  %v2209 = vmul.f32 %v1850, 1.442695
  %v2210 = vpow.pop %v2209
  %v2211 = vmul.f32 %v1851, 1.442695
  %v2212 = vpow.pop %v2211
  %v2213 = vmul.f32 %v1852, 1.442695
  %v2214 = vpow.pop %v2213
  %v2215 = vmul.f32 %v1853, 1.442695
  %v2216 = vpow.pop %v2215
  %v2217 = vmul.f32 %v1854, 1.442695
  %v2218 = vpow.pop %v2217
  %v2219 = vmul.f32 %v1855, 1.442695
  %v2220 = vpow.pop %v2219
  %v2221 = vmul.f32 %v1856, 1.442695
  %v2222 = vpow.pop %v2221
  %v2223 = vmul.f32 %v1857, 1.442695
  %v2224 = vpow.pop %v2223
  %v2225 = vmul.f32 %v1858, 1.442695
  %v2226 = vpow.pop %v2225
  %v2227 = vmul.f32 %v1859, 1.442695
  %v2228 = vpow.pop %v2227
  %v2229 = vmul.f32 %v1860, 1.442695
  %v2230 = vpow.pop %v2229
  %v2231 = vmul.f32 %v1861, 1.442695
  %v2232 = vpow.pop %v2231
  %v2233 = vmul.f32 %v1862, 1.442695
  %v2234 = vpow.pop %v2233
  %v2235 = vmul.f32 %v1863, 1.442695
  %v2236 = vpow.pop %v2235
  %v2237 = vmul.f32 %v1864, 1.442695
  %v2238 = vpow.pop %v2237
  %v2239 = vmul.f32 %v1865, 1.442695
  %v2240 = vpow.pop %v2239
  %v2241 = vmul.f32 %v1866, 1.442695
  %v2242 = vpow.pop %v2241
  %v2243 = vmul.f32 %v1867, 1.442695
  %v2244 = vpow.pop %v2243
  %v2245 = vmul.f32 %v1868, 1.442695
  %v2246 = vpow.pop %v2245
  %v2247 = vmul.f32 %v1869, 1.442695
  %v2248 = vpow.pop %v2247
  %v2249 = vmul.f32 %v1870, 1.442695
  %v2250 = vpow.pop %v2249
  %v2251 = vmul.f32 %v1871, 1.442695
  %v2252 = vpow.pop %v2251
  %v2253 = vmul.f32 %v1872, 1.442695
  %v2254 = vpow.pop %v2253
  %v2255 = vmul.f32 %v1873, 1.442695
  %v2256 = vpow.pop %v2255
  %v2257 = vmul.f32 %v1874, 1.442695
  %v2258 = vpow.pop %v2257
  %v2259 = vmul.f32 %v1875, 1.442695
  %v2260 = vpow.pop %v2259
  %v2261 = vmul.f32 %v1876, 1.442695
  %v2262 = vpow.pop %v2261
  %v2263 = vmul.f32 %v1877, 1.442695
  %v2264 = vpow.pop %v2263
  %v2265 = vmul.f32 %v1878, 1.442695
  %v2266 = vpow.pop %v2265
  %v2267 = vmul.f32 %v1879, 1.442695
  %v2268 = vpow.pop %v2267
  %v2269 = vmul.f32 %v1880, 1.442695
  %v2270 = vpow.pop %v2269
  %v2271 = vmul.f32 %v1881, 1.442695
  %v2272 = vpow.pop %v2271
  %v2273 = vmul.f32 %v1882, 1.442695
  %v2274 = vpow.pop %v2273
  %v2275 = vadd.f32 %v1884, 1.0
  %v2276 = vadd.f32 %v1886, 1.0
  %v2277 = vadd.f32 %v1888, 1.0
  %v2278 = vadd.f32 %v1890, 1.0
  %v2279 = vadd.f32 %v1892, 1.0
  %v2280 = vadd.f32 %v1894, 1.0
  %v2281 = vadd.f32 %v1896, 1.0
  %v2282 = vadd.f32 %v1898, 1.0
  %v2283 = vadd.f32 %v1900, 1.0
  %v2284 = vadd.f32 %v1902, 1.0
  %v2285 = vadd.f32 %v1904, 1.0
  %v2286 = vadd.f32 %v1906, 1.0
  %v2287 = vadd.f32 %v1908, 1.0
  %v2288 = vadd.f32 %v1910, 1.0
  %v2289 = vadd.f32 %v1912, 1.0
  %v2290 = vadd.f32 %v1914, 1.0
  %v2291 = vadd.f32 %v1916, 1.0
  %v2292 = vadd.f32 %v1918, 1.0
  %v2293 = vadd.f32 %v1920, 1.0
  %v2294 = vadd.f32 %v1922, 1.0
  %v2295 = vadd.f32 %v1924, 1.0
  %v2296 = vadd.f32 %v1926, 1.0
  %v2297 = vadd.f32 %v1928, 1.0
  %v2298 = vadd.f32 %v1930, 1.0
  %v2299 = vadd.f32 %v1932, 1.0
  %v2300 = vadd.f32 %v1934, 1.0
  %v2301 = vadd.f32 %v1936, 1.0
  %v2302 = vadd.f32 %v1938, 1.0
  %v2303 = vadd.f32 %v1940, 1.0
  %v2304 = vadd.f32 %v1942, 1.0
  %v2305 = vadd.f32 %v1944, 1.0
  %v2306 = vadd.f32 %v1946, 1.0
  %v2307 = vadd.f32 %v1948, 1.0
  %v2308 = vadd.f32 %v1950, 1.0
  %v2309 = vadd.f32 %v1952, 1.0
  %v2310 = vadd.f32 %v1954, 1.0
  %v2311 = vadd.f32 %v1956, 1.0
  %v2312 = vadd.f32 %v1958, 1.0
  %v2313 = vadd.f32 %v1960, 1.0
  %v2314 = vadd.f32 %v1962, 1.0
  %v2315 = vadd.f32 %v1964, 1.0
  %v2316 = vadd.f32 %v1966, 1.0
  %v2317 = vadd.f32 %v1968, 1.0
  %v2318 = vadd.f32 %v1970, 1.0
  %v2319 = vadd.f32 %v1972, 1.0
  %v2320 = vadd.f32 %v1974, 1.0
  %v2321 = vadd.f32 %v1976, 1.0
  %v2322 = vadd.f32 %v1978, 1.0
  %v2323 = vadd.f32 %v1980, 1.0
  %v2324 = vadd.f32 %v1982, 1.0
  %v2325 = vadd.f32 %v1984, 1.0
  %v2326 = vadd.f32 %v1986, 1.0
  %v2327 = vadd.f32 %v1988, 1.0
  %v2328 = vadd.f32 %v1990, 1.0
  %v2329 = vadd.f32 %v1992, 1.0
  %v2330 = vadd.f32 %v1994, 1.0
  %v2331 = vadd.f32 %v1996, 1.0
  %v2332 = vadd.f32 %v1998, 1.0
  %v2333 = vadd.f32 %v2000, 1.0
  %v2334 = vadd.f32 %v2002, 1.0
  %v2335 = vadd.f32 %v2004, 1.0
  %v2336 = vadd.f32 %v2006, 1.0
  %v2337 = vadd.f32 %v2008, 1.0
  %v2338 = vadd.f32 %v2010, 1.0
  %v2339 = vadd.f32 %v2012, 1.0
  %v2340 = vadd.f32 %v2014, 1.0
  %v2341 = vadd.f32 %v2016, 1.0
  %v2342 = vadd.f32 %v2018, 1.0
  %v2343 = vadd.f32 %v2020, 1.0
  %v2344 = vadd.f32 %v2022, 1.0
  %v2345 = vadd.f32 %v2024, 1.0
  %v2346 = vadd.f32 %v2026, 1.0
  %v2347 = vadd.f32 %v2028, 1.0
  %v2348 = vadd.f32 %v2030, 1.0
  %v2349 = vadd.f32 %v2032, 1.0
  %v2350 = vadd.f32 %v2034, 1.0
  %v2351 = vadd.f32 %v2036, 1.0
  %v2352 = vadd.f32 %v2038, 1.0
  %v2353 = vadd.f32 %v2040, 1.0
  %v2354 = vadd.f32 %v2042, 1.0
  %v2355 = vadd.f32 %v2044, 1.0
  %v2356 = vadd.f32 %v2046, 1.0
  %v2357 = vadd.f32 %v2048, 1.0
  %v2358 = vadd.f32 %v2050, 1.0
  %v2359 = vadd.f32 %v2052, 1.0
  %v2360 = vadd.f32 %v2054, 1.0
  %v2361 = vadd.f32 %v2056, 1.0
  %v2362 = vadd.f32 %v2058, 1.0
  %v2363 = vadd.f32 %v2060, 1.0
  %v2364 = vadd.f32 %v2062, 1.0
  %v2365 = vadd.f32 %v2064, 1.0
  %v2366 = vadd.f32 %v2066, 1.0
  %v2367 = vadd.f32 %v2068, 1.0
  %v2368 = vadd.f32 %v2070, 1.0
  %v2369 = vadd.f32 %v2072, 1.0
  %v2370 = vadd.f32 %v2074, 1.0
  %v2371 = vadd.f32 %v2076, 1.0
  %v2372 = vadd.f32 %v2078, 1.0
  %v2373 = vadd.f32 %v2080, 1.0
  %v2374 = vadd.f32 %v2082, 1.0
  %v2375 = vadd.f32 %v2084, 1.0
  %v2376 = vadd.f32 %v2086, 1.0
  %v2377 = vadd.f32 %v2088, 1.0
  %v2378 = vadd.f32 %v2090, 1.0
  %v2379 = vadd.f32 %v2092, 1.0
  %v2380 = vadd.f32 %v2094, 1.0
  %v2381 = vadd.f32 %v2096, 1.0
  %v2382 = vadd.f32 %v2098, 1.0
  %v2383 = vadd.f32 %v2100, 1.0
  %v2384 = vadd.f32 %v2102, 1.0
  %v2385 = vadd.f32 %v2104, 1.0
  %v2386 = vadd.f32 %v2106, 1.0
  %v2387 = vadd.f32 %v2108, 1.0
  %v2388 = vadd.f32 %v2110, 1.0
  %v2389 = vadd.f32 %v2112, 1.0
  %v2390 = vadd.f32 %v2114, 1.0
  %v2391 = vadd.f32 %v2116, 1.0
  %v2392 = vadd.f32 %v2118, 1.0
  %v2393 = vadd.f32 %v2120, 1.0
  %v2394 = vadd.f32 %v2122, 1.0
  %v2395 = vadd.f32 %v2124, 1.0
  %v2396 = vadd.f32 %v2126, 1.0
  %v2397 = vadd.f32 %v2128, 1.0
  %v2398 = vadd.f32 %v2130, 1.0
  %v2399 = vadd.f32 %v2132, 1.0
  %v2400 = vadd.f32 %v2134, 1.0
  %v2401 = vadd.f32 %v2136, 1.0
  %v2402 = vadd.f32 %v2138, 1.0
  %v2403 = vadd.f32 %v2140, 1.0
  %v2404 = vadd.f32 %v2142, 1.0
  %v2405 = vadd.f32 %v2144, 1.0
  %v2406 = vadd.f32 %v2146, 1.0
  %v2407 = vadd.f32 %v2148, 1.0
  %v2408 = vadd.f32 %v2150, 1.0
  %v2409 = vadd.f32 %v2152, 1.0
  %v2410 = vadd.f32 %v2154, 1.0
  %v2411 = vadd.f32 %v2156, 1.0
  %v2412 = vadd.f32 %v2158, 1.0
  %v2413 = vadd.f32 %v2160, 1.0
  %v2414 = vadd.f32 %v2162, 1.0
  %v2415 = vadd.f32 %v2164, 1.0
  %v2416 = vadd.f32 %v2166, 1.0
  %v2417 = vadd.f32 %v2168, 1.0
  %v2418 = vadd.f32 %v2170, 1.0
  %v2419 = vadd.f32 %v2172, 1.0
  %v2420 = vadd.f32 %v2174, 1.0
  %v2421 = vadd.f32 %v2176, 1.0
  %v2422 = vadd.f32 %v2178, 1.0
  %v2423 = vadd.f32 %v2180, 1.0
  %v2424 = vadd.f32 %v2182, 1.0
  %v2425 = vadd.f32 %v2184, 1.0
  %v2426 = vadd.f32 %v2186, 1.0
  %v2427 = vadd.f32 %v2188, 1.0
  %v2428 = vadd.f32 %v2190, 1.0
  %v2429 = vadd.f32 %v2192, 1.0
  %v2430 = vadd.f32 %v2194, 1.0
  %v2431 = vadd.f32 %v2196, 1.0
  %v2432 = vadd.f32 %v2198, 1.0
  %v2433 = vadd.f32 %v2200, 1.0
  %v2434 = vadd.f32 %v2202, 1.0
  %v2435 = vadd.f32 %v2204, 1.0
  %v2436 = vadd.f32 %v2206, 1.0
  %v2437 = vadd.f32 %v2208, 1.0
  %v2438 = vadd.f32 %v2210, 1.0
  %v2439 = vadd.f32 %v2212, 1.0
  %v2440 = vadd.f32 %v2214, 1.0
  %v2441 = vadd.f32 %v2216, 1.0
  %v2442 = vadd.f32 %v2218, 1.0
  %v2443 = vadd.f32 %v2220, 1.0
  %v2444 = vadd.f32 %v2222, 1.0
  %v2445 = vadd.f32 %v2224, 1.0
  %v2446 = vadd.f32 %v2226, 1.0
  %v2447 = vadd.f32 %v2228, 1.0
  %v2448 = vadd.f32 %v2230, 1.0
  %v2449 = vadd.f32 %v2232, 1.0
  %v2450 = vadd.f32 %v2234, 1.0
  %v2451 = vadd.f32 %v2236, 1.0
  %v2452 = vadd.f32 %v2238, 1.0
  %v2453 = vadd.f32 %v2240, 1.0
  %v2454 = vadd.f32 %v2242, 1.0
  %v2455 = vadd.f32 %v2244, 1.0
  %v2456 = vadd.f32 %v2246, 1.0
  %v2457 = vadd.f32 %v2248, 1.0
  %v2458 = vadd.f32 %v2250, 1.0
  %v2459 = vadd.f32 %v2252, 1.0
  %v2460 = vadd.f32 %v2254, 1.0
  %v2461 = vadd.f32 %v2256, 1.0
  %v2462 = vadd.f32 %v2258, 1.0
  %v2463 = vadd.f32 %v2260, 1.0
  %v2464 = vadd.f32 %v2262, 1.0
  %v2465 = vadd.f32 %v2264, 1.0
  %v2466 = vadd.f32 %v2266, 1.0
  %v2467 = vadd.f32 %v2268, 1.0
  %v2468 = vadd.f32 %v2270, 1.0
  %v2469 = vadd.f32 %v2272, 1.0
  %v2470 = vadd.f32 %v2274, 1.0
  %v2471 = vrcp.pop %v2275
  %v2472 = vmul.f32 1.0, %v2471
  %v2473 = vrcp.pop %v2276
  %v2474 = vmul.f32 1.0, %v2473
  %v2475 = vrcp.pop %v2277
  %v2476 = vmul.f32 1.0, %v2475
  %v2477 = vrcp.pop %v2278
  %v2478 = vmul.f32 1.0, %v2477
  %v2479 = vrcp.pop %v2279
  %v2480 = vmul.f32 1.0, %v2479
  %v2481 = vrcp.pop %v2280
  %v2482 = vmul.f32 1.0, %v2481
  %v2483 = vrcp.pop %v2281
  %v2484 = vmul.f32 1.0, %v2483
  %v2485 = vrcp.pop %v2282
  %v2486 = vmul.f32 1.0, %v2485
  %v2487 = vrcp.pop %v2283
  %v2488 = vmul.f32 1.0, %v2487
  %v2489 = vrcp.pop %v2284
  %v2490 = vmul.f32 1.0, %v2489
  %v2491 = vrcp.pop %v2285
  %v2492 = vmul.f32 1.0, %v2491
  %v2493 = vrcp.pop %v2286
  %v2494 = vmul.f32 1.0, %v2493
  %v2495 = vrcp.pop %v2287
  %v2496 = vmul.f32 1.0, %v2495
  %v2497 = vrcp.pop %v2288
  %v2498 = vmul.f32 1.0, %v2497
  %v2499 = vrcp.pop %v2289
  %v2500 = vmul.f32 1.0, %v2499
  %v2501 = vrcp.pop %v2290
  %v2502 = vmul.f32 1.0, %v2501
  %v2503 = vrcp.pop %v2291
  %v2504 = vmul.f32 1.0, %v2503
  %v2505 = vrcp.pop %v2292
  %v2506 = vmul.f32 1.0, %v2505
  %v2507 = vrcp.pop %v2293
  %v2508 = vmul.f32 1.0, %v2507
  %v2509 = vrcp.pop %v2294
  %v2510 = vmul.f32 1.0, %v2509
  %v2511 = vrcp.pop %v2295
  %v2512 = vmul.f32 1.0, %v2511
  %v2513 = vrcp.pop %v2296
  %v2514 = vmul.f32 1.0, %v2513
  %v2515 = vrcp.pop %v2297
  %v2516 = vmul.f32 1.0, %v2515
  %v2517 = vrcp.pop %v2298
  %v2518 = vmul.f32 1.0, %v2517
  %v2519 = vrcp.pop %v2299
  %v2520 = vmul.f32 1.0, %v2519
  %v2521 = vrcp.pop %v2300
  %v2522 = vmul.f32 1.0, %v2521
  %v2523 = vrcp.pop %v2301
  %v2524 = vmul.f32 1.0, %v2523
  %v2525 = vrcp.pop %v2302
  %v2526 = vmul.f32 1.0, %v2525
  %v2527 = vrcp.pop %v2303
  %v2528 = vmul.f32 1.0, %v2527
  %v2529 = vrcp.pop %v2304
  %v2530 = vmul.f32 1.0, %v2529
  %v2531 = vrcp.pop %v2305
  %v2532 = vmul.f32 1.0, %v2531
  %v2533 = vrcp.pop %v2306
  %v2534 = vmul.f32 1.0, %v2533
  %v2535 = vrcp.pop %v2307
  %v2536 = vmul.f32 1.0, %v2535
  %v2537 = vrcp.pop %v2308
  %v2538 = vmul.f32 1.0, %v2537
  %v2539 = vrcp.pop %v2309
  %v2540 = vmul.f32 1.0, %v2539
  %v2541 = vrcp.pop %v2310
  %v2542 = vmul.f32 1.0, %v2541
  %v2543 = vrcp.pop %v2311
  %v2544 = vmul.f32 1.0, %v2543
  %v2545 = vrcp.pop %v2312
  %v2546 = vmul.f32 1.0, %v2545
  %v2547 = vrcp.pop %v2313
  %v2548 = vmul.f32 1.0, %v2547
  %v2549 = vrcp.pop %v2314
  %v2550 = vmul.f32 1.0, %v2549
  %v2551 = vrcp.pop %v2315
  %v2552 = vmul.f32 1.0, %v2551
  %v2553 = vrcp.pop %v2316
  %v2554 = vmul.f32 1.0, %v2553
  %v2555 = vrcp.pop %v2317
  %v2556 = vmul.f32 1.0, %v2555
  %v2557 = vrcp.pop %v2318
  %v2558 = vmul.f32 1.0, %v2557
  %v2559 = vrcp.pop %v2319
  %v2560 = vmul.f32 1.0, %v2559
  %v2561 = vrcp.pop %v2320
  %v2562 = vmul.f32 1.0, %v2561
  %v2563 = vrcp.pop %v2321
  %v2564 = vmul.f32 1.0, %v2563
  %v2565 = vrcp.pop %v2322
  %v2566 = vmul.f32 1.0, %v2565
  %v2567 = vrcp.pop %v2323
  %v2568 = vmul.f32 1.0, %v2567
  %v2569 = vrcp.pop %v2324
  %v2570 = vmul.f32 1.0, %v2569
  %v2571 = vrcp.pop %v2325
  %v2572 = vmul.f32 1.0, %v2571
  %v2573 = vrcp.pop %v2326
  %v2574 = vmul.f32 1.0, %v2573
  %v2575 = vrcp.pop %v2327
  %v2576 = vmul.f32 1.0, %v2575
  %v2577 = vrcp.pop %v2328
  %v2578 = vmul.f32 1.0, %v2577
  %v2579 = vrcp.pop %v2329
  %v2580 = vmul.f32 1.0, %v2579
  %v2581 = vrcp.pop %v2330
  %v2582 = vmul.f32 1.0, %v2581
  %v2583 = vrcp.pop %v2331
  %v2584 = vmul.f32 1.0, %v2583
  %v2585 = vrcp.pop %v2332
  %v2586 = vmul.f32 1.0, %v2585
  %v2587 = vrcp.pop %v2333
  %v2588 = vmul.f32 1.0, %v2587
  %v2589 = vrcp.pop %v2334
  %v2590 = vmul.f32 1.0, %v2589
  %v2591 = vrcp.pop %v2335
  %v2592 = vmul.f32 1.0, %v2591
  %v2593 = vrcp.pop %v2336
  %v2594 = vmul.f32 1.0, %v2593
  %v2595 = vrcp.pop %v2337
  %v2596 = vmul.f32 1.0, %v2595
  %v2597 = vrcp.pop %v2338
  %v2598 = vmul.f32 1.0, %v2597
  %v2599 = vrcp.pop %v2339
  %v2600 = vmul.f32 1.0, %v2599
  %v2601 = vrcp.pop %v2340
  %v2602 = vmul.f32 1.0, %v2601
  %v2603 = vrcp.pop %v2341
  %v2604 = vmul.f32 1.0, %v2603
  %v2605 = vrcp.pop %v2342
  %v2606 = vmul.f32 1.0, %v2605
  %v2607 = vrcp.pop %v2343
  %v2608 = vmul.f32 1.0, %v2607
  %v2609 = vrcp.pop %v2344
  %v2610 = vmul.f32 1.0, %v2609
  %v2611 = vrcp.pop %v2345
  %v2612 = vmul.f32 1.0, %v2611
  %v2613 = vrcp.pop %v2346
  %v2614 = vmul.f32 1.0, %v2613
  %v2615 = vrcp.pop %v2347
  %v2616 = vmul.f32 1.0, %v2615
  %v2617 = vrcp.pop %v2348
  %v2618 = vmul.f32 1.0, %v2617
  %v2619 = vrcp.pop %v2349
  %v2620 = vmul.f32 1.0, %v2619
  %v2621 = vrcp.pop %v2350
  %v2622 = vmul.f32 1.0, %v2621
  %v2623 = vrcp.pop %v2351
  %v2624 = vmul.f32 1.0, %v2623
  %v2625 = vrcp.pop %v2352
  %v2626 = vmul.f32 1.0, %v2625
  %v2627 = vrcp.pop %v2353
  %v2628 = vmul.f32 1.0, %v2627
  %v2629 = vrcp.pop %v2354
  %v2630 = vmul.f32 1.0, %v2629
  %v2631 = vrcp.pop %v2355
  %v2632 = vmul.f32 1.0, %v2631
  %v2633 = vrcp.pop %v2356
  %v2634 = vmul.f32 1.0, %v2633
  %v2635 = vrcp.pop %v2357
  %v2636 = vmul.f32 1.0, %v2635
  %v2637 = vrcp.pop %v2358
  %v2638 = vmul.f32 1.0, %v2637
  %v2639 = vrcp.pop %v2359
  %v2640 = vmul.f32 1.0, %v2639
  %v2641 = vrcp.pop %v2360
  %v2642 = vmul.f32 1.0, %v2641
  %v2643 = vrcp.pop %v2361
  %v2644 = vmul.f32 1.0, %v2643
  %v2645 = vrcp.pop %v2362
  %v2646 = vmul.f32 1.0, %v2645
  %v2647 = vrcp.pop %v2363
  %v2648 = vmul.f32 1.0, %v2647
  %v2649 = vrcp.pop %v2364
  %v2650 = vmul.f32 1.0, %v2649
  %v2651 = vrcp.pop %v2365
  %v2652 = vmul.f32 1.0, %v2651
  %v2653 = vrcp.pop %v2366
  %v2654 = vmul.f32 1.0, %v2653
  %v2655 = vrcp.pop %v2367
  %v2656 = vmul.f32 1.0, %v2655
  %v2657 = vrcp.pop %v2368
  %v2658 = vmul.f32 1.0, %v2657
  %v2659 = vrcp.pop %v2369
  %v2660 = vmul.f32 1.0, %v2659
  %v2661 = vrcp.pop %v2370
  %v2662 = vmul.f32 1.0, %v2661
  %v2663 = vrcp.pop %v2371
  %v2664 = vmul.f32 1.0, %v2663
  %v2665 = vrcp.pop %v2372
  %v2666 = vmul.f32 1.0, %v2665
  %v2667 = vrcp.pop %v2373
  %v2668 = vmul.f32 1.0, %v2667
  %v2669 = vrcp.pop %v2374
  %v2670 = vmul.f32 1.0, %v2669
  %v2671 = vrcp.pop %v2375
  %v2672 = vmul.f32 1.0, %v2671
  %v2673 = vrcp.pop %v2376
  %v2674 = vmul.f32 1.0, %v2673
  %v2675 = vrcp.pop %v2377
  %v2676 = vmul.f32 1.0, %v2675
  %v2677 = vrcp.pop %v2378
  %v2678 = vmul.f32 1.0, %v2677
  %v2679 = vrcp.pop %v2379
  %v2680 = vmul.f32 1.0, %v2679
  %v2681 = vrcp.pop %v2380
  %v2682 = vmul.f32 1.0, %v2681
  %v2683 = vrcp.pop %v2381
  %v2684 = vmul.f32 1.0, %v2683
  %v2685 = vrcp.pop %v2382
  %v2686 = vmul.f32 1.0, %v2685
  %v2687 = vrcp.pop %v2383
  %v2688 = vmul.f32 1.0, %v2687
  %v2689 = vrcp.pop %v2384
  %v2690 = vmul.f32 1.0, %v2689
  %v2691 = vrcp.pop %v2385
  %v2692 = vmul.f32 1.0, %v2691
  %v2693 = vrcp.pop %v2386
  %v2694 = vmul.f32 1.0, %v2693
  %v2695 = vrcp.pop %v2387
  %v2696 = vmul.f32 1.0, %v2695
  %v2697 = vrcp.pop %v2388
  %v2698 = vmul.f32 1.0, %v2697
  %v2699 = vrcp.pop %v2389
  %v2700 = vmul.f32 1.0, %v2699
  %v2701 = vrcp.pop %v2390
  %v2702 = vmul.f32 1.0, %v2701
  %v2703 = vrcp.pop %v2391
  %v2704 = vmul.f32 1.0, %v2703
  %v2705 = vrcp.pop %v2392
  %v2706 = vmul.f32 1.0, %v2705
  %v2707 = vrcp.pop %v2393
  %v2708 = vmul.f32 1.0, %v2707
  %v2709 = vrcp.pop %v2394
  %v2710 = vmul.f32 1.0, %v2709
  %v2711 = vrcp.pop %v2395
  %v2712 = vmul.f32 1.0, %v2711
  %v2713 = vrcp.pop %v2396
  %v2714 = vmul.f32 1.0, %v2713
  %v2715 = vrcp.pop %v2397
  %v2716 = vmul.f32 1.0, %v2715
  %v2717 = vrcp.pop %v2398
  %v2718 = vmul.f32 1.0, %v2717
  %v2719 = vrcp.pop %v2399
  %v2720 = vmul.f32 1.0, %v2719
  %v2721 = vrcp.pop %v2400
  %v2722 = vmul.f32 1.0, %v2721
  %v2723 = vrcp.pop %v2401
  %v2724 = vmul.f32 1.0, %v2723
  %v2725 = vrcp.pop %v2402
  %v2726 = vmul.f32 1.0, %v2725
  %v2727 = vrcp.pop %v2403
  %v2728 = vmul.f32 1.0, %v2727
  %v2729 = vrcp.pop %v2404
  %v2730 = vmul.f32 1.0, %v2729
  %v2731 = vrcp.pop %v2405
  %v2732 = vmul.f32 1.0, %v2731
  %v2733 = vrcp.pop %v2406
  %v2734 = vmul.f32 1.0, %v2733
  %v2735 = vrcp.pop %v2407
  %v2736 = vmul.f32 1.0, %v2735
  %v2737 = vrcp.pop %v2408
  %v2738 = vmul.f32 1.0, %v2737
  %v2739 = vrcp.pop %v2409
  %v2740 = vmul.f32 1.0, %v2739
  %v2741 = vrcp.pop %v2410
  %v2742 = vmul.f32 1.0, %v2741
  %v2743 = vrcp.pop %v2411
  %v2744 = vmul.f32 1.0, %v2743
  %v2745 = vrcp.pop %v2412
  %v2746 = vmul.f32 1.0, %v2745
  %v2747 = vrcp.pop %v2413
  %v2748 = vmul.f32 1.0, %v2747
  %v2749 = vrcp.pop %v2414
  %v2750 = vmul.f32 1.0, %v2749
  %v2751 = vrcp.pop %v2415
  %v2752 = vmul.f32 1.0, %v2751
  %v2753 = vrcp.pop %v2416
  %v2754 = vmul.f32 1.0, %v2753
  %v2755 = vrcp.pop %v2417
  %v2756 = vmul.f32 1.0, %v2755
  %v2757 = vrcp.pop %v2418
  %v2758 = vmul.f32 1.0, %v2757
  %v2759 = vrcp.pop %v2419
  %v2760 = vmul.f32 1.0, %v2759
  %v2761 = vrcp.pop %v2420
  %v2762 = vmul.f32 1.0, %v2761
  %v2763 = vrcp.pop %v2421
  %v2764 = vmul.f32 1.0, %v2763
  %v2765 = vrcp.pop %v2422
  %v2766 = vmul.f32 1.0, %v2765
  %v2767 = vrcp.pop %v2423
  %v2768 = vmul.f32 1.0, %v2767
  %v2769 = vrcp.pop %v2424
  %v2770 = vmul.f32 1.0, %v2769
  %v2771 = vrcp.pop %v2425
  %v2772 = vmul.f32 1.0, %v2771
  %v2773 = vrcp.pop %v2426
  %v2774 = vmul.f32 1.0, %v2773
  %v2775 = vrcp.pop %v2427
  %v2776 = vmul.f32 1.0, %v2775
  %v2777 = vrcp.pop %v2428
  %v2778 = vmul.f32 1.0, %v2777
  %v2779 = vrcp.pop %v2429
  %v2780 = vmul.f32 1.0, %v2779
  %v2781 = vrcp.pop %v2430
  %v2782 = vmul.f32 1.0, %v2781
  %v2783 = vrcp.pop %v2431
  %v2784 = vmul.f32 1.0, %v2783
  %v2785 = vrcp.pop %v2432
  %v2786 = vmul.f32 1.0, %v2785
  %v2787 = vrcp.pop %v2433
  %v2788 = vmul.f32 1.0, %v2787
  %v2789 = vrcp.pop %v2434
  %v2790 = vmul.f32 1.0, %v2789
  %v2791 = vrcp.pop %v2435
  %v2792 = vmul.f32 1.0, %v2791
  %v2793 = vrcp.pop %v2436
  %v2794 = vmul.f32 1.0, %v2793
  %v2795 = vrcp.pop %v2437
  %v2796 = vmul.f32 1.0, %v2795
  %v2797 = vrcp.pop %v2438
  %v2798 = vmul.f32 1.0, %v2797
  %v2799 = vrcp.pop %v2439
  %v2800 = vmul.f32 1.0, %v2799
  %v2801 = vrcp.pop %v2440
  %v2802 = vmul.f32 1.0, %v2801
  %v2803 = vrcp.pop %v2441
  %v2804 = vmul.f32 1.0, %v2803
  %v2805 = vrcp.pop %v2442
  %v2806 = vmul.f32 1.0, %v2805
  %v2807 = vrcp.pop %v2443
  %v2808 = vmul.f32 1.0, %v2807
  %v2809 = vrcp.pop %v2444
  %v2810 = vmul.f32 1.0, %v2809
  %v2811 = vrcp.pop %v2445
  %v2812 = vmul.f32 1.0, %v2811
  %v2813 = vrcp.pop %v2446
  %v2814 = vmul.f32 1.0, %v2813
  %v2815 = vrcp.pop %v2447
  %v2816 = vmul.f32 1.0, %v2815
  %v2817 = vrcp.pop %v2448
  %v2818 = vmul.f32 1.0, %v2817
  %v2819 = vrcp.pop %v2449
  %v2820 = vmul.f32 1.0, %v2819
  %v2821 = vrcp.pop %v2450
  %v2822 = vmul.f32 1.0, %v2821
  %v2823 = vrcp.pop %v2451
  %v2824 = vmul.f32 1.0, %v2823
  %v2825 = vrcp.pop %v2452
  %v2826 = vmul.f32 1.0, %v2825
  %v2827 = vrcp.pop %v2453
  %v2828 = vmul.f32 1.0, %v2827
  %v2829 = vrcp.pop %v2454
  %v2830 = vmul.f32 1.0, %v2829
  %v2831 = vrcp.pop %v2455
  %v2832 = vmul.f32 1.0, %v2831
  %v2833 = vrcp.pop %v2456
  %v2834 = vmul.f32 1.0, %v2833
  %v2835 = vrcp.pop %v2457
  %v2836 = vmul.f32 1.0, %v2835
  %v2837 = vrcp.pop %v2458
  %v2838 = vmul.f32 1.0, %v2837
  %v2839 = vrcp.pop %v2459
  %v2840 = vmul.f32 1.0, %v2839
  %v2841 = vrcp.pop %v2460
  %v2842 = vmul.f32 1.0, %v2841
  %v2843 = vrcp.pop %v2461
  %v2844 = vmul.f32 1.0, %v2843
  %v2845 = vrcp.pop %v2462
  %v2846 = vmul.f32 1.0, %v2845
  %v2847 = vrcp.pop %v2463
  %v2848 = vmul.f32 1.0, %v2847
  %v2849 = vrcp.pop %v2464
  %v2850 = vmul.f32 1.0, %v2849
  %v2851 = vrcp.pop %v2465
  %v2852 = vmul.f32 1.0, %v2851
  %v2853 = vrcp.pop %v2466
  %v2854 = vmul.f32 1.0, %v2853
  %v2855 = vrcp.pop %v2467
  %v2856 = vmul.f32 1.0, %v2855
  %v2857 = vrcp.pop %v2468
  %v2858 = vmul.f32 1.0, %v2857
  %v2859 = vrcp.pop %v2469
  %v2860 = vmul.f32 1.0, %v2859
  %v2861 = vrcp.pop %v2470
  %v2862 = vmul.f32 1.0, %v2861
  %2863 = vst [vmem:[%s3] sm:$0xff] %v2472
  %2864 = vst [vmem:[%s3 + $0x8] sm:$0xff] %v2474
  %2865 = vst [vmem:[%s3 + $0x10] sm:$0xff] %v2476
  %2866 = vst [vmem:[%s3 + $0x18] sm:$0xff] %v2478
  %2867 = vst [vmem:[%s3 + $0x20] sm:$0xff] %v2480
  %2868 = vst [vmem:[%s3 + $0x28] sm:$0xff] %v2482
  %2869 = vst [vmem:[%s3 + $0x30] sm:$0xff] %v2484
  %2870 = vst [vmem:[%s3 + $0x38] sm:$0xff] %v2486
  %2871 = vst [vmem:[%s3 + $0x40] sm:$0xff] %v2488
  %2872 = vst [vmem:[%s3 + $0x48] sm:$0xff] %v2490
  %2873 = vst [vmem:[%s3 + $0x50] sm:$0xff] %v2492
  %2874 = vst [vmem:[%s3 + $0x58] sm:$0xff] %v2494
  %2875 = vst [vmem:[%s3 + $0x60] sm:$0xff] %v2496
  %2876 = vst [vmem:[%s3 + $0x68] sm:$0xff] %v2498
  %2877 = vst [vmem:[%s3 + $0x70] sm:$0xff] %v2500
  %2878 = vst [vmem:[%s3 + $0x78] sm:$0xff] %v2502
  %2879 = vst [vmem:[%s3 + $0x80] sm:$0xff] %v2504
  %2880 = vst [vmem:[%s3 + $0x88] sm:$0xff] %v2506
  %2881 = vst [vmem:[%s3 + $0x90] sm:$0xff] %v2508
  %2882 = vst [vmem:[%s3 + $0x98] sm:$0xff] %v2510
  %2883 = vst [vmem:[%s3 + $0xa0] sm:$0xff] %v2512
  %2884 = vst [vmem:[%s3 + $0xa8] sm:$0xff] %v2514
  %2885 = vst [vmem:[%s3 + $0xb0] sm:$0xff] %v2516
  %2886 = vst [vmem:[%s3 + $0xb8] sm:$0xff] %v2518
  %2887 = vst [vmem:[%s3 + $0xc0] sm:$0xff] %v2520
  %2888 = vst [vmem:[%s3 + $0xc8] sm:$0xff] %v2522
  %2889 = vst [vmem:[%s3 + $0xd0] sm:$0xff] %v2524
  %2890 = vst [vmem:[%s3 + $0xd8] sm:$0xff] %v2526
  %2891 = vst [vmem:[%s3 + $0xe0] sm:$0xff] %v2528
  %2892 = vst [vmem:[%s3 + $0xe8] sm:$0xff] %v2530
  %2893 = vst [vmem:[%s3 + $0xf0] sm:$0xff] %v2532
  %2894 = vst [vmem:[%s3 + $0xf8] sm:$0xff] %v2534
  %2895 = vst [vmem:[%s3 + $0x100] sm:$0xff] %v2536
  %2896 = vst [vmem:[%s3 + $0x108] sm:$0xff] %v2538
  %2897 = vst [vmem:[%s3 + $0x110] sm:$0xff] %v2540
  %2898 = vst [vmem:[%s3 + $0x118] sm:$0xff] %v2542
  %2899 = vst [vmem:[%s3 + $0x120] sm:$0xff] %v2544
  %2900 = vst [vmem:[%s3 + $0x128] sm:$0xff] %v2546
  %2901 = vst [vmem:[%s3 + $0x130] sm:$0xff] %v2548
  %2902 = vst [vmem:[%s3 + $0x138] sm:$0xff] %v2550
  %2903 = vst [vmem:[%s3 + $0x140] sm:$0xff] %v2552
  %2904 = vst [vmem:[%s3 + $0x148] sm:$0xff] %v2554
  %2905 = vst [vmem:[%s3 + $0x150] sm:$0xff] %v2556
  %2906 = vst [vmem:[%s3 + $0x158] sm:$0xff] %v2558
  %2907 = vst [vmem:[%s3 + $0x160] sm:$0xff] %v2560
  %2908 = vst [vmem:[%s3 + $0x168] sm:$0xff] %v2562
  %2909 = vst [vmem:[%s3 + $0x170] sm:$0xff] %v2564
  %2910 = vst [vmem:[%s3 + $0x178] sm:$0xff] %v2566
  %2911 = vst [vmem:[%s3 + $0x180] sm:$0xff] %v2568
  %2912 = vst [vmem:[%s3 + $0x188] sm:$0xff] %v2570
  %2913 = vst [vmem:[%s3 + $0x190] sm:$0xff] %v2572
  %2914 = vst [vmem:[%s3 + $0x198] sm:$0xff] %v2574
  %2915 = vst [vmem:[%s3 + $0x1a0] sm:$0xff] %v2576
  %2916 = vst [vmem:[%s3 + $0x1a8] sm:$0xff] %v2578
  %2917 = vst [vmem:[%s3 + $0x1b0] sm:$0xff] %v2580
  %2918 = vst [vmem:[%s3 + $0x1b8] sm:$0xff] %v2582
  %2919 = vst [vmem:[%s3 + $0x1c0] sm:$0xff] %v2584
  %2920 = vst [vmem:[%s3 + $0x1c8] sm:$0xff] %v2586
  %2921 = vst [vmem:[%s3 + $0x1d0] sm:$0xff] %v2588
  %2922 = vst [vmem:[%s3 + $0x1d8] sm:$0xff] %v2590
  %2923 = vst [vmem:[%s3 + $0x1e0] sm:$0xff] %v2592
  %2924 = vst [vmem:[%s3 + $0x1e8] sm:$0xff] %v2594
  %2925 = vst [vmem:[%s3 + $0x1f0] sm:$0xff] %v2596
  %2926 = vst [vmem:[%s3 + $0x1f8] sm:$0xff] %v2598
  %2927 = vst [vmem:[%s3 + $0x200] sm:$0xff] %v2600
  %2928 = vst [vmem:[%s3 + $0x208] sm:$0xff] %v2602
  %2929 = vst [vmem:[%s3 + $0x210] sm:$0xff] %v2604
  %2930 = vst [vmem:[%s3 + $0x218] sm:$0xff] %v2606
  %2931 = vst [vmem:[%s3 + $0x220] sm:$0xff] %v2608
  %2932 = vst [vmem:[%s3 + $0x228] sm:$0xff] %v2610
  %2933 = vst [vmem:[%s3 + $0x230] sm:$0xff] %v2612
  %2934 = vst [vmem:[%s3 + $0x238] sm:$0xff] %v2614
  %2935 = vst [vmem:[%s3 + $0x240] sm:$0xff] %v2616
  %2936 = vst [vmem:[%s3 + $0x248] sm:$0xff] %v2618
  %2937 = vst [vmem:[%s3 + $0x250] sm:$0xff] %v2620
  %2938 = vst [vmem:[%s3 + $0x258] sm:$0xff] %v2622
  %2939 = vst [vmem:[%s3 + $0x260] sm:$0xff] %v2624
  %2940 = vst [vmem:[%s3 + $0x268] sm:$0xff] %v2626
  %2941 = vst [vmem:[%s3 + $0x270] sm:$0xff] %v2628
  %2942 = vst [vmem:[%s3 + $0x278] sm:$0xff] %v2630
  %2943 = vst [vmem:[%s3 + $0x280] sm:$0xff] %v2632
  %2944 = vst [vmem:[%s3 + $0x288] sm:$0xff] %v2634
  %2945 = vst [vmem:[%s3 + $0x290] sm:$0xff] %v2636
  %2946 = vst [vmem:[%s3 + $0x298] sm:$0xff] %v2638
  %2947 = vst [vmem:[%s3 + $0x2a0] sm:$0xff] %v2640
  %2948 = vst [vmem:[%s3 + $0x2a8] sm:$0xff] %v2642
  %2949 = vst [vmem:[%s3 + $0x2b0] sm:$0xff] %v2644
  %2950 = vst [vmem:[%s3 + $0x2b8] sm:$0xff] %v2646
  %2951 = vst [vmem:[%s3 + $0x2c0] sm:$0xff] %v2648
  %2952 = vst [vmem:[%s3 + $0x2c8] sm:$0xff] %v2650
  %2953 = vst [vmem:[%s3 + $0x2d0] sm:$0xff] %v2652
  %2954 = vst [vmem:[%s3 + $0x2d8] sm:$0xff] %v2654
  %2955 = vst [vmem:[%s3 + $0x2e0] sm:$0xff] %v2656
  %2956 = vst [vmem:[%s3 + $0x2e8] sm:$0xff] %v2658
  %2957 = vst [vmem:[%s3 + $0x2f0] sm:$0xff] %v2660
  %2958 = vst [vmem:[%s3 + $0x2f8] sm:$0xff] %v2662
  %2959 = vst [vmem:[%s3 + $0x300] sm:$0xff] %v2664
  %2960 = vst [vmem:[%s3 + $0x308] sm:$0xff] %v2666
  %2961 = vst [vmem:[%s3 + $0x310] sm:$0xff] %v2668
  %2962 = vst [vmem:[%s3 + $0x318] sm:$0xff] %v2670
  %2963 = vst [vmem:[%s3 + $0x320] sm:$0xff] %v2672
  %2964 = vst [vmem:[%s3 + $0x328] sm:$0xff] %v2674
  %2965 = vst [vmem:[%s3 + $0x330] sm:$0xff] %v2676
  %2966 = vst [vmem:[%s3 + $0x338] sm:$0xff] %v2678
  %2967 = vst [vmem:[%s3 + $0x340] sm:$0xff] %v2680
  %2968 = vst [vmem:[%s3 + $0x348] sm:$0xff] %v2682
  %2969 = vst [vmem:[%s3 + $0x350] sm:$0xff] %v2684
  %2970 = vst [vmem:[%s3 + $0x358] sm:$0xff] %v2686
  %2971 = vst [vmem:[%s3 + $0x360] sm:$0xff] %v2688
  %2972 = vst [vmem:[%s3 + $0x368] sm:$0xff] %v2690
  %2973 = vst [vmem:[%s3 + $0x370] sm:$0xff] %v2692
  %2974 = vst [vmem:[%s3 + $0x378] sm:$0xff] %v2694
  %2975 = vst [vmem:[%s3 + $0x380] sm:$0xff] %v2696
  %2976 = vst [vmem:[%s3 + $0x388] sm:$0xff] %v2698
  %2977 = vst [vmem:[%s3 + $0x390] sm:$0xff] %v2700
  %2978 = vst [vmem:[%s3 + $0x398] sm:$0xff] %v2702
  %2979 = vst [vmem:[%s3 + $0x3a0] sm:$0xff] %v2704
  %2980 = vst [vmem:[%s3 + $0x3a8] sm:$0xff] %v2706
  %2981 = vst [vmem:[%s3 + $0x3b0] sm:$0xff] %v2708
  %2982 = vst [vmem:[%s3 + $0x3b8] sm:$0xff] %v2710
  %2983 = vst [vmem:[%s3 + $0x3c0] sm:$0xff] %v2712
  %2984 = vst [vmem:[%s3 + $0x3c8] sm:$0xff] %v2714
  %2985 = vst [vmem:[%s3 + $0x3d0] sm:$0xff] %v2716
  %2986 = vst [vmem:[%s3 + $0x3d8] sm:$0xff] %v2718
  %2987 = vst [vmem:[%s3 + $0x3e0] sm:$0xff] %v2720
  %2988 = vst [vmem:[%s3 + $0x3e8] sm:$0xff] %v2722
  %2989 = vst [vmem:[%s3 + $0x3f0] sm:$0xff] %v2724
  %2990 = vst [vmem:[%s3 + $0x3f8] sm:$0xff] %v2726
  %2991 = vst [vmem:[%s3 + $0x400] sm:$0xff] %v2728
  %2992 = vst [vmem:[%s3 + $0x408] sm:$0xff] %v2730
  %2993 = vst [vmem:[%s3 + $0x410] sm:$0xff] %v2732
  %2994 = vst [vmem:[%s3 + $0x418] sm:$0xff] %v2734
  %2995 = vst [vmem:[%s3 + $0x420] sm:$0xff] %v2736
  %2996 = vst [vmem:[%s3 + $0x428] sm:$0xff] %v2738
  %2997 = vst [vmem:[%s3 + $0x430] sm:$0xff] %v2740
  %2998 = vst [vmem:[%s3 + $0x438] sm:$0xff] %v2742
  %2999 = vst [vmem:[%s3 + $0x440] sm:$0xff] %v2744
  %3000 = vst [vmem:[%s3 + $0x448] sm:$0xff] %v2746
  %3001 = vst [vmem:[%s3 + $0x450] sm:$0xff] %v2748
  %3002 = vst [vmem:[%s3 + $0x458] sm:$0xff] %v2750
  %3003 = vst [vmem:[%s3 + $0x460] sm:$0xff] %v2752
  %3004 = vst [vmem:[%s3 + $0x468] sm:$0xff] %v2754
  %3005 = vst [vmem:[%s3 + $0x470] sm:$0xff] %v2756
  %3006 = vst [vmem:[%s3 + $0x478] sm:$0xff] %v2758
  %3007 = vst [vmem:[%s3 + $0x480] sm:$0xff] %v2760
  %3008 = vst [vmem:[%s3 + $0x488] sm:$0xff] %v2762
  %3009 = vst [vmem:[%s3 + $0x490] sm:$0xff] %v2764
  %3010 = vst [vmem:[%s3 + $0x498] sm:$0xff] %v2766
  %3011 = vst [vmem:[%s3 + $0x4a0] sm:$0xff] %v2768
  %3012 = vst [vmem:[%s3 + $0x4a8] sm:$0xff] %v2770
  %3013 = vst [vmem:[%s3 + $0x4b0] sm:$0xff] %v2772
  %3014 = vst [vmem:[%s3 + $0x4b8] sm:$0xff] %v2774
  %3015 = vst [vmem:[%s3 + $0x4c0] sm:$0xff] %v2776
  %3016 = vst [vmem:[%s3 + $0x4c8] sm:$0xff] %v2778
  %3017 = vst [vmem:[%s3 + $0x4d0] sm:$0xff] %v2780
  %3018 = vst [vmem:[%s3 + $0x4d8] sm:$0xff] %v2782
  %3019 = vst [vmem:[%s3 + $0x4e0] sm:$0xff] %v2784
  %3020 = vst [vmem:[%s3 + $0x4e8] sm:$0xff] %v2786
  %3021 = vst [vmem:[%s3 + $0x4f0] sm:$0xff] %v2788
  %3022 = vst [vmem:[%s3 + $0x4f8] sm:$0xff] %v2790
  %3023 = vst [vmem:[%s3 + $0x500] sm:$0xff] %v2792
  %3024 = vst [vmem:[%s3 + $0x508] sm:$0xff] %v2794
  %3025 = vst [vmem:[%s3 + $0x510] sm:$0xff] %v2796
  %3026 = vst [vmem:[%s3 + $0x518] sm:$0xff] %v2798
  %3027 = vst [vmem:[%s3 + $0x520] sm:$0xff] %v2800
  %3028 = vst [vmem:[%s3 + $0x528] sm:$0xff] %v2802
  %3029 = vst [vmem:[%s3 + $0x530] sm:$0xff] %v2804
  %3030 = vst [vmem:[%s3 + $0x538] sm:$0xff] %v2806
  %3031 = vst [vmem:[%s3 + $0x540] sm:$0xff] %v2808
  %3032 = vst [vmem:[%s3 + $0x548] sm:$0xff] %v2810
  %3033 = vst [vmem:[%s3 + $0x550] sm:$0xff] %v2812
  %3034 = vst [vmem:[%s3 + $0x558] sm:$0xff] %v2814
  %3035 = vst [vmem:[%s3 + $0x560] sm:$0xff] %v2816
  %3036 = vst [vmem:[%s3 + $0x568] sm:$0xff] %v2818
  %3037 = vst [vmem:[%s3 + $0x570] sm:$0xff] %v2820
  %3038 = vst [vmem:[%s3 + $0x578] sm:$0xff] %v2822
  %3039 = vst [vmem:[%s3 + $0x580] sm:$0xff] %v2824
  %3040 = vst [vmem:[%s3 + $0x588] sm:$0xff] %v2826
  %3041 = vst [vmem:[%s3 + $0x590] sm:$0xff] %v2828
  %3042 = vst [vmem:[%s3 + $0x598] sm:$0xff] %v2830
  %3043 = vst [vmem:[%s3 + $0x5a0] sm:$0xff] %v2832
  %3044 = vst [vmem:[%s3 + $0x5a8] sm:$0xff] %v2834
  %3045 = vst [vmem:[%s3 + $0x5b0] sm:$0xff] %v2836
  %3046 = vst [vmem:[%s3 + $0x5b8] sm:$0xff] %v2838
  %3047 = vst [vmem:[%s3 + $0x5c0] sm:$0xff] %v2840
  %3048 = vst [vmem:[%s3 + $0x5c8] sm:$0xff] %v2842
  %3049 = vst [vmem:[%s3 + $0x5d0] sm:$0xff] %v2844
  %3050 = vst [vmem:[%s3 + $0x5d8] sm:$0xff] %v2846
  %3051 = vst [vmem:[%s3 + $0x5e0] sm:$0xff] %v2848
  %3052 = vst [vmem:[%s3 + $0x5e8] sm:$0xff] %v2850
  %3053 = vst [vmem:[%s3 + $0x5f0] sm:$0xff] %v2852
  %3054 = vst [vmem:[%s3 + $0x5f8] sm:$0xff] %v2854
  %3055 = vst [vmem:[%s3 + $0x600] sm:$0xff] %v2856
  %3056 = vst [vmem:[%s3 + $0x608] sm:$0xff] %v2858
  %3057 = vst [vmem:[%s3 + $0x610] sm:$0xff] %v2860
  %3058 = vst [vmem:[%s3 + $0x618] sm:$0xff] %v2862
  // Predicated region
  $region14: #{_lambda_.7} parent=0 // pred_check
    _
  $region15: #{_lambda_.7} parent=0 // pred_check_branch
    %3060 = sbr.rel (0) target = $region17
  $region16: #{_lambda_.7} parent=0 // pred_region
    _
  $region17: #{_lambda_.7} parent=0 // pred_fallthru
    _
  // Predicated region
  $region18: #{_lambda_.7} parent=0 // pred_check
    _
  $region19: #{_lambda_.7} parent=0 // pred_check_branch
    %3062 = sbr.rel (0) target = $region21
  $region20: #{_lambda_.7} parent=0 // pred_region
    _
  $region21: #{_lambda_.7} parent=0 // pred_fallthru
    _

</llo_original>
